<compile_context>
chip_gen: v7x
topology: tpu7x:2x2x1
jax: 0.10.0
libtpu: 0.0.40
codegen_flags: <defaults>
</compile_context>

<pallas_src>
import functools

import jax
import jax.numpy as jnp
from jax.experimental import pallas as pl
from jax.experimental.pallas import tpu as pltpu


# ------------------------------ in-kernel helpers -----------------------------
def _layernorm_f32(x, w, b, eps):
    # x: (R, C) f32; w, b: (1, C).  Biased variance == torch.nn.LayerNorm.
    mean = jnp.mean(x, axis=-1, keepdims=True)
    xc = x - mean
    var = jnp.mean(xc * xc, axis=-1, keepdims=True)
    return xc * jax.lax.rsqrt(var + eps) * w + b


def _erf_f32(x):
    # Abramowitz & Stegun 7.1.26 rational approximation (|err| < 1.5e-7), built
    # only from ops that lower in Mosaic (abs/mul/add/div/exp/select).
    a1, a2, a3, a4, a5 = (0.254829592, -0.284496736, 1.421413741,
                          -1.453152027, 1.061405429)
    p = 0.3275911
    ax = jnp.abs(x)
    t = 1.0 / (1.0 + p * ax)
    poly = t * (a1 + t * (a2 + t * (a3 + t * (a4 + t * a5))))
    y = 1.0 - poly * jnp.exp(-ax * ax)
    return jnp.where(x < 0.0, -y, y)


def _gelu_exact_f32(x):
    # torch.nn.GELU() default (exact erf form).
    return 0.5 * x * (1.0 + _erf_f32(x * 0.7071067811865476))


def _attention_f32(q_in, kv, wq, wk, wv, wp, bp, num_heads, scale):
    # q_in: (N, C), kv: (M, C); returns proj(attn) of shape (N, C).
    N, C = q_in.shape
    M = kv.shape[0]
    D = C // num_heads

    # Projections: one MXU matmul each.  q is pre-scaled here (cheap, O(N*C)).
    q = jnp.dot(q_in, wq, preferred_element_type=jnp.float32) * scale
    k = jnp.dot(kv, wk, preferred_element_type=jnp.float32)
    v = jnp.dot(kv, wv, preferred_element_type=jnp.float32)

    qh = q.reshape(N, num_heads, D)
    kh = k.reshape(M, num_heads, D)
    vh = v.reshape(M, num_heads, D)

    # Batched-over-heads contractions (single dot_general each, no per-head loop).
    s = jnp.einsum('nhd,mhd->hnm', qh, kh,
                   preferred_element_type=jnp.float32)        # (H, N, M)
    s = s - jnp.max(s, axis=-1, keepdims=True)
    p = jnp.exp(s)
    p = p * pl.reciprocal(jnp.sum(p, axis=-1, keepdims=True), approx=True)
    o = jnp.einsum('hnm,mhd->nhd', p, vh,
                   preferred_element_type=jnp.float32)        # (N, H, D)
    o = o.reshape(N, C)
    return jnp.dot(o, wp, preferred_element_type=jnp.float32) + bp


# ------------------------- fully fused decoder layer --------------------------
def _decoder_layer_kernel(x_ref, mem_ref,
                          ln1w_ref, ln1b_ref, swq_ref, swk_ref, swv_ref,
                          swp_ref, sbp_ref,
                          ln2w_ref, ln2b_ref, cwq_ref, cwk_ref, cwv_ref,
                          cwp_ref, cbp_ref,
                          ln3w_ref, ln3b_ref, w1_ref, b1_ref, w2_ref, b2_ref,
                          o_ref, *, num_heads, scale, eps):
    x = x_ref[0].astype(jnp.float32)       # (N, C) residual stream for this batch
    mem = mem_ref[0].astype(jnp.float32)   # (M, C) cross-attn memory

    # x = x + self_attn(norm1(x), norm1(x), norm1(x))
    h = _layernorm_f32(x, ln1w_ref[...], ln1b_ref[...], eps)
    x = x + _attention_f32(h, h, swq_ref[...], swk_ref[...], swv_ref[...],
                           swp_ref[...], sbp_ref[...], num_heads, scale)

    # x = x + cross_attn(norm2(x), mem, mem)
    h = _layernorm_f32(x, ln2w_ref[...], ln2b_ref[...], eps)
    x = x + _attention_f32(h, mem, cwq_ref[...], cwk_ref[...], cwv_ref[...],
                           cwp_ref[...], cbp_ref[...], num_heads, scale)

    # x = x + mlp(norm3(x))   (dropout = identity at inference)
    h = _layernorm_f32(x, ln3w_ref[...], ln3b_ref[...], eps)
    z = jnp.dot(h, w1_ref[...], preferred_element_type=jnp.float32) + b1_ref[...]
    z = _gelu_exact_f32(z)
    y = jnp.dot(z, w2_ref[...], preferred_element_type=jnp.float32) + b2_ref[...]

    o_ref[0] = (x + y).astype(o_ref.dtype)


def transformer_decoder_layer(x, mem, p, num_heads, eps=1e-5):
    """One pre-norm TransformerDecoderLayer, fused into a single pallas_call."""
    B, N, C = x.shape
    M = mem.shape[1]
    Hd = p["mlp_w1"].shape[1]
    scale = float((C // num_heads) ** -0.5)

    kern = functools.partial(_decoder_layer_kernel, num_heads=num_heads,
                             scale=scale, eps=eps)

    w_spec = pl.BlockSpec((C, C), lambda b: (0, 0))
    vC = pl.BlockSpec((1, C), lambda b: (0, 0))
    vH = pl.BlockSpec((1, Hd), lambda b: (0, 0))

    in_specs = [
        pl.BlockSpec((1, N, C), lambda b: (b, 0, 0)),   # x (per-batch tile)
        pl.BlockSpec((1, M, C), lambda b: (b, 0, 0)),   # mem (per-batch tile)
        vC, vC, w_spec, w_spec, w_spec, w_spec, vC,     # LN1 + self-attn
        vC, vC, w_spec, w_spec, w_spec, w_spec, vC,     # LN2 + cross-attn
        vC, vC,                                         # LN3
        pl.BlockSpec((C, Hd), lambda b: (0, 0)), vH,    # MLP fc1
        pl.BlockSpec((Hd, C), lambda b: (0, 0)), vC,    # MLP fc2
    ]
    args = [
        x, mem,
        p["ln1_w"].reshape(1, C), p["ln1_b"].reshape(1, C),
        p["self_wq"], p["self_wk"], p["self_wv"], p["self_wp"],
        p["self_bp"].reshape(1, C),
        p["ln2_w"].reshape(1, C), p["ln2_b"].reshape(1, C),
        p["cross_wq"], p["cross_wk"], p["cross_wv"], p["cross_wp"],
        p["cross_bp"].reshape(1, C),
        p["ln3_w"].reshape(1, C), p["ln3_b"].reshape(1, C),
        p["mlp_w1"], p["mlp_b1"].reshape(1, Hd),
        p["mlp_w2"], p["mlp_b2"].reshape(1, C),
    ]

    return pl.pallas_call(
        kern,
        out_shape=jax.ShapeDtypeStruct((B, N, C), x.dtype),
        grid=(B,),
        in_specs=in_specs,
        out_specs=pl.BlockSpec((1, N, C), lambda b: (b, 0, 0)),
        compiler_params=pltpu.CompilerParams(dimension_semantics=("parallel",)),
    )(*args)


# ------------------------------ params / reference -----------------------------
def init_params(key, d_model):
    ks = jax.random.split(key, 10)

    def w(k, shape):
        return (0.02 * jax.random.normal(k, shape)).astype(jnp.float32)

    p = {}
    for i, name in enumerate(["self", "cross"]):
        off = i * 4
        p[f"{name}_wq"] = w(ks[off + 0], (d_model, d_model))   # qkv_bias=False
        p[f"{name}_wk"] = w(ks[off + 1], (d_model, d_model))
        p[f"{name}_wv"] = w(ks[off + 2], (d_model, d_model))
        p[f"{name}_wp"] = w(ks[off + 3], (d_model, d_model))
        p[f"{name}_bp"] = jnp.zeros((d_model,), jnp.float32)
    for i in (1, 2, 3):
        p[f"ln{i}_w"] = jnp.ones((d_model,), jnp.float32)
        p[f"ln{i}_b"] = jnp.zeros((d_model,), jnp.float32)
    p["mlp_w1"] = w(ks[8], (d_model, 4 * d_model))
    p["mlp_b1"] = jnp.zeros((4 * d_model,), jnp.float32)
    p["mlp_w2"] = w(ks[9], (4 * d_model, d_model))
    p["mlp_b2"] = jnp.zeros((d_model,), jnp.float32)
    return p


def _reference_layer(x, mem, p, num_heads):
    """Pure-JAX reference matching the PyTorch module (eval mode)."""
    def ln(t, w, b, eps=1e-5):
        mu = jnp.mean(t, -1, keepdims=True)
        var = jnp.mean((t - mu) ** 2, -1, keepdims=True)
        return (t - mu) / jnp.sqrt(var + eps) * w + b

    def attn(q_in, kv_in, wq, wk, wv, wp, bp):
        B, N, C = q_in.shape
        M = kv_in.shape[1]
        H = num_heads
        D = C // H
        q = (q_in @ wq).reshape(B, N, H, D)
        k = (kv_in @ wk).reshape(B, M, H, D)
        v = (kv_in @ wv).reshape(B, M, H, D)
        s = jnp.einsum('bnhd,bmhd->bhnm', q, k) * (D ** -0.5)
        a = jax.nn.softmax(s, axis=-1)
        o = jnp.einsum('bhnm,bmhd->bnhd', a, v).reshape(B, N, C)
        return o @ wp + bp

    h = ln(x, p["ln1_w"], p["ln1_b"])
    x = x + attn(h, h, p["self_wq"], p["self_wk"], p["self_wv"],
                 p["self_wp"], p["self_bp"])
    qn = ln(x, p["ln2_w"], p["ln2_b"])
    x = x + attn(qn, mem, p["cross_wq"], p["cross_wk"], p["cross_wv"],
                 p["cross_wp"], p["cross_bp"])
    h3 = ln(x, p["ln3_w"], p["ln3_b"])
    z = h3 @ p["mlp_w1"] + p["mlp_b1"]
    z = jax.nn.gelu(z, approximate=False)
    y = z @ p["mlp_w2"] + p["mlp_b2"]
    return x + y


if __name__ == "__main__":
    B, N, M, C, H = 2, 8, 16, 32, 8  # batch, tgt seq, mem seq, d_model, heads
    key = jax.random.PRNGKey(0)
    kx, kmem, kparams = jax.random.split(key, 3)
    x = jax.random.normal(kx, (B, N, C), jnp.float32)
    mem = jax.random.normal(kmem, (B, M, C), jnp.float32)
    params = init_params(kparams, C)

    layer = jax.jit(lambda xx, mm, pp: transformer_decoder_layer(xx, mm, pp, H))
    out = layer(x, mem, params)
    jax.block_until_ready(out)

    assert out.shape == (B, N, C) and out.dtype == jnp.float32
    ref = _reference_layer(x, mem, params, H)
    err = float(jnp.max(jnp.abs(out - ref)))
    assert err < 1e-2, f"max abs error vs reference too large: {err}"
    print("KERNEL_OK")
</pallas_src>

<mosaic_0001>
module attributes {stable_mosaic.version = 11 : i64} {
  func.func @_decoder_layer_kernel(%arg0: i32, %arg1: memref<1x8x32xf32, #tpu.memory_space<vmem>>, %arg2: memref<1x16x32xf32, #tpu.memory_space<vmem>>, %arg3: memref<1x32xf32, #tpu.memory_space<vmem>>, %arg4: memref<1x32xf32, #tpu.memory_space<vmem>>, %arg5: memref<32x32xf32, #tpu.memory_space<vmem>>, %arg6: memref<32x32xf32, #tpu.memory_space<vmem>>, %arg7: memref<32x32xf32, #tpu.memory_space<vmem>>, %arg8: memref<32x32xf32, #tpu.memory_space<vmem>>, %arg9: memref<1x32xf32, #tpu.memory_space<vmem>>, %arg10: memref<1x32xf32, #tpu.memory_space<vmem>>, %arg11: memref<1x32xf32, #tpu.memory_space<vmem>>, %arg12: memref<32x32xf32, #tpu.memory_space<vmem>>, %arg13: memref<32x32xf32, #tpu.memory_space<vmem>>, %arg14: memref<32x32xf32, #tpu.memory_space<vmem>>, %arg15: memref<32x32xf32, #tpu.memory_space<vmem>>, %arg16: memref<1x32xf32, #tpu.memory_space<vmem>>, %arg17: memref<1x32xf32, #tpu.memory_space<vmem>>, %arg18: memref<1x32xf32, #tpu.memory_space<vmem>>, %arg19: memref<32x128xf32, #tpu.memory_space<vmem>>, %arg20: memref<1x128xf32, #tpu.memory_space<vmem>>, %arg21: memref<128x32xf32, #tpu.memory_space<vmem>>, %arg22: memref<1x32xf32, #tpu.memory_space<vmem>>, %arg23: memref<1x8x32xf32, #tpu.memory_space<vmem>>) attributes {dimension_semantics = [#tpu.dimension_semantics<parallel>], iteration_bounds = array<i64: 2>, scalar_prefetch = 0 : i64, scratch_operands = 0 : i64, tpu.core_type = #tpu.core_type<tc>, window_params = [{transform_indices = @transform_0, window_bounds = array<i64: 1, 8, 32>}, {transform_indices = @transform_1, window_bounds = array<i64: 1, 16, 32>}, {pipeline_mode = #tpu.pipeline_mode<synchronous>, transform_indices = @transform_2, window_bounds = array<i64: 1, 32>}, {pipeline_mode = #tpu.pipeline_mode<synchronous>, transform_indices = @transform_3, window_bounds = array<i64: 1, 32>}, {pipeline_mode = #tpu.pipeline_mode<synchronous>, transform_indices = @transform_4, window_bounds = array<i64: 32, 32>}, {pipeline_mode = #tpu.pipeline_mode<synchronous>, transform_indices = @transform_5, window_bounds = array<i64: 32, 32>}, {pipeline_mode = #tpu.pipeline_mode<synchronous>, transform_indices = @transform_6, window_bounds = array<i64: 32, 32>}, {pipeline_mode = #tpu.pipeline_mode<synchronous>, transform_indices = @transform_7, window_bounds = array<i64: 32, 32>}, {pipeline_mode = #tpu.pipeline_mode<synchronous>, transform_indices = @transform_8, window_bounds = array<i64: 1, 32>}, {pipeline_mode = #tpu.pipeline_mode<synchronous>, transform_indices = @transform_9, window_bounds = array<i64: 1, 32>}, {pipeline_mode = #tpu.pipeline_mode<synchronous>, transform_indices = @transform_10, window_bounds = array<i64: 1, 32>}, {pipeline_mode = #tpu.pipeline_mode<synchronous>, transform_indices = @transform_11, window_bounds = array<i64: 32, 32>}, {pipeline_mode = #tpu.pipeline_mode<synchronous>, transform_indices = @transform_12, window_bounds = array<i64: 32, 32>}, {pipeline_mode = #tpu.pipeline_mode<synchronous>, transform_indices = @transform_13, window_bounds = array<i64: 32, 32>}, {pipeline_mode = #tpu.pipeline_mode<synchronous>, transform_indices = @transform_14, window_bounds = array<i64: 32, 32>}, {pipeline_mode = #tpu.pipeline_mode<synchronous>, transform_indices = @transform_15, window_bounds = array<i64: 1, 32>}, {pipeline_mode = #tpu.pipeline_mode<synchronous>, transform_indices = @transform_16, window_bounds = array<i64: 1, 32>}, {pipeline_mode = #tpu.pipeline_mode<synchronous>, transform_indices = @transform_17, window_bounds = array<i64: 1, 32>}, {pipeline_mode = #tpu.pipeline_mode<synchronous>, transform_indices = @transform_18, window_bounds = array<i64: 32, 128>}, {pipeline_mode = #tpu.pipeline_mode<synchronous>, transform_indices = @transform_19, window_bounds = array<i64: 1, 128>}, {pipeline_mode = #tpu.pipeline_mode<synchronous>, transform_indices = @transform_20, window_bounds = array<i64: 128, 32>}, {pipeline_mode = #tpu.pipeline_mode<synchronous>, transform_indices = @transform_21, window_bounds = array<i64: 1, 32>}, {transform_indices = @transform_22, window_bounds = array<i64: 1, 8, 32>}]} {
    %c0 = arith.constant 0 : index
    %c0_0 = arith.constant 0 : index
    %c0_1 = arith.constant 0 : index
    %0 = vector.load %arg1[%c0, %c0_0, %c0_1] : memref<1x8x32xf32, #tpu.memory_space<vmem>>, vector<1x8x32xf32>
    %1 = vector.shape_cast %0 : vector<1x8x32xf32> to vector<8x32xf32>
    %c0_2 = arith.constant 0 : index
    %c0_3 = arith.constant 0 : index
    %c0_4 = arith.constant 0 : index
    %2 = vector.load %arg2[%c0_2, %c0_3, %c0_4] : memref<1x16x32xf32, #tpu.memory_space<vmem>>, vector<1x16x32xf32>
    %3 = vector.shape_cast %2 : vector<1x16x32xf32> to vector<16x32xf32>
    %c0_5 = arith.constant 0 : index
    %c0_6 = arith.constant 0 : index
    %4 = vector.load %arg3[%c0_5, %c0_6] : memref<1x32xf32, #tpu.memory_space<vmem>>, vector<1x32xf32>
    %c0_7 = arith.constant 0 : index
    %c0_8 = arith.constant 0 : index
    %5 = vector.load %arg4[%c0_7, %c0_8] : memref<1x32xf32, #tpu.memory_space<vmem>>, vector<1x32xf32>
    %cst = arith.constant dense<0.000000e+00> : vector<8xf32>
    %6 = vector.multi_reduction <add>, %1, %cst [1] : vector<8x32xf32> to vector<8xf32>
    %7 = vector.shape_cast %6 : vector<8xf32> to vector<8x1xf32>
    %cst_9 = arith.constant 3.200000e+01 : f32
    %8 = vector.broadcast %cst_9 : f32 to vector<8x1xf32>
    %9 = arith.divf %7, %8 : vector<8x1xf32>
    %10 = vector.broadcast %9 : vector<8x1xf32> to vector<8x32xf32>
    %11 = arith.subf %1, %10 : vector<8x32xf32>
    %12 = arith.mulf %11, %11 : vector<8x32xf32>
    %cst_10 = arith.constant dense<0.000000e+00> : vector<8xf32>
    %13 = vector.multi_reduction <add>, %12, %cst_10 [1] : vector<8x32xf32> to vector<8xf32>
    %14 = vector.shape_cast %13 : vector<8xf32> to vector<8x1xf32>
    %cst_11 = arith.constant 3.200000e+01 : f32
    %15 = vector.broadcast %cst_11 : f32 to vector<8x1xf32>
    %16 = arith.divf %14, %15 : vector<8x1xf32>
    %cst_12 = arith.constant 9.99999974E-6 : f32
    %17 = vector.broadcast %cst_12 : f32 to vector<8x1xf32>
    %18 = arith.addf %16, %17 : vector<8x1xf32>
    %19 = math.rsqrt %18 : vector<8x1xf32>
    %20 = vector.broadcast %19 : vector<8x1xf32> to vector<8x32xf32>
    %21 = arith.mulf %11, %20 : vector<8x32xf32>
    %22 = vector.broadcast %4 : vector<1x32xf32> to vector<8x32xf32>
    %23 = arith.mulf %21, %22 : vector<8x32xf32>
    %24 = vector.broadcast %5 : vector<1x32xf32> to vector<8x32xf32>
    %25 = arith.addf %23, %24 : vector<8x32xf32>
    %c0_13 = arith.constant 0 : index
    %c0_14 = arith.constant 0 : index
    %26 = vector.load %arg5[%c0_13, %c0_14] : memref<32x32xf32, #tpu.memory_space<vmem>>, vector<32x32xf32>
    %c0_15 = arith.constant 0 : index
    %c0_16 = arith.constant 0 : index
    %27 = vector.load %arg6[%c0_15, %c0_16] : memref<32x32xf32, #tpu.memory_space<vmem>>, vector<32x32xf32>
    %c0_17 = arith.constant 0 : index
    %c0_18 = arith.constant 0 : index
    %28 = vector.load %arg7[%c0_17, %c0_18] : memref<32x32xf32, #tpu.memory_space<vmem>>, vector<32x32xf32>
    %c0_19 = arith.constant 0 : index
    %c0_20 = arith.constant 0 : index
    %29 = vector.load %arg8[%c0_19, %c0_20] : memref<32x32xf32, #tpu.memory_space<vmem>>, vector<32x32xf32>
    %c0_21 = arith.constant 0 : index
    %c0_22 = arith.constant 0 : index
    %30 = vector.load %arg9[%c0_21, %c0_22] : memref<1x32xf32, #tpu.memory_space<vmem>>, vector<1x32xf32>
    %cst_23 = arith.constant dense<0.000000e+00> : vector<8x32xf32>
    %31 = tpu.matmul %25, %26, %cst_23 {dimension_numbers = #tpu.dot_dimension_numbers<[1], [0], [0], [1], [0, 0, 1, 1], [], []>} : vector<8x32xf32>, vector<32x32xf32>, vector<8x32xf32> -> vector<8x32xf32>
    %cst_24 = arith.constant 5.000000e-01 : f32
    %32 = vector.broadcast %cst_24 : f32 to vector<8x32xf32>
    %33 = arith.mulf %31, %32 : vector<8x32xf32>
    %cst_25 = arith.constant dense<0.000000e+00> : vector<8x32xf32>
    %34 = tpu.matmul %25, %27, %cst_25 {dimension_numbers = #tpu.dot_dimension_numbers<[1], [0], [0], [1], [0, 0, 1, 1], [], []>} : vector<8x32xf32>, vector<32x32xf32>, vector<8x32xf32> -> vector<8x32xf32>
    %cst_26 = arith.constant dense<0.000000e+00> : vector<8x32xf32>
    %35 = tpu.matmul %25, %28, %cst_26 {dimension_numbers = #tpu.dot_dimension_numbers<[1], [0], [0], [1], [0, 0, 1, 1], [], []>} : vector<8x32xf32>, vector<32x32xf32>, vector<8x32xf32> -> vector<8x32xf32>
    %36 = vector.shape_cast %33 : vector<8x32xf32> to vector<8x8x4xf32>
    %37 = vector.shape_cast %34 : vector<8x32xf32> to vector<8x8x4xf32>
    %38 = vector.shape_cast %35 : vector<8x32xf32> to vector<8x8x4xf32>
    "tpu.trace_start"() <{level = 10 : i32, message = "nhd,mhd->hnm"}> : () -> ()
    %cst_27 = arith.constant dense<0.000000e+00> : vector<8x8x8xf32>
    %39 = tpu.matmul %36, %37, %cst_27 {dimension_numbers = #tpu.dot_dimension_numbers<[2], [2], [0], [0], [0, 1, 0, 0, 1, 0], [1], [1]>} : vector<8x8x4xf32>, vector<8x8x4xf32>, vector<8x8x8xf32> -> vector<8x8x8xf32>
    "tpu.trace_stop"() : () -> ()
    %cst_28 = arith.constant dense<0xFF800000> : vector<8x8xf32>
    %40 = vector.multi_reduction <maximumf>, %39, %cst_28 [2] : vector<8x8x8xf32> to vector<8x8xf32>
    %41 = vector.shape_cast %40 : vector<8x8xf32> to vector<8x8x1xf32>
    %42 = vector.broadcast %41 : vector<8x8x1xf32> to vector<8x8x8xf32>
    %43 = arith.subf %39, %42 : vector<8x8x8xf32>
    %44 = math.exp %43 : vector<8x8x8xf32>
    %cst_29 = arith.constant dense<0.000000e+00> : vector<8x8xf32>
    %45 = vector.multi_reduction <add>, %44, %cst_29 [2] : vector<8x8x8xf32> to vector<8x8xf32>
    %46 = vector.shape_cast %45 : vector<8x8xf32> to vector<8x8x1xf32>
    %47 = tpu.reciprocal %46 {approx = true} : vector<8x8x1xf32> -> vector<8x8x1xf32>
    %48 = vector.broadcast %47 : vector<8x8x1xf32> to vector<8x8x8xf32>
    %49 = arith.mulf %44, %48 : vector<8x8x8xf32>
    "tpu.trace_start"() <{level = 10 : i32, message = "hnm,mhd->nhd"}> : () -> ()
    %cst_30 = arith.constant dense<0.000000e+00> : vector<8x4x8xf32>
    %50 = tpu.matmul %38, %49, %cst_30 {dimension_numbers = #tpu.dot_dimension_numbers<[0], [2], [2], [1], [0, 1, 0, 2, 1, 1], [1], [0]>} : vector<8x8x4xf32>, vector<8x8x8xf32>, vector<8x4x8xf32> -> vector<8x4x8xf32>
    %51 = tpu.transpose %50, [2, 0, 1] : vector<8x4x8xf32> -> vector<8x8x4xf32>
    "tpu.trace_stop"() : () -> ()
    %52 = vector.shape_cast %51 : vector<8x8x4xf32> to vector<8x32xf32>
    %cst_31 = arith.constant dense<0.000000e+00> : vector<8x32xf32>
    %53 = tpu.matmul %52, %29, %cst_31 {dimension_numbers = #tpu.dot_dimension_numbers<[1], [0], [0], [1], [0, 0, 1, 1], [], []>} : vector<8x32xf32>, vector<32x32xf32>, vector<8x32xf32> -> vector<8x32xf32>
    %54 = vector.broadcast %30 : vector<1x32xf32> to vector<8x32xf32>
    %55 = arith.addf %53, %54 : vector<8x32xf32>
    %56 = arith.addf %1, %55 : vector<8x32xf32>
    %c0_32 = arith.constant 0 : index
    %c0_33 = arith.constant 0 : index
    %57 = vector.load %arg10[%c0_32, %c0_33] : memref<1x32xf32, #tpu.memory_space<vmem>>, vector<1x32xf32>
    %c0_34 = arith.constant 0 : index
    %c0_35 = arith.constant 0 : index
    %58 = vector.load %arg11[%c0_34, %c0_35] : memref<1x32xf32, #tpu.memory_space<vmem>>, vector<1x32xf32>
    %cst_36 = arith.constant dense<0.000000e+00> : vector<8xf32>
    %59 = vector.multi_reduction <add>, %56, %cst_36 [1] : vector<8x32xf32> to vector<8xf32>
    %60 = vector.shape_cast %59 : vector<8xf32> to vector<8x1xf32>
    %cst_37 = arith.constant 3.200000e+01 : f32
    %61 = vector.broadcast %cst_37 : f32 to vector<8x1xf32>
    %62 = arith.divf %60, %61 : vector<8x1xf32>
    %63 = vector.broadcast %62 : vector<8x1xf32> to vector<8x32xf32>
    %64 = arith.subf %56, %63 : vector<8x32xf32>
    %65 = arith.mulf %64, %64 : vector<8x32xf32>
    %cst_38 = arith.constant dense<0.000000e+00> : vector<8xf32>
    %66 = vector.multi_reduction <add>, %65, %cst_38 [1] : vector<8x32xf32> to vector<8xf32>
    %67 = vector.shape_cast %66 : vector<8xf32> to vector<8x1xf32>
    %cst_39 = arith.constant 3.200000e+01 : f32
    %68 = vector.broadcast %cst_39 : f32 to vector<8x1xf32>
    %69 = arith.divf %67, %68 : vector<8x1xf32>
    %cst_40 = arith.constant 9.99999974E-6 : f32
    %70 = vector.broadcast %cst_40 : f32 to vector<8x1xf32>
    %71 = arith.addf %69, %70 : vector<8x1xf32>
    %72 = math.rsqrt %71 : vector<8x1xf32>
    %73 = vector.broadcast %72 : vector<8x1xf32> to vector<8x32xf32>
    %74 = arith.mulf %64, %73 : vector<8x32xf32>
    %75 = vector.broadcast %57 : vector<1x32xf32> to vector<8x32xf32>
    %76 = arith.mulf %74, %75 : vector<8x32xf32>
    %77 = vector.broadcast %58 : vector<1x32xf32> to vector<8x32xf32>
    %78 = arith.addf %76, %77 : vector<8x32xf32>
    %c0_41 = arith.constant 0 : index
    %c0_42 = arith.constant 0 : index
    %79 = vector.load %arg12[%c0_41, %c0_42] : memref<32x32xf32, #tpu.memory_space<vmem>>, vector<32x32xf32>
    %c0_43 = arith.constant 0 : index
    %c0_44 = arith.constant 0 : index
    %80 = vector.load %arg13[%c0_43, %c0_44] : memref<32x32xf32, #tpu.memory_space<vmem>>, vector<32x32xf32>
    %c0_45 = arith.constant 0 : index
    %c0_46 = arith.constant 0 : index
    %81 = vector.load %arg14[%c0_45, %c0_46] : memref<32x32xf32, #tpu.memory_space<vmem>>, vector<32x32xf32>
    %c0_47 = arith.constant 0 : index
    %c0_48 = arith.constant 0 : index
    %82 = vector.load %arg15[%c0_47, %c0_48] : memref<32x32xf32, #tpu.memory_space<vmem>>, vector<32x32xf32>
    %c0_49 = arith.constant 0 : index
    %c0_50 = arith.constant 0 : index
    %83 = vector.load %arg16[%c0_49, %c0_50] : memref<1x32xf32, #tpu.memory_space<vmem>>, vector<1x32xf32>
    %cst_51 = arith.constant dense<0.000000e+00> : vector<8x32xf32>
    %84 = tpu.matmul %78, %79, %cst_51 {dimension_numbers = #tpu.dot_dimension_numbers<[1], [0], [0], [1], [0, 0, 1, 1], [], []>} : vector<8x32xf32>, vector<32x32xf32>, vector<8x32xf32> -> vector<8x32xf32>
    %cst_52 = arith.constant 5.000000e-01 : f32
    %85 = vector.broadcast %cst_52 : f32 to vector<8x32xf32>
    %86 = arith.mulf %84, %85 : vector<8x32xf32>
    %cst_53 = arith.constant dense<0.000000e+00> : vector<16x32xf32>
    %87 = tpu.matmul %3, %80, %cst_53 {dimension_numbers = #tpu.dot_dimension_numbers<[1], [0], [0], [1], [0, 0, 1, 1], [], []>} : vector<16x32xf32>, vector<32x32xf32>, vector<16x32xf32> -> vector<16x32xf32>
    %cst_54 = arith.constant dense<0.000000e+00> : vector<16x32xf32>
    %88 = tpu.matmul %3, %81, %cst_54 {dimension_numbers = #tpu.dot_dimension_numbers<[1], [0], [0], [1], [0, 0, 1, 1], [], []>} : vector<16x32xf32>, vector<32x32xf32>, vector<16x32xf32> -> vector<16x32xf32>
    %89 = vector.shape_cast %86 : vector<8x32xf32> to vector<8x8x4xf32>
    %90 = vector.shape_cast %87 : vector<16x32xf32> to vector<16x8x4xf32>
    %91 = vector.shape_cast %88 : vector<16x32xf32> to vector<16x8x4xf32>
    "tpu.trace_start"() <{level = 10 : i32, message = "nhd,mhd->hnm"}> : () -> ()
    %cst_55 = arith.constant dense<0.000000e+00> : vector<8x8x16xf32>
    %92 = tpu.matmul %89, %90, %cst_55 {dimension_numbers = #tpu.dot_dimension_numbers<[2], [2], [0], [0], [0, 1, 0, 0, 1, 0], [1], [1]>} : vector<8x8x4xf32>, vector<16x8x4xf32>, vector<8x8x16xf32> -> vector<8x8x16xf32>
    "tpu.trace_stop"() : () -> ()
    %cst_56 = arith.constant dense<0xFF800000> : vector<8x8xf32>
    %93 = vector.multi_reduction <maximumf>, %92, %cst_56 [2] : vector<8x8x16xf32> to vector<8x8xf32>
    %94 = vector.shape_cast %93 : vector<8x8xf32> to vector<8x8x1xf32>
    %95 = vector.broadcast %94 : vector<8x8x1xf32> to vector<8x8x16xf32>
    %96 = arith.subf %92, %95 : vector<8x8x16xf32>
    %97 = math.exp %96 : vector<8x8x16xf32>
    %cst_57 = arith.constant dense<0.000000e+00> : vector<8x8xf32>
    %98 = vector.multi_reduction <add>, %97, %cst_57 [2] : vector<8x8x16xf32> to vector<8x8xf32>
    %99 = vector.shape_cast %98 : vector<8x8xf32> to vector<8x8x1xf32>
    %100 = tpu.reciprocal %99 {approx = true} : vector<8x8x1xf32> -> vector<8x8x1xf32>
    %101 = vector.broadcast %100 : vector<8x8x1xf32> to vector<8x8x16xf32>
    %102 = arith.mulf %97, %101 : vector<8x8x16xf32>
    "tpu.trace_start"() <{level = 10 : i32, message = "hnm,mhd->nhd"}> : () -> ()
    %cst_58 = arith.constant dense<0.000000e+00> : vector<8x4x8xf32>
    %103 = tpu.matmul %91, %102, %cst_58 {dimension_numbers = #tpu.dot_dimension_numbers<[0], [2], [2], [1], [0, 1, 0, 2, 1, 1], [1], [0]>} : vector<16x8x4xf32>, vector<8x8x16xf32>, vector<8x4x8xf32> -> vector<8x4x8xf32>
    %104 = tpu.transpose %103, [2, 0, 1] : vector<8x4x8xf32> -> vector<8x8x4xf32>
    "tpu.trace_stop"() : () -> ()
    %105 = vector.shape_cast %104 : vector<8x8x4xf32> to vector<8x32xf32>
    %cst_59 = arith.constant dense<0.000000e+00> : vector<8x32xf32>
    %106 = tpu.matmul %105, %82, %cst_59 {dimension_numbers = #tpu.dot_dimension_numbers<[1], [0], [0], [1], [0, 0, 1, 1], [], []>} : vector<8x32xf32>, vector<32x32xf32>, vector<8x32xf32> -> vector<8x32xf32>
    %107 = vector.broadcast %83 : vector<1x32xf32> to vector<8x32xf32>
    %108 = arith.addf %106, %107 : vector<8x32xf32>
    %109 = arith.addf %56, %108 : vector<8x32xf32>
    %c0_60 = arith.constant 0 : index
    %c0_61 = arith.constant 0 : index
    %110 = vector.load %arg17[%c0_60, %c0_61] : memref<1x32xf32, #tpu.memory_space<vmem>>, vector<1x32xf32>
    %c0_62 = arith.constant 0 : index
    %c0_63 = arith.constant 0 : index
    %111 = vector.load %arg18[%c0_62, %c0_63] : memref<1x32xf32, #tpu.memory_space<vmem>>, vector<1x32xf32>
    %cst_64 = arith.constant dense<0.000000e+00> : vector<8xf32>
    %112 = vector.multi_reduction <add>, %109, %cst_64 [1] : vector<8x32xf32> to vector<8xf32>
    %113 = vector.shape_cast %112 : vector<8xf32> to vector<8x1xf32>
    %cst_65 = arith.constant 3.200000e+01 : f32
    %114 = vector.broadcast %cst_65 : f32 to vector<8x1xf32>
    %115 = arith.divf %113, %114 : vector<8x1xf32>
    %116 = vector.broadcast %115 : vector<8x1xf32> to vector<8x32xf32>
    %117 = arith.subf %109, %116 : vector<8x32xf32>
    %118 = arith.mulf %117, %117 : vector<8x32xf32>
    %cst_66 = arith.constant dense<0.000000e+00> : vector<8xf32>
    %119 = vector.multi_reduction <add>, %118, %cst_66 [1] : vector<8x32xf32> to vector<8xf32>
    %120 = vector.shape_cast %119 : vector<8xf32> to vector<8x1xf32>
    %cst_67 = arith.constant 3.200000e+01 : f32
    %121 = vector.broadcast %cst_67 : f32 to vector<8x1xf32>
    %122 = arith.divf %120, %121 : vector<8x1xf32>
    %cst_68 = arith.constant 9.99999974E-6 : f32
    %123 = vector.broadcast %cst_68 : f32 to vector<8x1xf32>
    %124 = arith.addf %122, %123 : vector<8x1xf32>
    %125 = math.rsqrt %124 : vector<8x1xf32>
    %126 = vector.broadcast %125 : vector<8x1xf32> to vector<8x32xf32>
    %127 = arith.mulf %117, %126 : vector<8x32xf32>
    %128 = vector.broadcast %110 : vector<1x32xf32> to vector<8x32xf32>
    %129 = arith.mulf %127, %128 : vector<8x32xf32>
    %130 = vector.broadcast %111 : vector<1x32xf32> to vector<8x32xf32>
    %131 = arith.addf %129, %130 : vector<8x32xf32>
    %c0_69 = arith.constant 0 : index
    %c0_70 = arith.constant 0 : index
    %132 = vector.load %arg19[%c0_69, %c0_70] : memref<32x128xf32, #tpu.memory_space<vmem>>, vector<32x128xf32>
    %cst_71 = arith.constant dense<0.000000e+00> : vector<8x128xf32>
    %133 = tpu.matmul %131, %132, %cst_71 {dimension_numbers = #tpu.dot_dimension_numbers<[1], [0], [0], [1], [0, 0, 1, 1], [], []>} : vector<8x32xf32>, vector<32x128xf32>, vector<8x128xf32> -> vector<8x128xf32>
    %c0_72 = arith.constant 0 : index
    %c0_73 = arith.constant 0 : index
    %134 = vector.load %arg20[%c0_72, %c0_73] : memref<1x128xf32, #tpu.memory_space<vmem>>, vector<1x128xf32>
    %135 = vector.broadcast %134 : vector<1x128xf32> to vector<8x128xf32>
    %136 = arith.addf %133, %135 : vector<8x128xf32>
    %cst_74 = arith.constant 5.000000e-01 : f32
    %137 = vector.broadcast %cst_74 : f32 to vector<8x128xf32>
    %138 = arith.mulf %137, %136 : vector<8x128xf32>
    %cst_75 = arith.constant 0.707106769 : f32
    %139 = vector.broadcast %cst_75 : f32 to vector<8x128xf32>
    %140 = arith.mulf %136, %139 : vector<8x128xf32>
    %141 = math.absf %140 : vector<8x128xf32>
    %cst_76 = arith.constant 0.327591091 : f32
    %142 = vector.broadcast %cst_76 : f32 to vector<8x128xf32>
    %143 = arith.mulf %142, %141 : vector<8x128xf32>
    %cst_77 = arith.constant 1.000000e+00 : f32
    %144 = vector.broadcast %cst_77 : f32 to vector<8x128xf32>
    %145 = arith.addf %144, %143 : vector<8x128xf32>
    %cst_78 = arith.constant 1.000000e+00 : f32
    %146 = vector.broadcast %cst_78 : f32 to vector<8x128xf32>
    %147 = arith.divf %146, %145 : vector<8x128xf32>
    %cst_79 = arith.constant 1.06140542 : f32
    %148 = vector.broadcast %cst_79 : f32 to vector<8x128xf32>
    %149 = arith.mulf %147, %148 : vector<8x128xf32>
    %cst_80 = arith.constant -1.45315206 : f32
    %150 = vector.broadcast %cst_80 : f32 to vector<8x128xf32>
    %151 = arith.addf %150, %149 : vector<8x128xf32>
    %152 = arith.mulf %147, %151 : vector<8x128xf32>
    %cst_81 = arith.constant 1.42141378 : f32
    %153 = vector.broadcast %cst_81 : f32 to vector<8x128xf32>
    %154 = arith.addf %153, %152 : vector<8x128xf32>
    %155 = arith.mulf %147, %154 : vector<8x128xf32>
    %cst_82 = arith.constant -0.284496725 : f32
    %156 = vector.broadcast %cst_82 : f32 to vector<8x128xf32>
    %157 = arith.addf %156, %155 : vector<8x128xf32>
    %158 = arith.mulf %147, %157 : vector<8x128xf32>
    %cst_83 = arith.constant 0.254829586 : f32
    %159 = vector.broadcast %cst_83 : f32 to vector<8x128xf32>
    %160 = arith.addf %159, %158 : vector<8x128xf32>
    %161 = arith.mulf %147, %160 : vector<8x128xf32>
    %cst_84 = arith.constant 0.000000e+00 : f32
    %162 = vector.broadcast %cst_84 : f32 to vector<8x128xf32>
    %163 = arith.subf %162, %141 : vector<8x128xf32>
    %164 = arith.mulf %163, %141 : vector<8x128xf32>
    %165 = math.exp %164 : vector<8x128xf32>
    %166 = arith.mulf %161, %165 : vector<8x128xf32>
    %cst_85 = arith.constant 1.000000e+00 : f32
    %167 = vector.broadcast %cst_85 : f32 to vector<8x128xf32>
    %168 = arith.subf %167, %166 : vector<8x128xf32>
    %cst_86 = arith.constant 0.000000e+00 : f32
    %169 = vector.broadcast %cst_86 : f32 to vector<8x128xf32>
    %170 = arith.cmpf olt, %140, %169 : vector<8x128xf32>
    %cst_87 = arith.constant 0.000000e+00 : f32
    %171 = vector.broadcast %cst_87 : f32 to vector<8x128xf32>
    %172 = arith.subf %171, %168 : vector<8x128xf32>
    %173 = arith.select %170, %172, %168 : vector<8x128xi1>, vector<8x128xf32>
    %cst_88 = arith.constant 1.000000e+00 : f32
    %174 = vector.broadcast %cst_88 : f32 to vector<8x128xf32>
    %175 = arith.addf %174, %173 : vector<8x128xf32>
    %176 = arith.mulf %138, %175 : vector<8x128xf32>
    %c0_89 = arith.constant 0 : index
    %c0_90 = arith.constant 0 : index
    %177 = vector.load %arg21[%c0_89, %c0_90] : memref<128x32xf32, #tpu.memory_space<vmem>>, vector<128x32xf32>
    %cst_91 = arith.constant dense<0.000000e+00> : vector<8x32xf32>
    %178 = tpu.matmul %176, %177, %cst_91 {dimension_numbers = #tpu.dot_dimension_numbers<[1], [0], [0], [1], [0, 0, 1, 1], [], []>} : vector<8x128xf32>, vector<128x32xf32>, vector<8x32xf32> -> vector<8x32xf32>
    %c0_92 = arith.constant 0 : index
    %c0_93 = arith.constant 0 : index
    %179 = vector.load %arg22[%c0_92, %c0_93] : memref<1x32xf32, #tpu.memory_space<vmem>>, vector<1x32xf32>
    %180 = vector.broadcast %179 : vector<1x32xf32> to vector<8x32xf32>
    %181 = arith.addf %178, %180 : vector<8x32xf32>
    %182 = arith.addf %109, %181 : vector<8x32xf32>
    %c0_94 = arith.constant 0 : index
    %c0_95 = arith.constant 0 : index
    %c0_96 = arith.constant 0 : index
    %183 = vector.load %arg23[%c0_94, %c0_95, %c0_96] : memref<1x8x32xf32, #tpu.memory_space<vmem>>, vector<1x8x32xf32>
    %184 = vector.shape_cast %183 : vector<1x8x32xf32> to vector<8x32xf32>
    %185 = vector.shape_cast %182 : vector<8x32xf32> to vector<1x8x32xf32>
    tpu.vector_store %arg23[%c0_94, %c0_95, %c0_96], %185 {strides = array<i32>} : memref<1x8x32xf32, #tpu.memory_space<vmem>>, vector<1x8x32xf32>,
    return
  }
  func.func @transform_0(%arg0: i32) -> (i32, i32, i32) {
    %c0_i32 = arith.constant 0 : i32
    %c0_i32_0 = arith.constant 0 : i32
    %c0_i32_1 = arith.constant 0 : i32
    return %arg0, %c0_i32, %c0_i32_0 : i32, i32, i32
  }
  func.func @transform_1(%arg0: i32) -> (i32, i32, i32) {
    %c0_i32 = arith.constant 0 : i32
    %c0_i32_0 = arith.constant 0 : i32
    %c0_i32_1 = arith.constant 0 : i32
    return %arg0, %c0_i32, %c0_i32_0 : i32, i32, i32
  }
  func.func @transform_2(%arg0: i32) -> (i32, i32) {
    %c0_i32 = arith.constant 0 : i32
    %c0_i32_0 = arith.constant 0 : i32
    %c0_i32_1 = arith.constant 0 : i32
    return %c0_i32, %c0_i32_0 : i32, i32
  }
  func.func @transform_3(%arg0: i32) -> (i32, i32) {
    %c0_i32 = arith.constant 0 : i32
    %c0_i32_0 = arith.constant 0 : i32
    %c0_i32_1 = arith.constant 0 : i32
    return %c0_i32, %c0_i32_0 : i32, i32
  }
  func.func @transform_4(%arg0: i32) -> (i32, i32) {
    %c0_i32 = arith.constant 0 : i32
    %c0_i32_0 = arith.constant 0 : i32
    %c0_i32_1 = arith.constant 0 : i32
    return %c0_i32, %c0_i32_0 : i32, i32
  }
  func.func @transform_5(%arg0: i32) -> (i32, i32) {
    %c0_i32 = arith.constant 0 : i32
    %c0_i32_0 = arith.constant 0 : i32
    %c0_i32_1 = arith.constant 0 : i32
    return %c0_i32, %c0_i32_0 : i32, i32
  }
  func.func @transform_6(%arg0: i32) -> (i32, i32) {
    %c0_i32 = arith.constant 0 : i32
    %c0_i32_0 = arith.constant 0 : i32
    %c0_i32_1 = arith.constant 0 : i32
    return %c0_i32, %c0_i32_0 : i32, i32
  }
  func.func @transform_7(%arg0: i32) -> (i32, i32) {
    %c0_i32 = arith.constant 0 : i32
    %c0_i32_0 = arith.constant 0 : i32
    %c0_i32_1 = arith.constant 0 : i32
    return %c0_i32, %c0_i32_0 : i32, i32
  }
  func.func @transform_8(%arg0: i32) -> (i32, i32) {
    %c0_i32 = arith.constant 0 : i32
    %c0_i32_0 = arith.constant 0 : i32
    %c0_i32_1 = arith.constant 0 : i32
    return %c0_i32, %c0_i32_0 : i32, i32
  }
  func.func @transform_9(%arg0: i32) -> (i32, i32) {
    %c0_i32 = arith.constant 0 : i32
    %c0_i32_0 = arith.constant 0 : i32
    %c0_i32_1 = arith.constant 0 : i32
    return %c0_i32, %c0_i32_0 : i32, i32
  }
  func.func @transform_10(%arg0: i32) -> (i32, i32) {
    %c0_i32 = arith.constant 0 : i32
    %c0_i32_0 = arith.constant 0 : i32
    %c0_i32_1 = arith.constant 0 : i32
    return %c0_i32, %c0_i32_0 : i32, i32
  }
  func.func @transform_11(%arg0: i32) -> (i32, i32) {
    %c0_i32 = arith.constant 0 : i32
    %c0_i32_0 = arith.constant 0 : i32
    %c0_i32_1 = arith.constant 0 : i32
    return %c0_i32, %c0_i32_0 : i32, i32
  }
  func.func @transform_12(%arg0: i32) -> (i32, i32) {
    %c0_i32 = arith.constant 0 : i32
    %c0_i32_0 = arith.constant 0 : i32
    %c0_i32_1 = arith.constant 0 : i32
    return %c0_i32, %c0_i32_0 : i32, i32
  }
  func.func @transform_13(%arg0: i32) -> (i32, i32) {
    %c0_i32 = arith.constant 0 : i32
    %c0_i32_0 = arith.constant 0 : i32
    %c0_i32_1 = arith.constant 0 : i32
    return %c0_i32, %c0_i32_0 : i32, i32
  }
  func.func @transform_14(%arg0: i32) -> (i32, i32) {
    %c0_i32 = arith.constant 0 : i32
    %c0_i32_0 = arith.constant 0 : i32
    %c0_i32_1 = arith.constant 0 : i32
    return %c0_i32, %c0_i32_0 : i32, i32
  }
  func.func @transform_15(%arg0: i32) -> (i32, i32) {
    %c0_i32 = arith.constant 0 : i32
    %c0_i32_0 = arith.constant 0 : i32
    %c0_i32_1 = arith.constant 0 : i32
    return %c0_i32, %c0_i32_0 : i32, i32
  }
  func.func @transform_16(%arg0: i32) -> (i32, i32) {
    %c0_i32 = arith.constant 0 : i32
    %c0_i32_0 = arith.constant 0 : i32
    %c0_i32_1 = arith.constant 0 : i32
    return %c0_i32, %c0_i32_0 : i32, i32
  }
  func.func @transform_17(%arg0: i32) -> (i32, i32) {
    %c0_i32 = arith.constant 0 : i32
    %c0_i32_0 = arith.constant 0 : i32
    %c0_i32_1 = arith.constant 0 : i32
    return %c0_i32, %c0_i32_0 : i32, i32
  }
  func.func @transform_18(%arg0: i32) -> (i32, i32) {
    %c0_i32 = arith.constant 0 : i32
    %c0_i32_0 = arith.constant 0 : i32
    %c0_i32_1 = arith.constant 0 : i32
    return %c0_i32, %c0_i32_0 : i32, i32
  }
  func.func @transform_19(%arg0: i32) -> (i32, i32) {
    %c0_i32 = arith.constant 0 : i32
    %c0_i32_0 = arith.constant 0 : i32
    %c0_i32_1 = arith.constant 0 : i32
    return %c0_i32, %c0_i32_0 : i32, i32
  }
  func.func @transform_20(%arg0: i32) -> (i32, i32) {
    %c0_i32 = arith.constant 0 : i32
    %c0_i32_0 = arith.constant 0 : i32
    %c0_i32_1 = arith.constant 0 : i32
    return %c0_i32, %c0_i32_0 : i32, i32
  }
  func.func @transform_21(%arg0: i32) -> (i32, i32) {
    %c0_i32 = arith.constant 0 : i32
    %c0_i32_0 = arith.constant 0 : i32
    %c0_i32_1 = arith.constant 0 : i32
    return %c0_i32, %c0_i32_0 : i32, i32
  }
  func.func @transform_22(%arg0: i32) -> (i32, i32, i32) {
    %c0_i32 = arith.constant 0 : i32
    %c0_i32_0 = arith.constant 0 : i32
    %c0_i32_1 = arith.constant 0 : i32
    return %arg0, %c0_i32, %c0_i32_0 : i32, i32, i32
  }
}

</mosaic_0001>

<llo_original>
// kernel: _lambda_.1
$region0: #{_lambda_.1}
  #allocation0 [shape = 'u32[]', space=smem, size = 0x4, offset = 0x4, fixed_abs, tag = 'smem constant byte address 0x4 - core index']
  #allocation1 [shape = 'u32[144,128]{1,0:T(1,128)}', space=vmem, size = 0x12000, scoped, tag = 'internal scratch']
  %s0 = inlined_call_operand.hbm [shape: f32[2,8,32], index: 0, kind: input, shape index: {}]
  %s1 = inlined_call_operand.vmem [shape: f32[2,16,32], index: 1, kind: input, shape index: {}]
  %s2 = inlined_call_operand.vmem [shape: f32[1,32], index: 2, kind: input, shape index: {}]
  %s3 = inlined_call_operand.hbm [shape: f32[1,32], index: 3, kind: input, shape index: {}]
  %s4 = inlined_call_operand.vmem [shape: f32[32,32], index: 4, kind: input, shape index: {}]
  %s5 = inlined_call_operand.vmem [shape: f32[32,32], index: 5, kind: input, shape index: {}]
  %s6 = inlined_call_operand.vmem [shape: f32[32,32], index: 6, kind: input, shape index: {}]
  %s7 = inlined_call_operand.vmem [shape: f32[32,32], index: 7, kind: input, shape index: {}]
  %s8 = inlined_call_operand.vmem [shape: f32[1,32], index: 8, kind: input, shape index: {}]
  %s9 = inlined_call_operand.vmem [shape: f32[1,32], index: 9, kind: input, shape index: {}]
  %s10 = inlined_call_operand.vmem [shape: f32[1,32], index: 10, kind: input, shape index: {}]
  %s11 = inlined_call_operand.vmem [shape: f32[32,32], index: 11, kind: input, shape index: {}]
  %s12 = inlined_call_operand.hbm [shape: f32[32,32], index: 12, kind: input, shape index: {}]
  %s13 = inlined_call_operand.hbm [shape: f32[32,32], index: 13, kind: input, shape index: {}]
  %s14 = inlined_call_operand.hbm [shape: f32[32,32], index: 14, kind: input, shape index: {}]
  %s15 = inlined_call_operand.hbm [shape: f32[1,32], index: 15, kind: input, shape index: {}]
  %s16 = inlined_call_operand.vmem [shape: f32[1,32], index: 16, kind: input, shape index: {}]
  %s17 = inlined_call_operand.vmem [shape: f32[1,32], index: 17, kind: input, shape index: {}]
  %s18 = inlined_call_operand.hbm [shape: f32[32,128], index: 18, kind: input, shape index: {}]
  %s19 = inlined_call_operand.vmem [shape: f32[1,128], index: 19, kind: input, shape index: {}]
  %s20 = inlined_call_operand.vmem [shape: f32[128,32], index: 20, kind: input, shape index: {}]
  %s21 = inlined_call_operand.vmem [shape: f32[1,32], index: 21, kind: input, shape index: {}]
  %s22 = inlined_call_operand.hbm [shape: f32[2,8,32], index: 22, kind: output, shape index: {}]
  %s23 = sld [smem:[#allocation0]]
  $region149: #{_lambda_.1} parent=0
    _
  %s25 = ssub.s32 1, %s23
  %s26 = scalar_select 0, %s25, %s23
  $region1: #{_lambda_.1} parent=0
    #allocation2 [shape = 'u8[8192]{0}', space=vmem, size = 0x2000, scoped, tag = 'input window, operand 0']
    #allocation3 [shape = 's32[2]{0}', space=sflag, size = 0x8, scoped, tag = 'scoped memory for _lambda_.1']
    #allocation4 [shape = 's32[2]{0}', space=sflag, size = 0x8, scoped, tag = 'scoped memory for _lambda_.1']
    #allocation5 [shape = 'u8[512]{0}', space=vmem, size = 0x400, scoped, tag = 'input window, operand 3, single buffered']
    #allocation6 [shape = 's32[1]{0}', space=sflag, size = 0x4, scoped, tag = 'scoped memory for _lambda_.1']
    #allocation7 [shape = 'u8[16384]{0}', space=vmem, size = 0x4000, scoped, tag = 'input window, operand 12, single buffered']
    #allocation8 [shape = 'u8[16384]{0}', space=vmem, size = 0x4000, scoped, tag = 'input window, operand 13, single buffered']
    #allocation9 [shape = 's32[1]{0}', space=sflag, size = 0x4, scoped, tag = 'scoped memory for _lambda_.1']
    #allocation10 [shape = 'u8[16384]{0}', space=vmem, size = 0x4000, scoped, tag = 'input window, operand 14, single buffered']
    #allocation11 [shape = 'u8[512]{0}', space=vmem, size = 0x400, scoped, tag = 'input window, operand 15, single buffered']
    #allocation12 [shape = 's32[1]{0}', space=sflag, size = 0x4, scoped, tag = 'scoped memory for _lambda_.1']
    #allocation13 [shape = 'u8[16384]{0}', space=vmem, size = 0x4000, scoped, tag = 'input window, operand 18, single buffered']
    #allocation14 [shape = 'u8[8192]{0}', space=vmem, size = 0x2000, scoped, tag = 'output window, operand 0']
    %27 = vsyncpa [#allocation3], 0
    %s28 = scalar_lea.sflag [#allocation3], 1
    %29 = vsyncpa %s28, 0
    %30 = vsyncpa [#allocation6], 0
    %31 = vsyncpa [#allocation9], 0
    %32 = vsyncpa [#allocation12], 0
    %33 = vsyncpa [#allocation4], 0
    %s34 = scalar_lea.sflag [#allocation4], 1
    %35 = vsyncpa %s34, 0
    loop: start=0, step=1, limit=4
    $region2: #{_lambda_.1} parent=1 // loop_pre_header
      _
    $region3: #{_lambda_.1} parent=1 // loop_header
      %s37 = sphi 0, %s41
      %p38 = scmp.ge.s32.totalorder %s37, 4
      %s47 = sphi 0, %s49
      %s50 = sphi 0, %s47
      %s51 = sphi 0, %s50
      %s67 = sphi 0, %s51
      %s73 = sphi 0, %s75
      %s76 = sphi 0, %s73
      %s77 = sphi 0, %s76
      %s93 = sphi 0, %s77
      %s97 = sphi 0, %s97
      %s99 = sphi 0, %s97
      %s100 = sphi 0, %s99
      %s114 = sphi 0, %s100
      %s118 = sphi 0, %s118
      %s120 = sphi 0, %s118
      %s121 = sphi 0, %s120
      %s135 = sphi 0, %s121
      %s139 = sphi 0, %s139
      %s141 = sphi 0, %s139
      %s142 = sphi 0, %s141
      %s156 = sphi 0, %s142
      %s160 = sphi 0, %s160
      %s162 = sphi 0, %s160
      %s163 = sphi 0, %s162
      %s177 = sphi 0, %s163
      %s181 = sphi 0, %s181
      %s183 = sphi 0, %s181
      %s184 = sphi 0, %s183
      %s198 = sphi 0, %s184
      %s202 = sphi 0, %s202
      %s204 = sphi 0, %s202
      %s205 = sphi 0, %s204
      %s219 = sphi 0, %s205
      %s223 = sphi 0, %s223
      %s225 = sphi 0, %s223
      %s226 = sphi 0, %s225
      %s240 = sphi 0, %s226
      %s244 = sphi 0, %s244
      %s246 = sphi 0, %s244
      %s247 = sphi 0, %s246
      %s261 = sphi 0, %s247
      %s265 = sphi 0, %s265
      %s267 = sphi 0, %s265
      %s268 = sphi 0, %s267
      %s282 = sphi 0, %s268
      %s286 = sphi 0, %s286
      %s288 = sphi 0, %s286
      %s289 = sphi 0, %s288
      %s303 = sphi 0, %s289
      %s307 = sphi 0, %s307
      %s309 = sphi 0, %s307
      %s310 = sphi 0, %s309
      %s324 = sphi 0, %s310
      %s328 = sphi 0, %s328
      %s330 = sphi 0, %s328
      %s331 = sphi 0, %s330
      %s345 = sphi 0, %s331
      %s349 = sphi 0, %s349
      %s351 = sphi 0, %s349
      %s352 = sphi 0, %s351
      %s366 = sphi 0, %s352
      %s370 = sphi 0, %s370
      %s372 = sphi 0, %s370
      %s373 = sphi 0, %s372
      %s387 = sphi 0, %s373
      %s391 = sphi 0, %s391
      %s393 = sphi 0, %s391
      %s394 = sphi 0, %s393
      %s408 = sphi 0, %s394
      %s412 = sphi 0, %s412
      %s414 = sphi 0, %s412
      %s415 = sphi 0, %s414
      %s429 = sphi 0, %s415
      %s433 = sphi 0, %s433
      %s435 = sphi 0, %s433
      %s436 = sphi 0, %s435
      %s450 = sphi 0, %s436
      %s454 = sphi 0, %s454
      %s456 = sphi 0, %s454
      %s457 = sphi 0, %s456
      %s471 = sphi 0, %s457
      %s475 = sphi 0, %s475
      %s477 = sphi 0, %s475
      %s478 = sphi 0, %s477
      %s492 = sphi 0, %s478
      %s496 = sphi 0, %s496
      %s498 = sphi 0, %s496
      %s499 = sphi 0, %s498
      %s513 = sphi 0, %s499
      %s519 = sphi 0, %s521
      %s522 = sphi 0, %s519
      %s523 = sphi 0, %s522
      %s539 = sphi 0, %s523
    $region4: #{_lambda_.1} parent=1 // loop_header_branch
      %40 = sbr.rel (%p38) target = $region8
    $region5: #{_lambda_.1} parent=1 // loop_body
      %s42 = ssub.s32 %s37, 1
      %s43 = ssub.s32 %s37, 2
      %s44 = sadd.s32 %s37, 1
      %s45 = ssub.s32 %s37, %s44
      %p46 = scmp.eq.s32.totalorder %s45, 0
      %s48 = sadd.s32 %s47, 1
      %s49 = scalar_select %p46, %s47, %s48
      %p52 = pneg %p46
      %p53 = scmp.eq.s32.totalorder %s37, 1
      %p54 = por %p52, %p53
      %p55 = scmp.ne.s32.totalorder %s47, %s50
      %p56 = scmp.eq.s32.totalorder %s37, 0
      %p57 = por %p55, %p56
      %p58 = scmp.ne.s32.totalorder %s47, %s50
      %p59 = scmp.eq.s32.totalorder %s42, 1
      %p60 = por %p58, %p59
      %p61 = scmp.ne.s32.totalorder %s50, %s51
      %p62 = scmp.eq.s32.totalorder %s42, 0
      %p63 = por %p61, %p62
      %p64 = scmp.ne.s32.totalorder %s50, %s51
      %p65 = scmp.eq.s32.totalorder %s43, 1
      %p66 = por %p64, %p65
      %p68 = scmp.ne.s32.totalorder %s51, %s67
      %p69 = scmp.eq.s32.totalorder %s43, 0
      %p70 = por %p68, %p69
      %s71 = ssub.s32 %s37, %s44
      %p72 = scmp.eq.s32.totalorder %s71, 0
      %s74 = sadd.s32 %s73, 1
      %s75 = scalar_select %p72, %s73, %s74
      %p78 = pneg %p72
      %p79 = scmp.eq.s32.totalorder %s37, 1
      %p80 = por %p78, %p79
      %p81 = scmp.ne.s32.totalorder %s73, %s76
      %p82 = scmp.eq.s32.totalorder %s37, 0
      %p83 = por %p81, %p82
      %p84 = scmp.ne.s32.totalorder %s73, %s76
      %p85 = scmp.eq.s32.totalorder %s42, 1
      %p86 = por %p84, %p85
      %p87 = scmp.ne.s32.totalorder %s76, %s77
      %p88 = scmp.eq.s32.totalorder %s42, 0
      %p89 = por %p87, %p88
      %p90 = scmp.ne.s32.totalorder %s76, %s77
      %p91 = scmp.eq.s32.totalorder %s43, 1
      %p92 = por %p90, %p91
      %p94 = scmp.ne.s32.totalorder %s77, %s93
      %p95 = scmp.eq.s32.totalorder %s43, 0
      %p96 = por %p94, %p95
      %s98 = sadd.s32 %s97, 1
      %p101 = scmp.eq.s32.totalorder %s37, 1
      %p102 = scmp.ne.s32.totalorder %s97, %s99
      %p103 = scmp.eq.s32.totalorder %s37, 0
      %p104 = por %p102, %p103
      %p105 = scmp.ne.s32.totalorder %s97, %s99
      %p106 = scmp.eq.s32.totalorder %s42, 1
      %p107 = por %p105, %p106
      %p108 = scmp.ne.s32.totalorder %s99, %s100
      %p109 = scmp.eq.s32.totalorder %s42, 0
      %p110 = por %p108, %p109
      %p111 = scmp.ne.s32.totalorder %s99, %s100
      %p112 = scmp.eq.s32.totalorder %s43, 1
      %p113 = por %p111, %p112
      %p115 = scmp.ne.s32.totalorder %s100, %s114
      %p116 = scmp.eq.s32.totalorder %s43, 0
      %p117 = por %p115, %p116
      %s119 = sadd.s32 %s118, 1
      %p122 = scmp.eq.s32.totalorder %s37, 1
      %p123 = scmp.ne.s32.totalorder %s118, %s120
      %p124 = scmp.eq.s32.totalorder %s37, 0
      %p125 = por %p123, %p124
      %p126 = scmp.ne.s32.totalorder %s118, %s120
      %p127 = scmp.eq.s32.totalorder %s42, 1
      %p128 = por %p126, %p127
      %p129 = scmp.ne.s32.totalorder %s120, %s121
      %p130 = scmp.eq.s32.totalorder %s42, 0
      %p131 = por %p129, %p130
      %p132 = scmp.ne.s32.totalorder %s120, %s121
      %p133 = scmp.eq.s32.totalorder %s43, 1
      %p134 = por %p132, %p133
      %p136 = scmp.ne.s32.totalorder %s121, %s135
      %p137 = scmp.eq.s32.totalorder %s43, 0
      %p138 = por %p136, %p137
      %s140 = sadd.s32 %s139, 1
      %p143 = scmp.eq.s32.totalorder %s37, 1
      %p144 = scmp.ne.s32.totalorder %s139, %s141
      %p145 = scmp.eq.s32.totalorder %s37, 0
      %p146 = por %p144, %p145
      %p147 = scmp.ne.s32.totalorder %s139, %s141
      %p148 = scmp.eq.s32.totalorder %s42, 1
      %p149 = por %p147, %p148
      %p150 = scmp.ne.s32.totalorder %s141, %s142
      %p151 = scmp.eq.s32.totalorder %s42, 0
      %p152 = por %p150, %p151
      %p153 = scmp.ne.s32.totalorder %s141, %s142
      %p154 = scmp.eq.s32.totalorder %s43, 1
      %p155 = por %p153, %p154
      %p157 = scmp.ne.s32.totalorder %s142, %s156
      %p158 = scmp.eq.s32.totalorder %s43, 0
      %p159 = por %p157, %p158
      %s161 = sadd.s32 %s160, 1
      %p164 = scmp.eq.s32.totalorder %s37, 1
      %p165 = scmp.ne.s32.totalorder %s160, %s162
      %p166 = scmp.eq.s32.totalorder %s37, 0
      %p167 = por %p165, %p166
      %p168 = scmp.ne.s32.totalorder %s160, %s162
      %p169 = scmp.eq.s32.totalorder %s42, 1
      %p170 = por %p168, %p169
      %p171 = scmp.ne.s32.totalorder %s162, %s163
      %p172 = scmp.eq.s32.totalorder %s42, 0
      %p173 = por %p171, %p172
      %p174 = scmp.ne.s32.totalorder %s162, %s163
      %p175 = scmp.eq.s32.totalorder %s43, 1
      %p176 = por %p174, %p175
      %p178 = scmp.ne.s32.totalorder %s163, %s177
      %p179 = scmp.eq.s32.totalorder %s43, 0
      %p180 = por %p178, %p179
      %s182 = sadd.s32 %s181, 1
      %p185 = scmp.eq.s32.totalorder %s37, 1
      %p186 = scmp.ne.s32.totalorder %s181, %s183
      %p187 = scmp.eq.s32.totalorder %s37, 0
      %p188 = por %p186, %p187
      %p189 = scmp.ne.s32.totalorder %s181, %s183
      %p190 = scmp.eq.s32.totalorder %s42, 1
      %p191 = por %p189, %p190
      %p192 = scmp.ne.s32.totalorder %s183, %s184
      %p193 = scmp.eq.s32.totalorder %s42, 0
      %p194 = por %p192, %p193
      %p195 = scmp.ne.s32.totalorder %s183, %s184
      %p196 = scmp.eq.s32.totalorder %s43, 1
      %p197 = por %p195, %p196
      %p199 = scmp.ne.s32.totalorder %s184, %s198
      %p200 = scmp.eq.s32.totalorder %s43, 0
      %p201 = por %p199, %p200
      %s203 = sadd.s32 %s202, 1
      %p206 = scmp.eq.s32.totalorder %s37, 1
      %p207 = scmp.ne.s32.totalorder %s202, %s204
      %p208 = scmp.eq.s32.totalorder %s37, 0
      %p209 = por %p207, %p208
      %p210 = scmp.ne.s32.totalorder %s202, %s204
      %p211 = scmp.eq.s32.totalorder %s42, 1
      %p212 = por %p210, %p211
      %p213 = scmp.ne.s32.totalorder %s204, %s205
      %p214 = scmp.eq.s32.totalorder %s42, 0
      %p215 = por %p213, %p214
      %p216 = scmp.ne.s32.totalorder %s204, %s205
      %p217 = scmp.eq.s32.totalorder %s43, 1
      %p218 = por %p216, %p217
      %p220 = scmp.ne.s32.totalorder %s205, %s219
      %p221 = scmp.eq.s32.totalorder %s43, 0
      %p222 = por %p220, %p221
      %s224 = sadd.s32 %s223, 1
      %p227 = scmp.eq.s32.totalorder %s37, 1
      %p228 = scmp.ne.s32.totalorder %s223, %s225
      %p229 = scmp.eq.s32.totalorder %s37, 0
      %p230 = por %p228, %p229
      %p231 = scmp.ne.s32.totalorder %s223, %s225
      %p232 = scmp.eq.s32.totalorder %s42, 1
      %p233 = por %p231, %p232
      %p234 = scmp.ne.s32.totalorder %s225, %s226
      %p235 = scmp.eq.s32.totalorder %s42, 0
      %p236 = por %p234, %p235
      %p237 = scmp.ne.s32.totalorder %s225, %s226
      %p238 = scmp.eq.s32.totalorder %s43, 1
      %p239 = por %p237, %p238
      %p241 = scmp.ne.s32.totalorder %s226, %s240
      %p242 = scmp.eq.s32.totalorder %s43, 0
      %p243 = por %p241, %p242
      %s245 = sadd.s32 %s244, 1
      %p248 = scmp.eq.s32.totalorder %s37, 1
      %p249 = scmp.ne.s32.totalorder %s244, %s246
      %p250 = scmp.eq.s32.totalorder %s37, 0
      %p251 = por %p249, %p250
      %p252 = scmp.ne.s32.totalorder %s244, %s246
      %p253 = scmp.eq.s32.totalorder %s42, 1
      %p254 = por %p252, %p253
      %p255 = scmp.ne.s32.totalorder %s246, %s247
      %p256 = scmp.eq.s32.totalorder %s42, 0
      %p257 = por %p255, %p256
      %p258 = scmp.ne.s32.totalorder %s246, %s247
      %p259 = scmp.eq.s32.totalorder %s43, 1
      %p260 = por %p258, %p259
      %p262 = scmp.ne.s32.totalorder %s247, %s261
      %p263 = scmp.eq.s32.totalorder %s43, 0
      %p264 = por %p262, %p263
      %s266 = sadd.s32 %s265, 1
      %p269 = scmp.eq.s32.totalorder %s37, 1
      %p270 = scmp.ne.s32.totalorder %s265, %s267
      %p271 = scmp.eq.s32.totalorder %s37, 0
      %p272 = por %p270, %p271
      %p273 = scmp.ne.s32.totalorder %s265, %s267
      %p274 = scmp.eq.s32.totalorder %s42, 1
      %p275 = por %p273, %p274
      %p276 = scmp.ne.s32.totalorder %s267, %s268
      %p277 = scmp.eq.s32.totalorder %s42, 0
      %p278 = por %p276, %p277
      %p279 = scmp.ne.s32.totalorder %s267, %s268
      %p280 = scmp.eq.s32.totalorder %s43, 1
      %p281 = por %p279, %p280
      %p283 = scmp.ne.s32.totalorder %s268, %s282
      %p284 = scmp.eq.s32.totalorder %s43, 0
      %p285 = por %p283, %p284
      %s287 = sadd.s32 %s286, 1
      %p290 = scmp.eq.s32.totalorder %s37, 1
      %p291 = scmp.ne.s32.totalorder %s286, %s288
      %p292 = scmp.eq.s32.totalorder %s37, 0
      %p293 = por %p291, %p292
      %p294 = scmp.ne.s32.totalorder %s286, %s288
      %p295 = scmp.eq.s32.totalorder %s42, 1
      %p296 = por %p294, %p295
      %p297 = scmp.ne.s32.totalorder %s288, %s289
      %p298 = scmp.eq.s32.totalorder %s42, 0
      %p299 = por %p297, %p298
      %p300 = scmp.ne.s32.totalorder %s288, %s289
      %p301 = scmp.eq.s32.totalorder %s43, 1
      %p302 = por %p300, %p301
      %p304 = scmp.ne.s32.totalorder %s289, %s303
      %p305 = scmp.eq.s32.totalorder %s43, 0
      %p306 = por %p304, %p305
      %s308 = sadd.s32 %s307, 1
      %p311 = scmp.eq.s32.totalorder %s37, 1
      %p312 = scmp.ne.s32.totalorder %s307, %s309
      %p313 = scmp.eq.s32.totalorder %s37, 0
      %p314 = por %p312, %p313
      %p315 = scmp.ne.s32.totalorder %s307, %s309
      %p316 = scmp.eq.s32.totalorder %s42, 1
      %p317 = por %p315, %p316
      %p318 = scmp.ne.s32.totalorder %s309, %s310
      %p319 = scmp.eq.s32.totalorder %s42, 0
      %p320 = por %p318, %p319
      %p321 = scmp.ne.s32.totalorder %s309, %s310
      %p322 = scmp.eq.s32.totalorder %s43, 1
      %p323 = por %p321, %p322
      %p325 = scmp.ne.s32.totalorder %s310, %s324
      %p326 = scmp.eq.s32.totalorder %s43, 0
      %p327 = por %p325, %p326
      %s329 = sadd.s32 %s328, 1
      %p332 = scmp.eq.s32.totalorder %s37, 1
      %p333 = scmp.ne.s32.totalorder %s328, %s330
      %p334 = scmp.eq.s32.totalorder %s37, 0
      %p335 = por %p333, %p334
      %p336 = scmp.ne.s32.totalorder %s328, %s330
      %p337 = scmp.eq.s32.totalorder %s42, 1
      %p338 = por %p336, %p337
      %p339 = scmp.ne.s32.totalorder %s330, %s331
      %p340 = scmp.eq.s32.totalorder %s42, 0
      %p341 = por %p339, %p340
      %p342 = scmp.ne.s32.totalorder %s330, %s331
      %p343 = scmp.eq.s32.totalorder %s43, 1
      %p344 = por %p342, %p343
      %p346 = scmp.ne.s32.totalorder %s331, %s345
      %p347 = scmp.eq.s32.totalorder %s43, 0
      %p348 = por %p346, %p347
      %s350 = sadd.s32 %s349, 1
      %p353 = scmp.eq.s32.totalorder %s37, 1
      %p354 = scmp.ne.s32.totalorder %s349, %s351
      %p355 = scmp.eq.s32.totalorder %s37, 0
      %p356 = por %p354, %p355
      %p357 = scmp.ne.s32.totalorder %s349, %s351
      %p358 = scmp.eq.s32.totalorder %s42, 1
      %p359 = por %p357, %p358
      %p360 = scmp.ne.s32.totalorder %s351, %s352
      %p361 = scmp.eq.s32.totalorder %s42, 0
      %p362 = por %p360, %p361
      %p363 = scmp.ne.s32.totalorder %s351, %s352
      %p364 = scmp.eq.s32.totalorder %s43, 1
      %p365 = por %p363, %p364
      %p367 = scmp.ne.s32.totalorder %s352, %s366
      %p368 = scmp.eq.s32.totalorder %s43, 0
      %p369 = por %p367, %p368
      %s371 = sadd.s32 %s370, 1
      %p374 = scmp.eq.s32.totalorder %s37, 1
      %p375 = scmp.ne.s32.totalorder %s370, %s372
      %p376 = scmp.eq.s32.totalorder %s37, 0
      %p377 = por %p375, %p376
      %p378 = scmp.ne.s32.totalorder %s370, %s372
      %p379 = scmp.eq.s32.totalorder %s42, 1
      %p380 = por %p378, %p379
      %p381 = scmp.ne.s32.totalorder %s372, %s373
      %p382 = scmp.eq.s32.totalorder %s42, 0
      %p383 = por %p381, %p382
      %p384 = scmp.ne.s32.totalorder %s372, %s373
      %p385 = scmp.eq.s32.totalorder %s43, 1
      %p386 = por %p384, %p385
      %p388 = scmp.ne.s32.totalorder %s373, %s387
      %p389 = scmp.eq.s32.totalorder %s43, 0
      %p390 = por %p388, %p389
      %s392 = sadd.s32 %s391, 1
      %p395 = scmp.eq.s32.totalorder %s37, 1
      %p396 = scmp.ne.s32.totalorder %s391, %s393
      %p397 = scmp.eq.s32.totalorder %s37, 0
      %p398 = por %p396, %p397
      %p399 = scmp.ne.s32.totalorder %s391, %s393
      %p400 = scmp.eq.s32.totalorder %s42, 1
      %p401 = por %p399, %p400
      %p402 = scmp.ne.s32.totalorder %s393, %s394
      %p403 = scmp.eq.s32.totalorder %s42, 0
      %p404 = por %p402, %p403
      %p405 = scmp.ne.s32.totalorder %s393, %s394
      %p406 = scmp.eq.s32.totalorder %s43, 1
      %p407 = por %p405, %p406
      %p409 = scmp.ne.s32.totalorder %s394, %s408
      %p410 = scmp.eq.s32.totalorder %s43, 0
      %p411 = por %p409, %p410
      %s413 = sadd.s32 %s412, 1
      %p416 = scmp.eq.s32.totalorder %s37, 1
      %p417 = scmp.ne.s32.totalorder %s412, %s414
      %p418 = scmp.eq.s32.totalorder %s37, 0
      %p419 = por %p417, %p418
      %p420 = scmp.ne.s32.totalorder %s412, %s414
      %p421 = scmp.eq.s32.totalorder %s42, 1
      %p422 = por %p420, %p421
      %p423 = scmp.ne.s32.totalorder %s414, %s415
      %p424 = scmp.eq.s32.totalorder %s42, 0
      %p425 = por %p423, %p424
      %p426 = scmp.ne.s32.totalorder %s414, %s415
      %p427 = scmp.eq.s32.totalorder %s43, 1
      %p428 = por %p426, %p427
      %p430 = scmp.ne.s32.totalorder %s415, %s429
      %p431 = scmp.eq.s32.totalorder %s43, 0
      %p432 = por %p430, %p431
      %s434 = sadd.s32 %s433, 1
      %p437 = scmp.eq.s32.totalorder %s37, 1
      %p438 = scmp.ne.s32.totalorder %s433, %s435
      %p439 = scmp.eq.s32.totalorder %s37, 0
      %p440 = por %p438, %p439
      %p441 = scmp.ne.s32.totalorder %s433, %s435
      %p442 = scmp.eq.s32.totalorder %s42, 1
      %p443 = por %p441, %p442
      %p444 = scmp.ne.s32.totalorder %s435, %s436
      %p445 = scmp.eq.s32.totalorder %s42, 0
      %p446 = por %p444, %p445
      %p447 = scmp.ne.s32.totalorder %s435, %s436
      %p448 = scmp.eq.s32.totalorder %s43, 1
      %p449 = por %p447, %p448
      %p451 = scmp.ne.s32.totalorder %s436, %s450
      %p452 = scmp.eq.s32.totalorder %s43, 0
      %p453 = por %p451, %p452
      %s455 = sadd.s32 %s454, 1
      %p458 = scmp.eq.s32.totalorder %s37, 1
      %p459 = scmp.ne.s32.totalorder %s454, %s456
      %p460 = scmp.eq.s32.totalorder %s37, 0
      %p461 = por %p459, %p460
      %p462 = scmp.ne.s32.totalorder %s454, %s456
      %p463 = scmp.eq.s32.totalorder %s42, 1
      %p464 = por %p462, %p463
      %p465 = scmp.ne.s32.totalorder %s456, %s457
      %p466 = scmp.eq.s32.totalorder %s42, 0
      %p467 = por %p465, %p466
      %p468 = scmp.ne.s32.totalorder %s456, %s457
      %p469 = scmp.eq.s32.totalorder %s43, 1
      %p470 = por %p468, %p469
      %p472 = scmp.ne.s32.totalorder %s457, %s471
      %p473 = scmp.eq.s32.totalorder %s43, 0
      %p474 = por %p472, %p473
      %s476 = sadd.s32 %s475, 1
      %p479 = scmp.eq.s32.totalorder %s37, 1
      %p480 = scmp.ne.s32.totalorder %s475, %s477
      %p481 = scmp.eq.s32.totalorder %s37, 0
      %p482 = por %p480, %p481
      %p483 = scmp.ne.s32.totalorder %s475, %s477
      %p484 = scmp.eq.s32.totalorder %s42, 1
      %p485 = por %p483, %p484
      %p486 = scmp.ne.s32.totalorder %s477, %s478
      %p487 = scmp.eq.s32.totalorder %s42, 0
      %p488 = por %p486, %p487
      %p489 = scmp.ne.s32.totalorder %s477, %s478
      %p490 = scmp.eq.s32.totalorder %s43, 1
      %p491 = por %p489, %p490
      %p493 = scmp.ne.s32.totalorder %s478, %s492
      %p494 = scmp.eq.s32.totalorder %s43, 0
      %p495 = por %p493, %p494
      %s497 = sadd.s32 %s496, 1
      %p500 = scmp.eq.s32.totalorder %s37, 1
      %p501 = scmp.ne.s32.totalorder %s496, %s498
      %p502 = scmp.eq.s32.totalorder %s37, 0
      %p503 = por %p501, %p502
      %p504 = scmp.ne.s32.totalorder %s496, %s498
      %p505 = scmp.eq.s32.totalorder %s42, 1
      %p506 = por %p504, %p505
      %p507 = scmp.ne.s32.totalorder %s498, %s499
      %p508 = scmp.eq.s32.totalorder %s42, 0
      %p509 = por %p507, %p508
      %p510 = scmp.ne.s32.totalorder %s498, %s499
      %p511 = scmp.eq.s32.totalorder %s43, 1
      %p512 = por %p510, %p511
      %p514 = scmp.ne.s32.totalorder %s499, %s513
      %p515 = scmp.eq.s32.totalorder %s43, 0
      %p516 = por %p514, %p515
      %s517 = ssub.s32 %s37, %s44
      %p518 = scmp.eq.s32.totalorder %s517, 0
      %s520 = sadd.s32 %s519, 1
      %s521 = scalar_select %p518, %s519, %s520
      %p524 = pneg %p518
      %p525 = scmp.eq.s32.totalorder %s37, 1
      %p526 = por %p524, %p525
      %p527 = scmp.ne.s32.totalorder %s519, %s522
      %p528 = scmp.eq.s32.totalorder %s37, 0
      %p529 = por %p527, %p528
      %p530 = scmp.ne.s32.totalorder %s519, %s522
      %p531 = scmp.eq.s32.totalorder %s42, 1
      %p532 = por %p530, %p531
      %p533 = scmp.ne.s32.totalorder %s522, %s523
      %p534 = scmp.eq.s32.totalorder %s42, 0
      %p535 = por %p533, %p534
      %p536 = scmp.ne.s32.totalorder %s522, %s523
      %p537 = scmp.eq.s32.totalorder %s43, 1
      %p538 = por %p536, %p537
      %p540 = scmp.ne.s32.totalorder %s523, %s539
      %p541 = scmp.eq.s32.totalorder %s43, 0
      %p542 = por %p540, %p541
      %p543 = scmp.le.s32.totalorder 1, %s37
      %p544 = scmp.lt.s32.totalorder %s37, 3
      %p545 = pnand %p543, %p544
      %p546 = pneg %p545
      // Predicated region
      $region9: #{_lambda_.1} parent=5 // pred_check
        _
      $region10: #{_lambda_.1} parent=5 // pred_check_branch
        %548 = sbr.rel (%p545) target = $region12
      $region11: #{_lambda_.1} parent=5 // pred_region
        %s549 = ssub.s32 %s37, 1
        // Predicated region
        $region13: #{_lambda_.1} parent=11 // pred_check
          %p550 = pneg %p110
        $region14: #{_lambda_.1} parent=11 // pred_check_branch
          %552 = sbr.rel (%p550) target = $region16
        $region15: #{_lambda_.1} parent=11 // pred_region
          _
        $region16: #{_lambda_.1} parent=11 // pred_fallthru
          _
        // Predicated region
        $region17: #{_lambda_.1} parent=11 // pred_check
          %p553 = pneg %p131
        $region18: #{_lambda_.1} parent=11 // pred_check_branch
          %555 = sbr.rel (%p553) target = $region20
        $region19: #{_lambda_.1} parent=11 // pred_region
          %s557 = ssub.s32 16, 16
          %558 = vsyncadd [#allocation6], %s557
          %s560 = sshll.u32 [#allocation5], 4
          %s561 = int_to_ptr.vmem [resolvable:$true] %s560
          %563 = dma.hbm_to_vmem [thread:$0]  %s3, 16, %s561, [#allocation6]
        $region20: #{_lambda_.1} parent=11 // pred_fallthru
          _
        // Predicated region
        $region21: #{_lambda_.1} parent=11 // pred_check
          %p564 = pneg %p152
        $region22: #{_lambda_.1} parent=11 // pred_check_branch
          %566 = sbr.rel (%p564) target = $region24
        $region23: #{_lambda_.1} parent=11 // pred_region
          _
        $region24: #{_lambda_.1} parent=11 // pred_fallthru
          _
        // Predicated region
        $region25: #{_lambda_.1} parent=11 // pred_check
          %p567 = pneg %p173
        $region26: #{_lambda_.1} parent=11 // pred_check_branch
          %569 = sbr.rel (%p567) target = $region28
        $region27: #{_lambda_.1} parent=11 // pred_region
          _
        $region28: #{_lambda_.1} parent=11 // pred_fallthru
          _
        // Predicated region
        $region29: #{_lambda_.1} parent=11 // pred_check
          %p570 = pneg %p194
        $region30: #{_lambda_.1} parent=11 // pred_check_branch
          %572 = sbr.rel (%p570) target = $region32
        $region31: #{_lambda_.1} parent=11 // pred_region
          _
        $region32: #{_lambda_.1} parent=11 // pred_fallthru
          _
        // Predicated region
        $region33: #{_lambda_.1} parent=11 // pred_check
          %p573 = pneg %p215
        $region34: #{_lambda_.1} parent=11 // pred_check_branch
          %575 = sbr.rel (%p573) target = $region36
        $region35: #{_lambda_.1} parent=11 // pred_region
          _
        $region36: #{_lambda_.1} parent=11 // pred_fallthru
          _
        // Predicated region
        $region37: #{_lambda_.1} parent=11 // pred_check
          %p576 = pneg %p236
        $region38: #{_lambda_.1} parent=11 // pred_check_branch
          %578 = sbr.rel (%p576) target = $region40
        $region39: #{_lambda_.1} parent=11 // pred_region
          _
        $region40: #{_lambda_.1} parent=11 // pred_fallthru
          _
        // Predicated region
        $region41: #{_lambda_.1} parent=11 // pred_check
          %p579 = pneg %p257
        $region42: #{_lambda_.1} parent=11 // pred_check_branch
          %581 = sbr.rel (%p579) target = $region44
        $region43: #{_lambda_.1} parent=11 // pred_region
          _
        $region44: #{_lambda_.1} parent=11 // pred_fallthru
          _
        // Predicated region
        $region45: #{_lambda_.1} parent=11 // pred_check
          %p582 = pneg %p278
        $region46: #{_lambda_.1} parent=11 // pred_check_branch
          %584 = sbr.rel (%p582) target = $region48
        $region47: #{_lambda_.1} parent=11 // pred_region
          _
        $region48: #{_lambda_.1} parent=11 // pred_fallthru
          _
        // Predicated region
        $region49: #{_lambda_.1} parent=11 // pred_check
          %p585 = pneg %p299
        $region50: #{_lambda_.1} parent=11 // pred_check_branch
          %587 = sbr.rel (%p585) target = $region52
        $region51: #{_lambda_.1} parent=11 // pred_region
          _
        $region52: #{_lambda_.1} parent=11 // pred_fallthru
          _
        // Predicated region
        $region53: #{_lambda_.1} parent=11 // pred_check
          %p588 = pneg %p320
        $region54: #{_lambda_.1} parent=11 // pred_check_branch
          %590 = sbr.rel (%p588) target = $region56
        $region55: #{_lambda_.1} parent=11 // pred_region
          %s592 = ssub.s32 512, 512
          %593 = vsyncadd [#allocation6], %s592
          %s594 = sshll.u32 [#allocation7], 4
          %s595 = int_to_ptr.vmem [resolvable:$true] %s594
          %600 = dma.hbm_to_vmem [thread:$0]  %s12, 512, %s595, [#allocation6], 128, 128, 8
        $region56: #{_lambda_.1} parent=11 // pred_fallthru
          _
        // Predicated region
        $region57: #{_lambda_.1} parent=11 // pred_check
          %p601 = pneg %p341
        $region58: #{_lambda_.1} parent=11 // pred_check_branch
          %603 = sbr.rel (%p601) target = $region60
        $region59: #{_lambda_.1} parent=11 // pred_region
          %s605 = ssub.s32 512, 512
          %606 = vsyncadd [#allocation9], %s605
          %s607 = sshll.u32 [#allocation8], 4
          %s608 = int_to_ptr.vmem [resolvable:$true] %s607
          %613 = dma.hbm_to_vmem [thread:$0]  %s13, 512, %s608, [#allocation9], 128, 128, 8
        $region60: #{_lambda_.1} parent=11 // pred_fallthru
          _
        // Predicated region
        $region61: #{_lambda_.1} parent=11 // pred_check
          %p614 = pneg %p362
        $region62: #{_lambda_.1} parent=11 // pred_check_branch
          %616 = sbr.rel (%p614) target = $region64
        $region63: #{_lambda_.1} parent=11 // pred_region
          %s618 = ssub.s32 512, 512
          %619 = vsyncadd [#allocation9], %s618
          %s620 = sshll.u32 [#allocation10], 4
          %s621 = int_to_ptr.vmem [resolvable:$true] %s620
          %626 = dma.hbm_to_vmem [thread:$0]  %s14, 512, %s621, [#allocation9], 128, 128, 8
        $region64: #{_lambda_.1} parent=11 // pred_fallthru
          _
        // Predicated region
        $region65: #{_lambda_.1} parent=11 // pred_check
          %p627 = pneg %p383
        $region66: #{_lambda_.1} parent=11 // pred_check_branch
          %629 = sbr.rel (%p627) target = $region68
        $region67: #{_lambda_.1} parent=11 // pred_region
          %s631 = ssub.s32 16, 16
          %632 = vsyncadd [#allocation12], %s631
          %s634 = sshll.u32 [#allocation11], 4
          %s635 = int_to_ptr.vmem [resolvable:$true] %s634
          %637 = dma.hbm_to_vmem [thread:$0]  %s15, 16, %s635, [#allocation12]
        $region68: #{_lambda_.1} parent=11 // pred_fallthru
          _
        // Predicated region
        $region69: #{_lambda_.1} parent=11 // pred_check
          %p638 = pneg %p404
        $region70: #{_lambda_.1} parent=11 // pred_check_branch
          %640 = sbr.rel (%p638) target = $region72
        $region71: #{_lambda_.1} parent=11 // pred_region
          _
        $region72: #{_lambda_.1} parent=11 // pred_fallthru
          _
        // Predicated region
        $region73: #{_lambda_.1} parent=11 // pred_check
          %p641 = pneg %p425
        $region74: #{_lambda_.1} parent=11 // pred_check_branch
          %643 = sbr.rel (%p641) target = $region76
        $region75: #{_lambda_.1} parent=11 // pred_region
          _
        $region76: #{_lambda_.1} parent=11 // pred_fallthru
          _
        // Predicated region
        $region77: #{_lambda_.1} parent=11 // pred_check
          %p644 = pneg %p446
        $region78: #{_lambda_.1} parent=11 // pred_check_branch
          %646 = sbr.rel (%p644) target = $region80
        $region79: #{_lambda_.1} parent=11 // pred_region
          %s648 = ssub.s32 512, 512
          %649 = vsyncadd [#allocation12], %s648
          %s650 = sshll.u32 [#allocation13], 4
          %s651 = int_to_ptr.vmem [resolvable:$true] %s650
          %656 = dma.hbm_to_vmem [thread:$0]  %s18, 512, %s651, [#allocation12], 128, 128, 8
        $region80: #{_lambda_.1} parent=11 // pred_fallthru
          _
        // Predicated region
        $region81: #{_lambda_.1} parent=11 // pred_check
          %p657 = pneg %p467
        $region82: #{_lambda_.1} parent=11 // pred_check_branch
          %659 = sbr.rel (%p657) target = $region84
        $region83: #{_lambda_.1} parent=11 // pred_region
          _
        $region84: #{_lambda_.1} parent=11 // pred_fallthru
          _
        // Predicated region
        $region85: #{_lambda_.1} parent=11 // pred_check
          %p660 = pneg %p488
        $region86: #{_lambda_.1} parent=11 // pred_check_branch
          %662 = sbr.rel (%p660) target = $region88
        $region87: #{_lambda_.1} parent=11 // pred_region
          _
        $region88: #{_lambda_.1} parent=11 // pred_fallthru
          _
        // Predicated region
        $region89: #{_lambda_.1} parent=11 // pred_check
          %p663 = pneg %p509
        $region90: #{_lambda_.1} parent=11 // pred_check_branch
          %665 = sbr.rel (%p663) target = $region92
        $region91: #{_lambda_.1} parent=11 // pred_region
          _
        $region92: #{_lambda_.1} parent=11 // pred_fallthru
          _
      $region12: #{_lambda_.1} parent=5 // pred_fallthru
        _
      %p666 = scmp.lt.s32.totalorder %s37, 2
      // Predicated region
      $region93: #{_lambda_.1} parent=5 // pred_check
        %p667 = pneg %p666
      $region94: #{_lambda_.1} parent=5 // pred_check_branch
        %669 = sbr.rel (%p667) target = $region96
      $region95: #{_lambda_.1} parent=5 // pred_region
        // Predicated region
        $region97: #{_lambda_.1} parent=95 // pred_check
          %p670 = pneg %p57
        $region98: #{_lambda_.1} parent=95 // pred_check_branch
          %672 = sbr.rel (%p670) target = $region100
        $region99: #{_lambda_.1} parent=95 // pred_region
          %s673 = sand.u32 %s47, 1
          %s674 = scalar_lea.sflag [#allocation3], %s673
          %s675 = sand.u32 %s47, 1
          %s676 = smul.addr %s675, 8
          %s677 = scalar_lea.vmem [#allocation2], %s676
          %s679 = ssub.s32 128, 128
          %680 = vsyncadd %s674, %s679
          %s681 = smul.addr %s37, 128
          %s682 = scalar_lea.hbm %s0, %s681
          %s684 = sshll.u32 %s677, 4
          %s685 = int_to_ptr.vmem [resolvable:$true] %s684
          %687 = dma.hbm_to_vmem [thread:$0]  %s682, 128, %s685, %s674
        $region100: #{_lambda_.1} parent=95 // pred_fallthru
          _
        // Predicated region
        $region101: #{_lambda_.1} parent=95 // pred_check
          %p688 = pneg %p83
        $region102: #{_lambda_.1} parent=95 // pred_check_branch
          %690 = sbr.rel (%p688) target = $region104
        $region103: #{_lambda_.1} parent=95 // pred_region
          %p691 = scmp.lt.s32.totalorder %s37, 1
          %s692 = scalar_select %p691, %s37, 1
          %s693 = smul.addr %s692, 2
          %s694 = smul.addr %s693, 8
          %s695 = scalar_lea.vmem %s1, %s694
        $region104: #{_lambda_.1} parent=95 // pred_fallthru
          _
      $region96: #{_lambda_.1} parent=5 // pred_fallthru
        _
      %p696 = scmp.le.s32.totalorder 1, %s37
      %p697 = scmp.lt.s32.totalorder %s37, 3
      %p698 = pnand %p696, %p697
      %p699 = pneg %p698
      // Predicated region
      $region105: #{_lambda_.1} parent=5 // pred_check
        _
      $region106: #{_lambda_.1} parent=5 // pred_check_branch
        %701 = sbr.rel (%p698) target = $region108
      $region107: #{_lambda_.1} parent=5 // pred_region
        %s702 = ssub.s32 %s37, 1
        %s703 = sand.u32 %s50, 1
        %s704 = scalar_lea.sflag [#allocation3], %s703
        %s705 = sand.u32 %s50, 1
        %s706 = smul.addr %s705, 8
        %s707 = scalar_lea.vmem [#allocation2], %s706
        // Predicated region
        $region109: #{_lambda_.1} parent=107 // pred_check
          %p708 = pneg %p63
        $region110: #{_lambda_.1} parent=107 // pred_check_branch
          %710 = sbr.rel (%p708) target = $region112
        $region111: #{_lambda_.1} parent=107 // pred_region
          %711 = dma.done %s704, 128
        $region112: #{_lambda_.1} parent=107 // pred_fallthru
          _
        // Predicated region
        $region113: #{_lambda_.1} parent=107 // pred_check
          %p712 = pneg %p131
        $region114: #{_lambda_.1} parent=107 // pred_check_branch
          %714 = sbr.rel (%p712) target = $region116
        $region115: #{_lambda_.1} parent=107 // pred_region
          %715 = dma.done [#allocation6], 16
        $region116: #{_lambda_.1} parent=107 // pred_fallthru
          _
        // Predicated region
        $region117: #{_lambda_.1} parent=107 // pred_check
          %p716 = pneg %p320
        $region118: #{_lambda_.1} parent=107 // pred_check_branch
          %718 = sbr.rel (%p716) target = $region120
        $region119: #{_lambda_.1} parent=107 // pred_region
          %719 = dma.done [#allocation6], 512
        $region120: #{_lambda_.1} parent=107 // pred_fallthru
          _
        // Predicated region
        $region121: #{_lambda_.1} parent=107 // pred_check
          %p720 = pneg %p341
        $region122: #{_lambda_.1} parent=107 // pred_check_branch
          %722 = sbr.rel (%p720) target = $region124
        $region123: #{_lambda_.1} parent=107 // pred_region
          %723 = dma.done [#allocation9], 512
        $region124: #{_lambda_.1} parent=107 // pred_fallthru
          _
        // Predicated region
        $region125: #{_lambda_.1} parent=107 // pred_check
          %p724 = pneg %p362
        $region126: #{_lambda_.1} parent=107 // pred_check_branch
          %726 = sbr.rel (%p724) target = $region128
        $region127: #{_lambda_.1} parent=107 // pred_region
          %727 = dma.done [#allocation9], 512
        $region128: #{_lambda_.1} parent=107 // pred_fallthru
          _
        // Predicated region
        $region129: #{_lambda_.1} parent=107 // pred_check
          %p728 = pneg %p383
        $region130: #{_lambda_.1} parent=107 // pred_check_branch
          %730 = sbr.rel (%p728) target = $region132
        $region131: #{_lambda_.1} parent=107 // pred_region
          %731 = dma.done [#allocation12], 16
        $region132: #{_lambda_.1} parent=107 // pred_fallthru
          _
        // Predicated region
        $region133: #{_lambda_.1} parent=107 // pred_check
          %p732 = pneg %p446
        $region134: #{_lambda_.1} parent=107 // pred_check_branch
          %734 = sbr.rel (%p732) target = $region136
        $region135: #{_lambda_.1} parent=107 // pred_region
          %735 = dma.done [#allocation12], 512
        $region136: #{_lambda_.1} parent=107 // pred_fallthru
          _
        %s736 = sand.u32 %s50, 1
        %s737 = scalar_lea.sflag [#allocation3], %s736
        %s738 = sand.u32 %s50, 1
        %s739 = smul.addr %s738, 8
        %s740 = scalar_lea.vmem [#allocation2], %s739
        %p741 = pneg %p63
        %p742 = pneg %p60
        %p743 = scmp.lt.s32.totalorder %s42, 1
        %s744 = scalar_select %p743, %s42, 1
        %s745 = smul.addr %s744, 2
        %s746 = smul.addr %s745, 8
        %s747 = scalar_lea.vmem %s1, %s746
        %p748 = pneg %p89
        %p749 = pneg %p86
        %p750 = pneg %p110
        %p751 = pneg %p107
        %p752 = pneg %p131
        %p753 = pneg %p128
        %p754 = pneg %p152
        %p755 = pneg %p149
        %p756 = pneg %p173
        %p757 = pneg %p170
        %p758 = pneg %p194
        %p759 = pneg %p191
        %p760 = pneg %p215
        %p761 = pneg %p212
        %p762 = pneg %p236
        %p763 = pneg %p233
        %p764 = pneg %p257
        %p765 = pneg %p254
        %p766 = pneg %p278
        %p767 = pneg %p275
        %p768 = pneg %p299
        %p769 = pneg %p296
        %p770 = pneg %p320
        %p771 = pneg %p317
        %p772 = pneg %p341
        %p773 = pneg %p338
        %p774 = pneg %p362
        %p775 = pneg %p359
        %p776 = pneg %p383
        %p777 = pneg %p380
        %p778 = pneg %p404
        %p779 = pneg %p401
        %p780 = pneg %p425
        %p781 = pneg %p422
        %p782 = pneg %p446
        %p783 = pneg %p443
        %p784 = pneg %p467
        %p785 = pneg %p464
        %p786 = pneg %p488
        %p787 = pneg %p485
        %p788 = pneg %p509
        %p789 = pneg %p506
        %p790 = pneg %p535
        %p791 = pneg %p532
        %s792 = sand.u32 %s522, 1
        %s793 = scalar_lea.sflag [#allocation4], %s792
        %s794 = sand.u32 %s522, 1
        %s795 = smul.addr %s794, 8
        %s796 = scalar_lea.vmem [#allocation14], %s795
        %p797 = scmp.lt.s32.totalorder %s42, 1
        %s798 = scalar_select %p797, %s42, 1
        %s799 = smul.addr %s798, 2
        %s800 = smul.addr %s799, 8
        %s801 = scalar_lea.vmem %s1, %s800
        %v802 = vld [vmem:[%s707] sm:$0xff]
        %v803 = vld [vmem:[%s801] sm:$0xff]
        %v804 = vld [vmem:[%s801 + $0x8] sm:$0xff]
        %v805 = vld [vmem:[%s2] sm:$0x1]
        %v806 = vld [vmem:[#allocation5] sm:$0x1]
        %vm807 = vcmask 261120
        %v808 = vsel %vm807, %v802, 0.0
        %809 = vadd.xlane.f32.xlu0 %v808
        %v810 = vpop.xlane.xlu0 %809
        %v811 = vrcp.pop 32.0
        %v812 = vmul.f32 %v810, %v811
        %v813 = vsub.f32 %v802, %v812
        %v814 = vmul.f32 %v813, %v813
        %v815 = vsel %vm807, %v814, 0.0
        %816 = vadd.xlane.f32.xlu0 %v815
        %v817 = vpop.xlane.xlu0 %816
        %v818 = vmul.f32 %v817, %v811
        %v819 = vadd.f32 %v818, 1e-05
        %v820 = vrsqrt.pop %v819
        %v821 = vmul.f32 %v813, %v820
        %v823 = vlaneseq
        %v824 = vshrl.u32 %v823, 7
        %v825 = vsub.s32 0, %v824
        %v826 = vrot.slane %v805, %v825
        %v828 = vmul.f32 %v821, %v826
        %v830 = vlaneseq
        %v831 = vshrl.u32 %v830, 7
        %v832 = vsub.s32 0, %v831
        %v833 = vrot.slane %v806, %v832
        %v835 = vadd.f32 %v828, %v833
        %v836 = vld [vmem:[%s4] sm:$0xff]
        %v837 = vld [vmem:[%s4 + $0x8] sm:$0xff]
        %v838 = vld [vmem:[%s4 + $0x10] sm:$0xff]
        %v839 = vld [vmem:[%s4 + $0x18] sm:$0xff]
        %v840 = vld [vmem:[%s5] sm:$0xff]
        %v841 = vld [vmem:[%s5 + $0x8] sm:$0xff]
        %v842 = vld [vmem:[%s5 + $0x10] sm:$0xff]
        %v843 = vld [vmem:[%s5 + $0x18] sm:$0xff]
        %v844 = vld [vmem:[%s6] sm:$0xff]
        %v845 = vld [vmem:[%s6 + $0x8] sm:$0xff]
        %v846 = vld [vmem:[%s6 + $0x10] sm:$0xff]
        %v847 = vld [vmem:[%s6 + $0x18] sm:$0xff]
        %v848 = vld [vmem:[%s7] sm:$0xff]
        %v849 = vld [vmem:[%s7 + $0x8] sm:$0xff]
        %v850 = vld [vmem:[%s7 + $0x10] sm:$0xff]
        %v851 = vld [vmem:[%s7 + $0x18] sm:$0xff]
        %v852 = vld [vmem:[%s8] sm:$0x1]
        %v854 = vsel %vm807, %v835, 0
        %856 = vmatprep.subr.mxu0 0.0
        %857 = vmatpush1.msra.mxu0 %v836
        %858 = vmatprep.subr.mxu0 0.0
        %859 = vmatpush1.msra.mxu0 %v837
        %860 = vmatprep.subr.mxu0 0.0
        %861 = vmatpush1.msra.mxu0 %v838
        %862 = vmatprep.subr.mxu0 0.0
        %863 = vmatpush1.msra.mxu0 %v839
        %864 = vmatprep.subr.mxu0 0.0
        %865 = vmatpush1.msra.mxu0 0.0
        %866 = vmatprep.subr.mxu0 0.0
        %867 = vmatpush1.msra.mxu0 0.0
        %868 = vmatprep.subr.mxu0 0.0
        %869 = vmatpush1.msra.mxu0 0.0
        %870 = vmatprep.subr.mxu0 0.0
        %871 = vmatpush1.msra.mxu0 0.0
        %872 = vmatprep.subr.mxu0 0.0
        %873 = vmatpush1.msra.mxu0 0.0
        %874 = vmatprep.subr.mxu0 0.0
        %875 = vmatpush1.msra.mxu0 0.0
        %876 = vmatprep.subr.mxu0 0.0
        %877 = vmatpush1.msra.mxu0 0.0
        %878 = vmatprep.subr.mxu0 0.0
        %879 = vmatpush1.msra.mxu0 0.0
        %880 = vmatprep.subr.mxu0 0.0
        %881 = vmatpush1.msra.mxu0 0.0
        %882 = vmatprep.subr.mxu0 0.0
        %883 = vmatpush1.msra.mxu0 0.0
        %884 = vmatprep.subr.mxu0 0.0
        %885 = vmatpush1.msra.mxu0 0.0
        %886 = vmatprep.subr.mxu0 0.0
        %887 = vmatpush1.msra.mxu0 0.0
        %888 = vmatprep.subr.mxu0 0.0
        %889 = vmatpush1.msra.mxu0 0.0
        %890 = vmatprep.subr.mxu0 0.0
        %891 = vmatpush1.msra.mxu0 0.0
        %892 = vmatprep.subr.mxu0 0.0
        %893 = vmatpush1.msra.mxu0 0.0
        %894 = vmatprep.subr.mxu0 0.0
        %895 = vmatpush1.msra.mxu0 0.0
        %896 = vmatprep.subr.mxu0 0.0
        %897 = vmatpush1.msra.mxu0 0.0
        %898 = vmatprep.subr.mxu0 0.0
        %899 = vmatpush1.msra.mxu0 0.0
        %900 = vmatprep.subr.mxu0 0.0
        %901 = vmatpush1.msra.mxu0 0.0
        %902 = vmatprep.subr.mxu0 0.0
        %903 = vmatpush1.msra.mxu0 0.0
        %904 = vmatprep.subr.mxu0 0.0
        %905 = vmatpush1.msra.mxu0 0.0
        %906 = vmatprep.subr.mxu0 0.0
        %907 = vmatpush1.msra.mxu0 0.0
        %908 = vmatprep.subr.mxu0 0.0
        %909 = vmatpush1.msra.mxu0 0.0
        %910 = vmatprep.subr.mxu0 0.0
        %911 = vmatpush1.msra.mxu0 0.0
        %912 = vmatprep.subr.mxu0 0.0
        %913 = vmatpush1.msra.mxu0 0.0
        %914 = vmatprep.subr.mxu0 0.0
        %915 = vmatpush1.msra.mxu0 0.0
        %916 = vmatprep.subr.mxu0 0.0
        %917 = vmatpush1.msra.mxu0 0.0
        %918 = vmatprep.subr.mxu0 0.0
        %919 = vmatpush1.msra.mxu0 0.0
        %920 = vmatprep.mubr.f32.mxu0 0.0
        %921 = vmatmul.mubr.f32.gmra.mrb[0].mxu0 %v854
        %v922 = vpop.f32.mrb[0].mxu0
        %v923 = vadd.f32 0.0, %v922
        %v924 = vpop.f32.mrb[0].mxu0
        %925 = vdwg.mxu0
        %v926 = vmul.f32 %v923, 0.5
        %927 = vmatprep.subr.mxu0 0.0
        %928 = vmatpush1.msra.mxu0 %v840
        %929 = vmatprep.subr.mxu0 0.0
        %930 = vmatpush1.msra.mxu0 %v841
        %931 = vmatprep.subr.mxu0 0.0
        %932 = vmatpush1.msra.mxu0 %v842
        %933 = vmatprep.subr.mxu0 0.0
        %934 = vmatpush1.msra.mxu0 %v843
        %935 = vmatprep.subr.mxu0 0.0
        %936 = vmatpush1.msra.mxu0 0.0
        %937 = vmatprep.subr.mxu0 0.0
        %938 = vmatpush1.msra.mxu0 0.0
        %939 = vmatprep.subr.mxu0 0.0
        %940 = vmatpush1.msra.mxu0 0.0
        %941 = vmatprep.subr.mxu0 0.0
        %942 = vmatpush1.msra.mxu0 0.0
        %943 = vmatprep.subr.mxu0 0.0
        %944 = vmatpush1.msra.mxu0 0.0
        %945 = vmatprep.subr.mxu0 0.0
        %946 = vmatpush1.msra.mxu0 0.0
        %947 = vmatprep.subr.mxu0 0.0
        %948 = vmatpush1.msra.mxu0 0.0
        %949 = vmatprep.subr.mxu0 0.0
        %950 = vmatpush1.msra.mxu0 0.0
        %951 = vmatprep.subr.mxu0 0.0
        %952 = vmatpush1.msra.mxu0 0.0
        %953 = vmatprep.subr.mxu0 0.0
        %954 = vmatpush1.msra.mxu0 0.0
        %955 = vmatprep.subr.mxu0 0.0
        %956 = vmatpush1.msra.mxu0 0.0
        %957 = vmatprep.subr.mxu0 0.0
        %958 = vmatpush1.msra.mxu0 0.0
        %959 = vmatprep.subr.mxu0 0.0
        %960 = vmatpush1.msra.mxu0 0.0
        %961 = vmatprep.subr.mxu0 0.0
        %962 = vmatpush1.msra.mxu0 0.0
        %963 = vmatprep.subr.mxu0 0.0
        %964 = vmatpush1.msra.mxu0 0.0
        %965 = vmatprep.subr.mxu0 0.0
        %966 = vmatpush1.msra.mxu0 0.0
        %967 = vmatprep.subr.mxu0 0.0
        %968 = vmatpush1.msra.mxu0 0.0
        %969 = vmatprep.subr.mxu0 0.0
        %970 = vmatpush1.msra.mxu0 0.0
        %971 = vmatprep.subr.mxu0 0.0
        %972 = vmatpush1.msra.mxu0 0.0
        %973 = vmatprep.subr.mxu0 0.0
        %974 = vmatpush1.msra.mxu0 0.0
        %975 = vmatprep.subr.mxu0 0.0
        %976 = vmatpush1.msra.mxu0 0.0
        %977 = vmatprep.subr.mxu0 0.0
        %978 = vmatpush1.msra.mxu0 0.0
        %979 = vmatprep.subr.mxu0 0.0
        %980 = vmatpush1.msra.mxu0 0.0
        %981 = vmatprep.subr.mxu0 0.0
        %982 = vmatpush1.msra.mxu0 0.0
        %983 = vmatprep.subr.mxu0 0.0
        %984 = vmatpush1.msra.mxu0 0.0
        %985 = vmatprep.subr.mxu0 0.0
        %986 = vmatpush1.msra.mxu0 0.0
        %987 = vmatprep.subr.mxu0 0.0
        %988 = vmatpush1.msra.mxu0 0.0
        %989 = vmatprep.subr.mxu0 0.0
        %990 = vmatpush1.msra.mxu0 0.0
        %991 = vmatprep.mubr.f32.mxu0 0.0
        %992 = vmatmul.mubr.f32.gmra.mrb[0].mxu0 %v854
        %v993 = vpop.f32.mrb[0].mxu0
        %v994 = vadd.f32 0.0, %v993
        %v995 = vpop.f32.mrb[0].mxu0
        %996 = vdwg.mxu0
        %997 = vmatprep.subr.mxu0 0.0
        %998 = vmatpush1.msra.mxu0 %v844
        %999 = vmatprep.subr.mxu0 0.0
        %1000 = vmatpush1.msra.mxu0 %v845
        %1001 = vmatprep.subr.mxu0 0.0
        %1002 = vmatpush1.msra.mxu0 %v846
        %1003 = vmatprep.subr.mxu0 0.0
        %1004 = vmatpush1.msra.mxu0 %v847
        %1005 = vmatprep.subr.mxu0 0.0
        %1006 = vmatpush1.msra.mxu0 0.0
        %1007 = vmatprep.subr.mxu0 0.0
        %1008 = vmatpush1.msra.mxu0 0.0
        %1009 = vmatprep.subr.mxu0 0.0
        %1010 = vmatpush1.msra.mxu0 0.0
        %1011 = vmatprep.subr.mxu0 0.0
        %1012 = vmatpush1.msra.mxu0 0.0
        %1013 = vmatprep.subr.mxu0 0.0
        %1014 = vmatpush1.msra.mxu0 0.0
        %1015 = vmatprep.subr.mxu0 0.0
        %1016 = vmatpush1.msra.mxu0 0.0
        %1017 = vmatprep.subr.mxu0 0.0
        %1018 = vmatpush1.msra.mxu0 0.0
        %1019 = vmatprep.subr.mxu0 0.0
        %1020 = vmatpush1.msra.mxu0 0.0
        %1021 = vmatprep.subr.mxu0 0.0
        %1022 = vmatpush1.msra.mxu0 0.0
        %1023 = vmatprep.subr.mxu0 0.0
        %1024 = vmatpush1.msra.mxu0 0.0
        %1025 = vmatprep.subr.mxu0 0.0
        %1026 = vmatpush1.msra.mxu0 0.0
        %1027 = vmatprep.subr.mxu0 0.0
        %1028 = vmatpush1.msra.mxu0 0.0
        %1029 = vmatprep.subr.mxu0 0.0
        %1030 = vmatpush1.msra.mxu0 0.0
        %1031 = vmatprep.subr.mxu0 0.0
        %1032 = vmatpush1.msra.mxu0 0.0
        %1033 = vmatprep.subr.mxu0 0.0
        %1034 = vmatpush1.msra.mxu0 0.0
        %1035 = vmatprep.subr.mxu0 0.0
        %1036 = vmatpush1.msra.mxu0 0.0
        %1037 = vmatprep.subr.mxu0 0.0
        %1038 = vmatpush1.msra.mxu0 0.0
        %1039 = vmatprep.subr.mxu0 0.0
        %1040 = vmatpush1.msra.mxu0 0.0
        %1041 = vmatprep.subr.mxu0 0.0
        %1042 = vmatpush1.msra.mxu0 0.0
        %1043 = vmatprep.subr.mxu0 0.0
        %1044 = vmatpush1.msra.mxu0 0.0
        %1045 = vmatprep.subr.mxu0 0.0
        %1046 = vmatpush1.msra.mxu0 0.0
        %1047 = vmatprep.subr.mxu0 0.0
        %1048 = vmatpush1.msra.mxu0 0.0
        %1049 = vmatprep.subr.mxu0 0.0
        %1050 = vmatpush1.msra.mxu0 0.0
        %1051 = vmatprep.subr.mxu0 0.0
        %1052 = vmatpush1.msra.mxu0 0.0
        %1053 = vmatprep.subr.mxu0 0.0
        %1054 = vmatpush1.msra.mxu0 0.0
        %1055 = vmatprep.subr.mxu0 0.0
        %1056 = vmatpush1.msra.mxu0 0.0
        %1057 = vmatprep.subr.mxu0 0.0
        %1058 = vmatpush1.msra.mxu0 0.0
        %1059 = vmatprep.subr.mxu0 0.0
        %1060 = vmatpush1.msra.mxu0 0.0
        %1061 = vmatprep.mubr.f32.mxu0 0.0
        %1062 = vmatmul.mubr.f32.gmra.mrb[0].mxu0 %v854
        %v1063 = vpop.f32.mrb[0].mxu0
        %v1064 = vadd.f32 0.0, %v1063
        %v1065 = vpop.f32.mrb[0].mxu0
        %1066 = vdwg.mxu0
        %1068 = vrot.lane.b32.xlu0 %v926, 124
        %v1069 = vpop.permute.xlu0 %1068
        %1070 = vrot.lane.b32.xlu0 %v926, 120
        %v1071 = vpop.permute.xlu0 %1070
        %1072 = vrot.lane.b32.xlu0 %v926, 116
        %v1073 = vpop.permute.xlu0 %1072
        %1074 = vrot.lane.b32.xlu0 %v926, 112
        %v1075 = vpop.permute.xlu0 %1074
        %1076 = vrot.lane.b32.xlu0 %v926, 108
        %v1077 = vpop.permute.xlu0 %1076
        %1078 = vrot.lane.b32.xlu0 %v926, 104
        %v1079 = vpop.permute.xlu0 %1078
        %1080 = vrot.lane.b32.xlu0 %v926, 100
        %v1081 = vpop.permute.xlu0 %1080
        %1083 = vrot.lane.b32.xlu0 %v994, 124
        %v1084 = vpop.permute.xlu0 %1083
        %1086 = vrot.lane.b32.xlu0 %v994, 120
        %v1087 = vpop.permute.xlu0 %1086
        %1089 = vrot.lane.b32.xlu0 %v994, 116
        %v1090 = vpop.permute.xlu0 %1089
        %1092 = vrot.lane.b32.xlu0 %v994, 112
        %v1093 = vpop.permute.xlu0 %1092
        %1095 = vrot.lane.b32.xlu0 %v994, 108
        %v1096 = vpop.permute.xlu0 %1095
        %1098 = vrot.lane.b32.xlu0 %v994, 104
        %v1099 = vpop.permute.xlu0 %1098
        %1101 = vrot.lane.b32.xlu0 %v994, 100
        %v1102 = vpop.permute.xlu0 %1101
        %1105 = vrot.lane.b32.xlu0 %v1064, 124
        %v1106 = vpop.permute.xlu0 %1105
        %1108 = vrot.lane.b32.xlu0 %v1064, 120
        %v1109 = vpop.permute.xlu0 %1108
        %1111 = vrot.lane.b32.xlu0 %v1064, 116
        %v1112 = vpop.permute.xlu0 %1111
        %1114 = vrot.lane.b32.xlu0 %v1064, 112
        %v1115 = vpop.permute.xlu0 %1114
        %1117 = vrot.lane.b32.xlu0 %v1064, 108
        %v1118 = vpop.permute.xlu0 %1117
        %1120 = vrot.lane.b32.xlu0 %v1064, 104
        %v1121 = vpop.permute.xlu0 %1120
        %1123 = vrot.lane.b32.xlu0 %v1064, 100
        %v1124 = vpop.permute.xlu0 %1123
        %1126 = vxpose.xlu0.b32.start [1/16] %v994, 128
        %1127 = vxpose.xlu0.b32.cont [2/16] 0.0, 128
        %1128 = vxpose.xlu0.b32.cont [3/16] 0.0, 128
        %1129 = vxpose.xlu0.b32.cont [4/16] 0.0, 128
        %1130 = vxpose.xlu0.b32.cont [5/16] 0.0, 128
        %1131 = vxpose.xlu0.b32.cont [6/16] 0.0, 128
        %1132 = vxpose.xlu0.b32.cont [7/16] 0.0, 128
        %1133 = vxpose.xlu0.b32.cont [8/16] 0.0, 128
        %1134 = vxpose.xlu0.b32.cont [9/16] 0.0, 128
        %1135 = vxpose.xlu0.b32.cont [10/16] 0.0, 128
        %1136 = vxpose.xlu0.b32.cont [11/16] 0.0, 128
        %1137 = vxpose.xlu0.b32.cont [12/16] 0.0, 128
        %1138 = vxpose.xlu0.b32.cont [13/16] 0.0, 128
        %1139 = vxpose.xlu0.b32.cont [14/16] 0.0, 128
        %1140 = vxpose.xlu0.b32.cont [15/16] 0.0, 128
        %1141 = vxpose.xlu0.b32.end [16/16] 0.0, 128
        %v1142 = vpop.trf.xlu0
        %v1143 = vpop.trf.xlu0
        %v1144 = vpop.trf.xlu0
        %v1145 = vpop.trf.xlu0
        %v1146 = vpop.trf.xlu0
        %v1147 = vpop.trf.xlu0
        %v1148 = vpop.trf.xlu0
        %v1149 = vpop.trf.xlu0
        %v1150 = vpop.trf.xlu0
        %v1151 = vpop.trf.xlu0
        %v1152 = vpop.trf.xlu0
        %v1153 = vpop.trf.xlu0
        %v1154 = vpop.trf.xlu0
        %v1155 = vpop.trf.xlu0
        %v1156 = vpop.trf.xlu0
        %v1157 = vpop.trf.xlu0
        %1158 = vxpose.xlu0.b32.start [1/16] %v1084, 128
        %1159 = vxpose.xlu0.b32.cont [2/16] 0.0, 128
        %1160 = vxpose.xlu0.b32.cont [3/16] 0.0, 128
        %1161 = vxpose.xlu0.b32.cont [4/16] 0.0, 128
        %1162 = vxpose.xlu0.b32.cont [5/16] 0.0, 128
        %1163 = vxpose.xlu0.b32.cont [6/16] 0.0, 128
        %1164 = vxpose.xlu0.b32.cont [7/16] 0.0, 128
        %1165 = vxpose.xlu0.b32.cont [8/16] 0.0, 128
        %1166 = vxpose.xlu0.b32.cont [9/16] 0.0, 128
        %1167 = vxpose.xlu0.b32.cont [10/16] 0.0, 128
        %1168 = vxpose.xlu0.b32.cont [11/16] 0.0, 128
        %1169 = vxpose.xlu0.b32.cont [12/16] 0.0, 128
        %1170 = vxpose.xlu0.b32.cont [13/16] 0.0, 128
        %1171 = vxpose.xlu0.b32.cont [14/16] 0.0, 128
        %1172 = vxpose.xlu0.b32.cont [15/16] 0.0, 128
        %1173 = vxpose.xlu0.b32.end [16/16] 0.0, 128
        %v1174 = vpop.trf.xlu0
        %v1175 = vpop.trf.xlu0
        %v1176 = vpop.trf.xlu0
        %v1177 = vpop.trf.xlu0
        %v1178 = vpop.trf.xlu0
        %v1179 = vpop.trf.xlu0
        %v1180 = vpop.trf.xlu0
        %v1181 = vpop.trf.xlu0
        %v1182 = vpop.trf.xlu0
        %v1183 = vpop.trf.xlu0
        %v1184 = vpop.trf.xlu0
        %v1185 = vpop.trf.xlu0
        %v1186 = vpop.trf.xlu0
        %v1187 = vpop.trf.xlu0
        %v1188 = vpop.trf.xlu0
        %v1189 = vpop.trf.xlu0
        %1190 = vxpose.xlu0.b32.start [1/16] %v1087, 128
        %1191 = vxpose.xlu0.b32.cont [2/16] 0.0, 128
        %1192 = vxpose.xlu0.b32.cont [3/16] 0.0, 128
        %1193 = vxpose.xlu0.b32.cont [4/16] 0.0, 128
        %1194 = vxpose.xlu0.b32.cont [5/16] 0.0, 128
        %1195 = vxpose.xlu0.b32.cont [6/16] 0.0, 128
        %1196 = vxpose.xlu0.b32.cont [7/16] 0.0, 128
        %1197 = vxpose.xlu0.b32.cont [8/16] 0.0, 128
        %1198 = vxpose.xlu0.b32.cont [9/16] 0.0, 128
        %1199 = vxpose.xlu0.b32.cont [10/16] 0.0, 128
        %1200 = vxpose.xlu0.b32.cont [11/16] 0.0, 128
        %1201 = vxpose.xlu0.b32.cont [12/16] 0.0, 128
        %1202 = vxpose.xlu0.b32.cont [13/16] 0.0, 128
        %1203 = vxpose.xlu0.b32.cont [14/16] 0.0, 128
        %1204 = vxpose.xlu0.b32.cont [15/16] 0.0, 128
        %1205 = vxpose.xlu0.b32.end [16/16] 0.0, 128
        %v1206 = vpop.trf.xlu0
        %v1207 = vpop.trf.xlu0
        %v1208 = vpop.trf.xlu0
        %v1209 = vpop.trf.xlu0
        %v1210 = vpop.trf.xlu0
        %v1211 = vpop.trf.xlu0
        %v1212 = vpop.trf.xlu0
        %v1213 = vpop.trf.xlu0
        %v1214 = vpop.trf.xlu0
        %v1215 = vpop.trf.xlu0
        %v1216 = vpop.trf.xlu0
        %v1217 = vpop.trf.xlu0
        %v1218 = vpop.trf.xlu0
        %v1219 = vpop.trf.xlu0
        %v1220 = vpop.trf.xlu0
        %v1221 = vpop.trf.xlu0
        %1222 = vxpose.xlu0.b32.start [1/16] %v1090, 128
        %1223 = vxpose.xlu0.b32.cont [2/16] 0.0, 128
        %1224 = vxpose.xlu0.b32.cont [3/16] 0.0, 128
        %1225 = vxpose.xlu0.b32.cont [4/16] 0.0, 128
        %1226 = vxpose.xlu0.b32.cont [5/16] 0.0, 128
        %1227 = vxpose.xlu0.b32.cont [6/16] 0.0, 128
        %1228 = vxpose.xlu0.b32.cont [7/16] 0.0, 128
        %1229 = vxpose.xlu0.b32.cont [8/16] 0.0, 128
        %1230 = vxpose.xlu0.b32.cont [9/16] 0.0, 128
        %1231 = vxpose.xlu0.b32.cont [10/16] 0.0, 128
        %1232 = vxpose.xlu0.b32.cont [11/16] 0.0, 128
        %1233 = vxpose.xlu0.b32.cont [12/16] 0.0, 128
        %1234 = vxpose.xlu0.b32.cont [13/16] 0.0, 128
        %1235 = vxpose.xlu0.b32.cont [14/16] 0.0, 128
        %1236 = vxpose.xlu0.b32.cont [15/16] 0.0, 128
        %1237 = vxpose.xlu0.b32.end [16/16] 0.0, 128
        %v1238 = vpop.trf.xlu0
        %v1239 = vpop.trf.xlu0
        %v1240 = vpop.trf.xlu0
        %v1241 = vpop.trf.xlu0
        %v1242 = vpop.trf.xlu0
        %v1243 = vpop.trf.xlu0
        %v1244 = vpop.trf.xlu0
        %v1245 = vpop.trf.xlu0
        %v1246 = vpop.trf.xlu0
        %v1247 = vpop.trf.xlu0
        %v1248 = vpop.trf.xlu0
        %v1249 = vpop.trf.xlu0
        %v1250 = vpop.trf.xlu0
        %v1251 = vpop.trf.xlu0
        %v1252 = vpop.trf.xlu0
        %v1253 = vpop.trf.xlu0
        %1254 = vxpose.xlu0.b32.start [1/16] %v1093, 128
        %1255 = vxpose.xlu0.b32.cont [2/16] 0.0, 128
        %1256 = vxpose.xlu0.b32.cont [3/16] 0.0, 128
        %1257 = vxpose.xlu0.b32.cont [4/16] 0.0, 128
        %1258 = vxpose.xlu0.b32.cont [5/16] 0.0, 128
        %1259 = vxpose.xlu0.b32.cont [6/16] 0.0, 128
        %1260 = vxpose.xlu0.b32.cont [7/16] 0.0, 128
        %1261 = vxpose.xlu0.b32.cont [8/16] 0.0, 128
        %1262 = vxpose.xlu0.b32.cont [9/16] 0.0, 128
        %1263 = vxpose.xlu0.b32.cont [10/16] 0.0, 128
        %1264 = vxpose.xlu0.b32.cont [11/16] 0.0, 128
        %1265 = vxpose.xlu0.b32.cont [12/16] 0.0, 128
        %1266 = vxpose.xlu0.b32.cont [13/16] 0.0, 128
        %1267 = vxpose.xlu0.b32.cont [14/16] 0.0, 128
        %1268 = vxpose.xlu0.b32.cont [15/16] 0.0, 128
        %1269 = vxpose.xlu0.b32.end [16/16] 0.0, 128
        %v1270 = vpop.trf.xlu0
        %v1271 = vpop.trf.xlu0
        %v1272 = vpop.trf.xlu0
        %v1273 = vpop.trf.xlu0
        %v1274 = vpop.trf.xlu0
        %v1275 = vpop.trf.xlu0
        %v1276 = vpop.trf.xlu0
        %v1277 = vpop.trf.xlu0
        %v1278 = vpop.trf.xlu0
        %v1279 = vpop.trf.xlu0
        %v1280 = vpop.trf.xlu0
        %v1281 = vpop.trf.xlu0
        %v1282 = vpop.trf.xlu0
        %v1283 = vpop.trf.xlu0
        %v1284 = vpop.trf.xlu0
        %v1285 = vpop.trf.xlu0
        %1286 = vxpose.xlu0.b32.start [1/16] %v1096, 128
        %1287 = vxpose.xlu0.b32.cont [2/16] 0.0, 128
        %1288 = vxpose.xlu0.b32.cont [3/16] 0.0, 128
        %1289 = vxpose.xlu0.b32.cont [4/16] 0.0, 128
        %1290 = vxpose.xlu0.b32.cont [5/16] 0.0, 128
        %1291 = vxpose.xlu0.b32.cont [6/16] 0.0, 128
        %1292 = vxpose.xlu0.b32.cont [7/16] 0.0, 128
        %1293 = vxpose.xlu0.b32.cont [8/16] 0.0, 128
        %1294 = vxpose.xlu0.b32.cont [9/16] 0.0, 128
        %1295 = vxpose.xlu0.b32.cont [10/16] 0.0, 128
        %1296 = vxpose.xlu0.b32.cont [11/16] 0.0, 128
        %1297 = vxpose.xlu0.b32.cont [12/16] 0.0, 128
        %1298 = vxpose.xlu0.b32.cont [13/16] 0.0, 128
        %1299 = vxpose.xlu0.b32.cont [14/16] 0.0, 128
        %1300 = vxpose.xlu0.b32.cont [15/16] 0.0, 128
        %1301 = vxpose.xlu0.b32.end [16/16] 0.0, 128
        %v1302 = vpop.trf.xlu0
        %v1303 = vpop.trf.xlu0
        %v1304 = vpop.trf.xlu0
        %v1305 = vpop.trf.xlu0
        %v1306 = vpop.trf.xlu0
        %v1307 = vpop.trf.xlu0
        %v1308 = vpop.trf.xlu0
        %v1309 = vpop.trf.xlu0
        %v1310 = vpop.trf.xlu0
        %v1311 = vpop.trf.xlu0
        %v1312 = vpop.trf.xlu0
        %v1313 = vpop.trf.xlu0
        %v1314 = vpop.trf.xlu0
        %v1315 = vpop.trf.xlu0
        %v1316 = vpop.trf.xlu0
        %v1317 = vpop.trf.xlu0
        %1318 = vxpose.xlu0.b32.start [1/16] %v1099, 128
        %1319 = vxpose.xlu0.b32.cont [2/16] 0.0, 128
        %1320 = vxpose.xlu0.b32.cont [3/16] 0.0, 128
        %1321 = vxpose.xlu0.b32.cont [4/16] 0.0, 128
        %1322 = vxpose.xlu0.b32.cont [5/16] 0.0, 128
        %1323 = vxpose.xlu0.b32.cont [6/16] 0.0, 128
        %1324 = vxpose.xlu0.b32.cont [7/16] 0.0, 128
        %1325 = vxpose.xlu0.b32.cont [8/16] 0.0, 128
        %1326 = vxpose.xlu0.b32.cont [9/16] 0.0, 128
        %1327 = vxpose.xlu0.b32.cont [10/16] 0.0, 128
        %1328 = vxpose.xlu0.b32.cont [11/16] 0.0, 128
        %1329 = vxpose.xlu0.b32.cont [12/16] 0.0, 128
        %1330 = vxpose.xlu0.b32.cont [13/16] 0.0, 128
        %1331 = vxpose.xlu0.b32.cont [14/16] 0.0, 128
        %1332 = vxpose.xlu0.b32.cont [15/16] 0.0, 128
        %1333 = vxpose.xlu0.b32.end [16/16] 0.0, 128
        %v1334 = vpop.trf.xlu0
        %v1335 = vpop.trf.xlu0
        %v1336 = vpop.trf.xlu0
        %v1337 = vpop.trf.xlu0
        %v1338 = vpop.trf.xlu0
        %v1339 = vpop.trf.xlu0
        %v1340 = vpop.trf.xlu0
        %v1341 = vpop.trf.xlu0
        %v1342 = vpop.trf.xlu0
        %v1343 = vpop.trf.xlu0
        %v1344 = vpop.trf.xlu0
        %v1345 = vpop.trf.xlu0
        %v1346 = vpop.trf.xlu0
        %v1347 = vpop.trf.xlu0
        %v1348 = vpop.trf.xlu0
        %v1349 = vpop.trf.xlu0
        %1350 = vxpose.xlu0.b32.start [1/16] %v1102, 128
        %1351 = vxpose.xlu0.b32.cont [2/16] 0.0, 128
        %1352 = vxpose.xlu0.b32.cont [3/16] 0.0, 128
        %1353 = vxpose.xlu0.b32.cont [4/16] 0.0, 128
        %1354 = vxpose.xlu0.b32.cont [5/16] 0.0, 128
        %1355 = vxpose.xlu0.b32.cont [6/16] 0.0, 128
        %1356 = vxpose.xlu0.b32.cont [7/16] 0.0, 128
        %1357 = vxpose.xlu0.b32.cont [8/16] 0.0, 128
        %1358 = vxpose.xlu0.b32.cont [9/16] 0.0, 128
        %1359 = vxpose.xlu0.b32.cont [10/16] 0.0, 128
        %1360 = vxpose.xlu0.b32.cont [11/16] 0.0, 128
        %1361 = vxpose.xlu0.b32.cont [12/16] 0.0, 128
        %1362 = vxpose.xlu0.b32.cont [13/16] 0.0, 128
        %1363 = vxpose.xlu0.b32.cont [14/16] 0.0, 128
        %1364 = vxpose.xlu0.b32.cont [15/16] 0.0, 128
        %1365 = vxpose.xlu0.b32.end [16/16] 0.0, 128
        %v1366 = vpop.trf.xlu0
        %v1367 = vpop.trf.xlu0
        %v1368 = vpop.trf.xlu0
        %v1369 = vpop.trf.xlu0
        %v1370 = vpop.trf.xlu0
        %v1371 = vpop.trf.xlu0
        %v1372 = vpop.trf.xlu0
        %v1373 = vpop.trf.xlu0
        %v1374 = vpop.trf.xlu0
        %v1375 = vpop.trf.xlu0
        %v1376 = vpop.trf.xlu0
        %v1377 = vpop.trf.xlu0
        %v1378 = vpop.trf.xlu0
        %v1379 = vpop.trf.xlu0
        %v1380 = vpop.trf.xlu0
        %v1381 = vpop.trf.xlu0
        %vm1382 = vcmask 31744
        %v1383 = vsel %vm1382, %v926, 0
        %vm1385 = vcmask 1043456
        %v1387 = vsel %vm1385, %v1142, 0
        %1389 = vmatprep.subr.mxu0 0.0
        %1390 = vmatpush1.msra.mxu0 %v1387
        %1391 = vmatprep.subr.mxu0 0.0
        %1392 = vmatpush1.msra.mxu0 0.0
        %1393 = vmatprep.subr.mxu0 0.0
        %1394 = vmatpush1.msra.mxu0 0.0
        %1395 = vmatprep.subr.mxu0 0.0
        %1396 = vmatpush1.msra.mxu0 0.0
        %1397 = vmatprep.subr.mxu0 0.0
        %1398 = vmatpush1.msra.mxu0 0.0
        %1399 = vmatprep.subr.mxu0 0.0
        %1400 = vmatpush1.msra.mxu0 0.0
        %1401 = vmatprep.subr.mxu0 0.0
        %1402 = vmatpush1.msra.mxu0 0.0
        %1403 = vmatprep.subr.mxu0 0.0
        %1404 = vmatpush1.msra.mxu0 0.0
        %1405 = vmatprep.subr.mxu0 0.0
        %1406 = vmatpush1.msra.mxu0 0.0
        %1407 = vmatprep.subr.mxu0 0.0
        %1408 = vmatpush1.msra.mxu0 0.0
        %1409 = vmatprep.subr.mxu0 0.0
        %1410 = vmatpush1.msra.mxu0 0.0
        %1411 = vmatprep.subr.mxu0 0.0
        %1412 = vmatpush1.msra.mxu0 0.0
        %1413 = vmatprep.subr.mxu0 0.0
        %1414 = vmatpush1.msra.mxu0 0.0
        %1415 = vmatprep.subr.mxu0 0.0
        %1416 = vmatpush1.msra.mxu0 0.0
        %1417 = vmatprep.subr.mxu0 0.0
        %1418 = vmatpush1.msra.mxu0 0.0
        %1419 = vmatprep.subr.mxu0 0.0
        %1420 = vmatpush1.msra.mxu0 0.0
        %1421 = vmatprep.subr.mxu0 0.0
        %1422 = vmatpush1.msra.mxu0 0.0
        %1423 = vmatprep.subr.mxu0 0.0
        %1424 = vmatpush1.msra.mxu0 0.0
        %1425 = vmatprep.subr.mxu0 0.0
        %1426 = vmatpush1.msra.mxu0 0.0
        %1427 = vmatprep.subr.mxu0 0.0
        %1428 = vmatpush1.msra.mxu0 0.0
        %1429 = vmatprep.subr.mxu0 0.0
        %1430 = vmatpush1.msra.mxu0 0.0
        %1431 = vmatprep.subr.mxu0 0.0
        %1432 = vmatpush1.msra.mxu0 0.0
        %1433 = vmatprep.subr.mxu0 0.0
        %1434 = vmatpush1.msra.mxu0 0.0
        %1435 = vmatprep.subr.mxu0 0.0
        %1436 = vmatpush1.msra.mxu0 0.0
        %1437 = vmatprep.subr.mxu0 0.0
        %1438 = vmatpush1.msra.mxu0 0.0
        %1439 = vmatprep.subr.mxu0 0.0
        %1440 = vmatpush1.msra.mxu0 0.0
        %1441 = vmatprep.subr.mxu0 0.0
        %1442 = vmatpush1.msra.mxu0 0.0
        %1443 = vmatprep.subr.mxu0 0.0
        %1444 = vmatpush1.msra.mxu0 0.0
        %1445 = vmatprep.subr.mxu0 0.0
        %1446 = vmatpush1.msra.mxu0 0.0
        %1447 = vmatprep.subr.mxu0 0.0
        %1448 = vmatpush1.msra.mxu0 0.0
        %1449 = vmatprep.subr.mxu0 0.0
        %1450 = vmatpush1.msra.mxu0 0.0
        %1451 = vmatprep.subr.mxu0 0.0
        %1452 = vmatpush1.msra.mxu0 0.0
        %1453 = vmatprep.mubr.f32.mxu0 0.0
        %1454 = vmatmul.mubr.f32.gmra.mrb[0].mxu0 %v1383
        %v1455 = vpop.f32.mrb[0].mxu0
        %v1456 = vadd.f32 0.0, %v1455
        %v1457 = vpop.f32.mrb[0].mxu0
        %1458 = vdwg.mxu0
        %v1459 = vsel %vm1382, %v1069, 0
        %v1462 = vsel %vm1385, %v1174, 0
        %1464 = vmatprep.subr.mxu0 0.0
        %1465 = vmatpush1.msra.mxu0 %v1462
        %1466 = vmatprep.subr.mxu0 0.0
        %1467 = vmatpush1.msra.mxu0 0.0
        %1468 = vmatprep.subr.mxu0 0.0
        %1469 = vmatpush1.msra.mxu0 0.0
        %1470 = vmatprep.subr.mxu0 0.0
        %1471 = vmatpush1.msra.mxu0 0.0
        %1472 = vmatprep.subr.mxu0 0.0
        %1473 = vmatpush1.msra.mxu0 0.0
        %1474 = vmatprep.subr.mxu0 0.0
        %1475 = vmatpush1.msra.mxu0 0.0
        %1476 = vmatprep.subr.mxu0 0.0
        %1477 = vmatpush1.msra.mxu0 0.0
        %1478 = vmatprep.subr.mxu0 0.0
        %1479 = vmatpush1.msra.mxu0 0.0
        %1480 = vmatprep.subr.mxu0 0.0
        %1481 = vmatpush1.msra.mxu0 0.0
        %1482 = vmatprep.subr.mxu0 0.0
        %1483 = vmatpush1.msra.mxu0 0.0
        %1484 = vmatprep.subr.mxu0 0.0
        %1485 = vmatpush1.msra.mxu0 0.0
        %1486 = vmatprep.subr.mxu0 0.0
        %1487 = vmatpush1.msra.mxu0 0.0
        %1488 = vmatprep.subr.mxu0 0.0
        %1489 = vmatpush1.msra.mxu0 0.0
        %1490 = vmatprep.subr.mxu0 0.0
        %1491 = vmatpush1.msra.mxu0 0.0
        %1492 = vmatprep.subr.mxu0 0.0
        %1493 = vmatpush1.msra.mxu0 0.0
        %1494 = vmatprep.subr.mxu0 0.0
        %1495 = vmatpush1.msra.mxu0 0.0
        %1496 = vmatprep.subr.mxu0 0.0
        %1497 = vmatpush1.msra.mxu0 0.0
        %1498 = vmatprep.subr.mxu0 0.0
        %1499 = vmatpush1.msra.mxu0 0.0
        %1500 = vmatprep.subr.mxu0 0.0
        %1501 = vmatpush1.msra.mxu0 0.0
        %1502 = vmatprep.subr.mxu0 0.0
        %1503 = vmatpush1.msra.mxu0 0.0
        %1504 = vmatprep.subr.mxu0 0.0
        %1505 = vmatpush1.msra.mxu0 0.0
        %1506 = vmatprep.subr.mxu0 0.0
        %1507 = vmatpush1.msra.mxu0 0.0
        %1508 = vmatprep.subr.mxu0 0.0
        %1509 = vmatpush1.msra.mxu0 0.0
        %1510 = vmatprep.subr.mxu0 0.0
        %1511 = vmatpush1.msra.mxu0 0.0
        %1512 = vmatprep.subr.mxu0 0.0
        %1513 = vmatpush1.msra.mxu0 0.0
        %1514 = vmatprep.subr.mxu0 0.0
        %1515 = vmatpush1.msra.mxu0 0.0
        %1516 = vmatprep.subr.mxu0 0.0
        %1517 = vmatpush1.msra.mxu0 0.0
        %1518 = vmatprep.subr.mxu0 0.0
        %1519 = vmatpush1.msra.mxu0 0.0
        %1520 = vmatprep.subr.mxu0 0.0
        %1521 = vmatpush1.msra.mxu0 0.0
        %1522 = vmatprep.subr.mxu0 0.0
        %1523 = vmatpush1.msra.mxu0 0.0
        %1524 = vmatprep.subr.mxu0 0.0
        %1525 = vmatpush1.msra.mxu0 0.0
        %1526 = vmatprep.subr.mxu0 0.0
        %1527 = vmatpush1.msra.mxu0 0.0
        %1528 = vmatprep.mubr.f32.mxu0 0.0
        %1529 = vmatmul.mubr.f32.gmra.mrb[0].mxu0 %v1459
        %v1530 = vpop.f32.mrb[0].mxu0
        %v1531 = vadd.f32 0.0, %v1530
        %v1532 = vpop.f32.mrb[0].mxu0
        %1533 = vdwg.mxu0
        %v1534 = vsel %vm1382, %v1071, 0
        %v1537 = vsel %vm1385, %v1206, 0
        %1539 = vmatprep.subr.mxu0 0.0
        %1540 = vmatpush1.msra.mxu0 %v1537
        %1541 = vmatprep.subr.mxu0 0.0
        %1542 = vmatpush1.msra.mxu0 0.0
        %1543 = vmatprep.subr.mxu0 0.0
        %1544 = vmatpush1.msra.mxu0 0.0
        %1545 = vmatprep.subr.mxu0 0.0
        %1546 = vmatpush1.msra.mxu0 0.0
        %1547 = vmatprep.subr.mxu0 0.0
        %1548 = vmatpush1.msra.mxu0 0.0
        %1549 = vmatprep.subr.mxu0 0.0
        %1550 = vmatpush1.msra.mxu0 0.0
        %1551 = vmatprep.subr.mxu0 0.0
        %1552 = vmatpush1.msra.mxu0 0.0
        %1553 = vmatprep.subr.mxu0 0.0
        %1554 = vmatpush1.msra.mxu0 0.0
        %1555 = vmatprep.subr.mxu0 0.0
        %1556 = vmatpush1.msra.mxu0 0.0
        %1557 = vmatprep.subr.mxu0 0.0
        %1558 = vmatpush1.msra.mxu0 0.0
        %1559 = vmatprep.subr.mxu0 0.0
        %1560 = vmatpush1.msra.mxu0 0.0
        %1561 = vmatprep.subr.mxu0 0.0
        %1562 = vmatpush1.msra.mxu0 0.0
        %1563 = vmatprep.subr.mxu0 0.0
        %1564 = vmatpush1.msra.mxu0 0.0
        %1565 = vmatprep.subr.mxu0 0.0
        %1566 = vmatpush1.msra.mxu0 0.0
        %1567 = vmatprep.subr.mxu0 0.0
        %1568 = vmatpush1.msra.mxu0 0.0
        %1569 = vmatprep.subr.mxu0 0.0
        %1570 = vmatpush1.msra.mxu0 0.0
        %1571 = vmatprep.subr.mxu0 0.0
        %1572 = vmatpush1.msra.mxu0 0.0
        %1573 = vmatprep.subr.mxu0 0.0
        %1574 = vmatpush1.msra.mxu0 0.0
        %1575 = vmatprep.subr.mxu0 0.0
        %1576 = vmatpush1.msra.mxu0 0.0
        %1577 = vmatprep.subr.mxu0 0.0
        %1578 = vmatpush1.msra.mxu0 0.0
        %1579 = vmatprep.subr.mxu0 0.0
        %1580 = vmatpush1.msra.mxu0 0.0
        %1581 = vmatprep.subr.mxu0 0.0
        %1582 = vmatpush1.msra.mxu0 0.0
        %1583 = vmatprep.subr.mxu0 0.0
        %1584 = vmatpush1.msra.mxu0 0.0
        %1585 = vmatprep.subr.mxu0 0.0
        %1586 = vmatpush1.msra.mxu0 0.0
        %1587 = vmatprep.subr.mxu0 0.0
        %1588 = vmatpush1.msra.mxu0 0.0
        %1589 = vmatprep.subr.mxu0 0.0
        %1590 = vmatpush1.msra.mxu0 0.0
        %1591 = vmatprep.subr.mxu0 0.0
        %1592 = vmatpush1.msra.mxu0 0.0
        %1593 = vmatprep.subr.mxu0 0.0
        %1594 = vmatpush1.msra.mxu0 0.0
        %1595 = vmatprep.subr.mxu0 0.0
        %1596 = vmatpush1.msra.mxu0 0.0
        %1597 = vmatprep.subr.mxu0 0.0
        %1598 = vmatpush1.msra.mxu0 0.0
        %1599 = vmatprep.subr.mxu0 0.0
        %1600 = vmatpush1.msra.mxu0 0.0
        %1601 = vmatprep.subr.mxu0 0.0
        %1602 = vmatpush1.msra.mxu0 0.0
        %1603 = vmatprep.mubr.f32.mxu0 0.0
        %1604 = vmatmul.mubr.f32.gmra.mrb[0].mxu0 %v1534
        %v1605 = vpop.f32.mrb[0].mxu0
        %v1606 = vadd.f32 0.0, %v1605
        %v1607 = vpop.f32.mrb[0].mxu0
        %1608 = vdwg.mxu0
        %v1609 = vsel %vm1382, %v1073, 0
        %v1612 = vsel %vm1385, %v1238, 0
        %1614 = vmatprep.subr.mxu0 0.0
        %1615 = vmatpush1.msra.mxu0 %v1612
        %1616 = vmatprep.subr.mxu0 0.0
        %1617 = vmatpush1.msra.mxu0 0.0
        %1618 = vmatprep.subr.mxu0 0.0
        %1619 = vmatpush1.msra.mxu0 0.0
        %1620 = vmatprep.subr.mxu0 0.0
        %1621 = vmatpush1.msra.mxu0 0.0
        %1622 = vmatprep.subr.mxu0 0.0
        %1623 = vmatpush1.msra.mxu0 0.0
        %1624 = vmatprep.subr.mxu0 0.0
        %1625 = vmatpush1.msra.mxu0 0.0
        %1626 = vmatprep.subr.mxu0 0.0
        %1627 = vmatpush1.msra.mxu0 0.0
        %1628 = vmatprep.subr.mxu0 0.0
        %1629 = vmatpush1.msra.mxu0 0.0
        %1630 = vmatprep.subr.mxu0 0.0
        %1631 = vmatpush1.msra.mxu0 0.0
        %1632 = vmatprep.subr.mxu0 0.0
        %1633 = vmatpush1.msra.mxu0 0.0
        %1634 = vmatprep.subr.mxu0 0.0
        %1635 = vmatpush1.msra.mxu0 0.0
        %1636 = vmatprep.subr.mxu0 0.0
        %1637 = vmatpush1.msra.mxu0 0.0
        %1638 = vmatprep.subr.mxu0 0.0
        %1639 = vmatpush1.msra.mxu0 0.0
        %1640 = vmatprep.subr.mxu0 0.0
        %1641 = vmatpush1.msra.mxu0 0.0
        %1642 = vmatprep.subr.mxu0 0.0
        %1643 = vmatpush1.msra.mxu0 0.0
        %1644 = vmatprep.subr.mxu0 0.0
        %1645 = vmatpush1.msra.mxu0 0.0
        %1646 = vmatprep.subr.mxu0 0.0
        %1647 = vmatpush1.msra.mxu0 0.0
        %1648 = vmatprep.subr.mxu0 0.0
        %1649 = vmatpush1.msra.mxu0 0.0
        %1650 = vmatprep.subr.mxu0 0.0
        %1651 = vmatpush1.msra.mxu0 0.0
        %1652 = vmatprep.subr.mxu0 0.0
        %1653 = vmatpush1.msra.mxu0 0.0
        %1654 = vmatprep.subr.mxu0 0.0
        %1655 = vmatpush1.msra.mxu0 0.0
        %1656 = vmatprep.subr.mxu0 0.0
        %1657 = vmatpush1.msra.mxu0 0.0
        %1658 = vmatprep.subr.mxu0 0.0
        %1659 = vmatpush1.msra.mxu0 0.0
        %1660 = vmatprep.subr.mxu0 0.0
        %1661 = vmatpush1.msra.mxu0 0.0
        %1662 = vmatprep.subr.mxu0 0.0
        %1663 = vmatpush1.msra.mxu0 0.0
        %1664 = vmatprep.subr.mxu0 0.0
        %1665 = vmatpush1.msra.mxu0 0.0
        %1666 = vmatprep.subr.mxu0 0.0
        %1667 = vmatpush1.msra.mxu0 0.0
        %1668 = vmatprep.subr.mxu0 0.0
        %1669 = vmatpush1.msra.mxu0 0.0
        %1670 = vmatprep.subr.mxu0 0.0
        %1671 = vmatpush1.msra.mxu0 0.0
        %1672 = vmatprep.subr.mxu0 0.0
        %1673 = vmatpush1.msra.mxu0 0.0
        %1674 = vmatprep.subr.mxu0 0.0
        %1675 = vmatpush1.msra.mxu0 0.0
        %1676 = vmatprep.subr.mxu0 0.0
        %1677 = vmatpush1.msra.mxu0 0.0
        %1678 = vmatprep.mubr.f32.mxu0 0.0
        %1679 = vmatmul.mubr.f32.gmra.mrb[0].mxu0 %v1609
        %v1680 = vpop.f32.mrb[0].mxu0
        %v1681 = vadd.f32 0.0, %v1680
        %v1682 = vpop.f32.mrb[0].mxu0
        %1683 = vdwg.mxu0
        %v1684 = vsel %vm1382, %v1075, 0
        %v1687 = vsel %vm1385, %v1270, 0
        %1689 = vmatprep.subr.mxu0 0.0
        %1690 = vmatpush1.msra.mxu0 %v1687
        %1691 = vmatprep.subr.mxu0 0.0
        %1692 = vmatpush1.msra.mxu0 0.0
        %1693 = vmatprep.subr.mxu0 0.0
        %1694 = vmatpush1.msra.mxu0 0.0
        %1695 = vmatprep.subr.mxu0 0.0
        %1696 = vmatpush1.msra.mxu0 0.0
        %1697 = vmatprep.subr.mxu0 0.0
        %1698 = vmatpush1.msra.mxu0 0.0
        %1699 = vmatprep.subr.mxu0 0.0
        %1700 = vmatpush1.msra.mxu0 0.0
        %1701 = vmatprep.subr.mxu0 0.0
        %1702 = vmatpush1.msra.mxu0 0.0
        %1703 = vmatprep.subr.mxu0 0.0
        %1704 = vmatpush1.msra.mxu0 0.0
        %1705 = vmatprep.subr.mxu0 0.0
        %1706 = vmatpush1.msra.mxu0 0.0
        %1707 = vmatprep.subr.mxu0 0.0
        %1708 = vmatpush1.msra.mxu0 0.0
        %1709 = vmatprep.subr.mxu0 0.0
        %1710 = vmatpush1.msra.mxu0 0.0
        %1711 = vmatprep.subr.mxu0 0.0
        %1712 = vmatpush1.msra.mxu0 0.0
        %1713 = vmatprep.subr.mxu0 0.0
        %1714 = vmatpush1.msra.mxu0 0.0
        %1715 = vmatprep.subr.mxu0 0.0
        %1716 = vmatpush1.msra.mxu0 0.0
        %1717 = vmatprep.subr.mxu0 0.0
        %1718 = vmatpush1.msra.mxu0 0.0
        %1719 = vmatprep.subr.mxu0 0.0
        %1720 = vmatpush1.msra.mxu0 0.0
        %1721 = vmatprep.subr.mxu0 0.0
        %1722 = vmatpush1.msra.mxu0 0.0
        %1723 = vmatprep.subr.mxu0 0.0
        %1724 = vmatpush1.msra.mxu0 0.0
        %1725 = vmatprep.subr.mxu0 0.0
        %1726 = vmatpush1.msra.mxu0 0.0
        %1727 = vmatprep.subr.mxu0 0.0
        %1728 = vmatpush1.msra.mxu0 0.0
        %1729 = vmatprep.subr.mxu0 0.0
        %1730 = vmatpush1.msra.mxu0 0.0
        %1731 = vmatprep.subr.mxu0 0.0
        %1732 = vmatpush1.msra.mxu0 0.0
        %1733 = vmatprep.subr.mxu0 0.0
        %1734 = vmatpush1.msra.mxu0 0.0
        %1735 = vmatprep.subr.mxu0 0.0
        %1736 = vmatpush1.msra.mxu0 0.0
        %1737 = vmatprep.subr.mxu0 0.0
        %1738 = vmatpush1.msra.mxu0 0.0
        %1739 = vmatprep.subr.mxu0 0.0
        %1740 = vmatpush1.msra.mxu0 0.0
        %1741 = vmatprep.subr.mxu0 0.0
        %1742 = vmatpush1.msra.mxu0 0.0
        %1743 = vmatprep.subr.mxu0 0.0
        %1744 = vmatpush1.msra.mxu0 0.0
        %1745 = vmatprep.subr.mxu0 0.0
        %1746 = vmatpush1.msra.mxu0 0.0
        %1747 = vmatprep.subr.mxu0 0.0
        %1748 = vmatpush1.msra.mxu0 0.0
        %1749 = vmatprep.subr.mxu0 0.0
        %1750 = vmatpush1.msra.mxu0 0.0
        %1751 = vmatprep.subr.mxu0 0.0
        %1752 = vmatpush1.msra.mxu0 0.0
        %1753 = vmatprep.mubr.f32.mxu0 0.0
        %1754 = vmatmul.mubr.f32.gmra.mrb[0].mxu0 %v1684
        %v1755 = vpop.f32.mrb[0].mxu0
        %v1756 = vadd.f32 0.0, %v1755
        %v1757 = vpop.f32.mrb[0].mxu0
        %1758 = vdwg.mxu0
        %v1759 = vsel %vm1382, %v1077, 0
        %v1762 = vsel %vm1385, %v1302, 0
        %1764 = vmatprep.subr.mxu0 0.0
        %1765 = vmatpush1.msra.mxu0 %v1762
        %1766 = vmatprep.subr.mxu0 0.0
        %1767 = vmatpush1.msra.mxu0 0.0
        %1768 = vmatprep.subr.mxu0 0.0
        %1769 = vmatpush1.msra.mxu0 0.0
        %1770 = vmatprep.subr.mxu0 0.0
        %1771 = vmatpush1.msra.mxu0 0.0
        %1772 = vmatprep.subr.mxu0 0.0
        %1773 = vmatpush1.msra.mxu0 0.0
        %1774 = vmatprep.subr.mxu0 0.0
        %1775 = vmatpush1.msra.mxu0 0.0
        %1776 = vmatprep.subr.mxu0 0.0
        %1777 = vmatpush1.msra.mxu0 0.0
        %1778 = vmatprep.subr.mxu0 0.0
        %1779 = vmatpush1.msra.mxu0 0.0
        %1780 = vmatprep.subr.mxu0 0.0
        %1781 = vmatpush1.msra.mxu0 0.0
        %1782 = vmatprep.subr.mxu0 0.0
        %1783 = vmatpush1.msra.mxu0 0.0
        %1784 = vmatprep.subr.mxu0 0.0
        %1785 = vmatpush1.msra.mxu0 0.0
        %1786 = vmatprep.subr.mxu0 0.0
        %1787 = vmatpush1.msra.mxu0 0.0
        %1788 = vmatprep.subr.mxu0 0.0
        %1789 = vmatpush1.msra.mxu0 0.0
        %1790 = vmatprep.subr.mxu0 0.0
        %1791 = vmatpush1.msra.mxu0 0.0
        %1792 = vmatprep.subr.mxu0 0.0
        %1793 = vmatpush1.msra.mxu0 0.0
        %1794 = vmatprep.subr.mxu0 0.0
        %1795 = vmatpush1.msra.mxu0 0.0
        %1796 = vmatprep.subr.mxu0 0.0
        %1797 = vmatpush1.msra.mxu0 0.0
        %1798 = vmatprep.subr.mxu0 0.0
        %1799 = vmatpush1.msra.mxu0 0.0
        %1800 = vmatprep.subr.mxu0 0.0
        %1801 = vmatpush1.msra.mxu0 0.0
        %1802 = vmatprep.subr.mxu0 0.0
        %1803 = vmatpush1.msra.mxu0 0.0
        %1804 = vmatprep.subr.mxu0 0.0
        %1805 = vmatpush1.msra.mxu0 0.0
        %1806 = vmatprep.subr.mxu0 0.0
        %1807 = vmatpush1.msra.mxu0 0.0
        %1808 = vmatprep.subr.mxu0 0.0
        %1809 = vmatpush1.msra.mxu0 0.0
        %1810 = vmatprep.subr.mxu0 0.0
        %1811 = vmatpush1.msra.mxu0 0.0
        %1812 = vmatprep.subr.mxu0 0.0
        %1813 = vmatpush1.msra.mxu0 0.0
        %1814 = vmatprep.subr.mxu0 0.0
        %1815 = vmatpush1.msra.mxu0 0.0
        %1816 = vmatprep.subr.mxu0 0.0
        %1817 = vmatpush1.msra.mxu0 0.0
        %1818 = vmatprep.subr.mxu0 0.0
        %1819 = vmatpush1.msra.mxu0 0.0
        %1820 = vmatprep.subr.mxu0 0.0
        %1821 = vmatpush1.msra.mxu0 0.0
        %1822 = vmatprep.subr.mxu0 0.0
        %1823 = vmatpush1.msra.mxu0 0.0
        %1824 = vmatprep.subr.mxu0 0.0
        %1825 = vmatpush1.msra.mxu0 0.0
        %1826 = vmatprep.subr.mxu0 0.0
        %1827 = vmatpush1.msra.mxu0 0.0
        %1828 = vmatprep.mubr.f32.mxu0 0.0
        %1829 = vmatmul.mubr.f32.gmra.mrb[0].mxu0 %v1759
        %v1830 = vpop.f32.mrb[0].mxu0
        %v1831 = vadd.f32 0.0, %v1830
        %v1832 = vpop.f32.mrb[0].mxu0
        %1833 = vdwg.mxu0
        %v1834 = vsel %vm1382, %v1079, 0
        %v1837 = vsel %vm1385, %v1334, 0
        %1839 = vmatprep.subr.mxu0 0.0
        %1840 = vmatpush1.msra.mxu0 %v1837
        %1841 = vmatprep.subr.mxu0 0.0
        %1842 = vmatpush1.msra.mxu0 0.0
        %1843 = vmatprep.subr.mxu0 0.0
        %1844 = vmatpush1.msra.mxu0 0.0
        %1845 = vmatprep.subr.mxu0 0.0
        %1846 = vmatpush1.msra.mxu0 0.0
        %1847 = vmatprep.subr.mxu0 0.0
        %1848 = vmatpush1.msra.mxu0 0.0
        %1849 = vmatprep.subr.mxu0 0.0
        %1850 = vmatpush1.msra.mxu0 0.0
        %1851 = vmatprep.subr.mxu0 0.0
        %1852 = vmatpush1.msra.mxu0 0.0
        %1853 = vmatprep.subr.mxu0 0.0
        %1854 = vmatpush1.msra.mxu0 0.0
        %1855 = vmatprep.subr.mxu0 0.0
        %1856 = vmatpush1.msra.mxu0 0.0
        %1857 = vmatprep.subr.mxu0 0.0
        %1858 = vmatpush1.msra.mxu0 0.0
        %1859 = vmatprep.subr.mxu0 0.0
        %1860 = vmatpush1.msra.mxu0 0.0
        %1861 = vmatprep.subr.mxu0 0.0
        %1862 = vmatpush1.msra.mxu0 0.0
        %1863 = vmatprep.subr.mxu0 0.0
        %1864 = vmatpush1.msra.mxu0 0.0
        %1865 = vmatprep.subr.mxu0 0.0
        %1866 = vmatpush1.msra.mxu0 0.0
        %1867 = vmatprep.subr.mxu0 0.0
        %1868 = vmatpush1.msra.mxu0 0.0
        %1869 = vmatprep.subr.mxu0 0.0
        %1870 = vmatpush1.msra.mxu0 0.0
        %1871 = vmatprep.subr.mxu0 0.0
        %1872 = vmatpush1.msra.mxu0 0.0
        %1873 = vmatprep.subr.mxu0 0.0
        %1874 = vmatpush1.msra.mxu0 0.0
        %1875 = vmatprep.subr.mxu0 0.0
        %1876 = vmatpush1.msra.mxu0 0.0
        %1877 = vmatprep.subr.mxu0 0.0
        %1878 = vmatpush1.msra.mxu0 0.0
        %1879 = vmatprep.subr.mxu0 0.0
        %1880 = vmatpush1.msra.mxu0 0.0
        %1881 = vmatprep.subr.mxu0 0.0
        %1882 = vmatpush1.msra.mxu0 0.0
        %1883 = vmatprep.subr.mxu0 0.0
        %1884 = vmatpush1.msra.mxu0 0.0
        %1885 = vmatprep.subr.mxu0 0.0
        %1886 = vmatpush1.msra.mxu0 0.0
        %1887 = vmatprep.subr.mxu0 0.0
        %1888 = vmatpush1.msra.mxu0 0.0
        %1889 = vmatprep.subr.mxu0 0.0
        %1890 = vmatpush1.msra.mxu0 0.0
        %1891 = vmatprep.subr.mxu0 0.0
        %1892 = vmatpush1.msra.mxu0 0.0
        %1893 = vmatprep.subr.mxu0 0.0
        %1894 = vmatpush1.msra.mxu0 0.0
        %1895 = vmatprep.subr.mxu0 0.0
        %1896 = vmatpush1.msra.mxu0 0.0
        %1897 = vmatprep.subr.mxu0 0.0
        %1898 = vmatpush1.msra.mxu0 0.0
        %1899 = vmatprep.subr.mxu0 0.0
        %1900 = vmatpush1.msra.mxu0 0.0
        %1901 = vmatprep.subr.mxu0 0.0
        %1902 = vmatpush1.msra.mxu0 0.0
        %1903 = vmatprep.mubr.f32.mxu0 0.0
        %1904 = vmatmul.mubr.f32.gmra.mrb[0].mxu0 %v1834
        %v1905 = vpop.f32.mrb[0].mxu0
        %v1906 = vadd.f32 0.0, %v1905
        %v1907 = vpop.f32.mrb[0].mxu0
        %1908 = vdwg.mxu0
        %v1909 = vsel %vm1382, %v1081, 0
        %v1912 = vsel %vm1385, %v1366, 0
        %1914 = vmatprep.subr.mxu0 0.0
        %1915 = vmatpush1.msra.mxu0 %v1912
        %1916 = vmatprep.subr.mxu0 0.0
        %1917 = vmatpush1.msra.mxu0 0.0
        %1918 = vmatprep.subr.mxu0 0.0
        %1919 = vmatpush1.msra.mxu0 0.0
        %1920 = vmatprep.subr.mxu0 0.0
        %1921 = vmatpush1.msra.mxu0 0.0
        %1922 = vmatprep.subr.mxu0 0.0
        %1923 = vmatpush1.msra.mxu0 0.0
        %1924 = vmatprep.subr.mxu0 0.0
        %1925 = vmatpush1.msra.mxu0 0.0
        %1926 = vmatprep.subr.mxu0 0.0
        %1927 = vmatpush1.msra.mxu0 0.0
        %1928 = vmatprep.subr.mxu0 0.0
        %1929 = vmatpush1.msra.mxu0 0.0
        %1930 = vmatprep.subr.mxu0 0.0
        %1931 = vmatpush1.msra.mxu0 0.0
        %1932 = vmatprep.subr.mxu0 0.0
        %1933 = vmatpush1.msra.mxu0 0.0
        %1934 = vmatprep.subr.mxu0 0.0
        %1935 = vmatpush1.msra.mxu0 0.0
        %1936 = vmatprep.subr.mxu0 0.0
        %1937 = vmatpush1.msra.mxu0 0.0
        %1938 = vmatprep.subr.mxu0 0.0
        %1939 = vmatpush1.msra.mxu0 0.0
        %1940 = vmatprep.subr.mxu0 0.0
        %1941 = vmatpush1.msra.mxu0 0.0
        %1942 = vmatprep.subr.mxu0 0.0
        %1943 = vmatpush1.msra.mxu0 0.0
        %1944 = vmatprep.subr.mxu0 0.0
        %1945 = vmatpush1.msra.mxu0 0.0
        %1946 = vmatprep.subr.mxu0 0.0
        %1947 = vmatpush1.msra.mxu0 0.0
        %1948 = vmatprep.subr.mxu0 0.0
        %1949 = vmatpush1.msra.mxu0 0.0
        %1950 = vmatprep.subr.mxu0 0.0
        %1951 = vmatpush1.msra.mxu0 0.0
        %1952 = vmatprep.subr.mxu0 0.0
        %1953 = vmatpush1.msra.mxu0 0.0
        %1954 = vmatprep.subr.mxu0 0.0
        %1955 = vmatpush1.msra.mxu0 0.0
        %1956 = vmatprep.subr.mxu0 0.0
        %1957 = vmatpush1.msra.mxu0 0.0
        %1958 = vmatprep.subr.mxu0 0.0
        %1959 = vmatpush1.msra.mxu0 0.0
        %1960 = vmatprep.subr.mxu0 0.0
        %1961 = vmatpush1.msra.mxu0 0.0
        %1962 = vmatprep.subr.mxu0 0.0
        %1963 = vmatpush1.msra.mxu0 0.0
        %1964 = vmatprep.subr.mxu0 0.0
        %1965 = vmatpush1.msra.mxu0 0.0
        %1966 = vmatprep.subr.mxu0 0.0
        %1967 = vmatpush1.msra.mxu0 0.0
        %1968 = vmatprep.subr.mxu0 0.0
        %1969 = vmatpush1.msra.mxu0 0.0
        %1970 = vmatprep.subr.mxu0 0.0
        %1971 = vmatpush1.msra.mxu0 0.0
        %1972 = vmatprep.subr.mxu0 0.0
        %1973 = vmatpush1.msra.mxu0 0.0
        %1974 = vmatprep.subr.mxu0 0.0
        %1975 = vmatpush1.msra.mxu0 0.0
        %1976 = vmatprep.subr.mxu0 0.0
        %1977 = vmatpush1.msra.mxu0 0.0
        %1978 = vmatprep.mubr.f32.mxu0 0.0
        %1979 = vmatmul.mubr.f32.gmra.mrb[0].mxu0 %v1909
        %v1980 = vpop.f32.mrb[0].mxu0
        %v1981 = vadd.f32 0.0, %v1980
        %v1982 = vpop.f32.mrb[0].mxu0
        %1983 = vdwg.mxu0
        %vm1984 = vcmask 64512
        %v1985 = vsel %vm1984, %v1456, -inf
        %1986 = vmax.xlane.f32.xlu0 %v1985
        %v1987 = vpop.xlane.xlu0 %1986
        %v1988 = vsel %vm1984, %v1531, -inf
        %1989 = vmax.xlane.f32.xlu0 %v1988
        %v1990 = vpop.xlane.xlu0 %1989
        %v1991 = vsel %vm1984, %v1606, -inf
        %1992 = vmax.xlane.f32.xlu0 %v1991
        %v1993 = vpop.xlane.xlu0 %1992
        %v1994 = vsel %vm1984, %v1681, -inf
        %1995 = vmax.xlane.f32.xlu0 %v1994
        %v1996 = vpop.xlane.xlu0 %1995
        %v1997 = vsel %vm1984, %v1756, -inf
        %1998 = vmax.xlane.f32.xlu0 %v1997
        %v1999 = vpop.xlane.xlu0 %1998
        %v2000 = vsel %vm1984, %v1831, -inf
        %2001 = vmax.xlane.f32.xlu0 %v2000
        %v2002 = vpop.xlane.xlu0 %2001
        %v2003 = vsel %vm1984, %v1906, -inf
        %2004 = vmax.xlane.f32.xlu0 %v2003
        %v2005 = vpop.xlane.xlu0 %2004
        %v2006 = vsel %vm1984, %v1981, -inf
        %2007 = vmax.xlane.f32.xlu0 %v2006
        %v2008 = vpop.xlane.xlu0 %2007
        %v2009 = vsub.f32 %v1456, %v1987
        %v2010 = vsub.f32 %v1531, %v1990
        %v2011 = vsub.f32 %v1606, %v1993
        %v2012 = vsub.f32 %v1681, %v1996
        %v2013 = vsub.f32 %v1756, %v1999
        %v2014 = vsub.f32 %v1831, %v2002
        %v2015 = vsub.f32 %v1906, %v2005
        %v2016 = vsub.f32 %v1981, %v2008
        %v2017 = vmul.f32 %v2009, 1.442695
        %v2018 = vpow.pop %v2017
        %v2019 = vmul.f32 %v2010, 1.442695
        %v2020 = vpow.pop %v2019
        %v2021 = vmul.f32 %v2011, 1.442695
        %v2022 = vpow.pop %v2021
        %v2023 = vmul.f32 %v2012, 1.442695
        %v2024 = vpow.pop %v2023
        %v2025 = vmul.f32 %v2013, 1.442695
        %v2026 = vpow.pop %v2025
        %v2027 = vmul.f32 %v2014, 1.442695
        %v2028 = vpow.pop %v2027
        %v2029 = vmul.f32 %v2015, 1.442695
        %v2030 = vpow.pop %v2029
        %v2031 = vmul.f32 %v2016, 1.442695
        %v2032 = vpow.pop %v2031
        %v2033 = vsel %vm1984, %v2018, 0.0
        %2034 = vadd.xlane.f32.xlu0 %v2033
        %v2035 = vpop.xlane.xlu0 %2034
        %v2036 = vsel %vm1984, %v2020, 0.0
        %2037 = vadd.xlane.f32.xlu0 %v2036
        %v2038 = vpop.xlane.xlu0 %2037
        %v2039 = vsel %vm1984, %v2022, 0.0
        %2040 = vadd.xlane.f32.xlu0 %v2039
        %v2041 = vpop.xlane.xlu0 %2040
        %v2042 = vsel %vm1984, %v2024, 0.0
        %2043 = vadd.xlane.f32.xlu0 %v2042
        %v2044 = vpop.xlane.xlu0 %2043
        %v2045 = vsel %vm1984, %v2026, 0.0
        %2046 = vadd.xlane.f32.xlu0 %v2045
        %v2047 = vpop.xlane.xlu0 %2046
        %v2048 = vsel %vm1984, %v2028, 0.0
        %2049 = vadd.xlane.f32.xlu0 %v2048
        %v2050 = vpop.xlane.xlu0 %2049
        %v2051 = vsel %vm1984, %v2030, 0.0
        %2052 = vadd.xlane.f32.xlu0 %v2051
        %v2053 = vpop.xlane.xlu0 %2052
        %v2054 = vsel %vm1984, %v2032, 0.0
        %2055 = vadd.xlane.f32.xlu0 %v2054
        %v2056 = vpop.xlane.xlu0 %2055
        %v2057 = vrcp.pop %v2035
        %v2058 = vrcp.pop %v2038
        %v2059 = vrcp.pop %v2041
        %v2060 = vrcp.pop %v2044
        %v2061 = vrcp.pop %v2047
        %v2062 = vrcp.pop %v2050
        %v2063 = vrcp.pop %v2053
        %v2064 = vrcp.pop %v2056
        %v2065 = vmul.f32 %v2018, %v2057
        %v2066 = vmul.f32 %v2020, %v2058
        %v2067 = vmul.f32 %v2022, %v2059
        %v2068 = vmul.f32 %v2024, %v2060
        %v2069 = vmul.f32 %v2026, %v2061
        %v2070 = vmul.f32 %v2028, %v2062
        %v2071 = vmul.f32 %v2030, %v2063
        %v2072 = vmul.f32 %v2032, %v2064
        %2073 = vxpose.xlu0.b32.start [1/16] %v1064, 128
        %2074 = vxpose.xlu0.b32.cont [2/16] 0.0, 128
        %2075 = vxpose.xlu0.b32.cont [3/16] 0.0, 128
        %2076 = vxpose.xlu0.b32.cont [4/16] 0.0, 128
        %2077 = vxpose.xlu0.b32.cont [5/16] 0.0, 128
        %2078 = vxpose.xlu0.b32.cont [6/16] 0.0, 128
        %2079 = vxpose.xlu0.b32.cont [7/16] 0.0, 128
        %2080 = vxpose.xlu0.b32.cont [8/16] 0.0, 128
        %2081 = vxpose.xlu0.b32.cont [9/16] 0.0, 128
        %2082 = vxpose.xlu0.b32.cont [10/16] 0.0, 128
        %2083 = vxpose.xlu0.b32.cont [11/16] 0.0, 128
        %2084 = vxpose.xlu0.b32.cont [12/16] 0.0, 128
        %2085 = vxpose.xlu0.b32.cont [13/16] 0.0, 128
        %2086 = vxpose.xlu0.b32.cont [14/16] 0.0, 128
        %2087 = vxpose.xlu0.b32.cont [15/16] 0.0, 128
        %2088 = vxpose.xlu0.b32.end [16/16] 0.0, 128
        %v2089 = vpop.trf.xlu0
        %v2090 = vpop.trf.xlu0
        %v2091 = vpop.trf.xlu0
        %v2092 = vpop.trf.xlu0
        %v2093 = vpop.trf.xlu0
        %v2094 = vpop.trf.xlu0
        %v2095 = vpop.trf.xlu0
        %v2096 = vpop.trf.xlu0
        %v2097 = vpop.trf.xlu0
        %v2098 = vpop.trf.xlu0
        %v2099 = vpop.trf.xlu0
        %v2100 = vpop.trf.xlu0
        %v2101 = vpop.trf.xlu0
        %v2102 = vpop.trf.xlu0
        %v2103 = vpop.trf.xlu0
        %v2104 = vpop.trf.xlu0
        %2105 = vxpose.xlu0.b32.start [1/16] %v1106, 128
        %2106 = vxpose.xlu0.b32.cont [2/16] 0.0, 128
        %2107 = vxpose.xlu0.b32.cont [3/16] 0.0, 128
        %2108 = vxpose.xlu0.b32.cont [4/16] 0.0, 128
        %2109 = vxpose.xlu0.b32.cont [5/16] 0.0, 128
        %2110 = vxpose.xlu0.b32.cont [6/16] 0.0, 128
        %2111 = vxpose.xlu0.b32.cont [7/16] 0.0, 128
        %2112 = vxpose.xlu0.b32.cont [8/16] 0.0, 128
        %2113 = vxpose.xlu0.b32.cont [9/16] 0.0, 128
        %2114 = vxpose.xlu0.b32.cont [10/16] 0.0, 128
        %2115 = vxpose.xlu0.b32.cont [11/16] 0.0, 128
        %2116 = vxpose.xlu0.b32.cont [12/16] 0.0, 128
        %2117 = vxpose.xlu0.b32.cont [13/16] 0.0, 128
        %2118 = vxpose.xlu0.b32.cont [14/16] 0.0, 128
        %2119 = vxpose.xlu0.b32.cont [15/16] 0.0, 128
        %2120 = vxpose.xlu0.b32.end [16/16] 0.0, 128
        %v2121 = vpop.trf.xlu0
        %v2122 = vpop.trf.xlu0
        %v2123 = vpop.trf.xlu0
        %v2124 = vpop.trf.xlu0
        %v2125 = vpop.trf.xlu0
        %v2126 = vpop.trf.xlu0
        %v2127 = vpop.trf.xlu0
        %v2128 = vpop.trf.xlu0
        %v2129 = vpop.trf.xlu0
        %v2130 = vpop.trf.xlu0
        %v2131 = vpop.trf.xlu0
        %v2132 = vpop.trf.xlu0
        %v2133 = vpop.trf.xlu0
        %v2134 = vpop.trf.xlu0
        %v2135 = vpop.trf.xlu0
        %v2136 = vpop.trf.xlu0
        %2137 = vxpose.xlu0.b32.start [1/16] %v1109, 128
        %2138 = vxpose.xlu0.b32.cont [2/16] 0.0, 128
        %2139 = vxpose.xlu0.b32.cont [3/16] 0.0, 128
        %2140 = vxpose.xlu0.b32.cont [4/16] 0.0, 128
        %2141 = vxpose.xlu0.b32.cont [5/16] 0.0, 128
        %2142 = vxpose.xlu0.b32.cont [6/16] 0.0, 128
        %2143 = vxpose.xlu0.b32.cont [7/16] 0.0, 128
        %2144 = vxpose.xlu0.b32.cont [8/16] 0.0, 128
        %2145 = vxpose.xlu0.b32.cont [9/16] 0.0, 128
        %2146 = vxpose.xlu0.b32.cont [10/16] 0.0, 128
        %2147 = vxpose.xlu0.b32.cont [11/16] 0.0, 128
        %2148 = vxpose.xlu0.b32.cont [12/16] 0.0, 128
        %2149 = vxpose.xlu0.b32.cont [13/16] 0.0, 128
        %2150 = vxpose.xlu0.b32.cont [14/16] 0.0, 128
        %2151 = vxpose.xlu0.b32.cont [15/16] 0.0, 128
        %2152 = vxpose.xlu0.b32.end [16/16] 0.0, 128
        %v2153 = vpop.trf.xlu0
        %v2154 = vpop.trf.xlu0
        %v2155 = vpop.trf.xlu0
        %v2156 = vpop.trf.xlu0
        %v2157 = vpop.trf.xlu0
        %v2158 = vpop.trf.xlu0
        %v2159 = vpop.trf.xlu0
        %v2160 = vpop.trf.xlu0
        %v2161 = vpop.trf.xlu0
        %v2162 = vpop.trf.xlu0
        %v2163 = vpop.trf.xlu0
        %v2164 = vpop.trf.xlu0
        %v2165 = vpop.trf.xlu0
        %v2166 = vpop.trf.xlu0
        %v2167 = vpop.trf.xlu0
        %v2168 = vpop.trf.xlu0
        %2169 = vxpose.xlu0.b32.start [1/16] %v1112, 128
        %2170 = vxpose.xlu0.b32.cont [2/16] 0.0, 128
        %2171 = vxpose.xlu0.b32.cont [3/16] 0.0, 128
        %2172 = vxpose.xlu0.b32.cont [4/16] 0.0, 128
        %2173 = vxpose.xlu0.b32.cont [5/16] 0.0, 128
        %2174 = vxpose.xlu0.b32.cont [6/16] 0.0, 128
        %2175 = vxpose.xlu0.b32.cont [7/16] 0.0, 128
        %2176 = vxpose.xlu0.b32.cont [8/16] 0.0, 128
        %2177 = vxpose.xlu0.b32.cont [9/16] 0.0, 128
        %2178 = vxpose.xlu0.b32.cont [10/16] 0.0, 128
        %2179 = vxpose.xlu0.b32.cont [11/16] 0.0, 128
        %2180 = vxpose.xlu0.b32.cont [12/16] 0.0, 128
        %2181 = vxpose.xlu0.b32.cont [13/16] 0.0, 128
        %2182 = vxpose.xlu0.b32.cont [14/16] 0.0, 128
        %2183 = vxpose.xlu0.b32.cont [15/16] 0.0, 128
        %2184 = vxpose.xlu0.b32.end [16/16] 0.0, 128
        %v2185 = vpop.trf.xlu0
        %v2186 = vpop.trf.xlu0
        %v2187 = vpop.trf.xlu0
        %v2188 = vpop.trf.xlu0
        %v2189 = vpop.trf.xlu0
        %v2190 = vpop.trf.xlu0
        %v2191 = vpop.trf.xlu0
        %v2192 = vpop.trf.xlu0
        %v2193 = vpop.trf.xlu0
        %v2194 = vpop.trf.xlu0
        %v2195 = vpop.trf.xlu0
        %v2196 = vpop.trf.xlu0
        %v2197 = vpop.trf.xlu0
        %v2198 = vpop.trf.xlu0
        %v2199 = vpop.trf.xlu0
        %v2200 = vpop.trf.xlu0
        %2201 = vxpose.xlu0.b32.start [1/16] %v1115, 128
        %2202 = vxpose.xlu0.b32.cont [2/16] 0.0, 128
        %2203 = vxpose.xlu0.b32.cont [3/16] 0.0, 128
        %2204 = vxpose.xlu0.b32.cont [4/16] 0.0, 128
        %2205 = vxpose.xlu0.b32.cont [5/16] 0.0, 128
        %2206 = vxpose.xlu0.b32.cont [6/16] 0.0, 128
        %2207 = vxpose.xlu0.b32.cont [7/16] 0.0, 128
        %2208 = vxpose.xlu0.b32.cont [8/16] 0.0, 128
        %2209 = vxpose.xlu0.b32.cont [9/16] 0.0, 128
        %2210 = vxpose.xlu0.b32.cont [10/16] 0.0, 128
        %2211 = vxpose.xlu0.b32.cont [11/16] 0.0, 128
        %2212 = vxpose.xlu0.b32.cont [12/16] 0.0, 128
        %2213 = vxpose.xlu0.b32.cont [13/16] 0.0, 128
        %2214 = vxpose.xlu0.b32.cont [14/16] 0.0, 128
        %2215 = vxpose.xlu0.b32.cont [15/16] 0.0, 128
        %2216 = vxpose.xlu0.b32.end [16/16] 0.0, 128
        %v2217 = vpop.trf.xlu0
        %v2218 = vpop.trf.xlu0
        %v2219 = vpop.trf.xlu0
        %v2220 = vpop.trf.xlu0
        %v2221 = vpop.trf.xlu0
        %v2222 = vpop.trf.xlu0
        %v2223 = vpop.trf.xlu0
        %v2224 = vpop.trf.xlu0
        %v2225 = vpop.trf.xlu0
        %v2226 = vpop.trf.xlu0
        %v2227 = vpop.trf.xlu0
        %v2228 = vpop.trf.xlu0
        %v2229 = vpop.trf.xlu0
        %v2230 = vpop.trf.xlu0
        %v2231 = vpop.trf.xlu0
        %v2232 = vpop.trf.xlu0
        %2233 = vxpose.xlu0.b32.start [1/16] %v1118, 128
        %2234 = vxpose.xlu0.b32.cont [2/16] 0.0, 128
        %2235 = vxpose.xlu0.b32.cont [3/16] 0.0, 128
        %2236 = vxpose.xlu0.b32.cont [4/16] 0.0, 128
        %2237 = vxpose.xlu0.b32.cont [5/16] 0.0, 128
        %2238 = vxpose.xlu0.b32.cont [6/16] 0.0, 128
        %2239 = vxpose.xlu0.b32.cont [7/16] 0.0, 128
        %2240 = vxpose.xlu0.b32.cont [8/16] 0.0, 128
        %2241 = vxpose.xlu0.b32.cont [9/16] 0.0, 128
        %2242 = vxpose.xlu0.b32.cont [10/16] 0.0, 128
        %2243 = vxpose.xlu0.b32.cont [11/16] 0.0, 128
        %2244 = vxpose.xlu0.b32.cont [12/16] 0.0, 128
        %2245 = vxpose.xlu0.b32.cont [13/16] 0.0, 128
        %2246 = vxpose.xlu0.b32.cont [14/16] 0.0, 128
        %2247 = vxpose.xlu0.b32.cont [15/16] 0.0, 128
        %2248 = vxpose.xlu0.b32.end [16/16] 0.0, 128
        %v2249 = vpop.trf.xlu0
        %v2250 = vpop.trf.xlu0
        %v2251 = vpop.trf.xlu0
        %v2252 = vpop.trf.xlu0
        %v2253 = vpop.trf.xlu0
        %v2254 = vpop.trf.xlu0
        %v2255 = vpop.trf.xlu0
        %v2256 = vpop.trf.xlu0
        %v2257 = vpop.trf.xlu0
        %v2258 = vpop.trf.xlu0
        %v2259 = vpop.trf.xlu0
        %v2260 = vpop.trf.xlu0
        %v2261 = vpop.trf.xlu0
        %v2262 = vpop.trf.xlu0
        %v2263 = vpop.trf.xlu0
        %v2264 = vpop.trf.xlu0
        %2265 = vxpose.xlu0.b32.start [1/16] %v1121, 128
        %2266 = vxpose.xlu0.b32.cont [2/16] 0.0, 128
        %2267 = vxpose.xlu0.b32.cont [3/16] 0.0, 128
        %2268 = vxpose.xlu0.b32.cont [4/16] 0.0, 128
        %2269 = vxpose.xlu0.b32.cont [5/16] 0.0, 128
        %2270 = vxpose.xlu0.b32.cont [6/16] 0.0, 128
        %2271 = vxpose.xlu0.b32.cont [7/16] 0.0, 128
        %2272 = vxpose.xlu0.b32.cont [8/16] 0.0, 128
        %2273 = vxpose.xlu0.b32.cont [9/16] 0.0, 128
        %2274 = vxpose.xlu0.b32.cont [10/16] 0.0, 128
        %2275 = vxpose.xlu0.b32.cont [11/16] 0.0, 128
        %2276 = vxpose.xlu0.b32.cont [12/16] 0.0, 128
        %2277 = vxpose.xlu0.b32.cont [13/16] 0.0, 128
        %2278 = vxpose.xlu0.b32.cont [14/16] 0.0, 128
        %2279 = vxpose.xlu0.b32.cont [15/16] 0.0, 128
        %2280 = vxpose.xlu0.b32.end [16/16] 0.0, 128
        %v2281 = vpop.trf.xlu0
        %v2282 = vpop.trf.xlu0
        %v2283 = vpop.trf.xlu0
        %v2284 = vpop.trf.xlu0
        %v2285 = vpop.trf.xlu0
        %v2286 = vpop.trf.xlu0
        %v2287 = vpop.trf.xlu0
        %v2288 = vpop.trf.xlu0
        %v2289 = vpop.trf.xlu0
        %v2290 = vpop.trf.xlu0
        %v2291 = vpop.trf.xlu0
        %v2292 = vpop.trf.xlu0
        %v2293 = vpop.trf.xlu0
        %v2294 = vpop.trf.xlu0
        %v2295 = vpop.trf.xlu0
        %v2296 = vpop.trf.xlu0
        %2297 = vxpose.xlu0.b32.start [1/16] %v1124, 128
        %2298 = vxpose.xlu0.b32.cont [2/16] 0.0, 128
        %2299 = vxpose.xlu0.b32.cont [3/16] 0.0, 128
        %2300 = vxpose.xlu0.b32.cont [4/16] 0.0, 128
        %2301 = vxpose.xlu0.b32.cont [5/16] 0.0, 128
        %2302 = vxpose.xlu0.b32.cont [6/16] 0.0, 128
        %2303 = vxpose.xlu0.b32.cont [7/16] 0.0, 128
        %2304 = vxpose.xlu0.b32.cont [8/16] 0.0, 128
        %2305 = vxpose.xlu0.b32.cont [9/16] 0.0, 128
        %2306 = vxpose.xlu0.b32.cont [10/16] 0.0, 128
        %2307 = vxpose.xlu0.b32.cont [11/16] 0.0, 128
        %2308 = vxpose.xlu0.b32.cont [12/16] 0.0, 128
        %2309 = vxpose.xlu0.b32.cont [13/16] 0.0, 128
        %2310 = vxpose.xlu0.b32.cont [14/16] 0.0, 128
        %2311 = vxpose.xlu0.b32.cont [15/16] 0.0, 128
        %2312 = vxpose.xlu0.b32.end [16/16] 0.0, 128
        %v2313 = vpop.trf.xlu0
        %v2314 = vpop.trf.xlu0
        %v2315 = vpop.trf.xlu0
        %v2316 = vpop.trf.xlu0
        %v2317 = vpop.trf.xlu0
        %v2318 = vpop.trf.xlu0
        %v2319 = vpop.trf.xlu0
        %v2320 = vpop.trf.xlu0
        %v2321 = vpop.trf.xlu0
        %v2322 = vpop.trf.xlu0
        %v2323 = vpop.trf.xlu0
        %v2324 = vpop.trf.xlu0
        %v2325 = vpop.trf.xlu0
        %v2326 = vpop.trf.xlu0
        %v2327 = vpop.trf.xlu0
        %v2328 = vpop.trf.xlu0
        %v2330 = vsel %vm1984, %v2089, 0
        %v2333 = vsel %vm1984, %v2065, 0
        %2335 = vmatprep.subr.mxu0 0.0
        %2336 = vmatpush1.xpose.msra.mxu0 %v2333
        %2337 = vmatprep.subr.mxu0 0.0
        %2338 = vmatpush1.xpose.msra.mxu0 0.0
        %2339 = vmatprep.subr.mxu0 0.0
        %2340 = vmatpush1.xpose.msra.mxu0 0.0
        %2341 = vmatprep.subr.mxu0 0.0
        %2342 = vmatpush1.xpose.msra.mxu0 0.0
        %2343 = vmatprep.subr.mxu0 0.0
        %2344 = vmatpush1.xpose.msra.mxu0 0.0
        %2345 = vmatprep.subr.mxu0 0.0
        %2346 = vmatpush1.xpose.msra.mxu0 0.0
        %2347 = vmatprep.subr.mxu0 0.0
        %2348 = vmatpush1.xpose.msra.mxu0 0.0
        %2349 = vmatprep.subr.mxu0 0.0
        %2350 = vmatpush1.xpose.msra.mxu0 0.0
        %2351 = vmatprep.subr.mxu0 0.0
        %2352 = vmatpush1.xpose.msra.mxu0 0.0
        %2353 = vmatprep.subr.mxu0 0.0
        %2354 = vmatpush1.xpose.msra.mxu0 0.0
        %2355 = vmatprep.subr.mxu0 0.0
        %2356 = vmatpush1.xpose.msra.mxu0 0.0
        %2357 = vmatprep.subr.mxu0 0.0
        %2358 = vmatpush1.xpose.msra.mxu0 0.0
        %2359 = vmatprep.subr.mxu0 0.0
        %2360 = vmatpush1.xpose.msra.mxu0 0.0
        %2361 = vmatprep.subr.mxu0 0.0
        %2362 = vmatpush1.xpose.msra.mxu0 0.0
        %2363 = vmatprep.subr.mxu0 0.0
        %2364 = vmatpush1.xpose.msra.mxu0 0.0
        %2365 = vmatprep.subr.mxu0 0.0
        %2366 = vmatpush1.xpose.msra.mxu0 0.0
        %2367 = vmatprep.subr.mxu0 0.0
        %2368 = vmatpush1.xpose.msra.mxu0 0.0
        %2369 = vmatprep.subr.mxu0 0.0
        %2370 = vmatpush1.xpose.msra.mxu0 0.0
        %2371 = vmatprep.subr.mxu0 0.0
        %2372 = vmatpush1.xpose.msra.mxu0 0.0
        %2373 = vmatprep.subr.mxu0 0.0
        %2374 = vmatpush1.xpose.msra.mxu0 0.0
        %2375 = vmatprep.subr.mxu0 0.0
        %2376 = vmatpush1.xpose.msra.mxu0 0.0
        %2377 = vmatprep.subr.mxu0 0.0
        %2378 = vmatpush1.xpose.msra.mxu0 0.0
        %2379 = vmatprep.subr.mxu0 0.0
        %2380 = vmatpush1.xpose.msra.mxu0 0.0
        %2381 = vmatprep.subr.mxu0 0.0
        %2382 = vmatpush1.xpose.msra.mxu0 0.0
        %2383 = vmatprep.subr.mxu0 0.0
        %2384 = vmatpush1.xpose.msra.mxu0 0.0
        %2385 = vmatprep.subr.mxu0 0.0
        %2386 = vmatpush1.xpose.msra.mxu0 0.0
        %2387 = vmatprep.subr.mxu0 0.0
        %2388 = vmatpush1.xpose.msra.mxu0 0.0
        %2389 = vmatprep.subr.mxu0 0.0
        %2390 = vmatpush1.xpose.msra.mxu0 0.0
        %2391 = vmatprep.subr.mxu0 0.0
        %2392 = vmatpush1.xpose.msra.mxu0 0.0
        %2393 = vmatprep.subr.mxu0 0.0
        %2394 = vmatpush1.xpose.msra.mxu0 0.0
        %2395 = vmatprep.subr.mxu0 0.0
        %2396 = vmatpush1.xpose.msra.mxu0 0.0
        %2397 = vmatprep.subr.mxu0 0.0
        %2398 = vmatpush1.xpose.msra.mxu0 0.0
        %2399 = vmatprep.mubr.f32.mxu0 0.0
        %2400 = vmatmul.mubr.f32.gmra.mrb[0].mxu0 %v2330
        %v2401 = vpop.f32.mrb[0].mxu0
        %v2402 = vadd.f32 0.0, %v2401
        %v2403 = vpop.f32.mrb[0].mxu0
        %2404 = vdwg.mxu0
        %v2406 = vsel %vm1984, %v2121, 0
        %v2409 = vsel %vm1984, %v2066, 0
        %2411 = vmatprep.subr.mxu0 0.0
        %2412 = vmatpush1.xpose.msra.mxu0 %v2409
        %2413 = vmatprep.subr.mxu0 0.0
        %2414 = vmatpush1.xpose.msra.mxu0 0.0
        %2415 = vmatprep.subr.mxu0 0.0
        %2416 = vmatpush1.xpose.msra.mxu0 0.0
        %2417 = vmatprep.subr.mxu0 0.0
        %2418 = vmatpush1.xpose.msra.mxu0 0.0
        %2419 = vmatprep.subr.mxu0 0.0
        %2420 = vmatpush1.xpose.msra.mxu0 0.0
        %2421 = vmatprep.subr.mxu0 0.0
        %2422 = vmatpush1.xpose.msra.mxu0 0.0
        %2423 = vmatprep.subr.mxu0 0.0
        %2424 = vmatpush1.xpose.msra.mxu0 0.0
        %2425 = vmatprep.subr.mxu0 0.0
        %2426 = vmatpush1.xpose.msra.mxu0 0.0
        %2427 = vmatprep.subr.mxu0 0.0
        %2428 = vmatpush1.xpose.msra.mxu0 0.0
        %2429 = vmatprep.subr.mxu0 0.0
        %2430 = vmatpush1.xpose.msra.mxu0 0.0
        %2431 = vmatprep.subr.mxu0 0.0
        %2432 = vmatpush1.xpose.msra.mxu0 0.0
        %2433 = vmatprep.subr.mxu0 0.0
        %2434 = vmatpush1.xpose.msra.mxu0 0.0
        %2435 = vmatprep.subr.mxu0 0.0
        %2436 = vmatpush1.xpose.msra.mxu0 0.0
        %2437 = vmatprep.subr.mxu0 0.0
        %2438 = vmatpush1.xpose.msra.mxu0 0.0
        %2439 = vmatprep.subr.mxu0 0.0
        %2440 = vmatpush1.xpose.msra.mxu0 0.0
        %2441 = vmatprep.subr.mxu0 0.0
        %2442 = vmatpush1.xpose.msra.mxu0 0.0
        %2443 = vmatprep.subr.mxu0 0.0
        %2444 = vmatpush1.xpose.msra.mxu0 0.0
        %2445 = vmatprep.subr.mxu0 0.0
        %2446 = vmatpush1.xpose.msra.mxu0 0.0
        %2447 = vmatprep.subr.mxu0 0.0
        %2448 = vmatpush1.xpose.msra.mxu0 0.0
        %2449 = vmatprep.subr.mxu0 0.0
        %2450 = vmatpush1.xpose.msra.mxu0 0.0
        %2451 = vmatprep.subr.mxu0 0.0
        %2452 = vmatpush1.xpose.msra.mxu0 0.0
        %2453 = vmatprep.subr.mxu0 0.0
        %2454 = vmatpush1.xpose.msra.mxu0 0.0
        %2455 = vmatprep.subr.mxu0 0.0
        %2456 = vmatpush1.xpose.msra.mxu0 0.0
        %2457 = vmatprep.subr.mxu0 0.0
        %2458 = vmatpush1.xpose.msra.mxu0 0.0
        %2459 = vmatprep.subr.mxu0 0.0
        %2460 = vmatpush1.xpose.msra.mxu0 0.0
        %2461 = vmatprep.subr.mxu0 0.0
        %2462 = vmatpush1.xpose.msra.mxu0 0.0
        %2463 = vmatprep.subr.mxu0 0.0
        %2464 = vmatpush1.xpose.msra.mxu0 0.0
        %2465 = vmatprep.subr.mxu0 0.0
        %2466 = vmatpush1.xpose.msra.mxu0 0.0
        %2467 = vmatprep.subr.mxu0 0.0
        %2468 = vmatpush1.xpose.msra.mxu0 0.0
        %2469 = vmatprep.subr.mxu0 0.0
        %2470 = vmatpush1.xpose.msra.mxu0 0.0
        %2471 = vmatprep.subr.mxu0 0.0
        %2472 = vmatpush1.xpose.msra.mxu0 0.0
        %2473 = vmatprep.subr.mxu0 0.0
        %2474 = vmatpush1.xpose.msra.mxu0 0.0
        %2475 = vmatprep.mubr.f32.mxu0 0.0
        %2476 = vmatmul.mubr.f32.gmra.mrb[0].mxu0 %v2406
        %v2477 = vpop.f32.mrb[0].mxu0
        %v2478 = vadd.f32 0.0, %v2477
        %v2479 = vpop.f32.mrb[0].mxu0
        %2480 = vdwg.mxu0
        %v2482 = vsel %vm1984, %v2153, 0
        %v2485 = vsel %vm1984, %v2067, 0
        %2487 = vmatprep.subr.mxu0 0.0
        %2488 = vmatpush1.xpose.msra.mxu0 %v2485
        %2489 = vmatprep.subr.mxu0 0.0
        %2490 = vmatpush1.xpose.msra.mxu0 0.0
        %2491 = vmatprep.subr.mxu0 0.0
        %2492 = vmatpush1.xpose.msra.mxu0 0.0
        %2493 = vmatprep.subr.mxu0 0.0
        %2494 = vmatpush1.xpose.msra.mxu0 0.0
        %2495 = vmatprep.subr.mxu0 0.0
        %2496 = vmatpush1.xpose.msra.mxu0 0.0
        %2497 = vmatprep.subr.mxu0 0.0
        %2498 = vmatpush1.xpose.msra.mxu0 0.0
        %2499 = vmatprep.subr.mxu0 0.0
        %2500 = vmatpush1.xpose.msra.mxu0 0.0
        %2501 = vmatprep.subr.mxu0 0.0
        %2502 = vmatpush1.xpose.msra.mxu0 0.0
        %2503 = vmatprep.subr.mxu0 0.0
        %2504 = vmatpush1.xpose.msra.mxu0 0.0
        %2505 = vmatprep.subr.mxu0 0.0
        %2506 = vmatpush1.xpose.msra.mxu0 0.0
        %2507 = vmatprep.subr.mxu0 0.0
        %2508 = vmatpush1.xpose.msra.mxu0 0.0
        %2509 = vmatprep.subr.mxu0 0.0
        %2510 = vmatpush1.xpose.msra.mxu0 0.0
        %2511 = vmatprep.subr.mxu0 0.0
        %2512 = vmatpush1.xpose.msra.mxu0 0.0
        %2513 = vmatprep.subr.mxu0 0.0
        %2514 = vmatpush1.xpose.msra.mxu0 0.0
        %2515 = vmatprep.subr.mxu0 0.0
        %2516 = vmatpush1.xpose.msra.mxu0 0.0
        %2517 = vmatprep.subr.mxu0 0.0
        %2518 = vmatpush1.xpose.msra.mxu0 0.0
        %2519 = vmatprep.subr.mxu0 0.0
        %2520 = vmatpush1.xpose.msra.mxu0 0.0
        %2521 = vmatprep.subr.mxu0 0.0
        %2522 = vmatpush1.xpose.msra.mxu0 0.0
        %2523 = vmatprep.subr.mxu0 0.0
        %2524 = vmatpush1.xpose.msra.mxu0 0.0
        %2525 = vmatprep.subr.mxu0 0.0
        %2526 = vmatpush1.xpose.msra.mxu0 0.0
        %2527 = vmatprep.subr.mxu0 0.0
        %2528 = vmatpush1.xpose.msra.mxu0 0.0
        %2529 = vmatprep.subr.mxu0 0.0
        %2530 = vmatpush1.xpose.msra.mxu0 0.0
        %2531 = vmatprep.subr.mxu0 0.0
        %2532 = vmatpush1.xpose.msra.mxu0 0.0
        %2533 = vmatprep.subr.mxu0 0.0
        %2534 = vmatpush1.xpose.msra.mxu0 0.0
        %2535 = vmatprep.subr.mxu0 0.0
        %2536 = vmatpush1.xpose.msra.mxu0 0.0
        %2537 = vmatprep.subr.mxu0 0.0
        %2538 = vmatpush1.xpose.msra.mxu0 0.0
        %2539 = vmatprep.subr.mxu0 0.0
        %2540 = vmatpush1.xpose.msra.mxu0 0.0
        %2541 = vmatprep.subr.mxu0 0.0
        %2542 = vmatpush1.xpose.msra.mxu0 0.0
        %2543 = vmatprep.subr.mxu0 0.0
        %2544 = vmatpush1.xpose.msra.mxu0 0.0
        %2545 = vmatprep.subr.mxu0 0.0
        %2546 = vmatpush1.xpose.msra.mxu0 0.0
        %2547 = vmatprep.subr.mxu0 0.0
        %2548 = vmatpush1.xpose.msra.mxu0 0.0
        %2549 = vmatprep.subr.mxu0 0.0
        %2550 = vmatpush1.xpose.msra.mxu0 0.0
        %2551 = vmatprep.mubr.f32.mxu0 0.0
        %2552 = vmatmul.mubr.f32.gmra.mrb[0].mxu0 %v2482
        %v2553 = vpop.f32.mrb[0].mxu0
        %v2554 = vadd.f32 0.0, %v2553
        %v2555 = vpop.f32.mrb[0].mxu0
        %2556 = vdwg.mxu0
        %v2558 = vsel %vm1984, %v2185, 0
        %v2561 = vsel %vm1984, %v2068, 0
        %2563 = vmatprep.subr.mxu0 0.0
        %2564 = vmatpush1.xpose.msra.mxu0 %v2561
        %2565 = vmatprep.subr.mxu0 0.0
        %2566 = vmatpush1.xpose.msra.mxu0 0.0
        %2567 = vmatprep.subr.mxu0 0.0
        %2568 = vmatpush1.xpose.msra.mxu0 0.0
        %2569 = vmatprep.subr.mxu0 0.0
        %2570 = vmatpush1.xpose.msra.mxu0 0.0
        %2571 = vmatprep.subr.mxu0 0.0
        %2572 = vmatpush1.xpose.msra.mxu0 0.0
        %2573 = vmatprep.subr.mxu0 0.0
        %2574 = vmatpush1.xpose.msra.mxu0 0.0
        %2575 = vmatprep.subr.mxu0 0.0
        %2576 = vmatpush1.xpose.msra.mxu0 0.0
        %2577 = vmatprep.subr.mxu0 0.0
        %2578 = vmatpush1.xpose.msra.mxu0 0.0
        %2579 = vmatprep.subr.mxu0 0.0
        %2580 = vmatpush1.xpose.msra.mxu0 0.0
        %2581 = vmatprep.subr.mxu0 0.0
        %2582 = vmatpush1.xpose.msra.mxu0 0.0
        %2583 = vmatprep.subr.mxu0 0.0
        %2584 = vmatpush1.xpose.msra.mxu0 0.0
        %2585 = vmatprep.subr.mxu0 0.0
        %2586 = vmatpush1.xpose.msra.mxu0 0.0
        %2587 = vmatprep.subr.mxu0 0.0
        %2588 = vmatpush1.xpose.msra.mxu0 0.0
        %2589 = vmatprep.subr.mxu0 0.0
        %2590 = vmatpush1.xpose.msra.mxu0 0.0
        %2591 = vmatprep.subr.mxu0 0.0
        %2592 = vmatpush1.xpose.msra.mxu0 0.0
        %2593 = vmatprep.subr.mxu0 0.0
        %2594 = vmatpush1.xpose.msra.mxu0 0.0
        %2595 = vmatprep.subr.mxu0 0.0
        %2596 = vmatpush1.xpose.msra.mxu0 0.0
        %2597 = vmatprep.subr.mxu0 0.0
        %2598 = vmatpush1.xpose.msra.mxu0 0.0
        %2599 = vmatprep.subr.mxu0 0.0
        %2600 = vmatpush1.xpose.msra.mxu0 0.0
        %2601 = vmatprep.subr.mxu0 0.0
        %2602 = vmatpush1.xpose.msra.mxu0 0.0
        %2603 = vmatprep.subr.mxu0 0.0
        %2604 = vmatpush1.xpose.msra.mxu0 0.0
        %2605 = vmatprep.subr.mxu0 0.0
        %2606 = vmatpush1.xpose.msra.mxu0 0.0
        %2607 = vmatprep.subr.mxu0 0.0
        %2608 = vmatpush1.xpose.msra.mxu0 0.0
        %2609 = vmatprep.subr.mxu0 0.0
        %2610 = vmatpush1.xpose.msra.mxu0 0.0
        %2611 = vmatprep.subr.mxu0 0.0
        %2612 = vmatpush1.xpose.msra.mxu0 0.0
        %2613 = vmatprep.subr.mxu0 0.0
        %2614 = vmatpush1.xpose.msra.mxu0 0.0
        %2615 = vmatprep.subr.mxu0 0.0
        %2616 = vmatpush1.xpose.msra.mxu0 0.0
        %2617 = vmatprep.subr.mxu0 0.0
        %2618 = vmatpush1.xpose.msra.mxu0 0.0
        %2619 = vmatprep.subr.mxu0 0.0
        %2620 = vmatpush1.xpose.msra.mxu0 0.0
        %2621 = vmatprep.subr.mxu0 0.0
        %2622 = vmatpush1.xpose.msra.mxu0 0.0
        %2623 = vmatprep.subr.mxu0 0.0
        %2624 = vmatpush1.xpose.msra.mxu0 0.0
        %2625 = vmatprep.subr.mxu0 0.0
        %2626 = vmatpush1.xpose.msra.mxu0 0.0
        %2627 = vmatprep.mubr.f32.mxu0 0.0
        %2628 = vmatmul.mubr.f32.gmra.mrb[0].mxu0 %v2558
        %v2629 = vpop.f32.mrb[0].mxu0
        %v2630 = vadd.f32 0.0, %v2629
        %v2631 = vpop.f32.mrb[0].mxu0
        %2632 = vdwg.mxu0
        %v2634 = vsel %vm1984, %v2217, 0
        %v2637 = vsel %vm1984, %v2069, 0
        %2639 = vmatprep.subr.mxu0 0.0
        %2640 = vmatpush1.xpose.msra.mxu0 %v2637
        %2641 = vmatprep.subr.mxu0 0.0
        %2642 = vmatpush1.xpose.msra.mxu0 0.0
        %2643 = vmatprep.subr.mxu0 0.0
        %2644 = vmatpush1.xpose.msra.mxu0 0.0
        %2645 = vmatprep.subr.mxu0 0.0
        %2646 = vmatpush1.xpose.msra.mxu0 0.0
        %2647 = vmatprep.subr.mxu0 0.0
        %2648 = vmatpush1.xpose.msra.mxu0 0.0
        %2649 = vmatprep.subr.mxu0 0.0
        %2650 = vmatpush1.xpose.msra.mxu0 0.0
        %2651 = vmatprep.subr.mxu0 0.0
        %2652 = vmatpush1.xpose.msra.mxu0 0.0
        %2653 = vmatprep.subr.mxu0 0.0
        %2654 = vmatpush1.xpose.msra.mxu0 0.0
        %2655 = vmatprep.subr.mxu0 0.0
        %2656 = vmatpush1.xpose.msra.mxu0 0.0
        %2657 = vmatprep.subr.mxu0 0.0
        %2658 = vmatpush1.xpose.msra.mxu0 0.0
        %2659 = vmatprep.subr.mxu0 0.0
        %2660 = vmatpush1.xpose.msra.mxu0 0.0
        %2661 = vmatprep.subr.mxu0 0.0
        %2662 = vmatpush1.xpose.msra.mxu0 0.0
        %2663 = vmatprep.subr.mxu0 0.0
        %2664 = vmatpush1.xpose.msra.mxu0 0.0
        %2665 = vmatprep.subr.mxu0 0.0
        %2666 = vmatpush1.xpose.msra.mxu0 0.0
        %2667 = vmatprep.subr.mxu0 0.0
        %2668 = vmatpush1.xpose.msra.mxu0 0.0
        %2669 = vmatprep.subr.mxu0 0.0
        %2670 = vmatpush1.xpose.msra.mxu0 0.0
        %2671 = vmatprep.subr.mxu0 0.0
        %2672 = vmatpush1.xpose.msra.mxu0 0.0
        %2673 = vmatprep.subr.mxu0 0.0
        %2674 = vmatpush1.xpose.msra.mxu0 0.0
        %2675 = vmatprep.subr.mxu0 0.0
        %2676 = vmatpush1.xpose.msra.mxu0 0.0
        %2677 = vmatprep.subr.mxu0 0.0
        %2678 = vmatpush1.xpose.msra.mxu0 0.0
        %2679 = vmatprep.subr.mxu0 0.0
        %2680 = vmatpush1.xpose.msra.mxu0 0.0
        %2681 = vmatprep.subr.mxu0 0.0
        %2682 = vmatpush1.xpose.msra.mxu0 0.0
        %2683 = vmatprep.subr.mxu0 0.0
        %2684 = vmatpush1.xpose.msra.mxu0 0.0
        %2685 = vmatprep.subr.mxu0 0.0
        %2686 = vmatpush1.xpose.msra.mxu0 0.0
        %2687 = vmatprep.subr.mxu0 0.0
        %2688 = vmatpush1.xpose.msra.mxu0 0.0
        %2689 = vmatprep.subr.mxu0 0.0
        %2690 = vmatpush1.xpose.msra.mxu0 0.0
        %2691 = vmatprep.subr.mxu0 0.0
        %2692 = vmatpush1.xpose.msra.mxu0 0.0
        %2693 = vmatprep.subr.mxu0 0.0
        %2694 = vmatpush1.xpose.msra.mxu0 0.0
        %2695 = vmatprep.subr.mxu0 0.0
        %2696 = vmatpush1.xpose.msra.mxu0 0.0
        %2697 = vmatprep.subr.mxu0 0.0
        %2698 = vmatpush1.xpose.msra.mxu0 0.0
        %2699 = vmatprep.subr.mxu0 0.0
        %2700 = vmatpush1.xpose.msra.mxu0 0.0
        %2701 = vmatprep.subr.mxu0 0.0
        %2702 = vmatpush1.xpose.msra.mxu0 0.0
        %2703 = vmatprep.mubr.f32.mxu0 0.0
        %2704 = vmatmul.mubr.f32.gmra.mrb[0].mxu0 %v2634
        %v2705 = vpop.f32.mrb[0].mxu0
        %v2706 = vadd.f32 0.0, %v2705
        %v2707 = vpop.f32.mrb[0].mxu0
        %2708 = vdwg.mxu0
        %v2710 = vsel %vm1984, %v2249, 0
        %v2713 = vsel %vm1984, %v2070, 0
        %2715 = vmatprep.subr.mxu0 0.0
        %2716 = vmatpush1.xpose.msra.mxu0 %v2713
        %2717 = vmatprep.subr.mxu0 0.0
        %2718 = vmatpush1.xpose.msra.mxu0 0.0
        %2719 = vmatprep.subr.mxu0 0.0
        %2720 = vmatpush1.xpose.msra.mxu0 0.0
        %2721 = vmatprep.subr.mxu0 0.0
        %2722 = vmatpush1.xpose.msra.mxu0 0.0
        %2723 = vmatprep.subr.mxu0 0.0
        %2724 = vmatpush1.xpose.msra.mxu0 0.0
        %2725 = vmatprep.subr.mxu0 0.0
        %2726 = vmatpush1.xpose.msra.mxu0 0.0
        %2727 = vmatprep.subr.mxu0 0.0
        %2728 = vmatpush1.xpose.msra.mxu0 0.0
        %2729 = vmatprep.subr.mxu0 0.0
        %2730 = vmatpush1.xpose.msra.mxu0 0.0
        %2731 = vmatprep.subr.mxu0 0.0
        %2732 = vmatpush1.xpose.msra.mxu0 0.0
        %2733 = vmatprep.subr.mxu0 0.0
        %2734 = vmatpush1.xpose.msra.mxu0 0.0
        %2735 = vmatprep.subr.mxu0 0.0
        %2736 = vmatpush1.xpose.msra.mxu0 0.0
        %2737 = vmatprep.subr.mxu0 0.0
        %2738 = vmatpush1.xpose.msra.mxu0 0.0
        %2739 = vmatprep.subr.mxu0 0.0
        %2740 = vmatpush1.xpose.msra.mxu0 0.0
        %2741 = vmatprep.subr.mxu0 0.0
        %2742 = vmatpush1.xpose.msra.mxu0 0.0
        %2743 = vmatprep.subr.mxu0 0.0
        %2744 = vmatpush1.xpose.msra.mxu0 0.0
        %2745 = vmatprep.subr.mxu0 0.0
        %2746 = vmatpush1.xpose.msra.mxu0 0.0
        %2747 = vmatprep.subr.mxu0 0.0
        %2748 = vmatpush1.xpose.msra.mxu0 0.0
        %2749 = vmatprep.subr.mxu0 0.0
        %2750 = vmatpush1.xpose.msra.mxu0 0.0
        %2751 = vmatprep.subr.mxu0 0.0
        %2752 = vmatpush1.xpose.msra.mxu0 0.0
        %2753 = vmatprep.subr.mxu0 0.0
        %2754 = vmatpush1.xpose.msra.mxu0 0.0
        %2755 = vmatprep.subr.mxu0 0.0
        %2756 = vmatpush1.xpose.msra.mxu0 0.0
        %2757 = vmatprep.subr.mxu0 0.0
        %2758 = vmatpush1.xpose.msra.mxu0 0.0
        %2759 = vmatprep.subr.mxu0 0.0
        %2760 = vmatpush1.xpose.msra.mxu0 0.0
        %2761 = vmatprep.subr.mxu0 0.0
        %2762 = vmatpush1.xpose.msra.mxu0 0.0
        %2763 = vmatprep.subr.mxu0 0.0
        %2764 = vmatpush1.xpose.msra.mxu0 0.0
        %2765 = vmatprep.subr.mxu0 0.0
        %2766 = vmatpush1.xpose.msra.mxu0 0.0
        %2767 = vmatprep.subr.mxu0 0.0
        %2768 = vmatpush1.xpose.msra.mxu0 0.0
        %2769 = vmatprep.subr.mxu0 0.0
        %2770 = vmatpush1.xpose.msra.mxu0 0.0
        %2771 = vmatprep.subr.mxu0 0.0
        %2772 = vmatpush1.xpose.msra.mxu0 0.0
        %2773 = vmatprep.subr.mxu0 0.0
        %2774 = vmatpush1.xpose.msra.mxu0 0.0
        %2775 = vmatprep.subr.mxu0 0.0
        %2776 = vmatpush1.xpose.msra.mxu0 0.0
        %2777 = vmatprep.subr.mxu0 0.0
        %2778 = vmatpush1.xpose.msra.mxu0 0.0
        %2779 = vmatprep.mubr.f32.mxu0 0.0
        %2780 = vmatmul.mubr.f32.gmra.mrb[0].mxu0 %v2710
        %v2781 = vpop.f32.mrb[0].mxu0
        %v2782 = vadd.f32 0.0, %v2781
        %v2783 = vpop.f32.mrb[0].mxu0
        %2784 = vdwg.mxu0
        %v2786 = vsel %vm1984, %v2281, 0
        %v2789 = vsel %vm1984, %v2071, 0
        %2791 = vmatprep.subr.mxu0 0.0
        %2792 = vmatpush1.xpose.msra.mxu0 %v2789
        %2793 = vmatprep.subr.mxu0 0.0
        %2794 = vmatpush1.xpose.msra.mxu0 0.0
        %2795 = vmatprep.subr.mxu0 0.0
        %2796 = vmatpush1.xpose.msra.mxu0 0.0
        %2797 = vmatprep.subr.mxu0 0.0
        %2798 = vmatpush1.xpose.msra.mxu0 0.0
        %2799 = vmatprep.subr.mxu0 0.0
        %2800 = vmatpush1.xpose.msra.mxu0 0.0
        %2801 = vmatprep.subr.mxu0 0.0
        %2802 = vmatpush1.xpose.msra.mxu0 0.0
        %2803 = vmatprep.subr.mxu0 0.0
        %2804 = vmatpush1.xpose.msra.mxu0 0.0
        %2805 = vmatprep.subr.mxu0 0.0
        %2806 = vmatpush1.xpose.msra.mxu0 0.0
        %2807 = vmatprep.subr.mxu0 0.0
        %2808 = vmatpush1.xpose.msra.mxu0 0.0
        %2809 = vmatprep.subr.mxu0 0.0
        %2810 = vmatpush1.xpose.msra.mxu0 0.0
        %2811 = vmatprep.subr.mxu0 0.0
        %2812 = vmatpush1.xpose.msra.mxu0 0.0
        %2813 = vmatprep.subr.mxu0 0.0
        %2814 = vmatpush1.xpose.msra.mxu0 0.0
        %2815 = vmatprep.subr.mxu0 0.0
        %2816 = vmatpush1.xpose.msra.mxu0 0.0
        %2817 = vmatprep.subr.mxu0 0.0
        %2818 = vmatpush1.xpose.msra.mxu0 0.0
        %2819 = vmatprep.subr.mxu0 0.0
        %2820 = vmatpush1.xpose.msra.mxu0 0.0
        %2821 = vmatprep.subr.mxu0 0.0
        %2822 = vmatpush1.xpose.msra.mxu0 0.0
        %2823 = vmatprep.subr.mxu0 0.0
        %2824 = vmatpush1.xpose.msra.mxu0 0.0
        %2825 = vmatprep.subr.mxu0 0.0
        %2826 = vmatpush1.xpose.msra.mxu0 0.0
        %2827 = vmatprep.subr.mxu0 0.0
        %2828 = vmatpush1.xpose.msra.mxu0 0.0
        %2829 = vmatprep.subr.mxu0 0.0
        %2830 = vmatpush1.xpose.msra.mxu0 0.0
        %2831 = vmatprep.subr.mxu0 0.0
        %2832 = vmatpush1.xpose.msra.mxu0 0.0
        %2833 = vmatprep.subr.mxu0 0.0
        %2834 = vmatpush1.xpose.msra.mxu0 0.0
        %2835 = vmatprep.subr.mxu0 0.0
        %2836 = vmatpush1.xpose.msra.mxu0 0.0
        %2837 = vmatprep.subr.mxu0 0.0
        %2838 = vmatpush1.xpose.msra.mxu0 0.0
        %2839 = vmatprep.subr.mxu0 0.0
        %2840 = vmatpush1.xpose.msra.mxu0 0.0
        %2841 = vmatprep.subr.mxu0 0.0
        %2842 = vmatpush1.xpose.msra.mxu0 0.0
        %2843 = vmatprep.subr.mxu0 0.0
        %2844 = vmatpush1.xpose.msra.mxu0 0.0
        %2845 = vmatprep.subr.mxu0 0.0
        %2846 = vmatpush1.xpose.msra.mxu0 0.0
        %2847 = vmatprep.subr.mxu0 0.0
        %2848 = vmatpush1.xpose.msra.mxu0 0.0
        %2849 = vmatprep.subr.mxu0 0.0
        %2850 = vmatpush1.xpose.msra.mxu0 0.0
        %2851 = vmatprep.subr.mxu0 0.0
        %2852 = vmatpush1.xpose.msra.mxu0 0.0
        %2853 = vmatprep.subr.mxu0 0.0
        %2854 = vmatpush1.xpose.msra.mxu0 0.0
        %2855 = vmatprep.mubr.f32.mxu0 0.0
        %2856 = vmatmul.mubr.f32.gmra.mrb[0].mxu0 %v2786
        %v2857 = vpop.f32.mrb[0].mxu0
        %v2858 = vadd.f32 0.0, %v2857
        %v2859 = vpop.f32.mrb[0].mxu0
        %2860 = vdwg.mxu0
        %v2862 = vsel %vm1984, %v2313, 0
        %v2865 = vsel %vm1984, %v2072, 0
        %2867 = vmatprep.subr.mxu0 0.0
        %2868 = vmatpush1.xpose.msra.mxu0 %v2865
        %2869 = vmatprep.subr.mxu0 0.0
        %2870 = vmatpush1.xpose.msra.mxu0 0.0
        %2871 = vmatprep.subr.mxu0 0.0
        %2872 = vmatpush1.xpose.msra.mxu0 0.0
        %2873 = vmatprep.subr.mxu0 0.0
        %2874 = vmatpush1.xpose.msra.mxu0 0.0
        %2875 = vmatprep.subr.mxu0 0.0
        %2876 = vmatpush1.xpose.msra.mxu0 0.0
        %2877 = vmatprep.subr.mxu0 0.0
        %2878 = vmatpush1.xpose.msra.mxu0 0.0
        %2879 = vmatprep.subr.mxu0 0.0
        %2880 = vmatpush1.xpose.msra.mxu0 0.0
        %2881 = vmatprep.subr.mxu0 0.0
        %2882 = vmatpush1.xpose.msra.mxu0 0.0
        %2883 = vmatprep.subr.mxu0 0.0
        %2884 = vmatpush1.xpose.msra.mxu0 0.0
        %2885 = vmatprep.subr.mxu0 0.0
        %2886 = vmatpush1.xpose.msra.mxu0 0.0
        %2887 = vmatprep.subr.mxu0 0.0
        %2888 = vmatpush1.xpose.msra.mxu0 0.0
        %2889 = vmatprep.subr.mxu0 0.0
        %2890 = vmatpush1.xpose.msra.mxu0 0.0
        %2891 = vmatprep.subr.mxu0 0.0
        %2892 = vmatpush1.xpose.msra.mxu0 0.0
        %2893 = vmatprep.subr.mxu0 0.0
        %2894 = vmatpush1.xpose.msra.mxu0 0.0
        %2895 = vmatprep.subr.mxu0 0.0
        %2896 = vmatpush1.xpose.msra.mxu0 0.0
        %2897 = vmatprep.subr.mxu0 0.0
        %2898 = vmatpush1.xpose.msra.mxu0 0.0
        %2899 = vmatprep.subr.mxu0 0.0
        %2900 = vmatpush1.xpose.msra.mxu0 0.0
        %2901 = vmatprep.subr.mxu0 0.0
        %2902 = vmatpush1.xpose.msra.mxu0 0.0
        %2903 = vmatprep.subr.mxu0 0.0
        %2904 = vmatpush1.xpose.msra.mxu0 0.0
        %2905 = vmatprep.subr.mxu0 0.0
        %2906 = vmatpush1.xpose.msra.mxu0 0.0
        %2907 = vmatprep.subr.mxu0 0.0
        %2908 = vmatpush1.xpose.msra.mxu0 0.0
        %2909 = vmatprep.subr.mxu0 0.0
        %2910 = vmatpush1.xpose.msra.mxu0 0.0
        %2911 = vmatprep.subr.mxu0 0.0
        %2912 = vmatpush1.xpose.msra.mxu0 0.0
        %2913 = vmatprep.subr.mxu0 0.0
        %2914 = vmatpush1.xpose.msra.mxu0 0.0
        %2915 = vmatprep.subr.mxu0 0.0
        %2916 = vmatpush1.xpose.msra.mxu0 0.0
        %2917 = vmatprep.subr.mxu0 0.0
        %2918 = vmatpush1.xpose.msra.mxu0 0.0
        %2919 = vmatprep.subr.mxu0 0.0
        %2920 = vmatpush1.xpose.msra.mxu0 0.0
        %2921 = vmatprep.subr.mxu0 0.0
        %2922 = vmatpush1.xpose.msra.mxu0 0.0
        %2923 = vmatprep.subr.mxu0 0.0
        %2924 = vmatpush1.xpose.msra.mxu0 0.0
        %2925 = vmatprep.subr.mxu0 0.0
        %2926 = vmatpush1.xpose.msra.mxu0 0.0
        %2927 = vmatprep.subr.mxu0 0.0
        %2928 = vmatpush1.xpose.msra.mxu0 0.0
        %2929 = vmatprep.subr.mxu0 0.0
        %2930 = vmatpush1.xpose.msra.mxu0 0.0
        %2931 = vmatprep.mubr.f32.mxu0 0.0
        %2932 = vmatmul.mubr.f32.gmra.mrb[0].mxu0 %v2862
        %v2933 = vpop.f32.mrb[0].mxu0
        %v2934 = vadd.f32 0.0, %v2933
        %v2935 = vpop.f32.mrb[0].mxu0
        %2936 = vdwg.mxu0
        %2937 = vxpose.xlu0.b32.start [1/16] %v2402, 128
        %2938 = vxpose.xlu0.b32.cont [2/16] 0.0, 128
        %2939 = vxpose.xlu0.b32.cont [3/16] 0.0, 128
        %2940 = vxpose.xlu0.b32.cont [4/16] 0.0, 128
        %2941 = vxpose.xlu0.b32.cont [5/16] 0.0, 128
        %2942 = vxpose.xlu0.b32.cont [6/16] 0.0, 128
        %2943 = vxpose.xlu0.b32.cont [7/16] 0.0, 128
        %2944 = vxpose.xlu0.b32.cont [8/16] 0.0, 128
        %2945 = vxpose.xlu0.b32.cont [9/16] 0.0, 128
        %2946 = vxpose.xlu0.b32.cont [10/16] 0.0, 128
        %2947 = vxpose.xlu0.b32.cont [11/16] 0.0, 128
        %2948 = vxpose.xlu0.b32.cont [12/16] 0.0, 128
        %2949 = vxpose.xlu0.b32.cont [13/16] 0.0, 128
        %2950 = vxpose.xlu0.b32.cont [14/16] 0.0, 128
        %2951 = vxpose.xlu0.b32.cont [15/16] 0.0, 128
        %2952 = vxpose.xlu0.b32.end [16/16] 0.0, 128
        %v2953 = vpop.trf.xlu0
        %v2954 = vpop.trf.xlu0
        %v2955 = vpop.trf.xlu0
        %v2956 = vpop.trf.xlu0
        %v2957 = vpop.trf.xlu0
        %v2958 = vpop.trf.xlu0
        %v2959 = vpop.trf.xlu0
        %v2960 = vpop.trf.xlu0
        %v2961 = vpop.trf.xlu0
        %v2962 = vpop.trf.xlu0
        %v2963 = vpop.trf.xlu0
        %v2964 = vpop.trf.xlu0
        %v2965 = vpop.trf.xlu0
        %v2966 = vpop.trf.xlu0
        %v2967 = vpop.trf.xlu0
        %v2968 = vpop.trf.xlu0
        %2969 = vxpose.xlu0.b32.start [1/16] %v2478, 128
        %2970 = vxpose.xlu0.b32.cont [2/16] 0.0, 128
        %2971 = vxpose.xlu0.b32.cont [3/16] 0.0, 128
        %2972 = vxpose.xlu0.b32.cont [4/16] 0.0, 128
        %2973 = vxpose.xlu0.b32.cont [5/16] 0.0, 128
        %2974 = vxpose.xlu0.b32.cont [6/16] 0.0, 128
        %2975 = vxpose.xlu0.b32.cont [7/16] 0.0, 128
        %2976 = vxpose.xlu0.b32.cont [8/16] 0.0, 128
        %2977 = vxpose.xlu0.b32.cont [9/16] 0.0, 128
        %2978 = vxpose.xlu0.b32.cont [10/16] 0.0, 128
        %2979 = vxpose.xlu0.b32.cont [11/16] 0.0, 128
        %2980 = vxpose.xlu0.b32.cont [12/16] 0.0, 128
        %2981 = vxpose.xlu0.b32.cont [13/16] 0.0, 128
        %2982 = vxpose.xlu0.b32.cont [14/16] 0.0, 128
        %2983 = vxpose.xlu0.b32.cont [15/16] 0.0, 128
        %2984 = vxpose.xlu0.b32.end [16/16] 0.0, 128
        %v2985 = vpop.trf.xlu0
        %v2986 = vpop.trf.xlu0
        %v2987 = vpop.trf.xlu0
        %v2988 = vpop.trf.xlu0
        %v2989 = vpop.trf.xlu0
        %v2990 = vpop.trf.xlu0
        %v2991 = vpop.trf.xlu0
        %v2992 = vpop.trf.xlu0
        %v2993 = vpop.trf.xlu0
        %v2994 = vpop.trf.xlu0
        %v2995 = vpop.trf.xlu0
        %v2996 = vpop.trf.xlu0
        %v2997 = vpop.trf.xlu0
        %v2998 = vpop.trf.xlu0
        %v2999 = vpop.trf.xlu0
        %v3000 = vpop.trf.xlu0
        %3001 = vxpose.xlu0.b32.start [1/16] %v2554, 128
        %3002 = vxpose.xlu0.b32.cont [2/16] 0.0, 128
        %3003 = vxpose.xlu0.b32.cont [3/16] 0.0, 128
        %3004 = vxpose.xlu0.b32.cont [4/16] 0.0, 128
        %3005 = vxpose.xlu0.b32.cont [5/16] 0.0, 128
        %3006 = vxpose.xlu0.b32.cont [6/16] 0.0, 128
        %3007 = vxpose.xlu0.b32.cont [7/16] 0.0, 128
        %3008 = vxpose.xlu0.b32.cont [8/16] 0.0, 128
        %3009 = vxpose.xlu0.b32.cont [9/16] 0.0, 128
        %3010 = vxpose.xlu0.b32.cont [10/16] 0.0, 128
        %3011 = vxpose.xlu0.b32.cont [11/16] 0.0, 128
        %3012 = vxpose.xlu0.b32.cont [12/16] 0.0, 128
        %3013 = vxpose.xlu0.b32.cont [13/16] 0.0, 128
        %3014 = vxpose.xlu0.b32.cont [14/16] 0.0, 128
        %3015 = vxpose.xlu0.b32.cont [15/16] 0.0, 128
        %3016 = vxpose.xlu0.b32.end [16/16] 0.0, 128
        %v3017 = vpop.trf.xlu0
        %v3018 = vpop.trf.xlu0
        %v3019 = vpop.trf.xlu0
        %v3020 = vpop.trf.xlu0
        %v3021 = vpop.trf.xlu0
        %v3022 = vpop.trf.xlu0
        %v3023 = vpop.trf.xlu0
        %v3024 = vpop.trf.xlu0
        %v3025 = vpop.trf.xlu0
        %v3026 = vpop.trf.xlu0
        %v3027 = vpop.trf.xlu0
        %v3028 = vpop.trf.xlu0
        %v3029 = vpop.trf.xlu0
        %v3030 = vpop.trf.xlu0
        %v3031 = vpop.trf.xlu0
        %v3032 = vpop.trf.xlu0
        %3033 = vxpose.xlu0.b32.start [1/16] %v2630, 128
        %3034 = vxpose.xlu0.b32.cont [2/16] 0.0, 128
        %3035 = vxpose.xlu0.b32.cont [3/16] 0.0, 128
        %3036 = vxpose.xlu0.b32.cont [4/16] 0.0, 128
        %3037 = vxpose.xlu0.b32.cont [5/16] 0.0, 128
        %3038 = vxpose.xlu0.b32.cont [6/16] 0.0, 128
        %3039 = vxpose.xlu0.b32.cont [7/16] 0.0, 128
        %3040 = vxpose.xlu0.b32.cont [8/16] 0.0, 128
        %3041 = vxpose.xlu0.b32.cont [9/16] 0.0, 128
        %3042 = vxpose.xlu0.b32.cont [10/16] 0.0, 128
        %3043 = vxpose.xlu0.b32.cont [11/16] 0.0, 128
        %3044 = vxpose.xlu0.b32.cont [12/16] 0.0, 128
        %3045 = vxpose.xlu0.b32.cont [13/16] 0.0, 128
        %3046 = vxpose.xlu0.b32.cont [14/16] 0.0, 128
        %3047 = vxpose.xlu0.b32.cont [15/16] 0.0, 128
        %3048 = vxpose.xlu0.b32.end [16/16] 0.0, 128
        %v3049 = vpop.trf.xlu0
        %v3050 = vpop.trf.xlu0
        %v3051 = vpop.trf.xlu0
        %v3052 = vpop.trf.xlu0
        %v3053 = vpop.trf.xlu0
        %v3054 = vpop.trf.xlu0
        %v3055 = vpop.trf.xlu0
        %v3056 = vpop.trf.xlu0
        %v3057 = vpop.trf.xlu0
        %v3058 = vpop.trf.xlu0
        %v3059 = vpop.trf.xlu0
        %v3060 = vpop.trf.xlu0
        %v3061 = vpop.trf.xlu0
        %v3062 = vpop.trf.xlu0
        %v3063 = vpop.trf.xlu0
        %v3064 = vpop.trf.xlu0
        %3065 = vxpose.xlu0.b32.start [1/16] %v2706, 128
        %3066 = vxpose.xlu0.b32.cont [2/16] 0.0, 128
        %3067 = vxpose.xlu0.b32.cont [3/16] 0.0, 128
        %3068 = vxpose.xlu0.b32.cont [4/16] 0.0, 128
        %3069 = vxpose.xlu0.b32.cont [5/16] 0.0, 128
        %3070 = vxpose.xlu0.b32.cont [6/16] 0.0, 128
        %3071 = vxpose.xlu0.b32.cont [7/16] 0.0, 128
        %3072 = vxpose.xlu0.b32.cont [8/16] 0.0, 128
        %3073 = vxpose.xlu0.b32.cont [9/16] 0.0, 128
        %3074 = vxpose.xlu0.b32.cont [10/16] 0.0, 128
        %3075 = vxpose.xlu0.b32.cont [11/16] 0.0, 128
        %3076 = vxpose.xlu0.b32.cont [12/16] 0.0, 128
        %3077 = vxpose.xlu0.b32.cont [13/16] 0.0, 128
        %3078 = vxpose.xlu0.b32.cont [14/16] 0.0, 128
        %3079 = vxpose.xlu0.b32.cont [15/16] 0.0, 128
        %3080 = vxpose.xlu0.b32.end [16/16] 0.0, 128
        %v3081 = vpop.trf.xlu0
        %v3082 = vpop.trf.xlu0
        %v3083 = vpop.trf.xlu0
        %v3084 = vpop.trf.xlu0
        %v3085 = vpop.trf.xlu0
        %v3086 = vpop.trf.xlu0
        %v3087 = vpop.trf.xlu0
        %v3088 = vpop.trf.xlu0
        %v3089 = vpop.trf.xlu0
        %v3090 = vpop.trf.xlu0
        %v3091 = vpop.trf.xlu0
        %v3092 = vpop.trf.xlu0
        %v3093 = vpop.trf.xlu0
        %v3094 = vpop.trf.xlu0
        %v3095 = vpop.trf.xlu0
        %v3096 = vpop.trf.xlu0
        %3097 = vxpose.xlu0.b32.start [1/16] %v2782, 128
        %3098 = vxpose.xlu0.b32.cont [2/16] 0.0, 128
        %3099 = vxpose.xlu0.b32.cont [3/16] 0.0, 128
        %3100 = vxpose.xlu0.b32.cont [4/16] 0.0, 128
        %3101 = vxpose.xlu0.b32.cont [5/16] 0.0, 128
        %3102 = vxpose.xlu0.b32.cont [6/16] 0.0, 128
        %3103 = vxpose.xlu0.b32.cont [7/16] 0.0, 128
        %3104 = vxpose.xlu0.b32.cont [8/16] 0.0, 128
        %3105 = vxpose.xlu0.b32.cont [9/16] 0.0, 128
        %3106 = vxpose.xlu0.b32.cont [10/16] 0.0, 128
        %3107 = vxpose.xlu0.b32.cont [11/16] 0.0, 128
        %3108 = vxpose.xlu0.b32.cont [12/16] 0.0, 128
        %3109 = vxpose.xlu0.b32.cont [13/16] 0.0, 128
        %3110 = vxpose.xlu0.b32.cont [14/16] 0.0, 128
        %3111 = vxpose.xlu0.b32.cont [15/16] 0.0, 128
        %3112 = vxpose.xlu0.b32.end [16/16] 0.0, 128
        %v3113 = vpop.trf.xlu0
        %v3114 = vpop.trf.xlu0
        %v3115 = vpop.trf.xlu0
        %v3116 = vpop.trf.xlu0
        %v3117 = vpop.trf.xlu0
        %v3118 = vpop.trf.xlu0
        %v3119 = vpop.trf.xlu0
        %v3120 = vpop.trf.xlu0
        %v3121 = vpop.trf.xlu0
        %v3122 = vpop.trf.xlu0
        %v3123 = vpop.trf.xlu0
        %v3124 = vpop.trf.xlu0
        %v3125 = vpop.trf.xlu0
        %v3126 = vpop.trf.xlu0
        %v3127 = vpop.trf.xlu0
        %v3128 = vpop.trf.xlu0
        %3129 = vxpose.xlu0.b32.start [1/16] %v2858, 128
        %3130 = vxpose.xlu0.b32.cont [2/16] 0.0, 128
        %3131 = vxpose.xlu0.b32.cont [3/16] 0.0, 128
        %3132 = vxpose.xlu0.b32.cont [4/16] 0.0, 128
        %3133 = vxpose.xlu0.b32.cont [5/16] 0.0, 128
        %3134 = vxpose.xlu0.b32.cont [6/16] 0.0, 128
        %3135 = vxpose.xlu0.b32.cont [7/16] 0.0, 128
        %3136 = vxpose.xlu0.b32.cont [8/16] 0.0, 128
        %3137 = vxpose.xlu0.b32.cont [9/16] 0.0, 128
        %3138 = vxpose.xlu0.b32.cont [10/16] 0.0, 128
        %3139 = vxpose.xlu0.b32.cont [11/16] 0.0, 128
        %3140 = vxpose.xlu0.b32.cont [12/16] 0.0, 128
        %3141 = vxpose.xlu0.b32.cont [13/16] 0.0, 128
        %3142 = vxpose.xlu0.b32.cont [14/16] 0.0, 128
        %3143 = vxpose.xlu0.b32.cont [15/16] 0.0, 128
        %3144 = vxpose.xlu0.b32.end [16/16] 0.0, 128
        %v3145 = vpop.trf.xlu0
        %v3146 = vpop.trf.xlu0
        %v3147 = vpop.trf.xlu0
        %v3148 = vpop.trf.xlu0
        %v3149 = vpop.trf.xlu0
        %v3150 = vpop.trf.xlu0
        %v3151 = vpop.trf.xlu0
        %v3152 = vpop.trf.xlu0
        %v3153 = vpop.trf.xlu0
        %v3154 = vpop.trf.xlu0
        %v3155 = vpop.trf.xlu0
        %v3156 = vpop.trf.xlu0
        %v3157 = vpop.trf.xlu0
        %v3158 = vpop.trf.xlu0
        %v3159 = vpop.trf.xlu0
        %v3160 = vpop.trf.xlu0
        %3161 = vxpose.xlu0.b32.start [1/16] %v2934, 128
        %3162 = vxpose.xlu0.b32.cont [2/16] 0.0, 128
        %3163 = vxpose.xlu0.b32.cont [3/16] 0.0, 128
        %3164 = vxpose.xlu0.b32.cont [4/16] 0.0, 128
        %3165 = vxpose.xlu0.b32.cont [5/16] 0.0, 128
        %3166 = vxpose.xlu0.b32.cont [6/16] 0.0, 128
        %3167 = vxpose.xlu0.b32.cont [7/16] 0.0, 128
        %3168 = vxpose.xlu0.b32.cont [8/16] 0.0, 128
        %3169 = vxpose.xlu0.b32.cont [9/16] 0.0, 128
        %3170 = vxpose.xlu0.b32.cont [10/16] 0.0, 128
        %3171 = vxpose.xlu0.b32.cont [11/16] 0.0, 128
        %3172 = vxpose.xlu0.b32.cont [12/16] 0.0, 128
        %3173 = vxpose.xlu0.b32.cont [13/16] 0.0, 128
        %3174 = vxpose.xlu0.b32.cont [14/16] 0.0, 128
        %3175 = vxpose.xlu0.b32.cont [15/16] 0.0, 128
        %3176 = vxpose.xlu0.b32.end [16/16] 0.0, 128
        %v3177 = vpop.trf.xlu0
        %v3178 = vpop.trf.xlu0
        %v3179 = vpop.trf.xlu0
        %v3180 = vpop.trf.xlu0
        %v3181 = vpop.trf.xlu0
        %v3182 = vpop.trf.xlu0
        %v3183 = vpop.trf.xlu0
        %v3184 = vpop.trf.xlu0
        %v3185 = vpop.trf.xlu0
        %v3186 = vpop.trf.xlu0
        %v3187 = vpop.trf.xlu0
        %v3188 = vpop.trf.xlu0
        %v3189 = vpop.trf.xlu0
        %v3190 = vpop.trf.xlu0
        %v3191 = vpop.trf.xlu0
        %v3192 = vpop.trf.xlu0
        %v3193 = vcombine.low %v2953, %v3017
        %v3194 = vcombine.high %v2953, %v3017
        %v3196 = vunpack.c.l.s4 1983009808
        %v3197 = vunpack.c.0.s8 %v3196
        %v3198 = vlaneseq
        %v3199 = vshrl.u32 %v3198, 7
        %v3200 = vsub.s32 %v3197, %v3199
        %v3201 = vrot.slane %v3193, %v3200
        %v3203 = vunpack.c.l.s4 1983009808
        %v3204 = vunpack.c.0.s8 %v3203
        %v3205 = vlaneseq
        %v3206 = vshrl.u32 %v3205, 7
        %v3207 = vsub.s32 %v3204, %v3206
        %v3208 = vrot.slane %v3194, %v3207
        %v3209 = vcombine.low %v2985, %v3049
        %v3210 = vcombine.high %v2985, %v3049
        %v3212 = vunpack.c.l.s4 1983009808
        %v3213 = vunpack.c.0.s8 %v3212
        %v3214 = vlaneseq
        %v3215 = vshrl.u32 %v3214, 7
        %v3216 = vsub.s32 %v3213, %v3215
        %v3217 = vrot.slane %v3209, %v3216
        %v3219 = vunpack.c.l.s4 1983009808
        %v3220 = vunpack.c.0.s8 %v3219
        %v3221 = vlaneseq
        %v3222 = vshrl.u32 %v3221, 7
        %v3223 = vsub.s32 %v3220, %v3222
        %v3224 = vrot.slane %v3210, %v3223
        %v3225 = vcombine.low %v3081, %v3145
        %v3226 = vcombine.high %v3081, %v3145
        %v3228 = vunpack.c.l.s4 1983009808
        %v3229 = vunpack.c.0.s8 %v3228
        %v3230 = vlaneseq
        %v3231 = vshrl.u32 %v3230, 7
        %v3232 = vsub.s32 %v3229, %v3231
        %v3233 = vrot.slane %v3225, %v3232
        %v3235 = vunpack.c.l.s4 1983009808
        %v3236 = vunpack.c.0.s8 %v3235
        %v3237 = vlaneseq
        %v3238 = vshrl.u32 %v3237, 7
        %v3239 = vsub.s32 %v3236, %v3238
        %v3240 = vrot.slane %v3226, %v3239
        %v3241 = vcombine.low %v3113, %v3177
        %v3242 = vcombine.high %v3113, %v3177
        %v3244 = vunpack.c.l.s4 1983009808
        %v3245 = vunpack.c.0.s8 %v3244
        %v3246 = vlaneseq
        %v3247 = vshrl.u32 %v3246, 7
        %v3248 = vsub.s32 %v3245, %v3247
        %v3249 = vrot.slane %v3241, %v3248
        %v3251 = vunpack.c.l.s4 1983009808
        %v3252 = vunpack.c.0.s8 %v3251
        %v3253 = vlaneseq
        %v3254 = vshrl.u32 %v3253, 7
        %v3255 = vsub.s32 %v3252, %v3254
        %v3256 = vrot.slane %v3242, %v3255
        %v3257 = vcombine.low %v3201, %v3217
        %v3258 = vcombine.high %v3201, %v3217
        %v3260 = vunpack.c.l.s4 1934713408
        %v3261 = vunpack.c.0.s8 %v3260
        %v3262 = vlaneseq
        %v3263 = vshrl.u32 %v3262, 7
        %v3264 = vsub.s32 %v3261, %v3263
        %v3265 = vrot.slane %v3257, %v3264
        %v3267 = vunpack.c.l.s4 1934713408
        %v3268 = vunpack.c.0.s8 %v3267
        %v3269 = vlaneseq
        %v3270 = vshrl.u32 %v3269, 7
        %v3271 = vsub.s32 %v3268, %v3270
        %v3272 = vrot.slane %v3258, %v3271
        %v3273 = vcombine.low %v3208, %v3224
        %v3274 = vcombine.high %v3208, %v3224
        %v3276 = vunpack.c.l.s4 1934713408
        %v3277 = vunpack.c.0.s8 %v3276
        %v3278 = vlaneseq
        %v3279 = vshrl.u32 %v3278, 7
        %v3280 = vsub.s32 %v3277, %v3279
        %v3281 = vrot.slane %v3273, %v3280
        %v3283 = vunpack.c.l.s4 1934713408
        %v3284 = vunpack.c.0.s8 %v3283
        %v3285 = vlaneseq
        %v3286 = vshrl.u32 %v3285, 7
        %v3287 = vsub.s32 %v3284, %v3286
        %v3288 = vrot.slane %v3274, %v3287
        %v3289 = vcombine.low %v3233, %v3249
        %v3290 = vcombine.high %v3233, %v3249
        %v3292 = vunpack.c.l.s4 1934713408
        %v3293 = vunpack.c.0.s8 %v3292
        %v3294 = vlaneseq
        %v3295 = vshrl.u32 %v3294, 7
        %v3296 = vsub.s32 %v3293, %v3295
        %v3297 = vrot.slane %v3289, %v3296
        %v3299 = vunpack.c.l.s4 1934713408
        %v3300 = vunpack.c.0.s8 %v3299
        %v3301 = vlaneseq
        %v3302 = vshrl.u32 %v3301, 7
        %v3303 = vsub.s32 %v3300, %v3302
        %v3304 = vrot.slane %v3290, %v3303
        %v3305 = vcombine.low %v3240, %v3256
        %v3306 = vcombine.high %v3240, %v3256
        %v3308 = vunpack.c.l.s4 1934713408
        %v3309 = vunpack.c.0.s8 %v3308
        %v3310 = vlaneseq
        %v3311 = vshrl.u32 %v3310, 7
        %v3312 = vsub.s32 %v3309, %v3311
        %v3313 = vrot.slane %v3305, %v3312
        %v3315 = vunpack.c.l.s4 1934713408
        %v3316 = vunpack.c.0.s8 %v3315
        %v3317 = vlaneseq
        %v3318 = vshrl.u32 %v3317, 7
        %v3319 = vsub.s32 %v3316, %v3318
        %v3320 = vrot.slane %v3306, %v3319
        %v3321 = vcombine.low %v3265, %v3297
        %v3322 = vcombine.high %v3265, %v3297
        %v3323 = vcombine.low %v3272, %v3304
        %v3324 = vcombine.high %v3272, %v3304
        %v3325 = vcombine.low %v3281, %v3313
        %v3326 = vcombine.high %v3281, %v3313
        %v3327 = vcombine.low %v3288, %v3320
        %v3328 = vcombine.high %v3288, %v3320
        %v3329 = vcombine.low %v3321, %v3323
        %v3330 = vcombine.high %v3321, %v3323
        %v3332 = vunpack.c.l.s4 1983009808
        %v3333 = vunpack.c.0.s8 %v3332
        %v3334 = vlaneseq
        %v3335 = vshrl.u32 %v3334, 7
        %v3336 = vsub.s32 %v3333, %v3335
        %v3337 = vrot.slane %v3329, %v3336
        %v3339 = vunpack.c.l.s4 1983009808
        %v3340 = vunpack.c.0.s8 %v3339
        %v3341 = vlaneseq
        %v3342 = vshrl.u32 %v3341, 7
        %v3343 = vsub.s32 %v3340, %v3342
        %v3344 = vrot.slane %v3330, %v3343
        %v3345 = vcombine.low %v3322, %v3324
        %v3346 = vcombine.high %v3322, %v3324
        %v3348 = vunpack.c.l.s4 1983009808
        %v3349 = vunpack.c.0.s8 %v3348
        %v3350 = vlaneseq
        %v3351 = vshrl.u32 %v3350, 7
        %v3352 = vsub.s32 %v3349, %v3351
        %v3353 = vrot.slane %v3345, %v3352
        %v3355 = vunpack.c.l.s4 1983009808
        %v3356 = vunpack.c.0.s8 %v3355
        %v3357 = vlaneseq
        %v3358 = vshrl.u32 %v3357, 7
        %v3359 = vsub.s32 %v3356, %v3358
        %v3360 = vrot.slane %v3346, %v3359
        %v3361 = vcombine.low %v3325, %v3327
        %v3362 = vcombine.high %v3325, %v3327
        %v3364 = vunpack.c.l.s4 1983009808
        %v3365 = vunpack.c.0.s8 %v3364
        %v3366 = vlaneseq
        %v3367 = vshrl.u32 %v3366, 7
        %v3368 = vsub.s32 %v3365, %v3367
        %v3369 = vrot.slane %v3361, %v3368
        %v3371 = vunpack.c.l.s4 1983009808
        %v3372 = vunpack.c.0.s8 %v3371
        %v3373 = vlaneseq
        %v3374 = vshrl.u32 %v3373, 7
        %v3375 = vsub.s32 %v3372, %v3374
        %v3376 = vrot.slane %v3362, %v3375
        %v3377 = vcombine.low %v3326, %v3328
        %v3378 = vcombine.high %v3326, %v3328
        %v3380 = vunpack.c.l.s4 1983009808
        %v3381 = vunpack.c.0.s8 %v3380
        %v3382 = vlaneseq
        %v3383 = vshrl.u32 %v3382, 7
        %v3384 = vsub.s32 %v3381, %v3383
        %v3385 = vrot.slane %v3377, %v3384
        %v3387 = vunpack.c.l.s4 1983009808
        %v3388 = vunpack.c.0.s8 %v3387
        %v3389 = vlaneseq
        %v3390 = vshrl.u32 %v3389, 7
        %v3391 = vsub.s32 %v3388, %v3390
        %v3392 = vrot.slane %v3378, %v3391
        %v3393 = vcombine.low %v3337, %v3353
        %v3394 = vcombine.high %v3337, %v3353
        %v3396 = vunpack.c.l.s4 1934713408
        %v3397 = vunpack.c.0.s8 %v3396
        %v3398 = vlaneseq
        %v3399 = vshrl.u32 %v3398, 7
        %v3400 = vsub.s32 %v3397, %v3399
        %v3401 = vrot.slane %v3393, %v3400
        %v3403 = vunpack.c.l.s4 1934713408
        %v3404 = vunpack.c.0.s8 %v3403
        %v3405 = vlaneseq
        %v3406 = vshrl.u32 %v3405, 7
        %v3407 = vsub.s32 %v3404, %v3406
        %v3408 = vrot.slane %v3394, %v3407
        %v3409 = vcombine.low %v3344, %v3360
        %v3410 = vcombine.high %v3344, %v3360
        %v3412 = vunpack.c.l.s4 1934713408
        %v3413 = vunpack.c.0.s8 %v3412
        %v3414 = vlaneseq
        %v3415 = vshrl.u32 %v3414, 7
        %v3416 = vsub.s32 %v3413, %v3415
        %v3417 = vrot.slane %v3409, %v3416
        %v3419 = vunpack.c.l.s4 1934713408
        %v3420 = vunpack.c.0.s8 %v3419
        %v3421 = vlaneseq
        %v3422 = vshrl.u32 %v3421, 7
        %v3423 = vsub.s32 %v3420, %v3422
        %v3424 = vrot.slane %v3410, %v3423
        %v3425 = vcombine.low %v3369, %v3385
        %v3426 = vcombine.high %v3369, %v3385
        %v3428 = vunpack.c.l.s4 1934713408
        %v3429 = vunpack.c.0.s8 %v3428
        %v3430 = vlaneseq
        %v3431 = vshrl.u32 %v3430, 7
        %v3432 = vsub.s32 %v3429, %v3431
        %v3433 = vrot.slane %v3425, %v3432
        %v3435 = vunpack.c.l.s4 1934713408
        %v3436 = vunpack.c.0.s8 %v3435
        %v3437 = vlaneseq
        %v3438 = vshrl.u32 %v3437, 7
        %v3439 = vsub.s32 %v3436, %v3438
        %v3440 = vrot.slane %v3426, %v3439
        %v3441 = vcombine.low %v3376, %v3392
        %v3442 = vcombine.high %v3376, %v3392
        %v3444 = vunpack.c.l.s4 1934713408
        %v3445 = vunpack.c.0.s8 %v3444
        %v3446 = vlaneseq
        %v3447 = vshrl.u32 %v3446, 7
        %v3448 = vsub.s32 %v3445, %v3447
        %v3449 = vrot.slane %v3441, %v3448
        %v3451 = vunpack.c.l.s4 1934713408
        %v3452 = vunpack.c.0.s8 %v3451
        %v3453 = vlaneseq
        %v3454 = vshrl.u32 %v3453, 7
        %v3455 = vsub.s32 %v3452, %v3454
        %v3456 = vrot.slane %v3442, %v3455
        %v3457 = vcombine.low %v3401, %v3433
        %v3458 = vcombine.high %v3401, %v3433
        %v3459 = vcombine.low %v3408, %v3440
        %v3460 = vcombine.high %v3408, %v3440
        %v3461 = vcombine.low %v3417, %v3449
        %v3462 = vcombine.high %v3417, %v3449
        %v3463 = vcombine.low %v3424, %v3456
        %v3464 = vcombine.high %v3424, %v3456
        %3466 = vrot.lane.b32.xlu0 %v3458, 4
        %v3467 = vpop.permute.xlu0 %3466
        %3470 = vrot.lane.b32.xlu0 %v3459, 8
        %v3471 = vpop.permute.xlu0 %3470
        %3474 = vrot.lane.b32.xlu0 %v3460, 12
        %v3475 = vpop.permute.xlu0 %3474
        %3478 = vrot.lane.b32.xlu0 %v3461, 16
        %v3479 = vpop.permute.xlu0 %3478
        %3482 = vrot.lane.b32.xlu0 %v3462, 20
        %v3483 = vpop.permute.xlu0 %3482
        %3486 = vrot.lane.b32.xlu0 %v3463, 24
        %v3487 = vpop.permute.xlu0 %3486
        %3490 = vrot.lane.b32.xlu0 %v3464, 28
        %v3491 = vpop.permute.xlu0 %3490
        %v3493 = vsel %vm1382, %v3457, %v3467
        %v3494 = vsel %vm1984, %v3493, %v3471
        %vm3495 = vcmask 97280
        %v3496 = vsel %vm3495, %v3494, %v3475
        %vm3497 = vcmask 130048
        %v3498 = vsel %vm3497, %v3496, %v3479
        %vm3499 = vcmask 162816
        %v3500 = vsel %vm3499, %v3498, %v3483
        %vm3501 = vcmask 195584
        %v3502 = vsel %vm3501, %v3500, %v3487
        %vm3503 = vcmask 228352
        %v3504 = vsel %vm3503, %v3502, %v3491
        %v3506 = vlaneseq
        %v3507 = vshrl.u32 %v3506, 7
        %v3508 = vsub.s32 0, %v3507
        %v3509 = vrot.slane %v852, %v3508
        %v3512 = vsel %vm807, %v3504, 0
        %3514 = vmatprep.subr.mxu0 0.0
        %3515 = vmatpush1.msra.mxu0 %v848
        %3516 = vmatprep.subr.mxu0 0.0
        %3517 = vmatpush1.msra.mxu0 %v849
        %3518 = vmatprep.subr.mxu0 0.0
        %3519 = vmatpush1.msra.mxu0 %v850
        %3520 = vmatprep.subr.mxu0 0.0
        %3521 = vmatpush1.msra.mxu0 %v851
        %3522 = vmatprep.subr.mxu0 0.0
        %3523 = vmatpush1.msra.mxu0 0.0
        %3524 = vmatprep.subr.mxu0 0.0
        %3525 = vmatpush1.msra.mxu0 0.0
        %3526 = vmatprep.subr.mxu0 0.0
        %3527 = vmatpush1.msra.mxu0 0.0
        %3528 = vmatprep.subr.mxu0 0.0
        %3529 = vmatpush1.msra.mxu0 0.0
        %3530 = vmatprep.subr.mxu0 0.0
        %3531 = vmatpush1.msra.mxu0 0.0
        %3532 = vmatprep.subr.mxu0 0.0
        %3533 = vmatpush1.msra.mxu0 0.0
        %3534 = vmatprep.subr.mxu0 0.0
        %3535 = vmatpush1.msra.mxu0 0.0
        %3536 = vmatprep.subr.mxu0 0.0
        %3537 = vmatpush1.msra.mxu0 0.0
        %3538 = vmatprep.subr.mxu0 0.0
        %3539 = vmatpush1.msra.mxu0 0.0
        %3540 = vmatprep.subr.mxu0 0.0
        %3541 = vmatpush1.msra.mxu0 0.0
        %3542 = vmatprep.subr.mxu0 0.0
        %3543 = vmatpush1.msra.mxu0 0.0
        %3544 = vmatprep.subr.mxu0 0.0
        %3545 = vmatpush1.msra.mxu0 0.0
        %3546 = vmatprep.subr.mxu0 0.0
        %3547 = vmatpush1.msra.mxu0 0.0
        %3548 = vmatprep.subr.mxu0 0.0
        %3549 = vmatpush1.msra.mxu0 0.0
        %3550 = vmatprep.subr.mxu0 0.0
        %3551 = vmatpush1.msra.mxu0 0.0
        %3552 = vmatprep.subr.mxu0 0.0
        %3553 = vmatpush1.msra.mxu0 0.0
        %3554 = vmatprep.subr.mxu0 0.0
        %3555 = vmatpush1.msra.mxu0 0.0
        %3556 = vmatprep.subr.mxu0 0.0
        %3557 = vmatpush1.msra.mxu0 0.0
        %3558 = vmatprep.subr.mxu0 0.0
        %3559 = vmatpush1.msra.mxu0 0.0
        %3560 = vmatprep.subr.mxu0 0.0
        %3561 = vmatpush1.msra.mxu0 0.0
        %3562 = vmatprep.subr.mxu0 0.0
        %3563 = vmatpush1.msra.mxu0 0.0
        %3564 = vmatprep.subr.mxu0 0.0
        %3565 = vmatpush1.msra.mxu0 0.0
        %3566 = vmatprep.subr.mxu0 0.0
        %3567 = vmatpush1.msra.mxu0 0.0
        %3568 = vmatprep.subr.mxu0 0.0
        %3569 = vmatpush1.msra.mxu0 0.0
        %3570 = vmatprep.subr.mxu0 0.0
        %3571 = vmatpush1.msra.mxu0 0.0
        %3572 = vmatprep.subr.mxu0 0.0
        %3573 = vmatpush1.msra.mxu0 0.0
        %3574 = vmatprep.subr.mxu0 0.0
        %3575 = vmatpush1.msra.mxu0 0.0
        %3576 = vmatprep.subr.mxu0 0.0
        %3577 = vmatpush1.msra.mxu0 0.0
        %3578 = vmatprep.mubr.f32.mxu0 0.0
        %3579 = vmatmul.mubr.f32.gmra.mrb[0].mxu0 %v3512
        %v3580 = vpop.f32.mrb[0].mxu0
        %v3581 = vadd.f32 %v3509, %v3580
        %v3582 = vpop.f32.mrb[0].mxu0
        %3583 = vdwg.mxu0
        %v3584 = vadd.f32 %v802, %v3581
        %v3585 = vld [vmem:[%s9] sm:$0x1]
        %v3586 = vld [vmem:[%s10] sm:$0x1]
        %v3587 = vsel %vm807, %v3584, 0.0
        %3588 = vadd.xlane.f32.xlu0 %v3587
        %v3589 = vpop.xlane.xlu0 %3588
        %v3590 = vmul.f32 %v3589, %v811
        %v3591 = vsub.f32 %v3584, %v3590
        %v3592 = vmul.f32 %v3591, %v3591
        %v3593 = vsel %vm807, %v3592, 0.0
        %3594 = vadd.xlane.f32.xlu0 %v3593
        %v3595 = vpop.xlane.xlu0 %3594
        %v3596 = vmul.f32 %v3595, %v811
        %v3597 = vadd.f32 %v3596, 1e-05
        %v3598 = vrsqrt.pop %v3597
        %v3599 = vmul.f32 %v3591, %v3598
        %v3601 = vlaneseq
        %v3602 = vshrl.u32 %v3601, 7
        %v3603 = vsub.s32 0, %v3602
        %v3604 = vrot.slane %v3585, %v3603
        %v3606 = vmul.f32 %v3599, %v3604
        %v3608 = vlaneseq
        %v3609 = vshrl.u32 %v3608, 7
        %v3610 = vsub.s32 0, %v3609
        %v3611 = vrot.slane %v3586, %v3610
        %v3613 = vadd.f32 %v3606, %v3611
        %v3614 = vld [vmem:[%s11] sm:$0xff]
        %v3615 = vld [vmem:[%s11 + $0x8] sm:$0xff]
        %v3616 = vld [vmem:[%s11 + $0x10] sm:$0xff]
        %v3617 = vld [vmem:[%s11 + $0x18] sm:$0xff]
        %v3618 = vld [vmem:[#allocation7] sm:$0xff]
        %v3619 = vld [vmem:[#allocation7 + $0x8] sm:$0xff]
        %v3620 = vld [vmem:[#allocation7 + $0x10] sm:$0xff]
        %v3621 = vld [vmem:[#allocation7 + $0x18] sm:$0xff]
        %v3622 = vld [vmem:[#allocation8] sm:$0xff]
        %v3623 = vld [vmem:[#allocation8 + $0x8] sm:$0xff]
        %v3624 = vld [vmem:[#allocation8 + $0x10] sm:$0xff]
        %v3625 = vld [vmem:[#allocation8 + $0x18] sm:$0xff]
        %v3626 = vld [vmem:[#allocation10] sm:$0xff]
        %v3627 = vld [vmem:[#allocation10 + $0x8] sm:$0xff]
        %v3628 = vld [vmem:[#allocation10 + $0x10] sm:$0xff]
        %v3629 = vld [vmem:[#allocation10 + $0x18] sm:$0xff]
        %v3630 = vld [vmem:[#allocation11] sm:$0x1]
        %v3632 = vsel %vm807, %v3613, 0
        %3634 = vmatprep.subr.mxu0 0.0
        %3635 = vmatpush1.msra.mxu0 %v3614
        %3636 = vmatprep.subr.mxu0 0.0
        %3637 = vmatpush1.msra.mxu0 %v3615
        %3638 = vmatprep.subr.mxu0 0.0
        %3639 = vmatpush1.msra.mxu0 %v3616
        %3640 = vmatprep.subr.mxu0 0.0
        %3641 = vmatpush1.msra.mxu0 %v3617
        %3642 = vmatprep.subr.mxu0 0.0
        %3643 = vmatpush1.msra.mxu0 0.0
        %3644 = vmatprep.subr.mxu0 0.0
        %3645 = vmatpush1.msra.mxu0 0.0
        %3646 = vmatprep.subr.mxu0 0.0
        %3647 = vmatpush1.msra.mxu0 0.0
        %3648 = vmatprep.subr.mxu0 0.0
        %3649 = vmatpush1.msra.mxu0 0.0
        %3650 = vmatprep.subr.mxu0 0.0
        %3651 = vmatpush1.msra.mxu0 0.0
        %3652 = vmatprep.subr.mxu0 0.0
        %3653 = vmatpush1.msra.mxu0 0.0
        %3654 = vmatprep.subr.mxu0 0.0
        %3655 = vmatpush1.msra.mxu0 0.0
        %3656 = vmatprep.subr.mxu0 0.0
        %3657 = vmatpush1.msra.mxu0 0.0
        %3658 = vmatprep.subr.mxu0 0.0
        %3659 = vmatpush1.msra.mxu0 0.0
        %3660 = vmatprep.subr.mxu0 0.0
        %3661 = vmatpush1.msra.mxu0 0.0
        %3662 = vmatprep.subr.mxu0 0.0
        %3663 = vmatpush1.msra.mxu0 0.0
        %3664 = vmatprep.subr.mxu0 0.0
        %3665 = vmatpush1.msra.mxu0 0.0
        %3666 = vmatprep.subr.mxu0 0.0
        %3667 = vmatpush1.msra.mxu0 0.0
        %3668 = vmatprep.subr.mxu0 0.0
        %3669 = vmatpush1.msra.mxu0 0.0
        %3670 = vmatprep.subr.mxu0 0.0
        %3671 = vmatpush1.msra.mxu0 0.0
        %3672 = vmatprep.subr.mxu0 0.0
        %3673 = vmatpush1.msra.mxu0 0.0
        %3674 = vmatprep.subr.mxu0 0.0
        %3675 = vmatpush1.msra.mxu0 0.0
        %3676 = vmatprep.subr.mxu0 0.0
        %3677 = vmatpush1.msra.mxu0 0.0
        %3678 = vmatprep.subr.mxu0 0.0
        %3679 = vmatpush1.msra.mxu0 0.0
        %3680 = vmatprep.subr.mxu0 0.0
        %3681 = vmatpush1.msra.mxu0 0.0
        %3682 = vmatprep.subr.mxu0 0.0
        %3683 = vmatpush1.msra.mxu0 0.0
        %3684 = vmatprep.subr.mxu0 0.0
        %3685 = vmatpush1.msra.mxu0 0.0
        %3686 = vmatprep.subr.mxu0 0.0
        %3687 = vmatpush1.msra.mxu0 0.0
        %3688 = vmatprep.subr.mxu0 0.0
        %3689 = vmatpush1.msra.mxu0 0.0
        %3690 = vmatprep.subr.mxu0 0.0
        %3691 = vmatpush1.msra.mxu0 0.0
        %3692 = vmatprep.subr.mxu0 0.0
        %3693 = vmatpush1.msra.mxu0 0.0
        %3694 = vmatprep.subr.mxu0 0.0
        %3695 = vmatpush1.msra.mxu0 0.0
        %3696 = vmatprep.subr.mxu0 0.0
        %3697 = vmatpush1.msra.mxu0 0.0
        %3698 = vmatprep.mubr.f32.mxu0 0.0
        %3699 = vmatmul.mubr.f32.gmra.mrb[0].mxu0 %v3632
        %v3700 = vpop.f32.mrb[0].mxu0
        %v3701 = vadd.f32 0.0, %v3700
        %v3702 = vpop.f32.mrb[0].mxu0
        %3703 = vdwg.mxu0
        %v3704 = vmul.f32 %v3701, 0.5
        %v3706 = vsel %vm807, %v803, 0
        %v3709 = vsel %vm807, %v804, 0
        %3711 = vmatprep.subr.mxu0 0.0
        %3712 = vmatpush1.msra.mxu0 %v3618
        %3713 = vmatprep.subr.mxu0 0.0
        %3714 = vmatpush1.msra.mxu0 %v3619
        %3715 = vmatprep.subr.mxu0 0.0
        %3716 = vmatpush1.msra.mxu0 %v3620
        %3717 = vmatprep.subr.mxu0 0.0
        %3718 = vmatpush1.msra.mxu0 %v3621
        %3719 = vmatprep.subr.mxu0 0.0
        %3720 = vmatpush1.msra.mxu0 0.0
        %3721 = vmatprep.subr.mxu0 0.0
        %3722 = vmatpush1.msra.mxu0 0.0
        %3723 = vmatprep.subr.mxu0 0.0
        %3724 = vmatpush1.msra.mxu0 0.0
        %3725 = vmatprep.subr.mxu0 0.0
        %3726 = vmatpush1.msra.mxu0 0.0
        %3727 = vmatprep.subr.mxu0 0.0
        %3728 = vmatpush1.msra.mxu0 0.0
        %3729 = vmatprep.subr.mxu0 0.0
        %3730 = vmatpush1.msra.mxu0 0.0
        %3731 = vmatprep.subr.mxu0 0.0
        %3732 = vmatpush1.msra.mxu0 0.0
        %3733 = vmatprep.subr.mxu0 0.0
        %3734 = vmatpush1.msra.mxu0 0.0
        %3735 = vmatprep.subr.mxu0 0.0
        %3736 = vmatpush1.msra.mxu0 0.0
        %3737 = vmatprep.subr.mxu0 0.0
        %3738 = vmatpush1.msra.mxu0 0.0
        %3739 = vmatprep.subr.mxu0 0.0
        %3740 = vmatpush1.msra.mxu0 0.0
        %3741 = vmatprep.subr.mxu0 0.0
        %3742 = vmatpush1.msra.mxu0 0.0
        %3743 = vmatprep.subr.mxu0 0.0
        %3744 = vmatpush1.msra.mxu0 0.0
        %3745 = vmatprep.subr.mxu0 0.0
        %3746 = vmatpush1.msra.mxu0 0.0
        %3747 = vmatprep.subr.mxu0 0.0
        %3748 = vmatpush1.msra.mxu0 0.0
        %3749 = vmatprep.subr.mxu0 0.0
        %3750 = vmatpush1.msra.mxu0 0.0
        %3751 = vmatprep.subr.mxu0 0.0
        %3752 = vmatpush1.msra.mxu0 0.0
        %3753 = vmatprep.subr.mxu0 0.0
        %3754 = vmatpush1.msra.mxu0 0.0
        %3755 = vmatprep.subr.mxu0 0.0
        %3756 = vmatpush1.msra.mxu0 0.0
        %3757 = vmatprep.subr.mxu0 0.0
        %3758 = vmatpush1.msra.mxu0 0.0
        %3759 = vmatprep.subr.mxu0 0.0
        %3760 = vmatpush1.msra.mxu0 0.0
        %3761 = vmatprep.subr.mxu0 0.0
        %3762 = vmatpush1.msra.mxu0 0.0
        %3763 = vmatprep.subr.mxu0 0.0
        %3764 = vmatpush1.msra.mxu0 0.0
        %3765 = vmatprep.subr.mxu0 0.0
        %3766 = vmatpush1.msra.mxu0 0.0
        %3767 = vmatprep.subr.mxu0 0.0
        %3768 = vmatpush1.msra.mxu0 0.0
        %3769 = vmatprep.subr.mxu0 0.0
        %3770 = vmatpush1.msra.mxu0 0.0
        %3771 = vmatprep.subr.mxu0 0.0
        %3772 = vmatpush1.msra.mxu0 0.0
        %3773 = vmatprep.subr.mxu0 0.0
        %3774 = vmatpush1.msra.mxu0 0.0
        %3775 = vmatprep.mubr.f32.mxu0 0.0
        %3776 = vmatmul.mubr.f32.gmra.mrb[0].mxu0 %v3706
        %v3777 = vpop.f32.mrb[0].mxu0
        %v3778 = vadd.f32 0.0, %v3777
        %v3779 = vpop.f32.mrb[0].mxu0
        %3780 = vmatprep.mubr.f32.mxu0 0.0
        %3781 = vmatmul.mubr.f32.gmra.mrb[0].mxu0 %v3709
        %v3782 = vpop.f32.mrb[0].mxu0
        %v3783 = vadd.f32 0.0, %v3782
        %v3784 = vpop.f32.mrb[0].mxu0
        %3785 = vdwg.mxu0
        %3786 = vmatprep.subr.mxu0 0.0
        %3787 = vmatpush1.msra.mxu0 %v3622
        %3788 = vmatprep.subr.mxu0 0.0
        %3789 = vmatpush1.msra.mxu0 %v3623
        %3790 = vmatprep.subr.mxu0 0.0
        %3791 = vmatpush1.msra.mxu0 %v3624
        %3792 = vmatprep.subr.mxu0 0.0
        %3793 = vmatpush1.msra.mxu0 %v3625
        %3794 = vmatprep.subr.mxu0 0.0
        %3795 = vmatpush1.msra.mxu0 0.0
        %3796 = vmatprep.subr.mxu0 0.0
        %3797 = vmatpush1.msra.mxu0 0.0
        %3798 = vmatprep.subr.mxu0 0.0
        %3799 = vmatpush1.msra.mxu0 0.0
        %3800 = vmatprep.subr.mxu0 0.0
        %3801 = vmatpush1.msra.mxu0 0.0
        %3802 = vmatprep.subr.mxu0 0.0
        %3803 = vmatpush1.msra.mxu0 0.0
        %3804 = vmatprep.subr.mxu0 0.0
        %3805 = vmatpush1.msra.mxu0 0.0
        %3806 = vmatprep.subr.mxu0 0.0
        %3807 = vmatpush1.msra.mxu0 0.0
        %3808 = vmatprep.subr.mxu0 0.0
        %3809 = vmatpush1.msra.mxu0 0.0
        %3810 = vmatprep.subr.mxu0 0.0
        %3811 = vmatpush1.msra.mxu0 0.0
        %3812 = vmatprep.subr.mxu0 0.0
        %3813 = vmatpush1.msra.mxu0 0.0
        %3814 = vmatprep.subr.mxu0 0.0
        %3815 = vmatpush1.msra.mxu0 0.0
        %3816 = vmatprep.subr.mxu0 0.0
        %3817 = vmatpush1.msra.mxu0 0.0
        %3818 = vmatprep.subr.mxu0 0.0
        %3819 = vmatpush1.msra.mxu0 0.0
        %3820 = vmatprep.subr.mxu0 0.0
        %3821 = vmatpush1.msra.mxu0 0.0
        %3822 = vmatprep.subr.mxu0 0.0
        %3823 = vmatpush1.msra.mxu0 0.0
        %3824 = vmatprep.subr.mxu0 0.0
        %3825 = vmatpush1.msra.mxu0 0.0
        %3826 = vmatprep.subr.mxu0 0.0
        %3827 = vmatpush1.msra.mxu0 0.0
        %3828 = vmatprep.subr.mxu0 0.0
        %3829 = vmatpush1.msra.mxu0 0.0
        %3830 = vmatprep.subr.mxu0 0.0
        %3831 = vmatpush1.msra.mxu0 0.0
        %3832 = vmatprep.subr.mxu0 0.0
        %3833 = vmatpush1.msra.mxu0 0.0
        %3834 = vmatprep.subr.mxu0 0.0
        %3835 = vmatpush1.msra.mxu0 0.0
        %3836 = vmatprep.subr.mxu0 0.0
        %3837 = vmatpush1.msra.mxu0 0.0
        %3838 = vmatprep.subr.mxu0 0.0
        %3839 = vmatpush1.msra.mxu0 0.0
        %3840 = vmatprep.subr.mxu0 0.0
        %3841 = vmatpush1.msra.mxu0 0.0
        %3842 = vmatprep.subr.mxu0 0.0
        %3843 = vmatpush1.msra.mxu0 0.0
        %3844 = vmatprep.subr.mxu0 0.0
        %3845 = vmatpush1.msra.mxu0 0.0
        %3846 = vmatprep.subr.mxu0 0.0
        %3847 = vmatpush1.msra.mxu0 0.0
        %3848 = vmatprep.subr.mxu0 0.0
        %3849 = vmatpush1.msra.mxu0 0.0
        %3850 = vmatprep.mubr.f32.mxu0 0.0
        %3851 = vmatmul.mubr.f32.gmra.mrb[0].mxu0 %v3706
        %v3852 = vpop.f32.mrb[0].mxu0
        %v3853 = vadd.f32 0.0, %v3852
        %v3854 = vpop.f32.mrb[0].mxu0
        %3855 = vmatprep.mubr.f32.mxu0 0.0
        %3856 = vmatmul.mubr.f32.gmra.mrb[0].mxu0 %v3709
        %v3857 = vpop.f32.mrb[0].mxu0
        %v3858 = vadd.f32 0.0, %v3857
        %v3859 = vpop.f32.mrb[0].mxu0
        %3860 = vdwg.mxu0
        %3862 = vrot.lane.b32.xlu0 %v3704, 124
        %v3863 = vpop.permute.xlu0 %3862
        %3864 = vrot.lane.b32.xlu0 %v3704, 120
        %v3865 = vpop.permute.xlu0 %3864
        %3866 = vrot.lane.b32.xlu0 %v3704, 116
        %v3867 = vpop.permute.xlu0 %3866
        %3868 = vrot.lane.b32.xlu0 %v3704, 112
        %v3869 = vpop.permute.xlu0 %3868
        %3870 = vrot.lane.b32.xlu0 %v3704, 108
        %v3871 = vpop.permute.xlu0 %3870
        %3872 = vrot.lane.b32.xlu0 %v3704, 104
        %v3873 = vpop.permute.xlu0 %3872
        %3874 = vrot.lane.b32.xlu0 %v3704, 100
        %v3875 = vpop.permute.xlu0 %3874
        %3878 = vrot.lane.b32.xlu0 %v3778, 124
        %v3879 = vpop.permute.xlu0 %3878
        %3880 = vrot.lane.b32.xlu0 %v3783, 124
        %v3881 = vpop.permute.xlu0 %3880
        %3884 = vrot.lane.b32.xlu0 %v3778, 120
        %v3885 = vpop.permute.xlu0 %3884
        %3886 = vrot.lane.b32.xlu0 %v3783, 120
        %v3887 = vpop.permute.xlu0 %3886
        %3890 = vrot.lane.b32.xlu0 %v3778, 116
        %v3891 = vpop.permute.xlu0 %3890
        %3892 = vrot.lane.b32.xlu0 %v3783, 116
        %v3893 = vpop.permute.xlu0 %3892
        %3896 = vrot.lane.b32.xlu0 %v3778, 112
        %v3897 = vpop.permute.xlu0 %3896
        %3898 = vrot.lane.b32.xlu0 %v3783, 112
        %v3899 = vpop.permute.xlu0 %3898
        %3902 = vrot.lane.b32.xlu0 %v3778, 108
        %v3903 = vpop.permute.xlu0 %3902
        %3904 = vrot.lane.b32.xlu0 %v3783, 108
        %v3905 = vpop.permute.xlu0 %3904
        %3908 = vrot.lane.b32.xlu0 %v3778, 104
        %v3909 = vpop.permute.xlu0 %3908
        %3910 = vrot.lane.b32.xlu0 %v3783, 104
        %v3911 = vpop.permute.xlu0 %3910
        %3914 = vrot.lane.b32.xlu0 %v3778, 100
        %v3915 = vpop.permute.xlu0 %3914
        %3916 = vrot.lane.b32.xlu0 %v3783, 100
        %v3917 = vpop.permute.xlu0 %3916
        %3922 = vrot.lane.b32.xlu0 %v3853, 124
        %v3923 = vpop.permute.xlu0 %3922
        %3924 = vrot.lane.b32.xlu0 %v3858, 124
        %v3925 = vpop.permute.xlu0 %3924
        %3928 = vrot.lane.b32.xlu0 %v3853, 120
        %v3929 = vpop.permute.xlu0 %3928
        %3930 = vrot.lane.b32.xlu0 %v3858, 120
        %v3931 = vpop.permute.xlu0 %3930
        %3934 = vrot.lane.b32.xlu0 %v3853, 116
        %v3935 = vpop.permute.xlu0 %3934
        %3936 = vrot.lane.b32.xlu0 %v3858, 116
        %v3937 = vpop.permute.xlu0 %3936
        %3940 = vrot.lane.b32.xlu0 %v3853, 112
        %v3941 = vpop.permute.xlu0 %3940
        %3942 = vrot.lane.b32.xlu0 %v3858, 112
        %v3943 = vpop.permute.xlu0 %3942
        %3946 = vrot.lane.b32.xlu0 %v3853, 108
        %v3947 = vpop.permute.xlu0 %3946
        %3948 = vrot.lane.b32.xlu0 %v3858, 108
        %v3949 = vpop.permute.xlu0 %3948
        %3952 = vrot.lane.b32.xlu0 %v3853, 104
        %v3953 = vpop.permute.xlu0 %3952
        %3954 = vrot.lane.b32.xlu0 %v3858, 104
        %v3955 = vpop.permute.xlu0 %3954
        %3958 = vrot.lane.b32.xlu0 %v3853, 100
        %v3959 = vpop.permute.xlu0 %3958
        %3960 = vrot.lane.b32.xlu0 %v3858, 100
        %v3961 = vpop.permute.xlu0 %3960
        %3964 = vxpose.xlu0.b32.start [1/16] %v3778, 128
        %3965 = vxpose.xlu0.b32.cont [2/16] %v3783, 128
        %3966 = vxpose.xlu0.b32.cont [3/16] 0.0, 128
        %3967 = vxpose.xlu0.b32.cont [4/16] 0.0, 128
        %3968 = vxpose.xlu0.b32.cont [5/16] 0.0, 128
        %3969 = vxpose.xlu0.b32.cont [6/16] 0.0, 128
        %3970 = vxpose.xlu0.b32.cont [7/16] 0.0, 128
        %3971 = vxpose.xlu0.b32.cont [8/16] 0.0, 128
        %3972 = vxpose.xlu0.b32.cont [9/16] 0.0, 128
        %3973 = vxpose.xlu0.b32.cont [10/16] 0.0, 128
        %3974 = vxpose.xlu0.b32.cont [11/16] 0.0, 128
        %3975 = vxpose.xlu0.b32.cont [12/16] 0.0, 128
        %3976 = vxpose.xlu0.b32.cont [13/16] 0.0, 128
        %3977 = vxpose.xlu0.b32.cont [14/16] 0.0, 128
        %3978 = vxpose.xlu0.b32.cont [15/16] 0.0, 128
        %3979 = vxpose.xlu0.b32.end [16/16] 0.0, 128
        %v3980 = vpop.trf.xlu0
        %v3981 = vpop.trf.xlu0
        %v3982 = vpop.trf.xlu0
        %v3983 = vpop.trf.xlu0
        %v3984 = vpop.trf.xlu0
        %v3985 = vpop.trf.xlu0
        %v3986 = vpop.trf.xlu0
        %v3987 = vpop.trf.xlu0
        %v3988 = vpop.trf.xlu0
        %v3989 = vpop.trf.xlu0
        %v3990 = vpop.trf.xlu0
        %v3991 = vpop.trf.xlu0
        %v3992 = vpop.trf.xlu0
        %v3993 = vpop.trf.xlu0
        %v3994 = vpop.trf.xlu0
        %v3995 = vpop.trf.xlu0
        %3996 = vxpose.xlu0.b32.start [1/16] %v3879, 128
        %3997 = vxpose.xlu0.b32.cont [2/16] %v3881, 128
        %3998 = vxpose.xlu0.b32.cont [3/16] 0.0, 128
        %3999 = vxpose.xlu0.b32.cont [4/16] 0.0, 128
        %4000 = vxpose.xlu0.b32.cont [5/16] 0.0, 128
        %4001 = vxpose.xlu0.b32.cont [6/16] 0.0, 128
        %4002 = vxpose.xlu0.b32.cont [7/16] 0.0, 128
        %4003 = vxpose.xlu0.b32.cont [8/16] 0.0, 128
        %4004 = vxpose.xlu0.b32.cont [9/16] 0.0, 128
        %4005 = vxpose.xlu0.b32.cont [10/16] 0.0, 128
        %4006 = vxpose.xlu0.b32.cont [11/16] 0.0, 128
        %4007 = vxpose.xlu0.b32.cont [12/16] 0.0, 128
        %4008 = vxpose.xlu0.b32.cont [13/16] 0.0, 128
        %4009 = vxpose.xlu0.b32.cont [14/16] 0.0, 128
        %4010 = vxpose.xlu0.b32.cont [15/16] 0.0, 128
        %4011 = vxpose.xlu0.b32.end [16/16] 0.0, 128
        %v4012 = vpop.trf.xlu0
        %v4013 = vpop.trf.xlu0
        %v4014 = vpop.trf.xlu0
        %v4015 = vpop.trf.xlu0
        %v4016 = vpop.trf.xlu0
        %v4017 = vpop.trf.xlu0
        %v4018 = vpop.trf.xlu0
        %v4019 = vpop.trf.xlu0
        %v4020 = vpop.trf.xlu0
        %v4021 = vpop.trf.xlu0
        %v4022 = vpop.trf.xlu0
        %v4023 = vpop.trf.xlu0
        %v4024 = vpop.trf.xlu0
        %v4025 = vpop.trf.xlu0
        %v4026 = vpop.trf.xlu0
        %v4027 = vpop.trf.xlu0
        %4028 = vxpose.xlu0.b32.start [1/16] %v3885, 128
        %4029 = vxpose.xlu0.b32.cont [2/16] %v3887, 128
        %4030 = vxpose.xlu0.b32.cont [3/16] 0.0, 128
        %4031 = vxpose.xlu0.b32.cont [4/16] 0.0, 128
        %4032 = vxpose.xlu0.b32.cont [5/16] 0.0, 128
        %4033 = vxpose.xlu0.b32.cont [6/16] 0.0, 128
        %4034 = vxpose.xlu0.b32.cont [7/16] 0.0, 128
        %4035 = vxpose.xlu0.b32.cont [8/16] 0.0, 128
        %4036 = vxpose.xlu0.b32.cont [9/16] 0.0, 128
        %4037 = vxpose.xlu0.b32.cont [10/16] 0.0, 128
        %4038 = vxpose.xlu0.b32.cont [11/16] 0.0, 128
        %4039 = vxpose.xlu0.b32.cont [12/16] 0.0, 128
        %4040 = vxpose.xlu0.b32.cont [13/16] 0.0, 128
        %4041 = vxpose.xlu0.b32.cont [14/16] 0.0, 128
        %4042 = vxpose.xlu0.b32.cont [15/16] 0.0, 128
        %4043 = vxpose.xlu0.b32.end [16/16] 0.0, 128
        %v4044 = vpop.trf.xlu0
        %v4045 = vpop.trf.xlu0
        %v4046 = vpop.trf.xlu0
        %v4047 = vpop.trf.xlu0
        %v4048 = vpop.trf.xlu0
        %v4049 = vpop.trf.xlu0
        %v4050 = vpop.trf.xlu0
        %v4051 = vpop.trf.xlu0
        %v4052 = vpop.trf.xlu0
        %v4053 = vpop.trf.xlu0
        %v4054 = vpop.trf.xlu0
        %v4055 = vpop.trf.xlu0
        %v4056 = vpop.trf.xlu0
        %v4057 = vpop.trf.xlu0
        %v4058 = vpop.trf.xlu0
        %v4059 = vpop.trf.xlu0
        %4060 = vxpose.xlu0.b32.start [1/16] %v3891, 128
        %4061 = vxpose.xlu0.b32.cont [2/16] %v3893, 128
        %4062 = vxpose.xlu0.b32.cont [3/16] 0.0, 128
        %4063 = vxpose.xlu0.b32.cont [4/16] 0.0, 128
        %4064 = vxpose.xlu0.b32.cont [5/16] 0.0, 128
        %4065 = vxpose.xlu0.b32.cont [6/16] 0.0, 128
        %4066 = vxpose.xlu0.b32.cont [7/16] 0.0, 128
        %4067 = vxpose.xlu0.b32.cont [8/16] 0.0, 128
        %4068 = vxpose.xlu0.b32.cont [9/16] 0.0, 128
        %4069 = vxpose.xlu0.b32.cont [10/16] 0.0, 128
        %4070 = vxpose.xlu0.b32.cont [11/16] 0.0, 128
        %4071 = vxpose.xlu0.b32.cont [12/16] 0.0, 128
        %4072 = vxpose.xlu0.b32.cont [13/16] 0.0, 128
        %4073 = vxpose.xlu0.b32.cont [14/16] 0.0, 128
        %4074 = vxpose.xlu0.b32.cont [15/16] 0.0, 128
        %4075 = vxpose.xlu0.b32.end [16/16] 0.0, 128
        %v4076 = vpop.trf.xlu0
        %v4077 = vpop.trf.xlu0
        %v4078 = vpop.trf.xlu0
        %v4079 = vpop.trf.xlu0
        %v4080 = vpop.trf.xlu0
        %v4081 = vpop.trf.xlu0
        %v4082 = vpop.trf.xlu0
        %v4083 = vpop.trf.xlu0
        %v4084 = vpop.trf.xlu0
        %v4085 = vpop.trf.xlu0
        %v4086 = vpop.trf.xlu0
        %v4087 = vpop.trf.xlu0
        %v4088 = vpop.trf.xlu0
        %v4089 = vpop.trf.xlu0
        %v4090 = vpop.trf.xlu0
        %v4091 = vpop.trf.xlu0
        %4092 = vxpose.xlu0.b32.start [1/16] %v3897, 128
        %4093 = vxpose.xlu0.b32.cont [2/16] %v3899, 128
        %4094 = vxpose.xlu0.b32.cont [3/16] 0.0, 128
        %4095 = vxpose.xlu0.b32.cont [4/16] 0.0, 128
        %4096 = vxpose.xlu0.b32.cont [5/16] 0.0, 128
        %4097 = vxpose.xlu0.b32.cont [6/16] 0.0, 128
        %4098 = vxpose.xlu0.b32.cont [7/16] 0.0, 128
        %4099 = vxpose.xlu0.b32.cont [8/16] 0.0, 128
        %4100 = vxpose.xlu0.b32.cont [9/16] 0.0, 128
        %4101 = vxpose.xlu0.b32.cont [10/16] 0.0, 128
        %4102 = vxpose.xlu0.b32.cont [11/16] 0.0, 128
        %4103 = vxpose.xlu0.b32.cont [12/16] 0.0, 128
        %4104 = vxpose.xlu0.b32.cont [13/16] 0.0, 128
        %4105 = vxpose.xlu0.b32.cont [14/16] 0.0, 128
        %4106 = vxpose.xlu0.b32.cont [15/16] 0.0, 128
        %4107 = vxpose.xlu0.b32.end [16/16] 0.0, 128
        %v4108 = vpop.trf.xlu0
        %v4109 = vpop.trf.xlu0
        %v4110 = vpop.trf.xlu0
        %v4111 = vpop.trf.xlu0
        %v4112 = vpop.trf.xlu0
        %v4113 = vpop.trf.xlu0
        %v4114 = vpop.trf.xlu0
        %v4115 = vpop.trf.xlu0
        %v4116 = vpop.trf.xlu0
        %v4117 = vpop.trf.xlu0
        %v4118 = vpop.trf.xlu0
        %v4119 = vpop.trf.xlu0
        %v4120 = vpop.trf.xlu0
        %v4121 = vpop.trf.xlu0
        %v4122 = vpop.trf.xlu0
        %v4123 = vpop.trf.xlu0
        %4124 = vxpose.xlu0.b32.start [1/16] %v3903, 128
        %4125 = vxpose.xlu0.b32.cont [2/16] %v3905, 128
        %4126 = vxpose.xlu0.b32.cont [3/16] 0.0, 128
        %4127 = vxpose.xlu0.b32.cont [4/16] 0.0, 128
        %4128 = vxpose.xlu0.b32.cont [5/16] 0.0, 128
        %4129 = vxpose.xlu0.b32.cont [6/16] 0.0, 128
        %4130 = vxpose.xlu0.b32.cont [7/16] 0.0, 128
        %4131 = vxpose.xlu0.b32.cont [8/16] 0.0, 128
        %4132 = vxpose.xlu0.b32.cont [9/16] 0.0, 128
        %4133 = vxpose.xlu0.b32.cont [10/16] 0.0, 128
        %4134 = vxpose.xlu0.b32.cont [11/16] 0.0, 128
        %4135 = vxpose.xlu0.b32.cont [12/16] 0.0, 128
        %4136 = vxpose.xlu0.b32.cont [13/16] 0.0, 128
        %4137 = vxpose.xlu0.b32.cont [14/16] 0.0, 128
        %4138 = vxpose.xlu0.b32.cont [15/16] 0.0, 128
        %4139 = vxpose.xlu0.b32.end [16/16] 0.0, 128
        %v4140 = vpop.trf.xlu0
        %v4141 = vpop.trf.xlu0
        %v4142 = vpop.trf.xlu0
        %v4143 = vpop.trf.xlu0
        %v4144 = vpop.trf.xlu0
        %v4145 = vpop.trf.xlu0
        %v4146 = vpop.trf.xlu0
        %v4147 = vpop.trf.xlu0
        %v4148 = vpop.trf.xlu0
        %v4149 = vpop.trf.xlu0
        %v4150 = vpop.trf.xlu0
        %v4151 = vpop.trf.xlu0
        %v4152 = vpop.trf.xlu0
        %v4153 = vpop.trf.xlu0
        %v4154 = vpop.trf.xlu0
        %v4155 = vpop.trf.xlu0
        %4156 = vxpose.xlu0.b32.start [1/16] %v3909, 128
        %4157 = vxpose.xlu0.b32.cont [2/16] %v3911, 128
        %4158 = vxpose.xlu0.b32.cont [3/16] 0.0, 128
        %4159 = vxpose.xlu0.b32.cont [4/16] 0.0, 128
        %4160 = vxpose.xlu0.b32.cont [5/16] 0.0, 128
        %4161 = vxpose.xlu0.b32.cont [6/16] 0.0, 128
        %4162 = vxpose.xlu0.b32.cont [7/16] 0.0, 128
        %4163 = vxpose.xlu0.b32.cont [8/16] 0.0, 128
        %4164 = vxpose.xlu0.b32.cont [9/16] 0.0, 128
        %4165 = vxpose.xlu0.b32.cont [10/16] 0.0, 128
        %4166 = vxpose.xlu0.b32.cont [11/16] 0.0, 128
        %4167 = vxpose.xlu0.b32.cont [12/16] 0.0, 128
        %4168 = vxpose.xlu0.b32.cont [13/16] 0.0, 128
        %4169 = vxpose.xlu0.b32.cont [14/16] 0.0, 128
        %4170 = vxpose.xlu0.b32.cont [15/16] 0.0, 128
        %4171 = vxpose.xlu0.b32.end [16/16] 0.0, 128
        %v4172 = vpop.trf.xlu0
        %v4173 = vpop.trf.xlu0
        %v4174 = vpop.trf.xlu0
        %v4175 = vpop.trf.xlu0
        %v4176 = vpop.trf.xlu0
        %v4177 = vpop.trf.xlu0
        %v4178 = vpop.trf.xlu0
        %v4179 = vpop.trf.xlu0
        %v4180 = vpop.trf.xlu0
        %v4181 = vpop.trf.xlu0
        %v4182 = vpop.trf.xlu0
        %v4183 = vpop.trf.xlu0
        %v4184 = vpop.trf.xlu0
        %v4185 = vpop.trf.xlu0
        %v4186 = vpop.trf.xlu0
        %v4187 = vpop.trf.xlu0
        %4188 = vxpose.xlu0.b32.start [1/16] %v3915, 128
        %4189 = vxpose.xlu0.b32.cont [2/16] %v3917, 128
        %4190 = vxpose.xlu0.b32.cont [3/16] 0.0, 128
        %4191 = vxpose.xlu0.b32.cont [4/16] 0.0, 128
        %4192 = vxpose.xlu0.b32.cont [5/16] 0.0, 128
        %4193 = vxpose.xlu0.b32.cont [6/16] 0.0, 128
        %4194 = vxpose.xlu0.b32.cont [7/16] 0.0, 128
        %4195 = vxpose.xlu0.b32.cont [8/16] 0.0, 128
        %4196 = vxpose.xlu0.b32.cont [9/16] 0.0, 128
        %4197 = vxpose.xlu0.b32.cont [10/16] 0.0, 128
        %4198 = vxpose.xlu0.b32.cont [11/16] 0.0, 128
        %4199 = vxpose.xlu0.b32.cont [12/16] 0.0, 128
        %4200 = vxpose.xlu0.b32.cont [13/16] 0.0, 128
        %4201 = vxpose.xlu0.b32.cont [14/16] 0.0, 128
        %4202 = vxpose.xlu0.b32.cont [15/16] 0.0, 128
        %4203 = vxpose.xlu0.b32.end [16/16] 0.0, 128
        %v4204 = vpop.trf.xlu0
        %v4205 = vpop.trf.xlu0
        %v4206 = vpop.trf.xlu0
        %v4207 = vpop.trf.xlu0
        %v4208 = vpop.trf.xlu0
        %v4209 = vpop.trf.xlu0
        %v4210 = vpop.trf.xlu0
        %v4211 = vpop.trf.xlu0
        %v4212 = vpop.trf.xlu0
        %v4213 = vpop.trf.xlu0
        %v4214 = vpop.trf.xlu0
        %v4215 = vpop.trf.xlu0
        %v4216 = vpop.trf.xlu0
        %v4217 = vpop.trf.xlu0
        %v4218 = vpop.trf.xlu0
        %v4219 = vpop.trf.xlu0
        %v4220 = vsel %vm1382, %v3704, 0
        %v4223 = vsel %vm1385, %v3980, 0
        %4225 = vmatprep.subr.mxu0 0.0
        %4226 = vmatpush1.msra.mxu0 %v4223
        %4227 = vmatprep.subr.mxu0 0.0
        %4228 = vmatpush1.msra.mxu0 0.0
        %4229 = vmatprep.subr.mxu0 0.0
        %4230 = vmatpush1.msra.mxu0 0.0
        %4231 = vmatprep.subr.mxu0 0.0
        %4232 = vmatpush1.msra.mxu0 0.0
        %4233 = vmatprep.subr.mxu0 0.0
        %4234 = vmatpush1.msra.mxu0 0.0
        %4235 = vmatprep.subr.mxu0 0.0
        %4236 = vmatpush1.msra.mxu0 0.0
        %4237 = vmatprep.subr.mxu0 0.0
        %4238 = vmatpush1.msra.mxu0 0.0
        %4239 = vmatprep.subr.mxu0 0.0
        %4240 = vmatpush1.msra.mxu0 0.0
        %4241 = vmatprep.subr.mxu0 0.0
        %4242 = vmatpush1.msra.mxu0 0.0
        %4243 = vmatprep.subr.mxu0 0.0
        %4244 = vmatpush1.msra.mxu0 0.0
        %4245 = vmatprep.subr.mxu0 0.0
        %4246 = vmatpush1.msra.mxu0 0.0
        %4247 = vmatprep.subr.mxu0 0.0
        %4248 = vmatpush1.msra.mxu0 0.0
        %4249 = vmatprep.subr.mxu0 0.0
        %4250 = vmatpush1.msra.mxu0 0.0
        %4251 = vmatprep.subr.mxu0 0.0
        %4252 = vmatpush1.msra.mxu0 0.0
        %4253 = vmatprep.subr.mxu0 0.0
        %4254 = vmatpush1.msra.mxu0 0.0
        %4255 = vmatprep.subr.mxu0 0.0
        %4256 = vmatpush1.msra.mxu0 0.0
        %4257 = vmatprep.subr.mxu0 0.0
        %4258 = vmatpush1.msra.mxu0 0.0
        %4259 = vmatprep.subr.mxu0 0.0
        %4260 = vmatpush1.msra.mxu0 0.0
        %4261 = vmatprep.subr.mxu0 0.0
        %4262 = vmatpush1.msra.mxu0 0.0
        %4263 = vmatprep.subr.mxu0 0.0
        %4264 = vmatpush1.msra.mxu0 0.0
        %4265 = vmatprep.subr.mxu0 0.0
        %4266 = vmatpush1.msra.mxu0 0.0
        %4267 = vmatprep.subr.mxu0 0.0
        %4268 = vmatpush1.msra.mxu0 0.0
        %4269 = vmatprep.subr.mxu0 0.0
        %4270 = vmatpush1.msra.mxu0 0.0
        %4271 = vmatprep.subr.mxu0 0.0
        %4272 = vmatpush1.msra.mxu0 0.0
        %4273 = vmatprep.subr.mxu0 0.0
        %4274 = vmatpush1.msra.mxu0 0.0
        %4275 = vmatprep.subr.mxu0 0.0
        %4276 = vmatpush1.msra.mxu0 0.0
        %4277 = vmatprep.subr.mxu0 0.0
        %4278 = vmatpush1.msra.mxu0 0.0
        %4279 = vmatprep.subr.mxu0 0.0
        %4280 = vmatpush1.msra.mxu0 0.0
        %4281 = vmatprep.subr.mxu0 0.0
        %4282 = vmatpush1.msra.mxu0 0.0
        %4283 = vmatprep.subr.mxu0 0.0
        %4284 = vmatpush1.msra.mxu0 0.0
        %4285 = vmatprep.subr.mxu0 0.0
        %4286 = vmatpush1.msra.mxu0 0.0
        %4287 = vmatprep.subr.mxu0 0.0
        %4288 = vmatpush1.msra.mxu0 0.0
        %4289 = vmatprep.mubr.f32.mxu0 0.0
        %4290 = vmatmul.mubr.f32.gmra.mrb[0].mxu0 %v4220
        %v4291 = vpop.f32.mrb[0].mxu0
        %v4292 = vadd.f32 0.0, %v4291
        %v4293 = vpop.f32.mrb[0].mxu0
        %4294 = vdwg.mxu0
        %v4295 = vsel %vm1382, %v3863, 0
        %v4298 = vsel %vm1385, %v4012, 0
        %4300 = vmatprep.subr.mxu0 0.0
        %4301 = vmatpush1.msra.mxu0 %v4298
        %4302 = vmatprep.subr.mxu0 0.0
        %4303 = vmatpush1.msra.mxu0 0.0
        %4304 = vmatprep.subr.mxu0 0.0
        %4305 = vmatpush1.msra.mxu0 0.0
        %4306 = vmatprep.subr.mxu0 0.0
        %4307 = vmatpush1.msra.mxu0 0.0
        %4308 = vmatprep.subr.mxu0 0.0
        %4309 = vmatpush1.msra.mxu0 0.0
        %4310 = vmatprep.subr.mxu0 0.0
        %4311 = vmatpush1.msra.mxu0 0.0
        %4312 = vmatprep.subr.mxu0 0.0
        %4313 = vmatpush1.msra.mxu0 0.0
        %4314 = vmatprep.subr.mxu0 0.0
        %4315 = vmatpush1.msra.mxu0 0.0
        %4316 = vmatprep.subr.mxu0 0.0
        %4317 = vmatpush1.msra.mxu0 0.0
        %4318 = vmatprep.subr.mxu0 0.0
        %4319 = vmatpush1.msra.mxu0 0.0
        %4320 = vmatprep.subr.mxu0 0.0
        %4321 = vmatpush1.msra.mxu0 0.0
        %4322 = vmatprep.subr.mxu0 0.0
        %4323 = vmatpush1.msra.mxu0 0.0
        %4324 = vmatprep.subr.mxu0 0.0
        %4325 = vmatpush1.msra.mxu0 0.0
        %4326 = vmatprep.subr.mxu0 0.0
        %4327 = vmatpush1.msra.mxu0 0.0
        %4328 = vmatprep.subr.mxu0 0.0
        %4329 = vmatpush1.msra.mxu0 0.0
        %4330 = vmatprep.subr.mxu0 0.0
        %4331 = vmatpush1.msra.mxu0 0.0
        %4332 = vmatprep.subr.mxu0 0.0
        %4333 = vmatpush1.msra.mxu0 0.0
        %4334 = vmatprep.subr.mxu0 0.0
        %4335 = vmatpush1.msra.mxu0 0.0
        %4336 = vmatprep.subr.mxu0 0.0
        %4337 = vmatpush1.msra.mxu0 0.0
        %4338 = vmatprep.subr.mxu0 0.0
        %4339 = vmatpush1.msra.mxu0 0.0
        %4340 = vmatprep.subr.mxu0 0.0
        %4341 = vmatpush1.msra.mxu0 0.0
        %4342 = vmatprep.subr.mxu0 0.0
        %4343 = vmatpush1.msra.mxu0 0.0
        %4344 = vmatprep.subr.mxu0 0.0
        %4345 = vmatpush1.msra.mxu0 0.0
        %4346 = vmatprep.subr.mxu0 0.0
        %4347 = vmatpush1.msra.mxu0 0.0
        %4348 = vmatprep.subr.mxu0 0.0
        %4349 = vmatpush1.msra.mxu0 0.0
        %4350 = vmatprep.subr.mxu0 0.0
        %4351 = vmatpush1.msra.mxu0 0.0
        %4352 = vmatprep.subr.mxu0 0.0
        %4353 = vmatpush1.msra.mxu0 0.0
        %4354 = vmatprep.subr.mxu0 0.0
        %4355 = vmatpush1.msra.mxu0 0.0
        %4356 = vmatprep.subr.mxu0 0.0
        %4357 = vmatpush1.msra.mxu0 0.0
        %4358 = vmatprep.subr.mxu0 0.0
        %4359 = vmatpush1.msra.mxu0 0.0
        %4360 = vmatprep.subr.mxu0 0.0
        %4361 = vmatpush1.msra.mxu0 0.0
        %4362 = vmatprep.subr.mxu0 0.0
        %4363 = vmatpush1.msra.mxu0 0.0
        %4364 = vmatprep.mubr.f32.mxu0 0.0
        %4365 = vmatmul.mubr.f32.gmra.mrb[0].mxu0 %v4295
        %v4366 = vpop.f32.mrb[0].mxu0
        %v4367 = vadd.f32 0.0, %v4366
        %v4368 = vpop.f32.mrb[0].mxu0
        %4369 = vdwg.mxu0
        %v4370 = vsel %vm1382, %v3865, 0
        %v4373 = vsel %vm1385, %v4044, 0
        %4375 = vmatprep.subr.mxu0 0.0
        %4376 = vmatpush1.msra.mxu0 %v4373
        %4377 = vmatprep.subr.mxu0 0.0
        %4378 = vmatpush1.msra.mxu0 0.0
        %4379 = vmatprep.subr.mxu0 0.0
        %4380 = vmatpush1.msra.mxu0 0.0
        %4381 = vmatprep.subr.mxu0 0.0
        %4382 = vmatpush1.msra.mxu0 0.0
        %4383 = vmatprep.subr.mxu0 0.0
        %4384 = vmatpush1.msra.mxu0 0.0
        %4385 = vmatprep.subr.mxu0 0.0
        %4386 = vmatpush1.msra.mxu0 0.0
        %4387 = vmatprep.subr.mxu0 0.0
        %4388 = vmatpush1.msra.mxu0 0.0
        %4389 = vmatprep.subr.mxu0 0.0
        %4390 = vmatpush1.msra.mxu0 0.0
        %4391 = vmatprep.subr.mxu0 0.0
        %4392 = vmatpush1.msra.mxu0 0.0
        %4393 = vmatprep.subr.mxu0 0.0
        %4394 = vmatpush1.msra.mxu0 0.0
        %4395 = vmatprep.subr.mxu0 0.0
        %4396 = vmatpush1.msra.mxu0 0.0
        %4397 = vmatprep.subr.mxu0 0.0
        %4398 = vmatpush1.msra.mxu0 0.0
        %4399 = vmatprep.subr.mxu0 0.0
        %4400 = vmatpush1.msra.mxu0 0.0
        %4401 = vmatprep.subr.mxu0 0.0
        %4402 = vmatpush1.msra.mxu0 0.0
        %4403 = vmatprep.subr.mxu0 0.0
        %4404 = vmatpush1.msra.mxu0 0.0
        %4405 = vmatprep.subr.mxu0 0.0
        %4406 = vmatpush1.msra.mxu0 0.0
        %4407 = vmatprep.subr.mxu0 0.0
        %4408 = vmatpush1.msra.mxu0 0.0
        %4409 = vmatprep.subr.mxu0 0.0
        %4410 = vmatpush1.msra.mxu0 0.0
        %4411 = vmatprep.subr.mxu0 0.0
        %4412 = vmatpush1.msra.mxu0 0.0
        %4413 = vmatprep.subr.mxu0 0.0
        %4414 = vmatpush1.msra.mxu0 0.0
        %4415 = vmatprep.subr.mxu0 0.0
        %4416 = vmatpush1.msra.mxu0 0.0
        %4417 = vmatprep.subr.mxu0 0.0
        %4418 = vmatpush1.msra.mxu0 0.0
        %4419 = vmatprep.subr.mxu0 0.0
        %4420 = vmatpush1.msra.mxu0 0.0
        %4421 = vmatprep.subr.mxu0 0.0
        %4422 = vmatpush1.msra.mxu0 0.0
        %4423 = vmatprep.subr.mxu0 0.0
        %4424 = vmatpush1.msra.mxu0 0.0
        %4425 = vmatprep.subr.mxu0 0.0
        %4426 = vmatpush1.msra.mxu0 0.0
        %4427 = vmatprep.subr.mxu0 0.0
        %4428 = vmatpush1.msra.mxu0 0.0
        %4429 = vmatprep.subr.mxu0 0.0
        %4430 = vmatpush1.msra.mxu0 0.0
        %4431 = vmatprep.subr.mxu0 0.0
        %4432 = vmatpush1.msra.mxu0 0.0
        %4433 = vmatprep.subr.mxu0 0.0
        %4434 = vmatpush1.msra.mxu0 0.0
        %4435 = vmatprep.subr.mxu0 0.0
        %4436 = vmatpush1.msra.mxu0 0.0
        %4437 = vmatprep.subr.mxu0 0.0
        %4438 = vmatpush1.msra.mxu0 0.0
        %4439 = vmatprep.mubr.f32.mxu0 0.0
        %4440 = vmatmul.mubr.f32.gmra.mrb[0].mxu0 %v4370
        %v4441 = vpop.f32.mrb[0].mxu0
        %v4442 = vadd.f32 0.0, %v4441
        %v4443 = vpop.f32.mrb[0].mxu0
        %4444 = vdwg.mxu0
        %v4445 = vsel %vm1382, %v3867, 0
        %v4448 = vsel %vm1385, %v4076, 0
        %4450 = vmatprep.subr.mxu0 0.0
        %4451 = vmatpush1.msra.mxu0 %v4448
        %4452 = vmatprep.subr.mxu0 0.0
        %4453 = vmatpush1.msra.mxu0 0.0
        %4454 = vmatprep.subr.mxu0 0.0
        %4455 = vmatpush1.msra.mxu0 0.0
        %4456 = vmatprep.subr.mxu0 0.0
        %4457 = vmatpush1.msra.mxu0 0.0
        %4458 = vmatprep.subr.mxu0 0.0
        %4459 = vmatpush1.msra.mxu0 0.0
        %4460 = vmatprep.subr.mxu0 0.0
        %4461 = vmatpush1.msra.mxu0 0.0
        %4462 = vmatprep.subr.mxu0 0.0
        %4463 = vmatpush1.msra.mxu0 0.0
        %4464 = vmatprep.subr.mxu0 0.0
        %4465 = vmatpush1.msra.mxu0 0.0
        %4466 = vmatprep.subr.mxu0 0.0
        %4467 = vmatpush1.msra.mxu0 0.0
        %4468 = vmatprep.subr.mxu0 0.0
        %4469 = vmatpush1.msra.mxu0 0.0
        %4470 = vmatprep.subr.mxu0 0.0
        %4471 = vmatpush1.msra.mxu0 0.0
        %4472 = vmatprep.subr.mxu0 0.0
        %4473 = vmatpush1.msra.mxu0 0.0
        %4474 = vmatprep.subr.mxu0 0.0
        %4475 = vmatpush1.msra.mxu0 0.0
        %4476 = vmatprep.subr.mxu0 0.0
        %4477 = vmatpush1.msra.mxu0 0.0
        %4478 = vmatprep.subr.mxu0 0.0
        %4479 = vmatpush1.msra.mxu0 0.0
        %4480 = vmatprep.subr.mxu0 0.0
        %4481 = vmatpush1.msra.mxu0 0.0
        %4482 = vmatprep.subr.mxu0 0.0
        %4483 = vmatpush1.msra.mxu0 0.0
        %4484 = vmatprep.subr.mxu0 0.0
        %4485 = vmatpush1.msra.mxu0 0.0
        %4486 = vmatprep.subr.mxu0 0.0
        %4487 = vmatpush1.msra.mxu0 0.0
        %4488 = vmatprep.subr.mxu0 0.0
        %4489 = vmatpush1.msra.mxu0 0.0
        %4490 = vmatprep.subr.mxu0 0.0
        %4491 = vmatpush1.msra.mxu0 0.0
        %4492 = vmatprep.subr.mxu0 0.0
        %4493 = vmatpush1.msra.mxu0 0.0
        %4494 = vmatprep.subr.mxu0 0.0
        %4495 = vmatpush1.msra.mxu0 0.0
        %4496 = vmatprep.subr.mxu0 0.0
        %4497 = vmatpush1.msra.mxu0 0.0
        %4498 = vmatprep.subr.mxu0 0.0
        %4499 = vmatpush1.msra.mxu0 0.0
        %4500 = vmatprep.subr.mxu0 0.0
        %4501 = vmatpush1.msra.mxu0 0.0
        %4502 = vmatprep.subr.mxu0 0.0
        %4503 = vmatpush1.msra.mxu0 0.0
        %4504 = vmatprep.subr.mxu0 0.0
        %4505 = vmatpush1.msra.mxu0 0.0
        %4506 = vmatprep.subr.mxu0 0.0
        %4507 = vmatpush1.msra.mxu0 0.0
        %4508 = vmatprep.subr.mxu0 0.0
        %4509 = vmatpush1.msra.mxu0 0.0
        %4510 = vmatprep.subr.mxu0 0.0
        %4511 = vmatpush1.msra.mxu0 0.0
        %4512 = vmatprep.subr.mxu0 0.0
        %4513 = vmatpush1.msra.mxu0 0.0
        %4514 = vmatprep.mubr.f32.mxu0 0.0
        %4515 = vmatmul.mubr.f32.gmra.mrb[0].mxu0 %v4445
        %v4516 = vpop.f32.mrb[0].mxu0
        %v4517 = vadd.f32 0.0, %v4516
        %v4518 = vpop.f32.mrb[0].mxu0
        %4519 = vdwg.mxu0
        %v4520 = vsel %vm1382, %v3869, 0
        %v4523 = vsel %vm1385, %v4108, 0
        %4525 = vmatprep.subr.mxu0 0.0
        %4526 = vmatpush1.msra.mxu0 %v4523
        %4527 = vmatprep.subr.mxu0 0.0
        %4528 = vmatpush1.msra.mxu0 0.0
        %4529 = vmatprep.subr.mxu0 0.0
        %4530 = vmatpush1.msra.mxu0 0.0
        %4531 = vmatprep.subr.mxu0 0.0
        %4532 = vmatpush1.msra.mxu0 0.0
        %4533 = vmatprep.subr.mxu0 0.0
        %4534 = vmatpush1.msra.mxu0 0.0
        %4535 = vmatprep.subr.mxu0 0.0
        %4536 = vmatpush1.msra.mxu0 0.0
        %4537 = vmatprep.subr.mxu0 0.0
        %4538 = vmatpush1.msra.mxu0 0.0
        %4539 = vmatprep.subr.mxu0 0.0
        %4540 = vmatpush1.msra.mxu0 0.0
        %4541 = vmatprep.subr.mxu0 0.0
        %4542 = vmatpush1.msra.mxu0 0.0
        %4543 = vmatprep.subr.mxu0 0.0
        %4544 = vmatpush1.msra.mxu0 0.0
        %4545 = vmatprep.subr.mxu0 0.0
        %4546 = vmatpush1.msra.mxu0 0.0
        %4547 = vmatprep.subr.mxu0 0.0
        %4548 = vmatpush1.msra.mxu0 0.0
        %4549 = vmatprep.subr.mxu0 0.0
        %4550 = vmatpush1.msra.mxu0 0.0
        %4551 = vmatprep.subr.mxu0 0.0
        %4552 = vmatpush1.msra.mxu0 0.0
        %4553 = vmatprep.subr.mxu0 0.0
        %4554 = vmatpush1.msra.mxu0 0.0
        %4555 = vmatprep.subr.mxu0 0.0
        %4556 = vmatpush1.msra.mxu0 0.0
        %4557 = vmatprep.subr.mxu0 0.0
        %4558 = vmatpush1.msra.mxu0 0.0
        %4559 = vmatprep.subr.mxu0 0.0
        %4560 = vmatpush1.msra.mxu0 0.0
        %4561 = vmatprep.subr.mxu0 0.0
        %4562 = vmatpush1.msra.mxu0 0.0
        %4563 = vmatprep.subr.mxu0 0.0
        %4564 = vmatpush1.msra.mxu0 0.0
        %4565 = vmatprep.subr.mxu0 0.0
        %4566 = vmatpush1.msra.mxu0 0.0
        %4567 = vmatprep.subr.mxu0 0.0
        %4568 = vmatpush1.msra.mxu0 0.0
        %4569 = vmatprep.subr.mxu0 0.0
        %4570 = vmatpush1.msra.mxu0 0.0
        %4571 = vmatprep.subr.mxu0 0.0
        %4572 = vmatpush1.msra.mxu0 0.0
        %4573 = vmatprep.subr.mxu0 0.0
        %4574 = vmatpush1.msra.mxu0 0.0
        %4575 = vmatprep.subr.mxu0 0.0
        %4576 = vmatpush1.msra.mxu0 0.0
        %4577 = vmatprep.subr.mxu0 0.0
        %4578 = vmatpush1.msra.mxu0 0.0
        %4579 = vmatprep.subr.mxu0 0.0
        %4580 = vmatpush1.msra.mxu0 0.0
        %4581 = vmatprep.subr.mxu0 0.0
        %4582 = vmatpush1.msra.mxu0 0.0
        %4583 = vmatprep.subr.mxu0 0.0
        %4584 = vmatpush1.msra.mxu0 0.0
        %4585 = vmatprep.subr.mxu0 0.0
        %4586 = vmatpush1.msra.mxu0 0.0
        %4587 = vmatprep.subr.mxu0 0.0
        %4588 = vmatpush1.msra.mxu0 0.0
        %4589 = vmatprep.mubr.f32.mxu0 0.0
        %4590 = vmatmul.mubr.f32.gmra.mrb[0].mxu0 %v4520
        %v4591 = vpop.f32.mrb[0].mxu0
        %v4592 = vadd.f32 0.0, %v4591
        %v4593 = vpop.f32.mrb[0].mxu0
        %4594 = vdwg.mxu0
        %v4595 = vsel %vm1382, %v3871, 0
        %v4598 = vsel %vm1385, %v4140, 0
        %4600 = vmatprep.subr.mxu0 0.0
        %4601 = vmatpush1.msra.mxu0 %v4598
        %4602 = vmatprep.subr.mxu0 0.0
        %4603 = vmatpush1.msra.mxu0 0.0
        %4604 = vmatprep.subr.mxu0 0.0
        %4605 = vmatpush1.msra.mxu0 0.0
        %4606 = vmatprep.subr.mxu0 0.0
        %4607 = vmatpush1.msra.mxu0 0.0
        %4608 = vmatprep.subr.mxu0 0.0
        %4609 = vmatpush1.msra.mxu0 0.0
        %4610 = vmatprep.subr.mxu0 0.0
        %4611 = vmatpush1.msra.mxu0 0.0
        %4612 = vmatprep.subr.mxu0 0.0
        %4613 = vmatpush1.msra.mxu0 0.0
        %4614 = vmatprep.subr.mxu0 0.0
        %4615 = vmatpush1.msra.mxu0 0.0
        %4616 = vmatprep.subr.mxu0 0.0
        %4617 = vmatpush1.msra.mxu0 0.0
        %4618 = vmatprep.subr.mxu0 0.0
        %4619 = vmatpush1.msra.mxu0 0.0
        %4620 = vmatprep.subr.mxu0 0.0
        %4621 = vmatpush1.msra.mxu0 0.0
        %4622 = vmatprep.subr.mxu0 0.0
        %4623 = vmatpush1.msra.mxu0 0.0
        %4624 = vmatprep.subr.mxu0 0.0
        %4625 = vmatpush1.msra.mxu0 0.0
        %4626 = vmatprep.subr.mxu0 0.0
        %4627 = vmatpush1.msra.mxu0 0.0
        %4628 = vmatprep.subr.mxu0 0.0
        %4629 = vmatpush1.msra.mxu0 0.0
        %4630 = vmatprep.subr.mxu0 0.0
        %4631 = vmatpush1.msra.mxu0 0.0
        %4632 = vmatprep.subr.mxu0 0.0
        %4633 = vmatpush1.msra.mxu0 0.0
        %4634 = vmatprep.subr.mxu0 0.0
        %4635 = vmatpush1.msra.mxu0 0.0
        %4636 = vmatprep.subr.mxu0 0.0
        %4637 = vmatpush1.msra.mxu0 0.0
        %4638 = vmatprep.subr.mxu0 0.0
        %4639 = vmatpush1.msra.mxu0 0.0
        %4640 = vmatprep.subr.mxu0 0.0
        %4641 = vmatpush1.msra.mxu0 0.0
        %4642 = vmatprep.subr.mxu0 0.0
        %4643 = vmatpush1.msra.mxu0 0.0
        %4644 = vmatprep.subr.mxu0 0.0
        %4645 = vmatpush1.msra.mxu0 0.0
        %4646 = vmatprep.subr.mxu0 0.0
        %4647 = vmatpush1.msra.mxu0 0.0
        %4648 = vmatprep.subr.mxu0 0.0
        %4649 = vmatpush1.msra.mxu0 0.0
        %4650 = vmatprep.subr.mxu0 0.0
        %4651 = vmatpush1.msra.mxu0 0.0
        %4652 = vmatprep.subr.mxu0 0.0
        %4653 = vmatpush1.msra.mxu0 0.0
        %4654 = vmatprep.subr.mxu0 0.0
        %4655 = vmatpush1.msra.mxu0 0.0
        %4656 = vmatprep.subr.mxu0 0.0
        %4657 = vmatpush1.msra.mxu0 0.0
        %4658 = vmatprep.subr.mxu0 0.0
        %4659 = vmatpush1.msra.mxu0 0.0
        %4660 = vmatprep.subr.mxu0 0.0
        %4661 = vmatpush1.msra.mxu0 0.0
        %4662 = vmatprep.subr.mxu0 0.0
        %4663 = vmatpush1.msra.mxu0 0.0
        %4664 = vmatprep.mubr.f32.mxu0 0.0
        %4665 = vmatmul.mubr.f32.gmra.mrb[0].mxu0 %v4595
        %v4666 = vpop.f32.mrb[0].mxu0
        %v4667 = vadd.f32 0.0, %v4666
        %v4668 = vpop.f32.mrb[0].mxu0
        %4669 = vdwg.mxu0
        %v4670 = vsel %vm1382, %v3873, 0
        %v4673 = vsel %vm1385, %v4172, 0
        %4675 = vmatprep.subr.mxu0 0.0
        %4676 = vmatpush1.msra.mxu0 %v4673
        %4677 = vmatprep.subr.mxu0 0.0
        %4678 = vmatpush1.msra.mxu0 0.0
        %4679 = vmatprep.subr.mxu0 0.0
        %4680 = vmatpush1.msra.mxu0 0.0
        %4681 = vmatprep.subr.mxu0 0.0
        %4682 = vmatpush1.msra.mxu0 0.0
        %4683 = vmatprep.subr.mxu0 0.0
        %4684 = vmatpush1.msra.mxu0 0.0
        %4685 = vmatprep.subr.mxu0 0.0
        %4686 = vmatpush1.msra.mxu0 0.0
        %4687 = vmatprep.subr.mxu0 0.0
        %4688 = vmatpush1.msra.mxu0 0.0
        %4689 = vmatprep.subr.mxu0 0.0
        %4690 = vmatpush1.msra.mxu0 0.0
        %4691 = vmatprep.subr.mxu0 0.0
        %4692 = vmatpush1.msra.mxu0 0.0
        %4693 = vmatprep.subr.mxu0 0.0
        %4694 = vmatpush1.msra.mxu0 0.0
        %4695 = vmatprep.subr.mxu0 0.0
        %4696 = vmatpush1.msra.mxu0 0.0
        %4697 = vmatprep.subr.mxu0 0.0
        %4698 = vmatpush1.msra.mxu0 0.0
        %4699 = vmatprep.subr.mxu0 0.0
        %4700 = vmatpush1.msra.mxu0 0.0
        %4701 = vmatprep.subr.mxu0 0.0
        %4702 = vmatpush1.msra.mxu0 0.0
        %4703 = vmatprep.subr.mxu0 0.0
        %4704 = vmatpush1.msra.mxu0 0.0
        %4705 = vmatprep.subr.mxu0 0.0
        %4706 = vmatpush1.msra.mxu0 0.0
        %4707 = vmatprep.subr.mxu0 0.0
        %4708 = vmatpush1.msra.mxu0 0.0
        %4709 = vmatprep.subr.mxu0 0.0
        %4710 = vmatpush1.msra.mxu0 0.0
        %4711 = vmatprep.subr.mxu0 0.0
        %4712 = vmatpush1.msra.mxu0 0.0
        %4713 = vmatprep.subr.mxu0 0.0
        %4714 = vmatpush1.msra.mxu0 0.0
        %4715 = vmatprep.subr.mxu0 0.0
        %4716 = vmatpush1.msra.mxu0 0.0
        %4717 = vmatprep.subr.mxu0 0.0
        %4718 = vmatpush1.msra.mxu0 0.0
        %4719 = vmatprep.subr.mxu0 0.0
        %4720 = vmatpush1.msra.mxu0 0.0
        %4721 = vmatprep.subr.mxu0 0.0
        %4722 = vmatpush1.msra.mxu0 0.0
        %4723 = vmatprep.subr.mxu0 0.0
        %4724 = vmatpush1.msra.mxu0 0.0
        %4725 = vmatprep.subr.mxu0 0.0
        %4726 = vmatpush1.msra.mxu0 0.0
        %4727 = vmatprep.subr.mxu0 0.0
        %4728 = vmatpush1.msra.mxu0 0.0
        %4729 = vmatprep.subr.mxu0 0.0
        %4730 = vmatpush1.msra.mxu0 0.0
        %4731 = vmatprep.subr.mxu0 0.0
        %4732 = vmatpush1.msra.mxu0 0.0
        %4733 = vmatprep.subr.mxu0 0.0
        %4734 = vmatpush1.msra.mxu0 0.0
        %4735 = vmatprep.subr.mxu0 0.0
        %4736 = vmatpush1.msra.mxu0 0.0
        %4737 = vmatprep.subr.mxu0 0.0
        %4738 = vmatpush1.msra.mxu0 0.0
        %4739 = vmatprep.mubr.f32.mxu0 0.0
        %4740 = vmatmul.mubr.f32.gmra.mrb[0].mxu0 %v4670
        %v4741 = vpop.f32.mrb[0].mxu0
        %v4742 = vadd.f32 0.0, %v4741
        %v4743 = vpop.f32.mrb[0].mxu0
        %4744 = vdwg.mxu0
        %v4745 = vsel %vm1382, %v3875, 0
        %v4748 = vsel %vm1385, %v4204, 0
        %4750 = vmatprep.subr.mxu0 0.0
        %4751 = vmatpush1.msra.mxu0 %v4748
        %4752 = vmatprep.subr.mxu0 0.0
        %4753 = vmatpush1.msra.mxu0 0.0
        %4754 = vmatprep.subr.mxu0 0.0
        %4755 = vmatpush1.msra.mxu0 0.0
        %4756 = vmatprep.subr.mxu0 0.0
        %4757 = vmatpush1.msra.mxu0 0.0
        %4758 = vmatprep.subr.mxu0 0.0
        %4759 = vmatpush1.msra.mxu0 0.0
        %4760 = vmatprep.subr.mxu0 0.0
        %4761 = vmatpush1.msra.mxu0 0.0
        %4762 = vmatprep.subr.mxu0 0.0
        %4763 = vmatpush1.msra.mxu0 0.0
        %4764 = vmatprep.subr.mxu0 0.0
        %4765 = vmatpush1.msra.mxu0 0.0
        %4766 = vmatprep.subr.mxu0 0.0
        %4767 = vmatpush1.msra.mxu0 0.0
        %4768 = vmatprep.subr.mxu0 0.0
        %4769 = vmatpush1.msra.mxu0 0.0
        %4770 = vmatprep.subr.mxu0 0.0
        %4771 = vmatpush1.msra.mxu0 0.0
        %4772 = vmatprep.subr.mxu0 0.0
        %4773 = vmatpush1.msra.mxu0 0.0
        %4774 = vmatprep.subr.mxu0 0.0
        %4775 = vmatpush1.msra.mxu0 0.0
        %4776 = vmatprep.subr.mxu0 0.0
        %4777 = vmatpush1.msra.mxu0 0.0
        %4778 = vmatprep.subr.mxu0 0.0
        %4779 = vmatpush1.msra.mxu0 0.0
        %4780 = vmatprep.subr.mxu0 0.0
        %4781 = vmatpush1.msra.mxu0 0.0
        %4782 = vmatprep.subr.mxu0 0.0
        %4783 = vmatpush1.msra.mxu0 0.0
        %4784 = vmatprep.subr.mxu0 0.0
        %4785 = vmatpush1.msra.mxu0 0.0
        %4786 = vmatprep.subr.mxu0 0.0
        %4787 = vmatpush1.msra.mxu0 0.0
        %4788 = vmatprep.subr.mxu0 0.0
        %4789 = vmatpush1.msra.mxu0 0.0
        %4790 = vmatprep.subr.mxu0 0.0
        %4791 = vmatpush1.msra.mxu0 0.0
        %4792 = vmatprep.subr.mxu0 0.0
        %4793 = vmatpush1.msra.mxu0 0.0
        %4794 = vmatprep.subr.mxu0 0.0
        %4795 = vmatpush1.msra.mxu0 0.0
        %4796 = vmatprep.subr.mxu0 0.0
        %4797 = vmatpush1.msra.mxu0 0.0
        %4798 = vmatprep.subr.mxu0 0.0
        %4799 = vmatpush1.msra.mxu0 0.0
        %4800 = vmatprep.subr.mxu0 0.0
        %4801 = vmatpush1.msra.mxu0 0.0
        %4802 = vmatprep.subr.mxu0 0.0
        %4803 = vmatpush1.msra.mxu0 0.0
        %4804 = vmatprep.subr.mxu0 0.0
        %4805 = vmatpush1.msra.mxu0 0.0
        %4806 = vmatprep.subr.mxu0 0.0
        %4807 = vmatpush1.msra.mxu0 0.0
        %4808 = vmatprep.subr.mxu0 0.0
        %4809 = vmatpush1.msra.mxu0 0.0
        %4810 = vmatprep.subr.mxu0 0.0
        %4811 = vmatpush1.msra.mxu0 0.0
        %4812 = vmatprep.subr.mxu0 0.0
        %4813 = vmatpush1.msra.mxu0 0.0
        %4814 = vmatprep.mubr.f32.mxu0 0.0
        %4815 = vmatmul.mubr.f32.gmra.mrb[0].mxu0 %v4745
        %v4816 = vpop.f32.mrb[0].mxu0
        %v4817 = vadd.f32 0.0, %v4816
        %v4818 = vpop.f32.mrb[0].mxu0
        %4819 = vdwg.mxu0
        %v4820 = vsel %vm3497, %v4292, -inf
        %4821 = vmax.xlane.f32.xlu0 %v4820
        %v4822 = vpop.xlane.xlu0 %4821
        %v4823 = vsel %vm3497, %v4367, -inf
        %4824 = vmax.xlane.f32.xlu0 %v4823
        %v4825 = vpop.xlane.xlu0 %4824
        %v4826 = vsel %vm3497, %v4442, -inf
        %4827 = vmax.xlane.f32.xlu0 %v4826
        %v4828 = vpop.xlane.xlu0 %4827
        %v4829 = vsel %vm3497, %v4517, -inf
        %4830 = vmax.xlane.f32.xlu0 %v4829
        %v4831 = vpop.xlane.xlu0 %4830
        %v4832 = vsel %vm3497, %v4592, -inf
        %4833 = vmax.xlane.f32.xlu0 %v4832
        %v4834 = vpop.xlane.xlu0 %4833
        %v4835 = vsel %vm3497, %v4667, -inf
        %4836 = vmax.xlane.f32.xlu0 %v4835
        %v4837 = vpop.xlane.xlu0 %4836
        %v4838 = vsel %vm3497, %v4742, -inf
        %4839 = vmax.xlane.f32.xlu0 %v4838
        %v4840 = vpop.xlane.xlu0 %4839
        %v4841 = vsel %vm3497, %v4817, -inf
        %4842 = vmax.xlane.f32.xlu0 %v4841
        %v4843 = vpop.xlane.xlu0 %4842
        %v4844 = vsub.f32 %v4292, %v4822
        %v4845 = vsub.f32 %v4367, %v4825
        %v4846 = vsub.f32 %v4442, %v4828
        %v4847 = vsub.f32 %v4517, %v4831
        %v4848 = vsub.f32 %v4592, %v4834
        %v4849 = vsub.f32 %v4667, %v4837
        %v4850 = vsub.f32 %v4742, %v4840
        %v4851 = vsub.f32 %v4817, %v4843
        %v4852 = vmul.f32 %v4844, 1.442695
        %v4853 = vpow.pop %v4852
        %v4854 = vmul.f32 %v4845, 1.442695
        %v4855 = vpow.pop %v4854
        %v4856 = vmul.f32 %v4846, 1.442695
        %v4857 = vpow.pop %v4856
        %v4858 = vmul.f32 %v4847, 1.442695
        %v4859 = vpow.pop %v4858
        %v4860 = vmul.f32 %v4848, 1.442695
        %v4861 = vpow.pop %v4860
        %v4862 = vmul.f32 %v4849, 1.442695
        %v4863 = vpow.pop %v4862
        %v4864 = vmul.f32 %v4850, 1.442695
        %v4865 = vpow.pop %v4864
        %v4866 = vmul.f32 %v4851, 1.442695
        %v4867 = vpow.pop %v4866
        %v4868 = vsel %vm3497, %v4853, 0.0
        %4869 = vadd.xlane.f32.xlu0 %v4868
        %v4870 = vpop.xlane.xlu0 %4869
        %v4871 = vsel %vm3497, %v4855, 0.0
        %4872 = vadd.xlane.f32.xlu0 %v4871
        %v4873 = vpop.xlane.xlu0 %4872
        %v4874 = vsel %vm3497, %v4857, 0.0
        %4875 = vadd.xlane.f32.xlu0 %v4874
        %v4876 = vpop.xlane.xlu0 %4875
        %v4877 = vsel %vm3497, %v4859, 0.0
        %4878 = vadd.xlane.f32.xlu0 %v4877
        %v4879 = vpop.xlane.xlu0 %4878
        %v4880 = vsel %vm3497, %v4861, 0.0
        %4881 = vadd.xlane.f32.xlu0 %v4880
        %v4882 = vpop.xlane.xlu0 %4881
        %v4883 = vsel %vm3497, %v4863, 0.0
        %4884 = vadd.xlane.f32.xlu0 %v4883
        %v4885 = vpop.xlane.xlu0 %4884
        %v4886 = vsel %vm3497, %v4865, 0.0
        %4887 = vadd.xlane.f32.xlu0 %v4886
        %v4888 = vpop.xlane.xlu0 %4887
        %v4889 = vsel %vm3497, %v4867, 0.0
        %4890 = vadd.xlane.f32.xlu0 %v4889
        %v4891 = vpop.xlane.xlu0 %4890
        %v4892 = vrcp.pop %v4870
        %v4893 = vrcp.pop %v4873
        %v4894 = vrcp.pop %v4876
        %v4895 = vrcp.pop %v4879
        %v4896 = vrcp.pop %v4882
        %v4897 = vrcp.pop %v4885
        %v4898 = vrcp.pop %v4888
        %v4899 = vrcp.pop %v4891
        %v4900 = vmul.f32 %v4853, %v4892
        %v4901 = vmul.f32 %v4855, %v4893
        %v4902 = vmul.f32 %v4857, %v4894
        %v4903 = vmul.f32 %v4859, %v4895
        %v4904 = vmul.f32 %v4861, %v4896
        %v4905 = vmul.f32 %v4863, %v4897
        %v4906 = vmul.f32 %v4865, %v4898
        %v4907 = vmul.f32 %v4867, %v4899
        %4908 = vxpose.xlu0.b32.start [1/16] %v3853, 128
        %4909 = vxpose.xlu0.b32.cont [2/16] %v3858, 128
        %4910 = vxpose.xlu0.b32.cont [3/16] 0.0, 128
        %4911 = vxpose.xlu0.b32.cont [4/16] 0.0, 128
        %4912 = vxpose.xlu0.b32.cont [5/16] 0.0, 128
        %4913 = vxpose.xlu0.b32.cont [6/16] 0.0, 128
        %4914 = vxpose.xlu0.b32.cont [7/16] 0.0, 128
        %4915 = vxpose.xlu0.b32.cont [8/16] 0.0, 128
        %4916 = vxpose.xlu0.b32.cont [9/16] 0.0, 128
        %4917 = vxpose.xlu0.b32.cont [10/16] 0.0, 128
        %4918 = vxpose.xlu0.b32.cont [11/16] 0.0, 128
        %4919 = vxpose.xlu0.b32.cont [12/16] 0.0, 128
        %4920 = vxpose.xlu0.b32.cont [13/16] 0.0, 128
        %4921 = vxpose.xlu0.b32.cont [14/16] 0.0, 128
        %4922 = vxpose.xlu0.b32.cont [15/16] 0.0, 128
        %4923 = vxpose.xlu0.b32.end [16/16] 0.0, 128
        %v4924 = vpop.trf.xlu0
        %v4925 = vpop.trf.xlu0
        %v4926 = vpop.trf.xlu0
        %v4927 = vpop.trf.xlu0
        %v4928 = vpop.trf.xlu0
        %v4929 = vpop.trf.xlu0
        %v4930 = vpop.trf.xlu0
        %v4931 = vpop.trf.xlu0
        %v4932 = vpop.trf.xlu0
        %v4933 = vpop.trf.xlu0
        %v4934 = vpop.trf.xlu0
        %v4935 = vpop.trf.xlu0
        %v4936 = vpop.trf.xlu0
        %v4937 = vpop.trf.xlu0
        %v4938 = vpop.trf.xlu0
        %v4939 = vpop.trf.xlu0
        %4940 = vxpose.xlu0.b32.start [1/16] %v3923, 128
        %4941 = vxpose.xlu0.b32.cont [2/16] %v3925, 128
        %4942 = vxpose.xlu0.b32.cont [3/16] 0.0, 128
        %4943 = vxpose.xlu0.b32.cont [4/16] 0.0, 128
        %4944 = vxpose.xlu0.b32.cont [5/16] 0.0, 128
        %4945 = vxpose.xlu0.b32.cont [6/16] 0.0, 128
        %4946 = vxpose.xlu0.b32.cont [7/16] 0.0, 128
        %4947 = vxpose.xlu0.b32.cont [8/16] 0.0, 128
        %4948 = vxpose.xlu0.b32.cont [9/16] 0.0, 128
        %4949 = vxpose.xlu0.b32.cont [10/16] 0.0, 128
        %4950 = vxpose.xlu0.b32.cont [11/16] 0.0, 128
        %4951 = vxpose.xlu0.b32.cont [12/16] 0.0, 128
        %4952 = vxpose.xlu0.b32.cont [13/16] 0.0, 128
        %4953 = vxpose.xlu0.b32.cont [14/16] 0.0, 128
        %4954 = vxpose.xlu0.b32.cont [15/16] 0.0, 128
        %4955 = vxpose.xlu0.b32.end [16/16] 0.0, 128
        %v4956 = vpop.trf.xlu0
        %v4957 = vpop.trf.xlu0
        %v4958 = vpop.trf.xlu0
        %v4959 = vpop.trf.xlu0
        %v4960 = vpop.trf.xlu0
        %v4961 = vpop.trf.xlu0
        %v4962 = vpop.trf.xlu0
        %v4963 = vpop.trf.xlu0
        %v4964 = vpop.trf.xlu0
        %v4965 = vpop.trf.xlu0
        %v4966 = vpop.trf.xlu0
        %v4967 = vpop.trf.xlu0
        %v4968 = vpop.trf.xlu0
        %v4969 = vpop.trf.xlu0
        %v4970 = vpop.trf.xlu0
        %v4971 = vpop.trf.xlu0
        %4972 = vxpose.xlu0.b32.start [1/16] %v3929, 128
        %4973 = vxpose.xlu0.b32.cont [2/16] %v3931, 128
        %4974 = vxpose.xlu0.b32.cont [3/16] 0.0, 128
        %4975 = vxpose.xlu0.b32.cont [4/16] 0.0, 128
        %4976 = vxpose.xlu0.b32.cont [5/16] 0.0, 128
        %4977 = vxpose.xlu0.b32.cont [6/16] 0.0, 128
        %4978 = vxpose.xlu0.b32.cont [7/16] 0.0, 128
        %4979 = vxpose.xlu0.b32.cont [8/16] 0.0, 128
        %4980 = vxpose.xlu0.b32.cont [9/16] 0.0, 128
        %4981 = vxpose.xlu0.b32.cont [10/16] 0.0, 128
        %4982 = vxpose.xlu0.b32.cont [11/16] 0.0, 128
        %4983 = vxpose.xlu0.b32.cont [12/16] 0.0, 128
        %4984 = vxpose.xlu0.b32.cont [13/16] 0.0, 128
        %4985 = vxpose.xlu0.b32.cont [14/16] 0.0, 128
        %4986 = vxpose.xlu0.b32.cont [15/16] 0.0, 128
        %4987 = vxpose.xlu0.b32.end [16/16] 0.0, 128
        %v4988 = vpop.trf.xlu0
        %v4989 = vpop.trf.xlu0
        %v4990 = vpop.trf.xlu0
        %v4991 = vpop.trf.xlu0
        %v4992 = vpop.trf.xlu0
        %v4993 = vpop.trf.xlu0
        %v4994 = vpop.trf.xlu0
        %v4995 = vpop.trf.xlu0
        %v4996 = vpop.trf.xlu0
        %v4997 = vpop.trf.xlu0
        %v4998 = vpop.trf.xlu0
        %v4999 = vpop.trf.xlu0
        %v5000 = vpop.trf.xlu0
        %v5001 = vpop.trf.xlu0
        %v5002 = vpop.trf.xlu0
        %v5003 = vpop.trf.xlu0
        %5004 = vxpose.xlu0.b32.start [1/16] %v3935, 128
        %5005 = vxpose.xlu0.b32.cont [2/16] %v3937, 128
        %5006 = vxpose.xlu0.b32.cont [3/16] 0.0, 128
        %5007 = vxpose.xlu0.b32.cont [4/16] 0.0, 128
        %5008 = vxpose.xlu0.b32.cont [5/16] 0.0, 128
        %5009 = vxpose.xlu0.b32.cont [6/16] 0.0, 128
        %5010 = vxpose.xlu0.b32.cont [7/16] 0.0, 128
        %5011 = vxpose.xlu0.b32.cont [8/16] 0.0, 128
        %5012 = vxpose.xlu0.b32.cont [9/16] 0.0, 128
        %5013 = vxpose.xlu0.b32.cont [10/16] 0.0, 128
        %5014 = vxpose.xlu0.b32.cont [11/16] 0.0, 128
        %5015 = vxpose.xlu0.b32.cont [12/16] 0.0, 128
        %5016 = vxpose.xlu0.b32.cont [13/16] 0.0, 128
        %5017 = vxpose.xlu0.b32.cont [14/16] 0.0, 128
        %5018 = vxpose.xlu0.b32.cont [15/16] 0.0, 128
        %5019 = vxpose.xlu0.b32.end [16/16] 0.0, 128
        %v5020 = vpop.trf.xlu0
        %v5021 = vpop.trf.xlu0
        %v5022 = vpop.trf.xlu0
        %v5023 = vpop.trf.xlu0
        %v5024 = vpop.trf.xlu0
        %v5025 = vpop.trf.xlu0
        %v5026 = vpop.trf.xlu0
        %v5027 = vpop.trf.xlu0
        %v5028 = vpop.trf.xlu0
        %v5029 = vpop.trf.xlu0
        %v5030 = vpop.trf.xlu0
        %v5031 = vpop.trf.xlu0
        %v5032 = vpop.trf.xlu0
        %v5033 = vpop.trf.xlu0
        %v5034 = vpop.trf.xlu0
        %v5035 = vpop.trf.xlu0
        %5036 = vxpose.xlu0.b32.start [1/16] %v3941, 128
        %5037 = vxpose.xlu0.b32.cont [2/16] %v3943, 128
        %5038 = vxpose.xlu0.b32.cont [3/16] 0.0, 128
        %5039 = vxpose.xlu0.b32.cont [4/16] 0.0, 128
        %5040 = vxpose.xlu0.b32.cont [5/16] 0.0, 128
        %5041 = vxpose.xlu0.b32.cont [6/16] 0.0, 128
        %5042 = vxpose.xlu0.b32.cont [7/16] 0.0, 128
        %5043 = vxpose.xlu0.b32.cont [8/16] 0.0, 128
        %5044 = vxpose.xlu0.b32.cont [9/16] 0.0, 128
        %5045 = vxpose.xlu0.b32.cont [10/16] 0.0, 128
        %5046 = vxpose.xlu0.b32.cont [11/16] 0.0, 128
        %5047 = vxpose.xlu0.b32.cont [12/16] 0.0, 128
        %5048 = vxpose.xlu0.b32.cont [13/16] 0.0, 128
        %5049 = vxpose.xlu0.b32.cont [14/16] 0.0, 128
        %5050 = vxpose.xlu0.b32.cont [15/16] 0.0, 128
        %5051 = vxpose.xlu0.b32.end [16/16] 0.0, 128
        %v5052 = vpop.trf.xlu0
        %v5053 = vpop.trf.xlu0
        %v5054 = vpop.trf.xlu0
        %v5055 = vpop.trf.xlu0
        %v5056 = vpop.trf.xlu0
        %v5057 = vpop.trf.xlu0
        %v5058 = vpop.trf.xlu0
        %v5059 = vpop.trf.xlu0
        %v5060 = vpop.trf.xlu0
        %v5061 = vpop.trf.xlu0
        %v5062 = vpop.trf.xlu0
        %v5063 = vpop.trf.xlu0
        %v5064 = vpop.trf.xlu0
        %v5065 = vpop.trf.xlu0
        %v5066 = vpop.trf.xlu0
        %v5067 = vpop.trf.xlu0
        %5068 = vxpose.xlu0.b32.start [1/16] %v3947, 128
        %5069 = vxpose.xlu0.b32.cont [2/16] %v3949, 128
        %5070 = vxpose.xlu0.b32.cont [3/16] 0.0, 128
        %5071 = vxpose.xlu0.b32.cont [4/16] 0.0, 128
        %5072 = vxpose.xlu0.b32.cont [5/16] 0.0, 128
        %5073 = vxpose.xlu0.b32.cont [6/16] 0.0, 128
        %5074 = vxpose.xlu0.b32.cont [7/16] 0.0, 128
        %5075 = vxpose.xlu0.b32.cont [8/16] 0.0, 128
        %5076 = vxpose.xlu0.b32.cont [9/16] 0.0, 128
        %5077 = vxpose.xlu0.b32.cont [10/16] 0.0, 128
        %5078 = vxpose.xlu0.b32.cont [11/16] 0.0, 128
        %5079 = vxpose.xlu0.b32.cont [12/16] 0.0, 128
        %5080 = vxpose.xlu0.b32.cont [13/16] 0.0, 128
        %5081 = vxpose.xlu0.b32.cont [14/16] 0.0, 128
        %5082 = vxpose.xlu0.b32.cont [15/16] 0.0, 128
        %5083 = vxpose.xlu0.b32.end [16/16] 0.0, 128
        %v5084 = vpop.trf.xlu0
        %v5085 = vpop.trf.xlu0
        %v5086 = vpop.trf.xlu0
        %v5087 = vpop.trf.xlu0
        %v5088 = vpop.trf.xlu0
        %v5089 = vpop.trf.xlu0
        %v5090 = vpop.trf.xlu0
        %v5091 = vpop.trf.xlu0
        %v5092 = vpop.trf.xlu0
        %v5093 = vpop.trf.xlu0
        %v5094 = vpop.trf.xlu0
        %v5095 = vpop.trf.xlu0
        %v5096 = vpop.trf.xlu0
        %v5097 = vpop.trf.xlu0
        %v5098 = vpop.trf.xlu0
        %v5099 = vpop.trf.xlu0
        %5100 = vxpose.xlu0.b32.start [1/16] %v3953, 128
        %5101 = vxpose.xlu0.b32.cont [2/16] %v3955, 128
        %5102 = vxpose.xlu0.b32.cont [3/16] 0.0, 128
        %5103 = vxpose.xlu0.b32.cont [4/16] 0.0, 128
        %5104 = vxpose.xlu0.b32.cont [5/16] 0.0, 128
        %5105 = vxpose.xlu0.b32.cont [6/16] 0.0, 128
        %5106 = vxpose.xlu0.b32.cont [7/16] 0.0, 128
        %5107 = vxpose.xlu0.b32.cont [8/16] 0.0, 128
        %5108 = vxpose.xlu0.b32.cont [9/16] 0.0, 128
        %5109 = vxpose.xlu0.b32.cont [10/16] 0.0, 128
        %5110 = vxpose.xlu0.b32.cont [11/16] 0.0, 128
        %5111 = vxpose.xlu0.b32.cont [12/16] 0.0, 128
        %5112 = vxpose.xlu0.b32.cont [13/16] 0.0, 128
        %5113 = vxpose.xlu0.b32.cont [14/16] 0.0, 128
        %5114 = vxpose.xlu0.b32.cont [15/16] 0.0, 128
        %5115 = vxpose.xlu0.b32.end [16/16] 0.0, 128
        %v5116 = vpop.trf.xlu0
        %v5117 = vpop.trf.xlu0
        %v5118 = vpop.trf.xlu0
        %v5119 = vpop.trf.xlu0
        %v5120 = vpop.trf.xlu0
        %v5121 = vpop.trf.xlu0
        %v5122 = vpop.trf.xlu0
        %v5123 = vpop.trf.xlu0
        %v5124 = vpop.trf.xlu0
        %v5125 = vpop.trf.xlu0
        %v5126 = vpop.trf.xlu0
        %v5127 = vpop.trf.xlu0
        %v5128 = vpop.trf.xlu0
        %v5129 = vpop.trf.xlu0
        %v5130 = vpop.trf.xlu0
        %v5131 = vpop.trf.xlu0
        %5132 = vxpose.xlu0.b32.start [1/16] %v3959, 128
        %5133 = vxpose.xlu0.b32.cont [2/16] %v3961, 128
        %5134 = vxpose.xlu0.b32.cont [3/16] 0.0, 128
        %5135 = vxpose.xlu0.b32.cont [4/16] 0.0, 128
        %5136 = vxpose.xlu0.b32.cont [5/16] 0.0, 128
        %5137 = vxpose.xlu0.b32.cont [6/16] 0.0, 128
        %5138 = vxpose.xlu0.b32.cont [7/16] 0.0, 128
        %5139 = vxpose.xlu0.b32.cont [8/16] 0.0, 128
        %5140 = vxpose.xlu0.b32.cont [9/16] 0.0, 128
        %5141 = vxpose.xlu0.b32.cont [10/16] 0.0, 128
        %5142 = vxpose.xlu0.b32.cont [11/16] 0.0, 128
        %5143 = vxpose.xlu0.b32.cont [12/16] 0.0, 128
        %5144 = vxpose.xlu0.b32.cont [13/16] 0.0, 128
        %5145 = vxpose.xlu0.b32.cont [14/16] 0.0, 128
        %5146 = vxpose.xlu0.b32.cont [15/16] 0.0, 128
        %5147 = vxpose.xlu0.b32.end [16/16] 0.0, 128
        %v5148 = vpop.trf.xlu0
        %v5149 = vpop.trf.xlu0
        %v5150 = vpop.trf.xlu0
        %v5151 = vpop.trf.xlu0
        %v5152 = vpop.trf.xlu0
        %v5153 = vpop.trf.xlu0
        %v5154 = vpop.trf.xlu0
        %v5155 = vpop.trf.xlu0
        %v5156 = vpop.trf.xlu0
        %v5157 = vpop.trf.xlu0
        %v5158 = vpop.trf.xlu0
        %v5159 = vpop.trf.xlu0
        %v5160 = vpop.trf.xlu0
        %v5161 = vpop.trf.xlu0
        %v5162 = vpop.trf.xlu0
        %v5163 = vpop.trf.xlu0
        %v5165 = vsel %vm3497, %v4924, 0
        %v5168 = vsel %vm3497, %v4900, 0
        %5170 = vmatprep.subr.mxu0 0.0
        %5171 = vmatpush1.xpose.msra.mxu0 %v5168
        %5172 = vmatprep.subr.mxu0 0.0
        %5173 = vmatpush1.xpose.msra.mxu0 0.0
        %5174 = vmatprep.subr.mxu0 0.0
        %5175 = vmatpush1.xpose.msra.mxu0 0.0
        %5176 = vmatprep.subr.mxu0 0.0
        %5177 = vmatpush1.xpose.msra.mxu0 0.0
        %5178 = vmatprep.subr.mxu0 0.0
        %5179 = vmatpush1.xpose.msra.mxu0 0.0
        %5180 = vmatprep.subr.mxu0 0.0
        %5181 = vmatpush1.xpose.msra.mxu0 0.0
        %5182 = vmatprep.subr.mxu0 0.0
        %5183 = vmatpush1.xpose.msra.mxu0 0.0
        %5184 = vmatprep.subr.mxu0 0.0
        %5185 = vmatpush1.xpose.msra.mxu0 0.0
        %5186 = vmatprep.subr.mxu0 0.0
        %5187 = vmatpush1.xpose.msra.mxu0 0.0
        %5188 = vmatprep.subr.mxu0 0.0
        %5189 = vmatpush1.xpose.msra.mxu0 0.0
        %5190 = vmatprep.subr.mxu0 0.0
        %5191 = vmatpush1.xpose.msra.mxu0 0.0
        %5192 = vmatprep.subr.mxu0 0.0
        %5193 = vmatpush1.xpose.msra.mxu0 0.0
        %5194 = vmatprep.subr.mxu0 0.0
        %5195 = vmatpush1.xpose.msra.mxu0 0.0
        %5196 = vmatprep.subr.mxu0 0.0
        %5197 = vmatpush1.xpose.msra.mxu0 0.0
        %5198 = vmatprep.subr.mxu0 0.0
        %5199 = vmatpush1.xpose.msra.mxu0 0.0
        %5200 = vmatprep.subr.mxu0 0.0
        %5201 = vmatpush1.xpose.msra.mxu0 0.0
        %5202 = vmatprep.subr.mxu0 0.0
        %5203 = vmatpush1.xpose.msra.mxu0 0.0
        %5204 = vmatprep.subr.mxu0 0.0
        %5205 = vmatpush1.xpose.msra.mxu0 0.0
        %5206 = vmatprep.subr.mxu0 0.0
        %5207 = vmatpush1.xpose.msra.mxu0 0.0
        %5208 = vmatprep.subr.mxu0 0.0
        %5209 = vmatpush1.xpose.msra.mxu0 0.0
        %5210 = vmatprep.subr.mxu0 0.0
        %5211 = vmatpush1.xpose.msra.mxu0 0.0
        %5212 = vmatprep.subr.mxu0 0.0
        %5213 = vmatpush1.xpose.msra.mxu0 0.0
        %5214 = vmatprep.subr.mxu0 0.0
        %5215 = vmatpush1.xpose.msra.mxu0 0.0
        %5216 = vmatprep.subr.mxu0 0.0
        %5217 = vmatpush1.xpose.msra.mxu0 0.0
        %5218 = vmatprep.subr.mxu0 0.0
        %5219 = vmatpush1.xpose.msra.mxu0 0.0
        %5220 = vmatprep.subr.mxu0 0.0
        %5221 = vmatpush1.xpose.msra.mxu0 0.0
        %5222 = vmatprep.subr.mxu0 0.0
        %5223 = vmatpush1.xpose.msra.mxu0 0.0
        %5224 = vmatprep.subr.mxu0 0.0
        %5225 = vmatpush1.xpose.msra.mxu0 0.0
        %5226 = vmatprep.subr.mxu0 0.0
        %5227 = vmatpush1.xpose.msra.mxu0 0.0
        %5228 = vmatprep.subr.mxu0 0.0
        %5229 = vmatpush1.xpose.msra.mxu0 0.0
        %5230 = vmatprep.subr.mxu0 0.0
        %5231 = vmatpush1.xpose.msra.mxu0 0.0
        %5232 = vmatprep.subr.mxu0 0.0
        %5233 = vmatpush1.xpose.msra.mxu0 0.0
        %5234 = vmatprep.mubr.f32.mxu0 0.0
        %5235 = vmatmul.mubr.f32.gmra.mrb[0].mxu0 %v5165
        %v5236 = vpop.f32.mrb[0].mxu0
        %v5237 = vadd.f32 0.0, %v5236
        %v5238 = vpop.f32.mrb[0].mxu0
        %5239 = vdwg.mxu0
        %v5241 = vsel %vm3497, %v4956, 0
        %v5244 = vsel %vm3497, %v4901, 0
        %5246 = vmatprep.subr.mxu0 0.0
        %5247 = vmatpush1.xpose.msra.mxu0 %v5244
        %5248 = vmatprep.subr.mxu0 0.0
        %5249 = vmatpush1.xpose.msra.mxu0 0.0
        %5250 = vmatprep.subr.mxu0 0.0
        %5251 = vmatpush1.xpose.msra.mxu0 0.0
        %5252 = vmatprep.subr.mxu0 0.0
        %5253 = vmatpush1.xpose.msra.mxu0 0.0
        %5254 = vmatprep.subr.mxu0 0.0
        %5255 = vmatpush1.xpose.msra.mxu0 0.0
        %5256 = vmatprep.subr.mxu0 0.0
        %5257 = vmatpush1.xpose.msra.mxu0 0.0
        %5258 = vmatprep.subr.mxu0 0.0
        %5259 = vmatpush1.xpose.msra.mxu0 0.0
        %5260 = vmatprep.subr.mxu0 0.0
        %5261 = vmatpush1.xpose.msra.mxu0 0.0
        %5262 = vmatprep.subr.mxu0 0.0
        %5263 = vmatpush1.xpose.msra.mxu0 0.0
        %5264 = vmatprep.subr.mxu0 0.0
        %5265 = vmatpush1.xpose.msra.mxu0 0.0
        %5266 = vmatprep.subr.mxu0 0.0
        %5267 = vmatpush1.xpose.msra.mxu0 0.0
        %5268 = vmatprep.subr.mxu0 0.0
        %5269 = vmatpush1.xpose.msra.mxu0 0.0
        %5270 = vmatprep.subr.mxu0 0.0
        %5271 = vmatpush1.xpose.msra.mxu0 0.0
        %5272 = vmatprep.subr.mxu0 0.0
        %5273 = vmatpush1.xpose.msra.mxu0 0.0
        %5274 = vmatprep.subr.mxu0 0.0
        %5275 = vmatpush1.xpose.msra.mxu0 0.0
        %5276 = vmatprep.subr.mxu0 0.0
        %5277 = vmatpush1.xpose.msra.mxu0 0.0
        %5278 = vmatprep.subr.mxu0 0.0
        %5279 = vmatpush1.xpose.msra.mxu0 0.0
        %5280 = vmatprep.subr.mxu0 0.0
        %5281 = vmatpush1.xpose.msra.mxu0 0.0
        %5282 = vmatprep.subr.mxu0 0.0
        %5283 = vmatpush1.xpose.msra.mxu0 0.0
        %5284 = vmatprep.subr.mxu0 0.0
        %5285 = vmatpush1.xpose.msra.mxu0 0.0
        %5286 = vmatprep.subr.mxu0 0.0
        %5287 = vmatpush1.xpose.msra.mxu0 0.0
        %5288 = vmatprep.subr.mxu0 0.0
        %5289 = vmatpush1.xpose.msra.mxu0 0.0
        %5290 = vmatprep.subr.mxu0 0.0
        %5291 = vmatpush1.xpose.msra.mxu0 0.0
        %5292 = vmatprep.subr.mxu0 0.0
        %5293 = vmatpush1.xpose.msra.mxu0 0.0
        %5294 = vmatprep.subr.mxu0 0.0
        %5295 = vmatpush1.xpose.msra.mxu0 0.0
        %5296 = vmatprep.subr.mxu0 0.0
        %5297 = vmatpush1.xpose.msra.mxu0 0.0
        %5298 = vmatprep.subr.mxu0 0.0
        %5299 = vmatpush1.xpose.msra.mxu0 0.0
        %5300 = vmatprep.subr.mxu0 0.0
        %5301 = vmatpush1.xpose.msra.mxu0 0.0
        %5302 = vmatprep.subr.mxu0 0.0
        %5303 = vmatpush1.xpose.msra.mxu0 0.0
        %5304 = vmatprep.subr.mxu0 0.0
        %5305 = vmatpush1.xpose.msra.mxu0 0.0
        %5306 = vmatprep.subr.mxu0 0.0
        %5307 = vmatpush1.xpose.msra.mxu0 0.0
        %5308 = vmatprep.subr.mxu0 0.0
        %5309 = vmatpush1.xpose.msra.mxu0 0.0
        %5310 = vmatprep.mubr.f32.mxu0 0.0
        %5311 = vmatmul.mubr.f32.gmra.mrb[0].mxu0 %v5241
        %v5312 = vpop.f32.mrb[0].mxu0
        %v5313 = vadd.f32 0.0, %v5312
        %v5314 = vpop.f32.mrb[0].mxu0
        %5315 = vdwg.mxu0
        %v5317 = vsel %vm3497, %v4988, 0
        %v5320 = vsel %vm3497, %v4902, 0
        %5322 = vmatprep.subr.mxu0 0.0
        %5323 = vmatpush1.xpose.msra.mxu0 %v5320
        %5324 = vmatprep.subr.mxu0 0.0
        %5325 = vmatpush1.xpose.msra.mxu0 0.0
        %5326 = vmatprep.subr.mxu0 0.0
        %5327 = vmatpush1.xpose.msra.mxu0 0.0
        %5328 = vmatprep.subr.mxu0 0.0
        %5329 = vmatpush1.xpose.msra.mxu0 0.0
        %5330 = vmatprep.subr.mxu0 0.0
        %5331 = vmatpush1.xpose.msra.mxu0 0.0
        %5332 = vmatprep.subr.mxu0 0.0
        %5333 = vmatpush1.xpose.msra.mxu0 0.0
        %5334 = vmatprep.subr.mxu0 0.0
        %5335 = vmatpush1.xpose.msra.mxu0 0.0
        %5336 = vmatprep.subr.mxu0 0.0
        %5337 = vmatpush1.xpose.msra.mxu0 0.0
        %5338 = vmatprep.subr.mxu0 0.0
        %5339 = vmatpush1.xpose.msra.mxu0 0.0
        %5340 = vmatprep.subr.mxu0 0.0
        %5341 = vmatpush1.xpose.msra.mxu0 0.0
        %5342 = vmatprep.subr.mxu0 0.0
        %5343 = vmatpush1.xpose.msra.mxu0 0.0
        %5344 = vmatprep.subr.mxu0 0.0
        %5345 = vmatpush1.xpose.msra.mxu0 0.0
        %5346 = vmatprep.subr.mxu0 0.0
        %5347 = vmatpush1.xpose.msra.mxu0 0.0
        %5348 = vmatprep.subr.mxu0 0.0
        %5349 = vmatpush1.xpose.msra.mxu0 0.0
        %5350 = vmatprep.subr.mxu0 0.0
        %5351 = vmatpush1.xpose.msra.mxu0 0.0
        %5352 = vmatprep.subr.mxu0 0.0
        %5353 = vmatpush1.xpose.msra.mxu0 0.0
        %5354 = vmatprep.subr.mxu0 0.0
        %5355 = vmatpush1.xpose.msra.mxu0 0.0
        %5356 = vmatprep.subr.mxu0 0.0
        %5357 = vmatpush1.xpose.msra.mxu0 0.0
        %5358 = vmatprep.subr.mxu0 0.0
        %5359 = vmatpush1.xpose.msra.mxu0 0.0
        %5360 = vmatprep.subr.mxu0 0.0
        %5361 = vmatpush1.xpose.msra.mxu0 0.0
        %5362 = vmatprep.subr.mxu0 0.0
        %5363 = vmatpush1.xpose.msra.mxu0 0.0
        %5364 = vmatprep.subr.mxu0 0.0
        %5365 = vmatpush1.xpose.msra.mxu0 0.0
        %5366 = vmatprep.subr.mxu0 0.0
        %5367 = vmatpush1.xpose.msra.mxu0 0.0
        %5368 = vmatprep.subr.mxu0 0.0
        %5369 = vmatpush1.xpose.msra.mxu0 0.0
        %5370 = vmatprep.subr.mxu0 0.0
        %5371 = vmatpush1.xpose.msra.mxu0 0.0
        %5372 = vmatprep.subr.mxu0 0.0
        %5373 = vmatpush1.xpose.msra.mxu0 0.0
        %5374 = vmatprep.subr.mxu0 0.0
        %5375 = vmatpush1.xpose.msra.mxu0 0.0
        %5376 = vmatprep.subr.mxu0 0.0
        %5377 = vmatpush1.xpose.msra.mxu0 0.0
        %5378 = vmatprep.subr.mxu0 0.0
        %5379 = vmatpush1.xpose.msra.mxu0 0.0
        %5380 = vmatprep.subr.mxu0 0.0
        %5381 = vmatpush1.xpose.msra.mxu0 0.0
        %5382 = vmatprep.subr.mxu0 0.0
        %5383 = vmatpush1.xpose.msra.mxu0 0.0
        %5384 = vmatprep.subr.mxu0 0.0
        %5385 = vmatpush1.xpose.msra.mxu0 0.0
        %5386 = vmatprep.mubr.f32.mxu0 0.0
        %5387 = vmatmul.mubr.f32.gmra.mrb[0].mxu0 %v5317
        %v5388 = vpop.f32.mrb[0].mxu0
        %v5389 = vadd.f32 0.0, %v5388
        %v5390 = vpop.f32.mrb[0].mxu0
        %5391 = vdwg.mxu0
        %v5393 = vsel %vm3497, %v5020, 0
        %v5396 = vsel %vm3497, %v4903, 0
        %5398 = vmatprep.subr.mxu0 0.0
        %5399 = vmatpush1.xpose.msra.mxu0 %v5396
        %5400 = vmatprep.subr.mxu0 0.0
        %5401 = vmatpush1.xpose.msra.mxu0 0.0
        %5402 = vmatprep.subr.mxu0 0.0
        %5403 = vmatpush1.xpose.msra.mxu0 0.0
        %5404 = vmatprep.subr.mxu0 0.0
        %5405 = vmatpush1.xpose.msra.mxu0 0.0
        %5406 = vmatprep.subr.mxu0 0.0
        %5407 = vmatpush1.xpose.msra.mxu0 0.0
        %5408 = vmatprep.subr.mxu0 0.0
        %5409 = vmatpush1.xpose.msra.mxu0 0.0
        %5410 = vmatprep.subr.mxu0 0.0
        %5411 = vmatpush1.xpose.msra.mxu0 0.0
        %5412 = vmatprep.subr.mxu0 0.0
        %5413 = vmatpush1.xpose.msra.mxu0 0.0
        %5414 = vmatprep.subr.mxu0 0.0
        %5415 = vmatpush1.xpose.msra.mxu0 0.0
        %5416 = vmatprep.subr.mxu0 0.0
        %5417 = vmatpush1.xpose.msra.mxu0 0.0
        %5418 = vmatprep.subr.mxu0 0.0
        %5419 = vmatpush1.xpose.msra.mxu0 0.0
        %5420 = vmatprep.subr.mxu0 0.0
        %5421 = vmatpush1.xpose.msra.mxu0 0.0
        %5422 = vmatprep.subr.mxu0 0.0
        %5423 = vmatpush1.xpose.msra.mxu0 0.0
        %5424 = vmatprep.subr.mxu0 0.0
        %5425 = vmatpush1.xpose.msra.mxu0 0.0
        %5426 = vmatprep.subr.mxu0 0.0
        %5427 = vmatpush1.xpose.msra.mxu0 0.0
        %5428 = vmatprep.subr.mxu0 0.0
        %5429 = vmatpush1.xpose.msra.mxu0 0.0
        %5430 = vmatprep.subr.mxu0 0.0
        %5431 = vmatpush1.xpose.msra.mxu0 0.0
        %5432 = vmatprep.subr.mxu0 0.0
        %5433 = vmatpush1.xpose.msra.mxu0 0.0
        %5434 = vmatprep.subr.mxu0 0.0
        %5435 = vmatpush1.xpose.msra.mxu0 0.0
        %5436 = vmatprep.subr.mxu0 0.0
        %5437 = vmatpush1.xpose.msra.mxu0 0.0
        %5438 = vmatprep.subr.mxu0 0.0
        %5439 = vmatpush1.xpose.msra.mxu0 0.0
        %5440 = vmatprep.subr.mxu0 0.0
        %5441 = vmatpush1.xpose.msra.mxu0 0.0
        %5442 = vmatprep.subr.mxu0 0.0
        %5443 = vmatpush1.xpose.msra.mxu0 0.0
        %5444 = vmatprep.subr.mxu0 0.0
        %5445 = vmatpush1.xpose.msra.mxu0 0.0
        %5446 = vmatprep.subr.mxu0 0.0
        %5447 = vmatpush1.xpose.msra.mxu0 0.0
        %5448 = vmatprep.subr.mxu0 0.0
        %5449 = vmatpush1.xpose.msra.mxu0 0.0
        %5450 = vmatprep.subr.mxu0 0.0
        %5451 = vmatpush1.xpose.msra.mxu0 0.0
        %5452 = vmatprep.subr.mxu0 0.0
        %5453 = vmatpush1.xpose.msra.mxu0 0.0
        %5454 = vmatprep.subr.mxu0 0.0
        %5455 = vmatpush1.xpose.msra.mxu0 0.0
        %5456 = vmatprep.subr.mxu0 0.0
        %5457 = vmatpush1.xpose.msra.mxu0 0.0
        %5458 = vmatprep.subr.mxu0 0.0
        %5459 = vmatpush1.xpose.msra.mxu0 0.0
        %5460 = vmatprep.subr.mxu0 0.0
        %5461 = vmatpush1.xpose.msra.mxu0 0.0
        %5462 = vmatprep.mubr.f32.mxu0 0.0
        %5463 = vmatmul.mubr.f32.gmra.mrb[0].mxu0 %v5393
        %v5464 = vpop.f32.mrb[0].mxu0
        %v5465 = vadd.f32 0.0, %v5464
        %v5466 = vpop.f32.mrb[0].mxu0
        %5467 = vdwg.mxu0
        %v5469 = vsel %vm3497, %v5052, 0
        %v5472 = vsel %vm3497, %v4904, 0
        %5474 = vmatprep.subr.mxu0 0.0
        %5475 = vmatpush1.xpose.msra.mxu0 %v5472
        %5476 = vmatprep.subr.mxu0 0.0
        %5477 = vmatpush1.xpose.msra.mxu0 0.0
        %5478 = vmatprep.subr.mxu0 0.0
        %5479 = vmatpush1.xpose.msra.mxu0 0.0
        %5480 = vmatprep.subr.mxu0 0.0
        %5481 = vmatpush1.xpose.msra.mxu0 0.0
        %5482 = vmatprep.subr.mxu0 0.0
        %5483 = vmatpush1.xpose.msra.mxu0 0.0
        %5484 = vmatprep.subr.mxu0 0.0
        %5485 = vmatpush1.xpose.msra.mxu0 0.0
        %5486 = vmatprep.subr.mxu0 0.0
        %5487 = vmatpush1.xpose.msra.mxu0 0.0
        %5488 = vmatprep.subr.mxu0 0.0
        %5489 = vmatpush1.xpose.msra.mxu0 0.0
        %5490 = vmatprep.subr.mxu0 0.0
        %5491 = vmatpush1.xpose.msra.mxu0 0.0
        %5492 = vmatprep.subr.mxu0 0.0
        %5493 = vmatpush1.xpose.msra.mxu0 0.0
        %5494 = vmatprep.subr.mxu0 0.0
        %5495 = vmatpush1.xpose.msra.mxu0 0.0
        %5496 = vmatprep.subr.mxu0 0.0
        %5497 = vmatpush1.xpose.msra.mxu0 0.0
        %5498 = vmatprep.subr.mxu0 0.0
        %5499 = vmatpush1.xpose.msra.mxu0 0.0
        %5500 = vmatprep.subr.mxu0 0.0
        %5501 = vmatpush1.xpose.msra.mxu0 0.0
        %5502 = vmatprep.subr.mxu0 0.0
        %5503 = vmatpush1.xpose.msra.mxu0 0.0
        %5504 = vmatprep.subr.mxu0 0.0
        %5505 = vmatpush1.xpose.msra.mxu0 0.0
        %5506 = vmatprep.subr.mxu0 0.0
        %5507 = vmatpush1.xpose.msra.mxu0 0.0
        %5508 = vmatprep.subr.mxu0 0.0
        %5509 = vmatpush1.xpose.msra.mxu0 0.0
        %5510 = vmatprep.subr.mxu0 0.0
        %5511 = vmatpush1.xpose.msra.mxu0 0.0
        %5512 = vmatprep.subr.mxu0 0.0
        %5513 = vmatpush1.xpose.msra.mxu0 0.0
        %5514 = vmatprep.subr.mxu0 0.0
        %5515 = vmatpush1.xpose.msra.mxu0 0.0
        %5516 = vmatprep.subr.mxu0 0.0
        %5517 = vmatpush1.xpose.msra.mxu0 0.0
        %5518 = vmatprep.subr.mxu0 0.0
        %5519 = vmatpush1.xpose.msra.mxu0 0.0
        %5520 = vmatprep.subr.mxu0 0.0
        %5521 = vmatpush1.xpose.msra.mxu0 0.0
        %5522 = vmatprep.subr.mxu0 0.0
        %5523 = vmatpush1.xpose.msra.mxu0 0.0
        %5524 = vmatprep.subr.mxu0 0.0
        %5525 = vmatpush1.xpose.msra.mxu0 0.0
        %5526 = vmatprep.subr.mxu0 0.0
        %5527 = vmatpush1.xpose.msra.mxu0 0.0
        %5528 = vmatprep.subr.mxu0 0.0
        %5529 = vmatpush1.xpose.msra.mxu0 0.0
        %5530 = vmatprep.subr.mxu0 0.0
        %5531 = vmatpush1.xpose.msra.mxu0 0.0
        %5532 = vmatprep.subr.mxu0 0.0
        %5533 = vmatpush1.xpose.msra.mxu0 0.0
        %5534 = vmatprep.subr.mxu0 0.0
        %5535 = vmatpush1.xpose.msra.mxu0 0.0
        %5536 = vmatprep.subr.mxu0 0.0
        %5537 = vmatpush1.xpose.msra.mxu0 0.0
        %5538 = vmatprep.mubr.f32.mxu0 0.0
        %5539 = vmatmul.mubr.f32.gmra.mrb[0].mxu0 %v5469
        %v5540 = vpop.f32.mrb[0].mxu0
        %v5541 = vadd.f32 0.0, %v5540
        %v5542 = vpop.f32.mrb[0].mxu0
        %5543 = vdwg.mxu0
        %v5545 = vsel %vm3497, %v5084, 0
        %v5548 = vsel %vm3497, %v4905, 0
        %5550 = vmatprep.subr.mxu0 0.0
        %5551 = vmatpush1.xpose.msra.mxu0 %v5548
        %5552 = vmatprep.subr.mxu0 0.0
        %5553 = vmatpush1.xpose.msra.mxu0 0.0
        %5554 = vmatprep.subr.mxu0 0.0
        %5555 = vmatpush1.xpose.msra.mxu0 0.0
        %5556 = vmatprep.subr.mxu0 0.0
        %5557 = vmatpush1.xpose.msra.mxu0 0.0
        %5558 = vmatprep.subr.mxu0 0.0
        %5559 = vmatpush1.xpose.msra.mxu0 0.0
        %5560 = vmatprep.subr.mxu0 0.0
        %5561 = vmatpush1.xpose.msra.mxu0 0.0
        %5562 = vmatprep.subr.mxu0 0.0
        %5563 = vmatpush1.xpose.msra.mxu0 0.0
        %5564 = vmatprep.subr.mxu0 0.0
        %5565 = vmatpush1.xpose.msra.mxu0 0.0
        %5566 = vmatprep.subr.mxu0 0.0
        %5567 = vmatpush1.xpose.msra.mxu0 0.0
        %5568 = vmatprep.subr.mxu0 0.0
        %5569 = vmatpush1.xpose.msra.mxu0 0.0
        %5570 = vmatprep.subr.mxu0 0.0
        %5571 = vmatpush1.xpose.msra.mxu0 0.0
        %5572 = vmatprep.subr.mxu0 0.0
        %5573 = vmatpush1.xpose.msra.mxu0 0.0
        %5574 = vmatprep.subr.mxu0 0.0
        %5575 = vmatpush1.xpose.msra.mxu0 0.0
        %5576 = vmatprep.subr.mxu0 0.0
        %5577 = vmatpush1.xpose.msra.mxu0 0.0
        %5578 = vmatprep.subr.mxu0 0.0
        %5579 = vmatpush1.xpose.msra.mxu0 0.0
        %5580 = vmatprep.subr.mxu0 0.0
        %5581 = vmatpush1.xpose.msra.mxu0 0.0
        %5582 = vmatprep.subr.mxu0 0.0
        %5583 = vmatpush1.xpose.msra.mxu0 0.0
        %5584 = vmatprep.subr.mxu0 0.0
        %5585 = vmatpush1.xpose.msra.mxu0 0.0
        %5586 = vmatprep.subr.mxu0 0.0
        %5587 = vmatpush1.xpose.msra.mxu0 0.0
        %5588 = vmatprep.subr.mxu0 0.0
        %5589 = vmatpush1.xpose.msra.mxu0 0.0
        %5590 = vmatprep.subr.mxu0 0.0
        %5591 = vmatpush1.xpose.msra.mxu0 0.0
        %5592 = vmatprep.subr.mxu0 0.0
        %5593 = vmatpush1.xpose.msra.mxu0 0.0
        %5594 = vmatprep.subr.mxu0 0.0
        %5595 = vmatpush1.xpose.msra.mxu0 0.0
        %5596 = vmatprep.subr.mxu0 0.0
        %5597 = vmatpush1.xpose.msra.mxu0 0.0
        %5598 = vmatprep.subr.mxu0 0.0
        %5599 = vmatpush1.xpose.msra.mxu0 0.0
        %5600 = vmatprep.subr.mxu0 0.0
        %5601 = vmatpush1.xpose.msra.mxu0 0.0
        %5602 = vmatprep.subr.mxu0 0.0
        %5603 = vmatpush1.xpose.msra.mxu0 0.0
        %5604 = vmatprep.subr.mxu0 0.0
        %5605 = vmatpush1.xpose.msra.mxu0 0.0
        %5606 = vmatprep.subr.mxu0 0.0
        %5607 = vmatpush1.xpose.msra.mxu0 0.0
        %5608 = vmatprep.subr.mxu0 0.0
        %5609 = vmatpush1.xpose.msra.mxu0 0.0
        %5610 = vmatprep.subr.mxu0 0.0
        %5611 = vmatpush1.xpose.msra.mxu0 0.0
        %5612 = vmatprep.subr.mxu0 0.0
        %5613 = vmatpush1.xpose.msra.mxu0 0.0
        %5614 = vmatprep.mubr.f32.mxu0 0.0
        %5615 = vmatmul.mubr.f32.gmra.mrb[0].mxu0 %v5545
        %v5616 = vpop.f32.mrb[0].mxu0
        %v5617 = vadd.f32 0.0, %v5616
        %v5618 = vpop.f32.mrb[0].mxu0
        %5619 = vdwg.mxu0
        %v5621 = vsel %vm3497, %v5116, 0
        %v5624 = vsel %vm3497, %v4906, 0
        %5626 = vmatprep.subr.mxu0 0.0
        %5627 = vmatpush1.xpose.msra.mxu0 %v5624
        %5628 = vmatprep.subr.mxu0 0.0
        %5629 = vmatpush1.xpose.msra.mxu0 0.0
        %5630 = vmatprep.subr.mxu0 0.0
        %5631 = vmatpush1.xpose.msra.mxu0 0.0
        %5632 = vmatprep.subr.mxu0 0.0
        %5633 = vmatpush1.xpose.msra.mxu0 0.0
        %5634 = vmatprep.subr.mxu0 0.0
        %5635 = vmatpush1.xpose.msra.mxu0 0.0
        %5636 = vmatprep.subr.mxu0 0.0
        %5637 = vmatpush1.xpose.msra.mxu0 0.0
        %5638 = vmatprep.subr.mxu0 0.0
        %5639 = vmatpush1.xpose.msra.mxu0 0.0
        %5640 = vmatprep.subr.mxu0 0.0
        %5641 = vmatpush1.xpose.msra.mxu0 0.0
        %5642 = vmatprep.subr.mxu0 0.0
        %5643 = vmatpush1.xpose.msra.mxu0 0.0
        %5644 = vmatprep.subr.mxu0 0.0
        %5645 = vmatpush1.xpose.msra.mxu0 0.0
        %5646 = vmatprep.subr.mxu0 0.0
        %5647 = vmatpush1.xpose.msra.mxu0 0.0
        %5648 = vmatprep.subr.mxu0 0.0
        %5649 = vmatpush1.xpose.msra.mxu0 0.0
        %5650 = vmatprep.subr.mxu0 0.0
        %5651 = vmatpush1.xpose.msra.mxu0 0.0
        %5652 = vmatprep.subr.mxu0 0.0
        %5653 = vmatpush1.xpose.msra.mxu0 0.0
        %5654 = vmatprep.subr.mxu0 0.0
        %5655 = vmatpush1.xpose.msra.mxu0 0.0
        %5656 = vmatprep.subr.mxu0 0.0
        %5657 = vmatpush1.xpose.msra.mxu0 0.0
        %5658 = vmatprep.subr.mxu0 0.0
        %5659 = vmatpush1.xpose.msra.mxu0 0.0
        %5660 = vmatprep.subr.mxu0 0.0
        %5661 = vmatpush1.xpose.msra.mxu0 0.0
        %5662 = vmatprep.subr.mxu0 0.0
        %5663 = vmatpush1.xpose.msra.mxu0 0.0
        %5664 = vmatprep.subr.mxu0 0.0
        %5665 = vmatpush1.xpose.msra.mxu0 0.0
        %5666 = vmatprep.subr.mxu0 0.0
        %5667 = vmatpush1.xpose.msra.mxu0 0.0
        %5668 = vmatprep.subr.mxu0 0.0
        %5669 = vmatpush1.xpose.msra.mxu0 0.0
        %5670 = vmatprep.subr.mxu0 0.0
        %5671 = vmatpush1.xpose.msra.mxu0 0.0
        %5672 = vmatprep.subr.mxu0 0.0
        %5673 = vmatpush1.xpose.msra.mxu0 0.0
        %5674 = vmatprep.subr.mxu0 0.0
        %5675 = vmatpush1.xpose.msra.mxu0 0.0
        %5676 = vmatprep.subr.mxu0 0.0
        %5677 = vmatpush1.xpose.msra.mxu0 0.0
        %5678 = vmatprep.subr.mxu0 0.0
        %5679 = vmatpush1.xpose.msra.mxu0 0.0
        %5680 = vmatprep.subr.mxu0 0.0
        %5681 = vmatpush1.xpose.msra.mxu0 0.0
        %5682 = vmatprep.subr.mxu0 0.0
        %5683 = vmatpush1.xpose.msra.mxu0 0.0
        %5684 = vmatprep.subr.mxu0 0.0
        %5685 = vmatpush1.xpose.msra.mxu0 0.0
        %5686 = vmatprep.subr.mxu0 0.0
        %5687 = vmatpush1.xpose.msra.mxu0 0.0
        %5688 = vmatprep.subr.mxu0 0.0
        %5689 = vmatpush1.xpose.msra.mxu0 0.0
        %5690 = vmatprep.mubr.f32.mxu0 0.0
        %5691 = vmatmul.mubr.f32.gmra.mrb[0].mxu0 %v5621
        %v5692 = vpop.f32.mrb[0].mxu0
        %v5693 = vadd.f32 0.0, %v5692
        %v5694 = vpop.f32.mrb[0].mxu0
        %5695 = vdwg.mxu0
        %v5697 = vsel %vm3497, %v5148, 0
        %v5700 = vsel %vm3497, %v4907, 0
        %5702 = vmatprep.subr.mxu0 0.0
        %5703 = vmatpush1.xpose.msra.mxu0 %v5700
        %5704 = vmatprep.subr.mxu0 0.0
        %5705 = vmatpush1.xpose.msra.mxu0 0.0
        %5706 = vmatprep.subr.mxu0 0.0
        %5707 = vmatpush1.xpose.msra.mxu0 0.0
        %5708 = vmatprep.subr.mxu0 0.0
        %5709 = vmatpush1.xpose.msra.mxu0 0.0
        %5710 = vmatprep.subr.mxu0 0.0
        %5711 = vmatpush1.xpose.msra.mxu0 0.0
        %5712 = vmatprep.subr.mxu0 0.0
        %5713 = vmatpush1.xpose.msra.mxu0 0.0
        %5714 = vmatprep.subr.mxu0 0.0
        %5715 = vmatpush1.xpose.msra.mxu0 0.0
        %5716 = vmatprep.subr.mxu0 0.0
        %5717 = vmatpush1.xpose.msra.mxu0 0.0
        %5718 = vmatprep.subr.mxu0 0.0
        %5719 = vmatpush1.xpose.msra.mxu0 0.0
        %5720 = vmatprep.subr.mxu0 0.0
        %5721 = vmatpush1.xpose.msra.mxu0 0.0
        %5722 = vmatprep.subr.mxu0 0.0
        %5723 = vmatpush1.xpose.msra.mxu0 0.0
        %5724 = vmatprep.subr.mxu0 0.0
        %5725 = vmatpush1.xpose.msra.mxu0 0.0
        %5726 = vmatprep.subr.mxu0 0.0
        %5727 = vmatpush1.xpose.msra.mxu0 0.0
        %5728 = vmatprep.subr.mxu0 0.0
        %5729 = vmatpush1.xpose.msra.mxu0 0.0
        %5730 = vmatprep.subr.mxu0 0.0
        %5731 = vmatpush1.xpose.msra.mxu0 0.0
        %5732 = vmatprep.subr.mxu0 0.0
        %5733 = vmatpush1.xpose.msra.mxu0 0.0
        %5734 = vmatprep.subr.mxu0 0.0
        %5735 = vmatpush1.xpose.msra.mxu0 0.0
        %5736 = vmatprep.subr.mxu0 0.0
        %5737 = vmatpush1.xpose.msra.mxu0 0.0
        %5738 = vmatprep.subr.mxu0 0.0
        %5739 = vmatpush1.xpose.msra.mxu0 0.0
        %5740 = vmatprep.subr.mxu0 0.0
        %5741 = vmatpush1.xpose.msra.mxu0 0.0
        %5742 = vmatprep.subr.mxu0 0.0
        %5743 = vmatpush1.xpose.msra.mxu0 0.0
        %5744 = vmatprep.subr.mxu0 0.0
        %5745 = vmatpush1.xpose.msra.mxu0 0.0
        %5746 = vmatprep.subr.mxu0 0.0
        %5747 = vmatpush1.xpose.msra.mxu0 0.0
        %5748 = vmatprep.subr.mxu0 0.0
        %5749 = vmatpush1.xpose.msra.mxu0 0.0
        %5750 = vmatprep.subr.mxu0 0.0
        %5751 = vmatpush1.xpose.msra.mxu0 0.0
        %5752 = vmatprep.subr.mxu0 0.0
        %5753 = vmatpush1.xpose.msra.mxu0 0.0
        %5754 = vmatprep.subr.mxu0 0.0
        %5755 = vmatpush1.xpose.msra.mxu0 0.0
        %5756 = vmatprep.subr.mxu0 0.0
        %5757 = vmatpush1.xpose.msra.mxu0 0.0
        %5758 = vmatprep.subr.mxu0 0.0
        %5759 = vmatpush1.xpose.msra.mxu0 0.0
        %5760 = vmatprep.subr.mxu0 0.0
        %5761 = vmatpush1.xpose.msra.mxu0 0.0
        %5762 = vmatprep.subr.mxu0 0.0
        %5763 = vmatpush1.xpose.msra.mxu0 0.0
        %5764 = vmatprep.subr.mxu0 0.0
        %5765 = vmatpush1.xpose.msra.mxu0 0.0
        %5766 = vmatprep.mubr.f32.mxu0 0.0
        %5767 = vmatmul.mubr.f32.gmra.mrb[0].mxu0 %v5697
        %v5768 = vpop.f32.mrb[0].mxu0
        %v5769 = vadd.f32 0.0, %v5768
        %v5770 = vpop.f32.mrb[0].mxu0
        %5771 = vdwg.mxu0
        %5772 = vxpose.xlu0.b32.start [1/16] %v5237, 128
        %5773 = vxpose.xlu0.b32.cont [2/16] 0.0, 128
        %5774 = vxpose.xlu0.b32.cont [3/16] 0.0, 128
        %5775 = vxpose.xlu0.b32.cont [4/16] 0.0, 128
        %5776 = vxpose.xlu0.b32.cont [5/16] 0.0, 128
        %5777 = vxpose.xlu0.b32.cont [6/16] 0.0, 128
        %5778 = vxpose.xlu0.b32.cont [7/16] 0.0, 128
        %5779 = vxpose.xlu0.b32.cont [8/16] 0.0, 128
        %5780 = vxpose.xlu0.b32.cont [9/16] 0.0, 128
        %5781 = vxpose.xlu0.b32.cont [10/16] 0.0, 128
        %5782 = vxpose.xlu0.b32.cont [11/16] 0.0, 128
        %5783 = vxpose.xlu0.b32.cont [12/16] 0.0, 128
        %5784 = vxpose.xlu0.b32.cont [13/16] 0.0, 128
        %5785 = vxpose.xlu0.b32.cont [14/16] 0.0, 128
        %5786 = vxpose.xlu0.b32.cont [15/16] 0.0, 128
        %5787 = vxpose.xlu0.b32.end [16/16] 0.0, 128
        %v5788 = vpop.trf.xlu0
        %v5789 = vpop.trf.xlu0
        %v5790 = vpop.trf.xlu0
        %v5791 = vpop.trf.xlu0
        %v5792 = vpop.trf.xlu0
        %v5793 = vpop.trf.xlu0
        %v5794 = vpop.trf.xlu0
        %v5795 = vpop.trf.xlu0
        %v5796 = vpop.trf.xlu0
        %v5797 = vpop.trf.xlu0
        %v5798 = vpop.trf.xlu0
        %v5799 = vpop.trf.xlu0
        %v5800 = vpop.trf.xlu0
        %v5801 = vpop.trf.xlu0
        %v5802 = vpop.trf.xlu0
        %v5803 = vpop.trf.xlu0
        %5804 = vxpose.xlu0.b32.start [1/16] %v5313, 128
        %5805 = vxpose.xlu0.b32.cont [2/16] 0.0, 128
        %5806 = vxpose.xlu0.b32.cont [3/16] 0.0, 128
        %5807 = vxpose.xlu0.b32.cont [4/16] 0.0, 128
        %5808 = vxpose.xlu0.b32.cont [5/16] 0.0, 128
        %5809 = vxpose.xlu0.b32.cont [6/16] 0.0, 128
        %5810 = vxpose.xlu0.b32.cont [7/16] 0.0, 128
        %5811 = vxpose.xlu0.b32.cont [8/16] 0.0, 128
        %5812 = vxpose.xlu0.b32.cont [9/16] 0.0, 128
        %5813 = vxpose.xlu0.b32.cont [10/16] 0.0, 128
        %5814 = vxpose.xlu0.b32.cont [11/16] 0.0, 128
        %5815 = vxpose.xlu0.b32.cont [12/16] 0.0, 128
        %5816 = vxpose.xlu0.b32.cont [13/16] 0.0, 128
        %5817 = vxpose.xlu0.b32.cont [14/16] 0.0, 128
        %5818 = vxpose.xlu0.b32.cont [15/16] 0.0, 128
        %5819 = vxpose.xlu0.b32.end [16/16] 0.0, 128
        %v5820 = vpop.trf.xlu0
        %v5821 = vpop.trf.xlu0
        %v5822 = vpop.trf.xlu0
        %v5823 = vpop.trf.xlu0
        %v5824 = vpop.trf.xlu0
        %v5825 = vpop.trf.xlu0
        %v5826 = vpop.trf.xlu0
        %v5827 = vpop.trf.xlu0
        %v5828 = vpop.trf.xlu0
        %v5829 = vpop.trf.xlu0
        %v5830 = vpop.trf.xlu0
        %v5831 = vpop.trf.xlu0
        %v5832 = vpop.trf.xlu0
        %v5833 = vpop.trf.xlu0
        %v5834 = vpop.trf.xlu0
        %v5835 = vpop.trf.xlu0
        %5836 = vxpose.xlu0.b32.start [1/16] %v5389, 128
        %5837 = vxpose.xlu0.b32.cont [2/16] 0.0, 128
        %5838 = vxpose.xlu0.b32.cont [3/16] 0.0, 128
        %5839 = vxpose.xlu0.b32.cont [4/16] 0.0, 128
        %5840 = vxpose.xlu0.b32.cont [5/16] 0.0, 128
        %5841 = vxpose.xlu0.b32.cont [6/16] 0.0, 128
        %5842 = vxpose.xlu0.b32.cont [7/16] 0.0, 128
        %5843 = vxpose.xlu0.b32.cont [8/16] 0.0, 128
        %5844 = vxpose.xlu0.b32.cont [9/16] 0.0, 128
        %5845 = vxpose.xlu0.b32.cont [10/16] 0.0, 128
        %5846 = vxpose.xlu0.b32.cont [11/16] 0.0, 128
        %5847 = vxpose.xlu0.b32.cont [12/16] 0.0, 128
        %5848 = vxpose.xlu0.b32.cont [13/16] 0.0, 128
        %5849 = vxpose.xlu0.b32.cont [14/16] 0.0, 128
        %5850 = vxpose.xlu0.b32.cont [15/16] 0.0, 128
        %5851 = vxpose.xlu0.b32.end [16/16] 0.0, 128
        %v5852 = vpop.trf.xlu0
        %v5853 = vpop.trf.xlu0
        %v5854 = vpop.trf.xlu0
        %v5855 = vpop.trf.xlu0
        %v5856 = vpop.trf.xlu0
        %v5857 = vpop.trf.xlu0
        %v5858 = vpop.trf.xlu0
        %v5859 = vpop.trf.xlu0
        %v5860 = vpop.trf.xlu0
        %v5861 = vpop.trf.xlu0
        %v5862 = vpop.trf.xlu0
        %v5863 = vpop.trf.xlu0
        %v5864 = vpop.trf.xlu0
        %v5865 = vpop.trf.xlu0
        %v5866 = vpop.trf.xlu0
        %v5867 = vpop.trf.xlu0
        %5868 = vxpose.xlu0.b32.start [1/16] %v5465, 128
        %5869 = vxpose.xlu0.b32.cont [2/16] 0.0, 128
        %5870 = vxpose.xlu0.b32.cont [3/16] 0.0, 128
        %5871 = vxpose.xlu0.b32.cont [4/16] 0.0, 128
        %5872 = vxpose.xlu0.b32.cont [5/16] 0.0, 128
        %5873 = vxpose.xlu0.b32.cont [6/16] 0.0, 128
        %5874 = vxpose.xlu0.b32.cont [7/16] 0.0, 128
        %5875 = vxpose.xlu0.b32.cont [8/16] 0.0, 128
        %5876 = vxpose.xlu0.b32.cont [9/16] 0.0, 128
        %5877 = vxpose.xlu0.b32.cont [10/16] 0.0, 128
        %5878 = vxpose.xlu0.b32.cont [11/16] 0.0, 128
        %5879 = vxpose.xlu0.b32.cont [12/16] 0.0, 128
        %5880 = vxpose.xlu0.b32.cont [13/16] 0.0, 128
        %5881 = vxpose.xlu0.b32.cont [14/16] 0.0, 128
        %5882 = vxpose.xlu0.b32.cont [15/16] 0.0, 128
        %5883 = vxpose.xlu0.b32.end [16/16] 0.0, 128
        %v5884 = vpop.trf.xlu0
        %v5885 = vpop.trf.xlu0
        %v5886 = vpop.trf.xlu0
        %v5887 = vpop.trf.xlu0
        %v5888 = vpop.trf.xlu0
        %v5889 = vpop.trf.xlu0
        %v5890 = vpop.trf.xlu0
        %v5891 = vpop.trf.xlu0
        %v5892 = vpop.trf.xlu0
        %v5893 = vpop.trf.xlu0
        %v5894 = vpop.trf.xlu0
        %v5895 = vpop.trf.xlu0
        %v5896 = vpop.trf.xlu0
        %v5897 = vpop.trf.xlu0
        %v5898 = vpop.trf.xlu0
        %v5899 = vpop.trf.xlu0
        %5900 = vxpose.xlu0.b32.start [1/16] %v5541, 128
        %5901 = vxpose.xlu0.b32.cont [2/16] 0.0, 128
        %5902 = vxpose.xlu0.b32.cont [3/16] 0.0, 128
        %5903 = vxpose.xlu0.b32.cont [4/16] 0.0, 128
        %5904 = vxpose.xlu0.b32.cont [5/16] 0.0, 128
        %5905 = vxpose.xlu0.b32.cont [6/16] 0.0, 128
        %5906 = vxpose.xlu0.b32.cont [7/16] 0.0, 128
        %5907 = vxpose.xlu0.b32.cont [8/16] 0.0, 128
        %5908 = vxpose.xlu0.b32.cont [9/16] 0.0, 128
        %5909 = vxpose.xlu0.b32.cont [10/16] 0.0, 128
        %5910 = vxpose.xlu0.b32.cont [11/16] 0.0, 128
        %5911 = vxpose.xlu0.b32.cont [12/16] 0.0, 128
        %5912 = vxpose.xlu0.b32.cont [13/16] 0.0, 128
        %5913 = vxpose.xlu0.b32.cont [14/16] 0.0, 128
        %5914 = vxpose.xlu0.b32.cont [15/16] 0.0, 128
        %5915 = vxpose.xlu0.b32.end [16/16] 0.0, 128
        %v5916 = vpop.trf.xlu0
        %v5917 = vpop.trf.xlu0
        %v5918 = vpop.trf.xlu0
        %v5919 = vpop.trf.xlu0
        %v5920 = vpop.trf.xlu0
        %v5921 = vpop.trf.xlu0
        %v5922 = vpop.trf.xlu0
        %v5923 = vpop.trf.xlu0
        %v5924 = vpop.trf.xlu0
        %v5925 = vpop.trf.xlu0
        %v5926 = vpop.trf.xlu0
        %v5927 = vpop.trf.xlu0
        %v5928 = vpop.trf.xlu0
        %v5929 = vpop.trf.xlu0
        %v5930 = vpop.trf.xlu0
        %v5931 = vpop.trf.xlu0
        %5932 = vxpose.xlu0.b32.start [1/16] %v5617, 128
        %5933 = vxpose.xlu0.b32.cont [2/16] 0.0, 128
        %5934 = vxpose.xlu0.b32.cont [3/16] 0.0, 128
        %5935 = vxpose.xlu0.b32.cont [4/16] 0.0, 128
        %5936 = vxpose.xlu0.b32.cont [5/16] 0.0, 128
        %5937 = vxpose.xlu0.b32.cont [6/16] 0.0, 128
        %5938 = vxpose.xlu0.b32.cont [7/16] 0.0, 128
        %5939 = vxpose.xlu0.b32.cont [8/16] 0.0, 128
        %5940 = vxpose.xlu0.b32.cont [9/16] 0.0, 128
        %5941 = vxpose.xlu0.b32.cont [10/16] 0.0, 128
        %5942 = vxpose.xlu0.b32.cont [11/16] 0.0, 128
        %5943 = vxpose.xlu0.b32.cont [12/16] 0.0, 128
        %5944 = vxpose.xlu0.b32.cont [13/16] 0.0, 128
        %5945 = vxpose.xlu0.b32.cont [14/16] 0.0, 128
        %5946 = vxpose.xlu0.b32.cont [15/16] 0.0, 128
        %5947 = vxpose.xlu0.b32.end [16/16] 0.0, 128
        %v5948 = vpop.trf.xlu0
        %v5949 = vpop.trf.xlu0
        %v5950 = vpop.trf.xlu0
        %v5951 = vpop.trf.xlu0
        %v5952 = vpop.trf.xlu0
        %v5953 = vpop.trf.xlu0
        %v5954 = vpop.trf.xlu0
        %v5955 = vpop.trf.xlu0
        %v5956 = vpop.trf.xlu0
        %v5957 = vpop.trf.xlu0
        %v5958 = vpop.trf.xlu0
        %v5959 = vpop.trf.xlu0
        %v5960 = vpop.trf.xlu0
        %v5961 = vpop.trf.xlu0
        %v5962 = vpop.trf.xlu0
        %v5963 = vpop.trf.xlu0
        %5964 = vxpose.xlu0.b32.start [1/16] %v5693, 128
        %5965 = vxpose.xlu0.b32.cont [2/16] 0.0, 128
        %5966 = vxpose.xlu0.b32.cont [3/16] 0.0, 128
        %5967 = vxpose.xlu0.b32.cont [4/16] 0.0, 128
        %5968 = vxpose.xlu0.b32.cont [5/16] 0.0, 128
        %5969 = vxpose.xlu0.b32.cont [6/16] 0.0, 128
        %5970 = vxpose.xlu0.b32.cont [7/16] 0.0, 128
        %5971 = vxpose.xlu0.b32.cont [8/16] 0.0, 128
        %5972 = vxpose.xlu0.b32.cont [9/16] 0.0, 128
        %5973 = vxpose.xlu0.b32.cont [10/16] 0.0, 128
        %5974 = vxpose.xlu0.b32.cont [11/16] 0.0, 128
        %5975 = vxpose.xlu0.b32.cont [12/16] 0.0, 128
        %5976 = vxpose.xlu0.b32.cont [13/16] 0.0, 128
        %5977 = vxpose.xlu0.b32.cont [14/16] 0.0, 128
        %5978 = vxpose.xlu0.b32.cont [15/16] 0.0, 128
        %5979 = vxpose.xlu0.b32.end [16/16] 0.0, 128
        %v5980 = vpop.trf.xlu0
        %v5981 = vpop.trf.xlu0
        %v5982 = vpop.trf.xlu0
        %v5983 = vpop.trf.xlu0
        %v5984 = vpop.trf.xlu0
        %v5985 = vpop.trf.xlu0
        %v5986 = vpop.trf.xlu0
        %v5987 = vpop.trf.xlu0
        %v5988 = vpop.trf.xlu0
        %v5989 = vpop.trf.xlu0
        %v5990 = vpop.trf.xlu0
        %v5991 = vpop.trf.xlu0
        %v5992 = vpop.trf.xlu0
        %v5993 = vpop.trf.xlu0
        %v5994 = vpop.trf.xlu0
        %v5995 = vpop.trf.xlu0
        %5996 = vxpose.xlu0.b32.start [1/16] %v5769, 128
        %5997 = vxpose.xlu0.b32.cont [2/16] 0.0, 128
        %5998 = vxpose.xlu0.b32.cont [3/16] 0.0, 128
        %5999 = vxpose.xlu0.b32.cont [4/16] 0.0, 128
        %6000 = vxpose.xlu0.b32.cont [5/16] 0.0, 128
        %6001 = vxpose.xlu0.b32.cont [6/16] 0.0, 128
        %6002 = vxpose.xlu0.b32.cont [7/16] 0.0, 128
        %6003 = vxpose.xlu0.b32.cont [8/16] 0.0, 128
        %6004 = vxpose.xlu0.b32.cont [9/16] 0.0, 128
        %6005 = vxpose.xlu0.b32.cont [10/16] 0.0, 128
        %6006 = vxpose.xlu0.b32.cont [11/16] 0.0, 128
        %6007 = vxpose.xlu0.b32.cont [12/16] 0.0, 128
        %6008 = vxpose.xlu0.b32.cont [13/16] 0.0, 128
        %6009 = vxpose.xlu0.b32.cont [14/16] 0.0, 128
        %6010 = vxpose.xlu0.b32.cont [15/16] 0.0, 128
        %6011 = vxpose.xlu0.b32.end [16/16] 0.0, 128
        %v6012 = vpop.trf.xlu0
        %v6013 = vpop.trf.xlu0
        %v6014 = vpop.trf.xlu0
        %v6015 = vpop.trf.xlu0
        %v6016 = vpop.trf.xlu0
        %v6017 = vpop.trf.xlu0
        %v6018 = vpop.trf.xlu0
        %v6019 = vpop.trf.xlu0
        %v6020 = vpop.trf.xlu0
        %v6021 = vpop.trf.xlu0
        %v6022 = vpop.trf.xlu0
        %v6023 = vpop.trf.xlu0
        %v6024 = vpop.trf.xlu0
        %v6025 = vpop.trf.xlu0
        %v6026 = vpop.trf.xlu0
        %v6027 = vpop.trf.xlu0
        %v6028 = vcombine.low %v5788, %v5852
        %v6029 = vcombine.high %v5788, %v5852
        %v6031 = vunpack.c.l.s4 1983009808
        %v6032 = vunpack.c.0.s8 %v6031
        %v6033 = vlaneseq
        %v6034 = vshrl.u32 %v6033, 7
        %v6035 = vsub.s32 %v6032, %v6034
        %v6036 = vrot.slane %v6028, %v6035
        %v6038 = vunpack.c.l.s4 1983009808
        %v6039 = vunpack.c.0.s8 %v6038
        %v6040 = vlaneseq
        %v6041 = vshrl.u32 %v6040, 7
        %v6042 = vsub.s32 %v6039, %v6041
        %v6043 = vrot.slane %v6029, %v6042
        %v6044 = vcombine.low %v5820, %v5884
        %v6045 = vcombine.high %v5820, %v5884
        %v6047 = vunpack.c.l.s4 1983009808
        %v6048 = vunpack.c.0.s8 %v6047
        %v6049 = vlaneseq
        %v6050 = vshrl.u32 %v6049, 7
        %v6051 = vsub.s32 %v6048, %v6050
        %v6052 = vrot.slane %v6044, %v6051
        %v6054 = vunpack.c.l.s4 1983009808
        %v6055 = vunpack.c.0.s8 %v6054
        %v6056 = vlaneseq
        %v6057 = vshrl.u32 %v6056, 7
        %v6058 = vsub.s32 %v6055, %v6057
        %v6059 = vrot.slane %v6045, %v6058
        %v6060 = vcombine.low %v5916, %v5980
        %v6061 = vcombine.high %v5916, %v5980
        %v6063 = vunpack.c.l.s4 1983009808
        %v6064 = vunpack.c.0.s8 %v6063
        %v6065 = vlaneseq
        %v6066 = vshrl.u32 %v6065, 7
        %v6067 = vsub.s32 %v6064, %v6066
        %v6068 = vrot.slane %v6060, %v6067
        %v6070 = vunpack.c.l.s4 1983009808
        %v6071 = vunpack.c.0.s8 %v6070
        %v6072 = vlaneseq
        %v6073 = vshrl.u32 %v6072, 7
        %v6074 = vsub.s32 %v6071, %v6073
        %v6075 = vrot.slane %v6061, %v6074
        %v6076 = vcombine.low %v5948, %v6012
        %v6077 = vcombine.high %v5948, %v6012
        %v6079 = vunpack.c.l.s4 1983009808
        %v6080 = vunpack.c.0.s8 %v6079
        %v6081 = vlaneseq
        %v6082 = vshrl.u32 %v6081, 7
        %v6083 = vsub.s32 %v6080, %v6082
        %v6084 = vrot.slane %v6076, %v6083
        %v6086 = vunpack.c.l.s4 1983009808
        %v6087 = vunpack.c.0.s8 %v6086
        %v6088 = vlaneseq
        %v6089 = vshrl.u32 %v6088, 7
        %v6090 = vsub.s32 %v6087, %v6089
        %v6091 = vrot.slane %v6077, %v6090
        %v6092 = vcombine.low %v6036, %v6052
        %v6093 = vcombine.high %v6036, %v6052
        %v6095 = vunpack.c.l.s4 1934713408
        %v6096 = vunpack.c.0.s8 %v6095
        %v6097 = vlaneseq
        %v6098 = vshrl.u32 %v6097, 7
        %v6099 = vsub.s32 %v6096, %v6098
        %v6100 = vrot.slane %v6092, %v6099
        %v6102 = vunpack.c.l.s4 1934713408
        %v6103 = vunpack.c.0.s8 %v6102
        %v6104 = vlaneseq
        %v6105 = vshrl.u32 %v6104, 7
        %v6106 = vsub.s32 %v6103, %v6105
        %v6107 = vrot.slane %v6093, %v6106
        %v6108 = vcombine.low %v6043, %v6059
        %v6109 = vcombine.high %v6043, %v6059
        %v6111 = vunpack.c.l.s4 1934713408
        %v6112 = vunpack.c.0.s8 %v6111
        %v6113 = vlaneseq
        %v6114 = vshrl.u32 %v6113, 7
        %v6115 = vsub.s32 %v6112, %v6114
        %v6116 = vrot.slane %v6108, %v6115
        %v6118 = vunpack.c.l.s4 1934713408
        %v6119 = vunpack.c.0.s8 %v6118
        %v6120 = vlaneseq
        %v6121 = vshrl.u32 %v6120, 7
        %v6122 = vsub.s32 %v6119, %v6121
        %v6123 = vrot.slane %v6109, %v6122
        %v6124 = vcombine.low %v6068, %v6084
        %v6125 = vcombine.high %v6068, %v6084
        %v6127 = vunpack.c.l.s4 1934713408
        %v6128 = vunpack.c.0.s8 %v6127
        %v6129 = vlaneseq
        %v6130 = vshrl.u32 %v6129, 7
        %v6131 = vsub.s32 %v6128, %v6130
        %v6132 = vrot.slane %v6124, %v6131
        %v6134 = vunpack.c.l.s4 1934713408
        %v6135 = vunpack.c.0.s8 %v6134
        %v6136 = vlaneseq
        %v6137 = vshrl.u32 %v6136, 7
        %v6138 = vsub.s32 %v6135, %v6137
        %v6139 = vrot.slane %v6125, %v6138
        %v6140 = vcombine.low %v6075, %v6091
        %v6141 = vcombine.high %v6075, %v6091
        %v6143 = vunpack.c.l.s4 1934713408
        %v6144 = vunpack.c.0.s8 %v6143
        %v6145 = vlaneseq
        %v6146 = vshrl.u32 %v6145, 7
        %v6147 = vsub.s32 %v6144, %v6146
        %v6148 = vrot.slane %v6140, %v6147
        %v6150 = vunpack.c.l.s4 1934713408
        %v6151 = vunpack.c.0.s8 %v6150
        %v6152 = vlaneseq
        %v6153 = vshrl.u32 %v6152, 7
        %v6154 = vsub.s32 %v6151, %v6153
        %v6155 = vrot.slane %v6141, %v6154
        %v6156 = vcombine.low %v6100, %v6132
        %v6157 = vcombine.high %v6100, %v6132
        %v6158 = vcombine.low %v6107, %v6139
        %v6159 = vcombine.high %v6107, %v6139
        %v6160 = vcombine.low %v6116, %v6148
        %v6161 = vcombine.high %v6116, %v6148
        %v6162 = vcombine.low %v6123, %v6155
        %v6163 = vcombine.high %v6123, %v6155
        %v6164 = vcombine.low %v6156, %v6158
        %v6165 = vcombine.high %v6156, %v6158
        %v6167 = vunpack.c.l.s4 1983009808
        %v6168 = vunpack.c.0.s8 %v6167
        %v6169 = vlaneseq
        %v6170 = vshrl.u32 %v6169, 7
        %v6171 = vsub.s32 %v6168, %v6170
        %v6172 = vrot.slane %v6164, %v6171
        %v6174 = vunpack.c.l.s4 1983009808
        %v6175 = vunpack.c.0.s8 %v6174
        %v6176 = vlaneseq
        %v6177 = vshrl.u32 %v6176, 7
        %v6178 = vsub.s32 %v6175, %v6177
        %v6179 = vrot.slane %v6165, %v6178
        %v6180 = vcombine.low %v6157, %v6159
        %v6181 = vcombine.high %v6157, %v6159
        %v6183 = vunpack.c.l.s4 1983009808
        %v6184 = vunpack.c.0.s8 %v6183
        %v6185 = vlaneseq
        %v6186 = vshrl.u32 %v6185, 7
        %v6187 = vsub.s32 %v6184, %v6186
        %v6188 = vrot.slane %v6180, %v6187
        %v6190 = vunpack.c.l.s4 1983009808
        %v6191 = vunpack.c.0.s8 %v6190
        %v6192 = vlaneseq
        %v6193 = vshrl.u32 %v6192, 7
        %v6194 = vsub.s32 %v6191, %v6193
        %v6195 = vrot.slane %v6181, %v6194
        %v6196 = vcombine.low %v6160, %v6162
        %v6197 = vcombine.high %v6160, %v6162
        %v6199 = vunpack.c.l.s4 1983009808
        %v6200 = vunpack.c.0.s8 %v6199
        %v6201 = vlaneseq
        %v6202 = vshrl.u32 %v6201, 7
        %v6203 = vsub.s32 %v6200, %v6202
        %v6204 = vrot.slane %v6196, %v6203
        %v6206 = vunpack.c.l.s4 1983009808
        %v6207 = vunpack.c.0.s8 %v6206
        %v6208 = vlaneseq
        %v6209 = vshrl.u32 %v6208, 7
        %v6210 = vsub.s32 %v6207, %v6209
        %v6211 = vrot.slane %v6197, %v6210
        %v6212 = vcombine.low %v6161, %v6163
        %v6213 = vcombine.high %v6161, %v6163
        %v6215 = vunpack.c.l.s4 1983009808
        %v6216 = vunpack.c.0.s8 %v6215
        %v6217 = vlaneseq
        %v6218 = vshrl.u32 %v6217, 7
        %v6219 = vsub.s32 %v6216, %v6218
        %v6220 = vrot.slane %v6212, %v6219
        %v6222 = vunpack.c.l.s4 1983009808
        %v6223 = vunpack.c.0.s8 %v6222
        %v6224 = vlaneseq
        %v6225 = vshrl.u32 %v6224, 7
        %v6226 = vsub.s32 %v6223, %v6225
        %v6227 = vrot.slane %v6213, %v6226
        %v6228 = vcombine.low %v6172, %v6188
        %v6229 = vcombine.high %v6172, %v6188
        %v6231 = vunpack.c.l.s4 1934713408
        %v6232 = vunpack.c.0.s8 %v6231
        %v6233 = vlaneseq
        %v6234 = vshrl.u32 %v6233, 7
        %v6235 = vsub.s32 %v6232, %v6234
        %v6236 = vrot.slane %v6228, %v6235
        %v6238 = vunpack.c.l.s4 1934713408
        %v6239 = vunpack.c.0.s8 %v6238
        %v6240 = vlaneseq
        %v6241 = vshrl.u32 %v6240, 7
        %v6242 = vsub.s32 %v6239, %v6241
        %v6243 = vrot.slane %v6229, %v6242
        %v6244 = vcombine.low %v6179, %v6195
        %v6245 = vcombine.high %v6179, %v6195
        %v6247 = vunpack.c.l.s4 1934713408
        %v6248 = vunpack.c.0.s8 %v6247
        %v6249 = vlaneseq
        %v6250 = vshrl.u32 %v6249, 7
        %v6251 = vsub.s32 %v6248, %v6250
        %v6252 = vrot.slane %v6244, %v6251
        %v6254 = vunpack.c.l.s4 1934713408
        %v6255 = vunpack.c.0.s8 %v6254
        %v6256 = vlaneseq
        %v6257 = vshrl.u32 %v6256, 7
        %v6258 = vsub.s32 %v6255, %v6257
        %v6259 = vrot.slane %v6245, %v6258
        %v6260 = vcombine.low %v6204, %v6220
        %v6261 = vcombine.high %v6204, %v6220
        %v6263 = vunpack.c.l.s4 1934713408
        %v6264 = vunpack.c.0.s8 %v6263
        %v6265 = vlaneseq
        %v6266 = vshrl.u32 %v6265, 7
        %v6267 = vsub.s32 %v6264, %v6266
        %v6268 = vrot.slane %v6260, %v6267
        %v6270 = vunpack.c.l.s4 1934713408
        %v6271 = vunpack.c.0.s8 %v6270
        %v6272 = vlaneseq
        %v6273 = vshrl.u32 %v6272, 7
        %v6274 = vsub.s32 %v6271, %v6273
        %v6275 = vrot.slane %v6261, %v6274
        %v6276 = vcombine.low %v6211, %v6227
        %v6277 = vcombine.high %v6211, %v6227
        %v6279 = vunpack.c.l.s4 1934713408
        %v6280 = vunpack.c.0.s8 %v6279
        %v6281 = vlaneseq
        %v6282 = vshrl.u32 %v6281, 7
        %v6283 = vsub.s32 %v6280, %v6282
        %v6284 = vrot.slane %v6276, %v6283
        %v6286 = vunpack.c.l.s4 1934713408
        %v6287 = vunpack.c.0.s8 %v6286
        %v6288 = vlaneseq
        %v6289 = vshrl.u32 %v6288, 7
        %v6290 = vsub.s32 %v6287, %v6289
        %v6291 = vrot.slane %v6277, %v6290
        %v6292 = vcombine.low %v6236, %v6268
        %v6293 = vcombine.high %v6236, %v6268
        %v6294 = vcombine.low %v6243, %v6275
        %v6295 = vcombine.high %v6243, %v6275
        %v6296 = vcombine.low %v6252, %v6284
        %v6297 = vcombine.high %v6252, %v6284
        %v6298 = vcombine.low %v6259, %v6291
        %v6299 = vcombine.high %v6259, %v6291
        %6301 = vrot.lane.b32.xlu0 %v6293, 4
        %v6302 = vpop.permute.xlu0 %6301
        %6305 = vrot.lane.b32.xlu0 %v6294, 8
        %v6306 = vpop.permute.xlu0 %6305
        %6309 = vrot.lane.b32.xlu0 %v6295, 12
        %v6310 = vpop.permute.xlu0 %6309
        %6313 = vrot.lane.b32.xlu0 %v6296, 16
        %v6314 = vpop.permute.xlu0 %6313
        %6317 = vrot.lane.b32.xlu0 %v6297, 20
        %v6318 = vpop.permute.xlu0 %6317
        %6321 = vrot.lane.b32.xlu0 %v6298, 24
        %v6322 = vpop.permute.xlu0 %6321
        %6325 = vrot.lane.b32.xlu0 %v6299, 28
        %v6326 = vpop.permute.xlu0 %6325
        %v6328 = vsel %vm1382, %v6292, %v6302
        %v6329 = vsel %vm1984, %v6328, %v6306
        %v6330 = vsel %vm3495, %v6329, %v6310
        %v6331 = vsel %vm3497, %v6330, %v6314
        %v6332 = vsel %vm3499, %v6331, %v6318
        %v6333 = vsel %vm3501, %v6332, %v6322
        %v6334 = vsel %vm3503, %v6333, %v6326
        %v6336 = vlaneseq
        %v6337 = vshrl.u32 %v6336, 7
        %v6338 = vsub.s32 0, %v6337
        %v6339 = vrot.slane %v3630, %v6338
        %v6342 = vsel %vm807, %v6334, 0
        %6344 = vmatprep.subr.mxu0 0.0
        %6345 = vmatpush1.msra.mxu0 %v3626
        %6346 = vmatprep.subr.mxu0 0.0
        %6347 = vmatpush1.msra.mxu0 %v3627
        %6348 = vmatprep.subr.mxu0 0.0
        %6349 = vmatpush1.msra.mxu0 %v3628
        %6350 = vmatprep.subr.mxu0 0.0
        %6351 = vmatpush1.msra.mxu0 %v3629
        %6352 = vmatprep.subr.mxu0 0.0
        %6353 = vmatpush1.msra.mxu0 0.0
        %6354 = vmatprep.subr.mxu0 0.0
        %6355 = vmatpush1.msra.mxu0 0.0
        %6356 = vmatprep.subr.mxu0 0.0
        %6357 = vmatpush1.msra.mxu0 0.0
        %6358 = vmatprep.subr.mxu0 0.0
        %6359 = vmatpush1.msra.mxu0 0.0
        %6360 = vmatprep.subr.mxu0 0.0
        %6361 = vmatpush1.msra.mxu0 0.0
        %6362 = vmatprep.subr.mxu0 0.0
        %6363 = vmatpush1.msra.mxu0 0.0
        %6364 = vmatprep.subr.mxu0 0.0
        %6365 = vmatpush1.msra.mxu0 0.0
        %6366 = vmatprep.subr.mxu0 0.0
        %6367 = vmatpush1.msra.mxu0 0.0
        %6368 = vmatprep.subr.mxu0 0.0
        %6369 = vmatpush1.msra.mxu0 0.0
        %6370 = vmatprep.subr.mxu0 0.0
        %6371 = vmatpush1.msra.mxu0 0.0
        %6372 = vmatprep.subr.mxu0 0.0
        %6373 = vmatpush1.msra.mxu0 0.0
        %6374 = vmatprep.subr.mxu0 0.0
        %6375 = vmatpush1.msra.mxu0 0.0
        %6376 = vmatprep.subr.mxu0 0.0
        %6377 = vmatpush1.msra.mxu0 0.0
        %6378 = vmatprep.subr.mxu0 0.0
        %6379 = vmatpush1.msra.mxu0 0.0
        %6380 = vmatprep.subr.mxu0 0.0
        %6381 = vmatpush1.msra.mxu0 0.0
        %6382 = vmatprep.subr.mxu0 0.0
        %6383 = vmatpush1.msra.mxu0 0.0
        %6384 = vmatprep.subr.mxu0 0.0
        %6385 = vmatpush1.msra.mxu0 0.0
        %6386 = vmatprep.subr.mxu0 0.0
        %6387 = vmatpush1.msra.mxu0 0.0
        %6388 = vmatprep.subr.mxu0 0.0
        %6389 = vmatpush1.msra.mxu0 0.0
        %6390 = vmatprep.subr.mxu0 0.0
        %6391 = vmatpush1.msra.mxu0 0.0
        %6392 = vmatprep.subr.mxu0 0.0
        %6393 = vmatpush1.msra.mxu0 0.0
        %6394 = vmatprep.subr.mxu0 0.0
        %6395 = vmatpush1.msra.mxu0 0.0
        %6396 = vmatprep.subr.mxu0 0.0
        %6397 = vmatpush1.msra.mxu0 0.0
        %6398 = vmatprep.subr.mxu0 0.0
        %6399 = vmatpush1.msra.mxu0 0.0
        %6400 = vmatprep.subr.mxu0 0.0
        %6401 = vmatpush1.msra.mxu0 0.0
        %6402 = vmatprep.subr.mxu0 0.0
        %6403 = vmatpush1.msra.mxu0 0.0
        %6404 = vmatprep.subr.mxu0 0.0
        %6405 = vmatpush1.msra.mxu0 0.0
        %6406 = vmatprep.subr.mxu0 0.0
        %6407 = vmatpush1.msra.mxu0 0.0
        %6408 = vmatprep.mubr.f32.mxu0 0.0
        %6409 = vmatmul.mubr.f32.gmra.mrb[0].mxu0 %v6342
        %v6410 = vpop.f32.mrb[0].mxu0
        %v6411 = vadd.f32 %v6339, %v6410
        %v6412 = vpop.f32.mrb[0].mxu0
        %6413 = vdwg.mxu0
        %v6414 = vadd.f32 %v3584, %v6411
        %v6415 = vld [vmem:[%s16] sm:$0x1]
        %v6416 = vld [vmem:[%s17] sm:$0x1]
        %v6417 = vsel %vm807, %v6414, 0.0
        %6418 = vadd.xlane.f32.xlu0 %v6417
        %v6419 = vpop.xlane.xlu0 %6418
        %v6420 = vmul.f32 %v6419, %v811
        %v6421 = vsub.f32 %v6414, %v6420
        %v6422 = vmul.f32 %v6421, %v6421
        %v6423 = vsel %vm807, %v6422, 0.0
        %6424 = vadd.xlane.f32.xlu0 %v6423
        %v6425 = vpop.xlane.xlu0 %6424
        %v6426 = vmul.f32 %v6425, %v811
        %v6427 = vadd.f32 %v6426, 1e-05
        %v6428 = vrsqrt.pop %v6427
        %v6429 = vmul.f32 %v6421, %v6428
        %v6431 = vlaneseq
        %v6432 = vshrl.u32 %v6431, 7
        %v6433 = vsub.s32 0, %v6432
        %v6434 = vrot.slane %v6415, %v6433
        %v6436 = vmul.f32 %v6429, %v6434
        %v6438 = vlaneseq
        %v6439 = vshrl.u32 %v6438, 7
        %v6440 = vsub.s32 0, %v6439
        %v6441 = vrot.slane %v6416, %v6440
        %v6443 = vadd.f32 %v6436, %v6441
        %v6444 = vld [vmem:[#allocation13] sm:$0xff]
        %v6445 = vld [vmem:[#allocation13 + $0x8] sm:$0xff]
        %v6446 = vld [vmem:[#allocation13 + $0x10] sm:$0xff]
        %v6447 = vld [vmem:[#allocation13 + $0x18] sm:$0xff]
        %v6448 = vld [vmem:[%s19] sm:$0x1]
        %v6450 = vlaneseq
        %v6451 = vshrl.u32 %v6450, 7
        %v6452 = vsub.s32 0, %v6451
        %v6453 = vrot.slane %v6448, %v6452
        %v6456 = vsel %vm807, %v6443, 0
        %6458 = vmatprep.subr.mxu0 0.0
        %6459 = vmatpush1.msra.mxu0 %v6444
        %6460 = vmatprep.subr.mxu0 0.0
        %6461 = vmatpush1.msra.mxu0 %v6445
        %6462 = vmatprep.subr.mxu0 0.0
        %6463 = vmatpush1.msra.mxu0 %v6446
        %6464 = vmatprep.subr.mxu0 0.0
        %6465 = vmatpush1.msra.mxu0 %v6447
        %6466 = vmatprep.subr.mxu0 0.0
        %6467 = vmatpush1.msra.mxu0 0.0
        %6468 = vmatprep.subr.mxu0 0.0
        %6469 = vmatpush1.msra.mxu0 0.0
        %6470 = vmatprep.subr.mxu0 0.0
        %6471 = vmatpush1.msra.mxu0 0.0
        %6472 = vmatprep.subr.mxu0 0.0
        %6473 = vmatpush1.msra.mxu0 0.0
        %6474 = vmatprep.subr.mxu0 0.0
        %6475 = vmatpush1.msra.mxu0 0.0
        %6476 = vmatprep.subr.mxu0 0.0
        %6477 = vmatpush1.msra.mxu0 0.0
        %6478 = vmatprep.subr.mxu0 0.0
        %6479 = vmatpush1.msra.mxu0 0.0
        %6480 = vmatprep.subr.mxu0 0.0
        %6481 = vmatpush1.msra.mxu0 0.0
        %6482 = vmatprep.subr.mxu0 0.0
        %6483 = vmatpush1.msra.mxu0 0.0
        %6484 = vmatprep.subr.mxu0 0.0
        %6485 = vmatpush1.msra.mxu0 0.0
        %6486 = vmatprep.subr.mxu0 0.0
        %6487 = vmatpush1.msra.mxu0 0.0
        %6488 = vmatprep.subr.mxu0 0.0
        %6489 = vmatpush1.msra.mxu0 0.0
        %6490 = vmatprep.subr.mxu0 0.0
        %6491 = vmatpush1.msra.mxu0 0.0
        %6492 = vmatprep.subr.mxu0 0.0
        %6493 = vmatpush1.msra.mxu0 0.0
        %6494 = vmatprep.subr.mxu0 0.0
        %6495 = vmatpush1.msra.mxu0 0.0
        %6496 = vmatprep.subr.mxu0 0.0
        %6497 = vmatpush1.msra.mxu0 0.0
        %6498 = vmatprep.subr.mxu0 0.0
        %6499 = vmatpush1.msra.mxu0 0.0
        %6500 = vmatprep.subr.mxu0 0.0
        %6501 = vmatpush1.msra.mxu0 0.0
        %6502 = vmatprep.subr.mxu0 0.0
        %6503 = vmatpush1.msra.mxu0 0.0
        %6504 = vmatprep.subr.mxu0 0.0
        %6505 = vmatpush1.msra.mxu0 0.0
        %6506 = vmatprep.subr.mxu0 0.0
        %6507 = vmatpush1.msra.mxu0 0.0
        %6508 = vmatprep.subr.mxu0 0.0
        %6509 = vmatpush1.msra.mxu0 0.0
        %6510 = vmatprep.subr.mxu0 0.0
        %6511 = vmatpush1.msra.mxu0 0.0
        %6512 = vmatprep.subr.mxu0 0.0
        %6513 = vmatpush1.msra.mxu0 0.0
        %6514 = vmatprep.subr.mxu0 0.0
        %6515 = vmatpush1.msra.mxu0 0.0
        %6516 = vmatprep.subr.mxu0 0.0
        %6517 = vmatpush1.msra.mxu0 0.0
        %6518 = vmatprep.subr.mxu0 0.0
        %6519 = vmatpush1.msra.mxu0 0.0
        %6520 = vmatprep.subr.mxu0 0.0
        %6521 = vmatpush1.msra.mxu0 0.0
        %6522 = vmatprep.mubr.f32.mxu0 0.0
        %6523 = vmatmul.mubr.f32.gmra.mrb[0].mxu0 %v6456
        %v6524 = vpop.f32.mrb[0].mxu0
        %v6525 = vadd.f32 %v6453, %v6524
        %v6526 = vpop.f32.mrb[0].mxu0
        %6527 = vdwg.mxu0
        %v6528 = vmul.f32 %v6525, 0.5
        %v6529 = vmul.f32 %v6525, 0.70710677
        %v6530 = vand.u32 2147483647, %v6529
        %v6531 = vmul.f32 %v6530, 0.3275911
        %v6532 = vadd.f32 %v6531, 1.0
        %v6533 = vrcp.pop %v6532
        %v6534 = vmul.f32 1.0, %v6533
        %v6535 = vmul.f32 %v6534, 1.0614054
        %v6536 = vadd.f32 %v6535, -1.4531521
        %v6537 = vmul.f32 %v6534, %v6536
        %v6538 = vadd.f32 %v6537, 1.4214138
        %v6539 = vmul.f32 %v6534, %v6538
        %v6540 = vadd.f32 %v6539, -0.28449672
        %v6541 = vmul.f32 %v6534, %v6540
        %v6542 = vadd.f32 %v6541, 0.2548296
        %v6543 = vmul.f32 %v6534, %v6542
        %v6544 = vsub.f32 0.0, %v6530
        %v6545 = vmul.f32 %v6544, %v6530
        %v6546 = vmul.f32 %v6545, 1.442695
        %v6547 = vpow.pop %v6546
        %v6548 = vmul.f32 %v6543, %v6547
        %v6549 = vsub.f32 1.0, %v6548
        %vm6550 = vcmp.lt.f32.partialorder %v6529, 0.0
        %v6551 = vsub.f32 0.0, %v6549
        %v6552 = vsel %vm6550, %v6551, %v6549
        %v6553 = vadd.f32 %v6552, 1.0
        %v6554 = vmul.f32 %v6528, %v6553
        %v6555 = vld [vmem:[%s20] sm:$0xff]
        %v6556 = vld [vmem:[%s20 + $0x8] sm:$0xff]
        %v6557 = vld [vmem:[%s20 + $0x10] sm:$0xff]
        %v6558 = vld [vmem:[%s20 + $0x18] sm:$0xff]
        %v6559 = vld [vmem:[%s20 + $0x20] sm:$0xff]
        %v6560 = vld [vmem:[%s20 + $0x28] sm:$0xff]
        %v6561 = vld [vmem:[%s20 + $0x30] sm:$0xff]
        %v6562 = vld [vmem:[%s20 + $0x38] sm:$0xff]
        %v6563 = vld [vmem:[%s20 + $0x40] sm:$0xff]
        %v6564 = vld [vmem:[%s20 + $0x48] sm:$0xff]
        %v6565 = vld [vmem:[%s20 + $0x50] sm:$0xff]
        %v6566 = vld [vmem:[%s20 + $0x58] sm:$0xff]
        %v6567 = vld [vmem:[%s20 + $0x60] sm:$0xff]
        %v6568 = vld [vmem:[%s20 + $0x68] sm:$0xff]
        %v6569 = vld [vmem:[%s20 + $0x70] sm:$0xff]
        %v6570 = vld [vmem:[%s20 + $0x78] sm:$0xff]
        %v6571 = vld [vmem:[%s21] sm:$0x1]
        %v6573 = vlaneseq
        %v6574 = vshrl.u32 %v6573, 7
        %v6575 = vsub.s32 0, %v6574
        %v6576 = vrot.slane %v6571, %v6575
        %6578 = vmatprep.subr.mxu0 0.0
        %6579 = vmatpush1.msra.mxu0 %v6555
        %6580 = vmatprep.subr.mxu0 0.0
        %6581 = vmatpush1.msra.mxu0 %v6556
        %6582 = vmatprep.subr.mxu0 0.0
        %6583 = vmatpush1.msra.mxu0 %v6557
        %6584 = vmatprep.subr.mxu0 0.0
        %6585 = vmatpush1.msra.mxu0 %v6558
        %6586 = vmatprep.subr.mxu0 0.0
        %6587 = vmatpush1.msra.mxu0 %v6559
        %6588 = vmatprep.subr.mxu0 0.0
        %6589 = vmatpush1.msra.mxu0 %v6560
        %6590 = vmatprep.subr.mxu0 0.0
        %6591 = vmatpush1.msra.mxu0 %v6561
        %6592 = vmatprep.subr.mxu0 0.0
        %6593 = vmatpush1.msra.mxu0 %v6562
        %6594 = vmatprep.subr.mxu0 0.0
        %6595 = vmatpush1.msra.mxu0 %v6563
        %6596 = vmatprep.subr.mxu0 0.0
        %6597 = vmatpush1.msra.mxu0 %v6564
        %6598 = vmatprep.subr.mxu0 0.0
        %6599 = vmatpush1.msra.mxu0 %v6565
        %6600 = vmatprep.subr.mxu0 0.0
        %6601 = vmatpush1.msra.mxu0 %v6566
        %6602 = vmatprep.subr.mxu0 0.0
        %6603 = vmatpush1.msra.mxu0 %v6567
        %6604 = vmatprep.subr.mxu0 0.0
        %6605 = vmatpush1.msra.mxu0 %v6568
        %6606 = vmatprep.subr.mxu0 0.0
        %6607 = vmatpush1.msra.mxu0 %v6569
        %6608 = vmatprep.subr.mxu0 0.0
        %6609 = vmatpush1.msra.mxu0 %v6570
        %6610 = vmatprep.subr.mxu0 0.0
        %6611 = vmatpush1.msra.mxu0 0.0
        %6612 = vmatprep.subr.mxu0 0.0
        %6613 = vmatpush1.msra.mxu0 0.0
        %6614 = vmatprep.subr.mxu0 0.0
        %6615 = vmatpush1.msra.mxu0 0.0
        %6616 = vmatprep.subr.mxu0 0.0
        %6617 = vmatpush1.msra.mxu0 0.0
        %6618 = vmatprep.subr.mxu0 0.0
        %6619 = vmatpush1.msra.mxu0 0.0
        %6620 = vmatprep.subr.mxu0 0.0
        %6621 = vmatpush1.msra.mxu0 0.0
        %6622 = vmatprep.subr.mxu0 0.0
        %6623 = vmatpush1.msra.mxu0 0.0
        %6624 = vmatprep.subr.mxu0 0.0
        %6625 = vmatpush1.msra.mxu0 0.0
        %6626 = vmatprep.subr.mxu0 0.0
        %6627 = vmatpush1.msra.mxu0 0.0
        %6628 = vmatprep.subr.mxu0 0.0
        %6629 = vmatpush1.msra.mxu0 0.0
        %6630 = vmatprep.subr.mxu0 0.0
        %6631 = vmatpush1.msra.mxu0 0.0
        %6632 = vmatprep.subr.mxu0 0.0
        %6633 = vmatpush1.msra.mxu0 0.0
        %6634 = vmatprep.subr.mxu0 0.0
        %6635 = vmatpush1.msra.mxu0 0.0
        %6636 = vmatprep.subr.mxu0 0.0
        %6637 = vmatpush1.msra.mxu0 0.0
        %6638 = vmatprep.subr.mxu0 0.0
        %6639 = vmatpush1.msra.mxu0 0.0
        %6640 = vmatprep.subr.mxu0 0.0
        %6641 = vmatpush1.msra.mxu0 0.0
        %6642 = vmatprep.mubr.f32.mxu0 0.0
        %6643 = vmatmul.mubr.f32.gmra.mrb[0].mxu0 %v6554
        %v6644 = vpop.f32.mrb[0].mxu0
        %v6645 = vadd.f32 %v6576, %v6644
        %v6646 = vpop.f32.mrb[0].mxu0
        %6647 = vdwg.mxu0
        %v6648 = vadd.f32 %v6414, %v6645
        %6649 = vst.msk [vmem:[%s796] sm:$0xff] %vm807, %v6648
        %s6650 = sand.u32 %s522, 1
        %s6651 = scalar_lea.sflag [#allocation4], %s6650
        %s6652 = sand.u32 %s522, 1
        %s6653 = smul.addr %s6652, 8
        %s6654 = scalar_lea.vmem [#allocation14], %s6653
        // Predicated region
        $region137: #{_lambda_.1} parent=107 // pred_check
          %p6655 = pneg %p532
        $region138: #{_lambda_.1} parent=107 // pred_check_branch
          %6657 = sbr.rel (%p6655) target = $region140
        $region139: #{_lambda_.1} parent=107 // pred_region
          %s6659 = ssub.s32 128, 128
          %6660 = vsyncadd %s6651, %s6659
          %s6661 = smul.addr %s42, 128
          %s6662 = scalar_lea.hbm %s22, %s6661
          %s6664 = sshll.u32 %s6654, 4
          %s6665 = int_to_ptr.vmem [resolvable:$true] %s6664
          %6667 = dma.vmem_to_hbm [thread:$0]  %s6665, 128, %s6662, %s6651
        $region140: #{_lambda_.1} parent=107 // pred_fallthru
          _
      $region108: #{_lambda_.1} parent=5 // pred_fallthru
        _
      %p6668 = scmp.le.s32.totalorder 2, %s37
      // Predicated region
      $region141: #{_lambda_.1} parent=5 // pred_check
        %p6669 = pneg %p6668
      $region142: #{_lambda_.1} parent=5 // pred_check_branch
        %6671 = sbr.rel (%p6669) target = $region144
      $region143: #{_lambda_.1} parent=5 // pred_region
        %s6672 = ssub.s32 %s37, 2
        // Predicated region
        $region145: #{_lambda_.1} parent=143 // pred_check
          %p6673 = pneg %p538
        $region146: #{_lambda_.1} parent=143 // pred_check_branch
          %6675 = sbr.rel (%p6673) target = $region148
        $region147: #{_lambda_.1} parent=143 // pred_region
          %s6676 = sand.u32 %s523, 1
          %s6677 = scalar_lea.sflag [#allocation4], %s6676
          %s6678 = sand.u32 %s523, 1
          %s6679 = smul.addr %s6678, 8
          %s6680 = scalar_lea.vmem [#allocation14], %s6679
          %6681 = dma.done %s6677, 128
        $region148: #{_lambda_.1} parent=143 // pred_fallthru
          _
      $region144: #{_lambda_.1} parent=5 // pred_fallthru
        _
    $region6: #{_lambda_.1} parent=1 // loop_footer
      %s41 = sadd.s32 1, %s37
    $region7: #{_lambda_.1} parent=1 // loop_footer_branch
      %36 = sbr.rel target = $region3
    $region8: #{_lambda_.1} parent=1 // loop_exit
      _
    %6682 = vsyncpa [#allocation3], 1
    %s6683 = scalar_lea.sflag [#allocation3], 1
    %6684 = vsyncpa %s6683, 1
    %6685 = vsyncpa [#allocation6], 1
    %6686 = vsyncpa [#allocation9], 1
    %6687 = vsyncpa [#allocation12], 1
    %6688 = vsyncpa [#allocation4], 1
    %s6689 = scalar_lea.sflag [#allocation4], 1
    %6690 = vsyncpa %s6689, 1

</llo_original>
